<compile_context>
chip_gen: v5e
topology: v5e:2x2
jax: 0.10.0
libtpu: 0.0.40
codegen_flags: <defaults>
</compile_context>

<pallas_src>
import jax
import jax.numpy as jnp
from jax import lax
from jax.experimental import pallas as pl
from jax.experimental.pallas import tpu as pltpu

# ----- scaled-down problem dims -------------------------------------------------
B, CIN, H, W = 2, 3, 16, 16
COUT = 32
NOUT = 64
KH = KW = 3
TAPS = KH * KW
HP, WP = H + 2, W + 2          # padded spatial dims (SAME conv, pad=1)
K = COUT * H * W               # 8192 (stand-in for 32*256*256)


# ----- conv kernel: in-kernel im2col via 9 block-diagonal tap matmuls -------------
def conv_kernel(xp_ref, wblk_ref, b_ref, o_ref):
    # xp_ref   [B*HP, WP*CIN]          whole padded NHWC input, resident in VMEM
    # wblk_ref [TAPS, W*CIN, W*COUT]   block-diagonal per-tap weights (host-prepped)
    # b_ref    [1, W*COUT]             bias tiled over W
    # o_ref    [B*H, W*COUT]           lane-dense output (512 lanes -> unmasked vst)
    for b in range(B):
        acc = jnp.zeros((H, W * COUT), jnp.float32)
        for kh in range(KH):
            for kw in range(KW):
                t = kh * KW + kw
                # static, unaligned 2D slice of the VMEM-resident padded input
                xs = xp_ref[pl.ds(b * HP + kh, H), pl.ds(kw * CIN, W * CIN)]
                acc = acc + jnp.dot(xs, wblk_ref[t],
                                    preferred_element_type=jnp.float32)
        o_ref[pl.ds(b * H, H), :] = acc + b_ref[...]


def conv2d_3x3_same(x_nhwc, wblk, bias_tiled):
    """x_nhwc [B,H,W,CIN] f32 -> conv output [B*H, W*COUT] f32 (NHWC ordering)."""
    xp = jnp.pad(x_nhwc, ((0, 0), (1, 1), (1, 1), (0, 0)))
    xp2d = xp.reshape(B * HP, WP * CIN)        # free row-major merge, ~7.6 KiB
    return pl.pallas_call(
        conv_kernel,
        out_shape=jax.ShapeDtypeStruct((B * H, W * COUT), jnp.float32),
        grid_spec=pltpu.PrefetchScalarGridSpec(
            num_scalar_prefetch=0,
            grid=(1,),
            in_specs=[
                pl.BlockSpec((B * HP, WP * CIN), lambda i: (0, 0)),
                pl.BlockSpec((TAPS, W * CIN, W * COUT), lambda i: (0, 0, 0)),
                pl.BlockSpec((1, W * COUT), lambda i: (0, 0)),
            ],
            out_specs=pl.BlockSpec((B * H, W * COUT), lambda i: (0, 0)),
        ),
        compiler_params=pltpu.CompilerParams(
            dimension_semantics=("arbitrary",),
            vmem_limit_bytes=32 << 20),
        cost_estimate=pl.CostEstimate(
            flops=2 * B * TAPS * H * (W * CIN) * (W * COUT),
            transcendentals=0,
            bytes_accessed=4 * (B * HP * WP * CIN
                                + TAPS * W * CIN * W * COUT
                                + W * COUT
                                + B * H * W * COUT)),
    )(xp2d, wblk, bias_tiled)


# ----- FC + ELU + (y*z) + global sum kernel (single full-K step, bf16 weight) -----
def fc_elu_sum_kernel(x_ref, w_ref, b_ref, y_ref, z_ref, o_ref):
    # Weight arrives as bf16 (halved HBM stream / VMEM buffer); upcast in VMEM so
    # products match the f32 reference bit-for-bit (weights are bf16-representable),
    # MXU accumulates in f32.  At full scale the activations would be bf16 too for
    # a native bf16 MXU pass.
    w = w_ref[...].astype(jnp.float32)
    h = (jnp.dot(x_ref[...], w, preferred_element_type=jnp.float32)
         + b_ref[...])
    # ELU, alpha=1; exp argument clamped <= 0 so the untaken branch never overflows.
    neg = jnp.exp(jnp.minimum(h, 0.0)) - 1.0
    h = jnp.where(h > 0.0, h, neg)
    h = h + y_ref[...] * z_ref[...]
    o_ref[...] = jnp.sum(h, keepdims=True)                     # scalar reduction


def fc_elu_add_sum(x_flat, w_t_bf16, bias, y, z):
    """x_flat [B,K] f32, w_t_bf16 [K,NOUT] bf16 (NHWC-permuted), bias [NOUT],
       y/z [B,NOUT] -> (1,1) f32 global sum."""
    return pl.pallas_call(
        fc_elu_sum_kernel,
        out_shape=jax.ShapeDtypeStruct((1, 1), jnp.float32),
        grid_spec=pltpu.PrefetchScalarGridSpec(
            num_scalar_prefetch=0,
            grid=(1,),
            in_specs=[
                pl.BlockSpec((B, K), lambda i: (0, 0)),
                pl.BlockSpec((K, NOUT), lambda i: (0, 0)),     # 1 MiB bf16 in VMEM
                pl.BlockSpec((1, NOUT), lambda i: (0, 0)),
                pl.BlockSpec((B, NOUT), lambda i: (0, 0)),
                pl.BlockSpec((B, NOUT), lambda i: (0, 0)),
            ],
            out_specs=pl.BlockSpec((1, 1), lambda i: (0, 0)),
        ),
        compiler_params=pltpu.CompilerParams(
            dimension_semantics=("arbitrary",),
            vmem_limit_bytes=32 << 20),
        cost_estimate=pl.CostEstimate(
            flops=2 * B * K * NOUT + 6 * B * NOUT,
            transcendentals=B * NOUT,
            bytes_accessed=(B * K * 4 + K * NOUT * 2 + NOUT * 4
                            + 2 * B * NOUT * 4 + 4)),
    )(x_flat, w_t_bf16, bias.reshape(1, NOUT), y, z)


# ----- full forward ---------------------------------------------------------------
@jax.jit
def simple_cnn_forward(x_nchw, y, z, conv_wblk, conv_b_tiled, fc_w_t_bf16, fc_b):
    x_nhwc = jnp.transpose(x_nchw, (0, 2, 3, 1))
    feat = conv2d_3x3_same(x_nhwc, conv_wblk, conv_b_tiled)    # [B*H, W*COUT]
    # Metadata-only reshape: row (b*H + h), col (w*COUT + c) -> [b, (h*W+w)*COUT + c]
    # (NHWC-flatten).  The FC weight was pre-permuted to this order host-side, so no
    # transpose/copy should be inserted between the two calls.
    x_flat = feat.reshape(B, H * W * COUT)                     # [B, K]
    return fc_elu_add_sum(x_flat, fc_w_t_bf16, fc_b, y, z)[0, 0]


# ----- pure-JAX reference (PyTorch semantics: NCHW conv + NCHW flatten) -----------
def reference(x_nchw, y, z, conv_w4, conv_b, fc_w, fc_b):
    w_oihw = jnp.transpose(conv_w4, (3, 2, 0, 1))              # [Cout,Cin,KH,KW]
    c = lax.conv_general_dilated(
        x_nchw, w_oihw, window_strides=(1, 1), padding="SAME",
        dimension_numbers=("NCHW", "OIHW", "NCHW"))
    c = c + conv_b[None, :, None, None]
    h = c.reshape(B, K) @ fc_w.T + fc_b
    h = jax.nn.elu(h)
    h = h + y * z
    return jnp.sum(h)


if __name__ == "__main__":
    key = jax.random.PRNGKey(0)
    k1, k2, k3, k4, k5, k6, k7 = jax.random.split(key, 7)

    # deterministic synthetic parameters (PyTorch shapes: conv [32,3,3,3], fc [64,K])
    conv_w4 = 0.1 * jax.random.normal(k1, (KH, KW, CIN, COUT), jnp.float32)
    conv_b = 0.1 * jax.random.normal(k2, (COUT,), jnp.float32)
    # FC weight values snapped to the bf16 grid so streaming it in bf16 is lossless
    # vs the f32 reference (the reference uses these exact f32 values).
    fc_w = (0.01 * jax.random.normal(k3, (NOUT, K), jnp.float32)
            ).astype(jnp.bfloat16).astype(jnp.float32)
    fc_b = 0.1 * jax.random.normal(k4, (NOUT,), jnp.float32)

    # inputs: a = (x, y, z)
    x = jax.random.normal(k5, (B, CIN, H, W), jnp.float32)
    y = jax.random.normal(k6, (B, NOUT), jnp.float32)
    z = jax.random.normal(k7, (B, NOUT), jnp.float32)

    # ---- one-time host-side weight prep (free; done at setup) -------------------
    # Block-diagonal per-tap conv weights:
    #   wblk[t, w*CIN + c, v*COUT + n] = (w == v) * conv_w4[kh, kw, c, n],  t = kh*KW+kw
    # so each tap is one [H, W*CIN] @ [W*CIN, W*COUT] matmul inside the kernel.
    w_taps = conv_w4.reshape(TAPS, CIN, COUT)
    conv_wblk = jnp.einsum("wv,tcn->twcvn",
                           jnp.eye(W, dtype=jnp.float32),
                           w_taps).reshape(TAPS, W * CIN, W * COUT)
    conv_b_tiled = jnp.tile(conv_b, W).reshape(1, W * COUT)
    # FC weight: permute columns from NCHW-flatten (c*H*W + h*W + w) to NHWC-flatten
    # ((h*W + w)*COUT + c), transpose to [K, NOUT], stream as bf16 (lossless here).
    fc_w_t_bf16 = jnp.transpose(
        fc_w.reshape(NOUT, COUT, H, W), (0, 2, 3, 1)
    ).reshape(NOUT, K).T.astype(jnp.bfloat16)

    out = simple_cnn_forward(x, y, z, conv_wblk, conv_b_tiled, fc_w_t_bf16, fc_b)
    out = jax.block_until_ready(out)

    ref = jax.block_until_ready(reference(x, y, z, conv_w4, conv_b, fc_w, fc_b))
    assert jnp.allclose(out, ref, rtol=1e-3, atol=1e-2), (out, ref)

    print("KERNEL_OK")
</pallas_src>

<mosaic_0001>
module attributes {stable_mosaic.version = 11 : i64} {
  func.func @conv_kernel(%arg0: i32, %arg1: memref<36x54xf32, #tpu.memory_space<vmem>>, %arg2: memref<9x48x512xf32, #tpu.memory_space<vmem>>, %arg3: memref<1x512xf32, #tpu.memory_space<vmem>>, %arg4: memref<32x512xf32, #tpu.memory_space<vmem>>) attributes {dimension_semantics = [#tpu.dimension_semantics<arbitrary>], iteration_bounds = array<i64: 1>, scalar_prefetch = 0 : i64, scratch_operands = 0 : i64, tpu.core_type = #tpu.core_type<tc>, window_params = [{pipeline_mode = #tpu.pipeline_mode<synchronous>, transform_indices = @transform_0, window_bounds = array<i64: 36, 54>}, {pipeline_mode = #tpu.pipeline_mode<synchronous>, transform_indices = @transform_1, window_bounds = array<i64: 9, 48, 512>}, {pipeline_mode = #tpu.pipeline_mode<synchronous>, transform_indices = @transform_2, window_bounds = array<i64: 1, 512>}, {pipeline_mode = #tpu.pipeline_mode<synchronous>, transform_indices = @transform_3, window_bounds = array<i64: 32, 512>}]} {
    %cst = arith.constant 0.000000e+00 : f32
    %0 = vector.broadcast %cst : f32 to vector<16x512xf32>
    %c0 = arith.constant 0 : index
    %c0_0 = arith.constant 0 : index
    %1 = vector.load %arg1[%c0, %c0_0] : memref<36x54xf32, #tpu.memory_space<vmem>>, vector<16x48xf32>
    %c0_1 = arith.constant 0 : index
    %c0_2 = arith.constant 0 : index
    %c0_3 = arith.constant 0 : index
    %2 = vector.load %arg2[%c0_1, %c0_2, %c0_3] : memref<9x48x512xf32, #tpu.memory_space<vmem>>, vector<1x48x512xf32>
    %3 = vector.shape_cast %2 : vector<1x48x512xf32> to vector<48x512xf32>
    %cst_4 = arith.constant dense<0.000000e+00> : vector<16x512xf32>
    %4 = tpu.matmul %1, %3, %cst_4 {dimension_numbers = #tpu.dot_dimension_numbers<[1], [0], [0], [1], [0, 0, 1, 1], [], []>} : vector<16x48xf32>, vector<48x512xf32>, vector<16x512xf32> -> vector<16x512xf32>
    %5 = arith.addf %0, %4 : vector<16x512xf32>
    %c0_5 = arith.constant 0 : index
    %c3 = arith.constant 3 : index
    %6 = vector.load %arg1[%c0_5, %c3] : memref<36x54xf32, #tpu.memory_space<vmem>>, vector<16x48xf32>
    %c1 = arith.constant 1 : index
    %c0_6 = arith.constant 0 : index
    %c0_7 = arith.constant 0 : index
    %7 = vector.load %arg2[%c1, %c0_6, %c0_7] : memref<9x48x512xf32, #tpu.memory_space<vmem>>, vector<1x48x512xf32>
    %8 = vector.shape_cast %7 : vector<1x48x512xf32> to vector<48x512xf32>
    %cst_8 = arith.constant dense<0.000000e+00> : vector<16x512xf32>
    %9 = tpu.matmul %6, %8, %cst_8 {dimension_numbers = #tpu.dot_dimension_numbers<[1], [0], [0], [1], [0, 0, 1, 1], [], []>} : vector<16x48xf32>, vector<48x512xf32>, vector<16x512xf32> -> vector<16x512xf32>
    %10 = arith.addf %5, %9 : vector<16x512xf32>
    %c0_9 = arith.constant 0 : index
    %c6 = arith.constant 6 : index
    %11 = vector.load %arg1[%c0_9, %c6] : memref<36x54xf32, #tpu.memory_space<vmem>>, vector<16x48xf32>
    %c2 = arith.constant 2 : index
    %c0_10 = arith.constant 0 : index
    %c0_11 = arith.constant 0 : index
    %12 = vector.load %arg2[%c2, %c0_10, %c0_11] : memref<9x48x512xf32, #tpu.memory_space<vmem>>, vector<1x48x512xf32>
    %13 = vector.shape_cast %12 : vector<1x48x512xf32> to vector<48x512xf32>
    %cst_12 = arith.constant dense<0.000000e+00> : vector<16x512xf32>
    %14 = tpu.matmul %11, %13, %cst_12 {dimension_numbers = #tpu.dot_dimension_numbers<[1], [0], [0], [1], [0, 0, 1, 1], [], []>} : vector<16x48xf32>, vector<48x512xf32>, vector<16x512xf32> -> vector<16x512xf32>
    %15 = arith.addf %10, %14 : vector<16x512xf32>
    %c1_13 = arith.constant 1 : index
    %c0_14 = arith.constant 0 : index
    %16 = vector.load %arg1[%c1_13, %c0_14] : memref<36x54xf32, #tpu.memory_space<vmem>>, vector<16x48xf32>
    %c3_15 = arith.constant 3 : index
    %c0_16 = arith.constant 0 : index
    %c0_17 = arith.constant 0 : index
    %17 = vector.load %arg2[%c3_15, %c0_16, %c0_17] : memref<9x48x512xf32, #tpu.memory_space<vmem>>, vector<1x48x512xf32>
    %18 = vector.shape_cast %17 : vector<1x48x512xf32> to vector<48x512xf32>
    %cst_18 = arith.constant dense<0.000000e+00> : vector<16x512xf32>
    %19 = tpu.matmul %16, %18, %cst_18 {dimension_numbers = #tpu.dot_dimension_numbers<[1], [0], [0], [1], [0, 0, 1, 1], [], []>} : vector<16x48xf32>, vector<48x512xf32>, vector<16x512xf32> -> vector<16x512xf32>
    %20 = arith.addf %15, %19 : vector<16x512xf32>
    %c1_19 = arith.constant 1 : index
    %c3_20 = arith.constant 3 : index
    %21 = vector.load %arg1[%c1_19, %c3_20] : memref<36x54xf32, #tpu.memory_space<vmem>>, vector<16x48xf32>
    %c4 = arith.constant 4 : index
    %c0_21 = arith.constant 0 : index
    %c0_22 = arith.constant 0 : index
    %22 = vector.load %arg2[%c4, %c0_21, %c0_22] : memref<9x48x512xf32, #tpu.memory_space<vmem>>, vector<1x48x512xf32>
    %23 = vector.shape_cast %22 : vector<1x48x512xf32> to vector<48x512xf32>
    %cst_23 = arith.constant dense<0.000000e+00> : vector<16x512xf32>
    %24 = tpu.matmul %21, %23, %cst_23 {dimension_numbers = #tpu.dot_dimension_numbers<[1], [0], [0], [1], [0, 0, 1, 1], [], []>} : vector<16x48xf32>, vector<48x512xf32>, vector<16x512xf32> -> vector<16x512xf32>
    %25 = arith.addf %20, %24 : vector<16x512xf32>
    %c1_24 = arith.constant 1 : index
    %c6_25 = arith.constant 6 : index
    %26 = vector.load %arg1[%c1_24, %c6_25] : memref<36x54xf32, #tpu.memory_space<vmem>>, vector<16x48xf32>
    %c5 = arith.constant 5 : index
    %c0_26 = arith.constant 0 : index
    %c0_27 = arith.constant 0 : index
    %27 = vector.load %arg2[%c5, %c0_26, %c0_27] : memref<9x48x512xf32, #tpu.memory_space<vmem>>, vector<1x48x512xf32>
    %28 = vector.shape_cast %27 : vector<1x48x512xf32> to vector<48x512xf32>
    %cst_28 = arith.constant dense<0.000000e+00> : vector<16x512xf32>
    %29 = tpu.matmul %26, %28, %cst_28 {dimension_numbers = #tpu.dot_dimension_numbers<[1], [0], [0], [1], [0, 0, 1, 1], [], []>} : vector<16x48xf32>, vector<48x512xf32>, vector<16x512xf32> -> vector<16x512xf32>
    %30 = arith.addf %25, %29 : vector<16x512xf32>
    %c2_29 = arith.constant 2 : index
    %c0_30 = arith.constant 0 : index
    %31 = vector.load %arg1[%c2_29, %c0_30] : memref<36x54xf32, #tpu.memory_space<vmem>>, vector<16x48xf32>
    %c6_31 = arith.constant 6 : index
    %c0_32 = arith.constant 0 : index
    %c0_33 = arith.constant 0 : index
    %32 = vector.load %arg2[%c6_31, %c0_32, %c0_33] : memref<9x48x512xf32, #tpu.memory_space<vmem>>, vector<1x48x512xf32>
    %33 = vector.shape_cast %32 : vector<1x48x512xf32> to vector<48x512xf32>
    %cst_34 = arith.constant dense<0.000000e+00> : vector<16x512xf32>
    %34 = tpu.matmul %31, %33, %cst_34 {dimension_numbers = #tpu.dot_dimension_numbers<[1], [0], [0], [1], [0, 0, 1, 1], [], []>} : vector<16x48xf32>, vector<48x512xf32>, vector<16x512xf32> -> vector<16x512xf32>
    %35 = arith.addf %30, %34 : vector<16x512xf32>
    %c2_35 = arith.constant 2 : index
    %c3_36 = arith.constant 3 : index
    %36 = vector.load %arg1[%c2_35, %c3_36] : memref<36x54xf32, #tpu.memory_space<vmem>>, vector<16x48xf32>
    %c7 = arith.constant 7 : index
    %c0_37 = arith.constant 0 : index
    %c0_38 = arith.constant 0 : index
    %37 = vector.load %arg2[%c7, %c0_37, %c0_38] : memref<9x48x512xf32, #tpu.memory_space<vmem>>, vector<1x48x512xf32>
    %38 = vector.shape_cast %37 : vector<1x48x512xf32> to vector<48x512xf32>
    %cst_39 = arith.constant dense<0.000000e+00> : vector<16x512xf32>
    %39 = tpu.matmul %36, %38, %cst_39 {dimension_numbers = #tpu.dot_dimension_numbers<[1], [0], [0], [1], [0, 0, 1, 1], [], []>} : vector<16x48xf32>, vector<48x512xf32>, vector<16x512xf32> -> vector<16x512xf32>
    %40 = arith.addf %35, %39 : vector<16x512xf32>
    %c2_40 = arith.constant 2 : index
    %c6_41 = arith.constant 6 : index
    %41 = vector.load %arg1[%c2_40, %c6_41] : memref<36x54xf32, #tpu.memory_space<vmem>>, vector<16x48xf32>
    %c8 = arith.constant 8 : index
    %c0_42 = arith.constant 0 : index
    %c0_43 = arith.constant 0 : index
    %42 = vector.load %arg2[%c8, %c0_42, %c0_43] : memref<9x48x512xf32, #tpu.memory_space<vmem>>, vector<1x48x512xf32>
    %43 = vector.shape_cast %42 : vector<1x48x512xf32> to vector<48x512xf32>
    %cst_44 = arith.constant dense<0.000000e+00> : vector<16x512xf32>
    %44 = tpu.matmul %41, %43, %cst_44 {dimension_numbers = #tpu.dot_dimension_numbers<[1], [0], [0], [1], [0, 0, 1, 1], [], []>} : vector<16x48xf32>, vector<48x512xf32>, vector<16x512xf32> -> vector<16x512xf32>
    %45 = arith.addf %40, %44 : vector<16x512xf32>
    %c0_45 = arith.constant 0 : index
    %c0_46 = arith.constant 0 : index
    %46 = vector.load %arg3[%c0_45, %c0_46] : memref<1x512xf32, #tpu.memory_space<vmem>>, vector<1x512xf32>
    %47 = vector.broadcast %46 : vector<1x512xf32> to vector<16x512xf32>
    %48 = arith.addf %45, %47 : vector<16x512xf32>
    %c0_47 = arith.constant 0 : index
    %c0_48 = arith.constant 0 : index
    %49 = vector.load %arg4[%c0_47, %c0_48] : memref<32x512xf32, #tpu.memory_space<vmem>>, vector<16x512xf32>
    tpu.vector_store %arg4[%c0_47, %c0_48], %48 {strides = array<i32>} : memref<32x512xf32, #tpu.memory_space<vmem>>, vector<16x512xf32>,
    %cst_49 = arith.constant 0.000000e+00 : f32
    %50 = vector.broadcast %cst_49 : f32 to vector<16x512xf32>
    %c18 = arith.constant 18 : index
    %c0_50 = arith.constant 0 : index
    %51 = vector.load %arg1[%c18, %c0_50] : memref<36x54xf32, #tpu.memory_space<vmem>>, vector<16x48xf32>
    %c0_51 = arith.constant 0 : index
    %c0_52 = arith.constant 0 : index
    %c0_53 = arith.constant 0 : index
    %52 = vector.load %arg2[%c0_51, %c0_52, %c0_53] : memref<9x48x512xf32, #tpu.memory_space<vmem>>, vector<1x48x512xf32>
    %53 = vector.shape_cast %52 : vector<1x48x512xf32> to vector<48x512xf32>
    %cst_54 = arith.constant dense<0.000000e+00> : vector<16x512xf32>
    %54 = tpu.matmul %51, %53, %cst_54 {dimension_numbers = #tpu.dot_dimension_numbers<[1], [0], [0], [1], [0, 0, 1, 1], [], []>} : vector<16x48xf32>, vector<48x512xf32>, vector<16x512xf32> -> vector<16x512xf32>
    %55 = arith.addf %50, %54 : vector<16x512xf32>
    %c18_55 = arith.constant 18 : index
    %c3_56 = arith.constant 3 : index
    %56 = vector.load %arg1[%c18_55, %c3_56] : memref<36x54xf32, #tpu.memory_space<vmem>>, vector<16x48xf32>
    %c1_57 = arith.constant 1 : index
    %c0_58 = arith.constant 0 : index
    %c0_59 = arith.constant 0 : index
    %57 = vector.load %arg2[%c1_57, %c0_58, %c0_59] : memref<9x48x512xf32, #tpu.memory_space<vmem>>, vector<1x48x512xf32>
    %58 = vector.shape_cast %57 : vector<1x48x512xf32> to vector<48x512xf32>
    %cst_60 = arith.constant dense<0.000000e+00> : vector<16x512xf32>
    %59 = tpu.matmul %56, %58, %cst_60 {dimension_numbers = #tpu.dot_dimension_numbers<[1], [0], [0], [1], [0, 0, 1, 1], [], []>} : vector<16x48xf32>, vector<48x512xf32>, vector<16x512xf32> -> vector<16x512xf32>
    %60 = arith.addf %55, %59 : vector<16x512xf32>
    %c18_61 = arith.constant 18 : index
    %c6_62 = arith.constant 6 : index
    %61 = vector.load %arg1[%c18_61, %c6_62] : memref<36x54xf32, #tpu.memory_space<vmem>>, vector<16x48xf32>
    %c2_63 = arith.constant 2 : index
    %c0_64 = arith.constant 0 : index
    %c0_65 = arith.constant 0 : index
    %62 = vector.load %arg2[%c2_63, %c0_64, %c0_65] : memref<9x48x512xf32, #tpu.memory_space<vmem>>, vector<1x48x512xf32>
    %63 = vector.shape_cast %62 : vector<1x48x512xf32> to vector<48x512xf32>
    %cst_66 = arith.constant dense<0.000000e+00> : vector<16x512xf32>
    %64 = tpu.matmul %61, %63, %cst_66 {dimension_numbers = #tpu.dot_dimension_numbers<[1], [0], [0], [1], [0, 0, 1, 1], [], []>} : vector<16x48xf32>, vector<48x512xf32>, vector<16x512xf32> -> vector<16x512xf32>
    %65 = arith.addf %60, %64 : vector<16x512xf32>
    %c19 = arith.constant 19 : index
    %c0_67 = arith.constant 0 : index
    %66 = vector.load %arg1[%c19, %c0_67] : memref<36x54xf32, #tpu.memory_space<vmem>>, vector<16x48xf32>
    %c3_68 = arith.constant 3 : index
    %c0_69 = arith.constant 0 : index
    %c0_70 = arith.constant 0 : index
    %67 = vector.load %arg2[%c3_68, %c0_69, %c0_70] : memref<9x48x512xf32, #tpu.memory_space<vmem>>, vector<1x48x512xf32>
    %68 = vector.shape_cast %67 : vector<1x48x512xf32> to vector<48x512xf32>
    %cst_71 = arith.constant dense<0.000000e+00> : vector<16x512xf32>
    %69 = tpu.matmul %66, %68, %cst_71 {dimension_numbers = #tpu.dot_dimension_numbers<[1], [0], [0], [1], [0, 0, 1, 1], [], []>} : vector<16x48xf32>, vector<48x512xf32>, vector<16x512xf32> -> vector<16x512xf32>
    %70 = arith.addf %65, %69 : vector<16x512xf32>
    %c19_72 = arith.constant 19 : index
    %c3_73 = arith.constant 3 : index
    %71 = vector.load %arg1[%c19_72, %c3_73] : memref<36x54xf32, #tpu.memory_space<vmem>>, vector<16x48xf32>
    %c4_74 = arith.constant 4 : index
    %c0_75 = arith.constant 0 : index
    %c0_76 = arith.constant 0 : index
    %72 = vector.load %arg2[%c4_74, %c0_75, %c0_76] : memref<9x48x512xf32, #tpu.memory_space<vmem>>, vector<1x48x512xf32>
    %73 = vector.shape_cast %72 : vector<1x48x512xf32> to vector<48x512xf32>
    %cst_77 = arith.constant dense<0.000000e+00> : vector<16x512xf32>
    %74 = tpu.matmul %71, %73, %cst_77 {dimension_numbers = #tpu.dot_dimension_numbers<[1], [0], [0], [1], [0, 0, 1, 1], [], []>} : vector<16x48xf32>, vector<48x512xf32>, vector<16x512xf32> -> vector<16x512xf32>
    %75 = arith.addf %70, %74 : vector<16x512xf32>
    %c19_78 = arith.constant 19 : index
    %c6_79 = arith.constant 6 : index
    %76 = vector.load %arg1[%c19_78, %c6_79] : memref<36x54xf32, #tpu.memory_space<vmem>>, vector<16x48xf32>
    %c5_80 = arith.constant 5 : index
    %c0_81 = arith.constant 0 : index
    %c0_82 = arith.constant 0 : index
    %77 = vector.load %arg2[%c5_80, %c0_81, %c0_82] : memref<9x48x512xf32, #tpu.memory_space<vmem>>, vector<1x48x512xf32>
    %78 = vector.shape_cast %77 : vector<1x48x512xf32> to vector<48x512xf32>
    %cst_83 = arith.constant dense<0.000000e+00> : vector<16x512xf32>
    %79 = tpu.matmul %76, %78, %cst_83 {dimension_numbers = #tpu.dot_dimension_numbers<[1], [0], [0], [1], [0, 0, 1, 1], [], []>} : vector<16x48xf32>, vector<48x512xf32>, vector<16x512xf32> -> vector<16x512xf32>
    %80 = arith.addf %75, %79 : vector<16x512xf32>
    %c20 = arith.constant 20 : index
    %c0_84 = arith.constant 0 : index
    %81 = vector.load %arg1[%c20, %c0_84] : memref<36x54xf32, #tpu.memory_space<vmem>>, vector<16x48xf32>
    %c6_85 = arith.constant 6 : index
    %c0_86 = arith.constant 0 : index
    %c0_87 = arith.constant 0 : index
    %82 = vector.load %arg2[%c6_85, %c0_86, %c0_87] : memref<9x48x512xf32, #tpu.memory_space<vmem>>, vector<1x48x512xf32>
    %83 = vector.shape_cast %82 : vector<1x48x512xf32> to vector<48x512xf32>
    %cst_88 = arith.constant dense<0.000000e+00> : vector<16x512xf32>
    %84 = tpu.matmul %81, %83, %cst_88 {dimension_numbers = #tpu.dot_dimension_numbers<[1], [0], [0], [1], [0, 0, 1, 1], [], []>} : vector<16x48xf32>, vector<48x512xf32>, vector<16x512xf32> -> vector<16x512xf32>
    %85 = arith.addf %80, %84 : vector<16x512xf32>
    %c20_89 = arith.constant 20 : index
    %c3_90 = arith.constant 3 : index
    %86 = vector.load %arg1[%c20_89, %c3_90] : memref<36x54xf32, #tpu.memory_space<vmem>>, vector<16x48xf32>
    %c7_91 = arith.constant 7 : index
    %c0_92 = arith.constant 0 : index
    %c0_93 = arith.constant 0 : index
    %87 = vector.load %arg2[%c7_91, %c0_92, %c0_93] : memref<9x48x512xf32, #tpu.memory_space<vmem>>, vector<1x48x512xf32>
    %88 = vector.shape_cast %87 : vector<1x48x512xf32> to vector<48x512xf32>
    %cst_94 = arith.constant dense<0.000000e+00> : vector<16x512xf32>
    %89 = tpu.matmul %86, %88, %cst_94 {dimension_numbers = #tpu.dot_dimension_numbers<[1], [0], [0], [1], [0, 0, 1, 1], [], []>} : vector<16x48xf32>, vector<48x512xf32>, vector<16x512xf32> -> vector<16x512xf32>
    %90 = arith.addf %85, %89 : vector<16x512xf32>
    %c20_95 = arith.constant 20 : index
    %c6_96 = arith.constant 6 : index
    %91 = vector.load %arg1[%c20_95, %c6_96] : memref<36x54xf32, #tpu.memory_space<vmem>>, vector<16x48xf32>
    %c8_97 = arith.constant 8 : index
    %c0_98 = arith.constant 0 : index
    %c0_99 = arith.constant 0 : index
    %92 = vector.load %arg2[%c8_97, %c0_98, %c0_99] : memref<9x48x512xf32, #tpu.memory_space<vmem>>, vector<1x48x512xf32>
    %93 = vector.shape_cast %92 : vector<1x48x512xf32> to vector<48x512xf32>
    %cst_100 = arith.constant dense<0.000000e+00> : vector<16x512xf32>
    %94 = tpu.matmul %91, %93, %cst_100 {dimension_numbers = #tpu.dot_dimension_numbers<[1], [0], [0], [1], [0, 0, 1, 1], [], []>} : vector<16x48xf32>, vector<48x512xf32>, vector<16x512xf32> -> vector<16x512xf32>
    %95 = arith.addf %90, %94 : vector<16x512xf32>
    %c0_101 = arith.constant 0 : index
    %c0_102 = arith.constant 0 : index
    %96 = vector.load %arg3[%c0_101, %c0_102] : memref<1x512xf32, #tpu.memory_space<vmem>>, vector<1x512xf32>
    %97 = vector.broadcast %96 : vector<1x512xf32> to vector<16x512xf32>
    %98 = arith.addf %95, %97 : vector<16x512xf32>
    %c16 = arith.constant 16 : index
    %c0_103 = arith.constant 0 : index
    %99 = vector.load %arg4[%c16, %c0_103] : memref<32x512xf32, #tpu.memory_space<vmem>>, vector<16x512xf32>
    tpu.vector_store %arg4[%c16, %c0_103], %98 {strides = array<i32>} : memref<32x512xf32, #tpu.memory_space<vmem>>, vector<16x512xf32>,
    return
  }
  func.func @transform_0(%arg0: i32) -> (i32, i32) {
    %c0_i32 = arith.constant 0 : i32
    %c0_i32_0 = arith.constant 0 : i32
    %c0_i32_1 = arith.constant 0 : i32
    return %c0_i32, %c0_i32_0 : i32, i32
  }
  func.func @transform_1(%arg0: i32) -> (i32, i32, i32) {
    %c0_i32 = arith.constant 0 : i32
    %c0_i32_0 = arith.constant 0 : i32
    %c0_i32_1 = arith.constant 0 : i32
    %c0_i32_2 = arith.constant 0 : i32
    return %c0_i32, %c0_i32_0, %c0_i32_1 : i32, i32, i32
  }
  func.func @transform_2(%arg0: i32) -> (i32, i32) {
    %c0_i32 = arith.constant 0 : i32
    %c0_i32_0 = arith.constant 0 : i32
    %c0_i32_1 = arith.constant 0 : i32
    return %c0_i32, %c0_i32_0 : i32, i32
  }
  func.func @transform_3(%arg0: i32) -> (i32, i32) {
    %c0_i32 = arith.constant 0 : i32
    %c0_i32_0 = arith.constant 0 : i32
    %c0_i32_1 = arith.constant 0 : i32
    return %c0_i32, %c0_i32_0 : i32, i32
  }
}

module attributes {stable_mosaic.version = 11 : i64} {
  func.func @fc_elu_sum_kernel(%arg0: i32, %arg1: memref<2x8192xf32, #tpu.memory_space<vmem>>, %arg2: memref<8192x64xbf16, #tpu.memory_space<vmem>>, %arg3: memref<1x64xf32, #tpu.memory_space<vmem>>, %arg4: memref<2x64xf32, #tpu.memory_space<vmem>>, %arg5: memref<2x64xf32, #tpu.memory_space<vmem>>, %arg6: memref<1x1xf32, #tpu.memory_space<vmem>>) attributes {dimension_semantics = [#tpu.dimension_semantics<arbitrary>], iteration_bounds = array<i64: 1>, scalar_prefetch = 0 : i64, scratch_operands = 0 : i64, tpu.core_type = #tpu.core_type<tc>, window_params = [{pipeline_mode = #tpu.pipeline_mode<synchronous>, transform_indices = @transform_0, window_bounds = array<i64: 2, 8192>}, {pipeline_mode = #tpu.pipeline_mode<synchronous>, transform_indices = @transform_1, window_bounds = array<i64: 8192, 64>}, {pipeline_mode = #tpu.pipeline_mode<synchronous>, transform_indices = @transform_2, window_bounds = array<i64: 1, 64>}, {pipeline_mode = #tpu.pipeline_mode<synchronous>, transform_indices = @transform_3, window_bounds = array<i64: 2, 64>}, {pipeline_mode = #tpu.pipeline_mode<synchronous>, transform_indices = @transform_4, window_bounds = array<i64: 2, 64>}, {pipeline_mode = #tpu.pipeline_mode<synchronous>, transform_indices = @transform_5, window_bounds = array<i64: 1, 1>}]} {
    %c0 = arith.constant 0 : index
    %c0_0 = arith.constant 0 : index
    %0 = vector.load %arg2[%c0, %c0_0] : memref<8192x64xbf16, #tpu.memory_space<vmem>>, vector<8192x64xbf16>
    %1 = arith.extf %0 : vector<8192x64xbf16> to vector<8192x64xf32>
    %c0_1 = arith.constant 0 : index
    %c0_2 = arith.constant 0 : index
    %2 = vector.load %arg1[%c0_1, %c0_2] : memref<2x8192xf32, #tpu.memory_space<vmem>>, vector<2x8192xf32>
    %cst = arith.constant dense<0.000000e+00> : vector<2x64xf32>
    %3 = tpu.matmul %2, %1, %cst {dimension_numbers = #tpu.dot_dimension_numbers<[1], [0], [0], [1], [0, 0, 1, 1], [], []>} : vector<2x8192xf32>, vector<8192x64xf32>, vector<2x64xf32> -> vector<2x64xf32>
    %c0_3 = arith.constant 0 : index
    %c0_4 = arith.constant 0 : index
    %4 = vector.load %arg3[%c0_3, %c0_4] : memref<1x64xf32, #tpu.memory_space<vmem>>, vector<1x64xf32>
    %5 = vector.broadcast %4 : vector<1x64xf32> to vector<2x64xf32>
    %6 = arith.addf %3, %5 : vector<2x64xf32>
    %cst_5 = arith.constant 0.000000e+00 : f32
    %7 = vector.broadcast %cst_5 : f32 to vector<2x64xf32>
    %8 = arith.minimumf %6, %7 : vector<2x64xf32>
    %9 = math.exp %8 : vector<2x64xf32>
    %cst_6 = arith.constant 1.000000e+00 : f32
    %10 = vector.broadcast %cst_6 : f32 to vector<2x64xf32>
    %11 = arith.subf %9, %10 : vector<2x64xf32>
    %cst_7 = arith.constant 0.000000e+00 : f32
    %12 = vector.broadcast %cst_7 : f32 to vector<2x64xf32>
    %13 = arith.cmpf ogt, %6, %12 : vector<2x64xf32>
    %14 = arith.select %13, %6, %11 : vector<2x64xi1>, vector<2x64xf32>
    %c0_8 = arith.constant 0 : index
    %c0_9 = arith.constant 0 : index
    %15 = vector.load %arg4[%c0_8, %c0_9] : memref<2x64xf32, #tpu.memory_space<vmem>>, vector<2x64xf32>
    %c0_10 = arith.constant 0 : index
    %c0_11 = arith.constant 0 : index
    %16 = vector.load %arg5[%c0_10, %c0_11] : memref<2x64xf32, #tpu.memory_space<vmem>>, vector<2x64xf32>
    %17 = arith.mulf %15, %16 : vector<2x64xf32>
    %18 = arith.addf %14, %17 : vector<2x64xf32>
    %19 = vector.shape_cast %18 : vector<2x64xf32> to vector<1x2x64xf32>
    %cst_12 = arith.constant dense<0.000000e+00> : vector<1xf32>
    %20 = vector.multi_reduction <add>, %19, %cst_12 [1, 2] : vector<1x2x64xf32> to vector<1xf32>
    %21 = vector.shape_cast %20 : vector<1xf32> to vector<1x1x1xf32>
    %22 = vector.extract %21[0, 0, 0] : f32 from vector<1x1x1xf32>
    %23 = vector.broadcast %22 : f32 to vector<1x1xf32>
    %c0_13 = arith.constant 0 : index
    %c0_14 = arith.constant 0 : index
    %24 = vector.load %arg6[%c0_13, %c0_14] : memref<1x1xf32, #tpu.memory_space<vmem>>, vector<1x1xf32>
    tpu.vector_store %arg6[%c0_13, %c0_14], %23 {strides = array<i32>} : memref<1x1xf32, #tpu.memory_space<vmem>>, vector<1x1xf32>,
    return
  }
  func.func @transform_0(%arg0: i32) -> (i32, i32) {
    %c0_i32 = arith.constant 0 : i32
    %c0_i32_0 = arith.constant 0 : i32
    %c0_i32_1 = arith.constant 0 : i32
    return %c0_i32, %c0_i32_0 : i32, i32
  }
  func.func @transform_1(%arg0: i32) -> (i32, i32) {
    %c0_i32 = arith.constant 0 : i32
    %c0_i32_0 = arith.constant 0 : i32
    %c0_i32_1 = arith.constant 0 : i32
    return %c0_i32, %c0_i32_0 : i32, i32
  }
  func.func @transform_2(%arg0: i32) -> (i32, i32) {
    %c0_i32 = arith.constant 0 : i32
    %c0_i32_0 = arith.constant 0 : i32
    %c0_i32_1 = arith.constant 0 : i32
    return %c0_i32, %c0_i32_0 : i32, i32
  }
  func.func @transform_3(%arg0: i32) -> (i32, i32) {
    %c0_i32 = arith.constant 0 : i32
    %c0_i32_0 = arith.constant 0 : i32
    %c0_i32_1 = arith.constant 0 : i32
    return %c0_i32, %c0_i32_0 : i32, i32
  }
  func.func @transform_4(%arg0: i32) -> (i32, i32) {
    %c0_i32 = arith.constant 0 : i32
    %c0_i32_0 = arith.constant 0 : i32
    %c0_i32_1 = arith.constant 0 : i32
    return %c0_i32, %c0_i32_0 : i32, i32
  }
  func.func @transform_5(%arg0: i32) -> (i32, i32) {
    %c0_i32 = arith.constant 0 : i32
    %c0_i32_0 = arith.constant 0 : i32
    %c0_i32_1 = arith.constant 0 : i32
    return %c0_i32, %c0_i32_0 : i32, i32
  }
}

</mosaic_0001>

<llo_original>
// kernel: simple_cnn_forward.2
$region0: #{simple_cnn_forward.2}
  #allocation0 [shape = 'u32[]', space=smem, size = 0x4, offset = 0x4, fixed_abs, tag = 'smem constant byte address 0x4 - core index']
  #allocation1 [shape = 'u32[72,128]{1,0:T(1,128)}', space=vmem, size = 0x9000, scoped, tag = 'internal scratch']
  %s0 = inlined_call_operand.vmem [shape: f32[36,54], index: 0, kind: input, shape index: {}]
  %s1 = inlined_call_operand.hbm [shape: f32[9,48,512], index: 1, kind: input, shape index: {}]
  %s2 = inlined_call_operand.hbm [shape: f32[1,512], index: 2, kind: input, shape index: {}]
  %s3 = inlined_call_operand.vmem [shape: f32[32,512], index: 3, kind: output, shape index: {}]
  %s4 = sld [smem:[#allocation0]]
  $region30: #{simple_cnn_forward.2} parent=0
    _
  %s6 = ssub.s32 1, %s4
  %s7 = scalar_select 0, %s6, %s4
  $region1: #{simple_cnn_forward.2} parent=0
    #allocation2 [shape = 'u8[884736]{0}', space=vmem, size = 0xd8000, scoped, tag = 'input window, operand 1, single buffered']
    #allocation3 [shape = 's32[1]{0}', space=sflag, size = 0x4, scoped, tag = 'scoped memory for simple_cnn_forward.2']
    #allocation4 [shape = 'u8[2048]{0}', space=vmem, size = 0x800, scoped, tag = 'input window, operand 2, single buffered']
    #allocation5 [shape = 's32[1]{0}', space=sflag, size = 0x4, scoped, tag = 'scoped memory for simple_cnn_forward.2']
    %8 = vsyncpa [#allocation3], 0
    %9 = vsyncpa [#allocation5], 0
    // Predicated region
    $region2: #{simple_cnn_forward.2} parent=1 // pred_check
      _
    $region3: #{simple_cnn_forward.2} parent=1 // pred_check_branch
      %11 = sbr.rel (0) target = $region5
    $region4: #{simple_cnn_forward.2} parent=1 // pred_region
      _
    $region5: #{simple_cnn_forward.2} parent=1 // pred_fallthru
      _
    // Predicated region
    $region6: #{simple_cnn_forward.2} parent=1 // pred_check
      _
    $region7: #{simple_cnn_forward.2} parent=1 // pred_check_branch
      %13 = sbr.rel (0) target = $region9
    $region8: #{simple_cnn_forward.2} parent=1 // pred_region
      %15 = vsyncadd [#allocation3], 0
      %s16 = sshll.u32 %s1, 4
      %s17 = int_to_ptr.hbm [resolvable:$true] %s16
      %s18 = sshll.u32 [#allocation2], 4
      %s19 = int_to_ptr.vmem [resolvable:$true] %s18
      %24 = dma.hbm_to_vmem [thread:$0]  %s17, 27648, %s19, [#allocation3], 512, 512, 32
    $region9: #{simple_cnn_forward.2} parent=1 // pred_fallthru
      _
    // Predicated region
    $region10: #{simple_cnn_forward.2} parent=1 // pred_check
      _
    $region11: #{simple_cnn_forward.2} parent=1 // pred_check_branch
      %26 = sbr.rel (0) target = $region13
    $region12: #{simple_cnn_forward.2} parent=1 // pred_region
      %28 = vsyncadd [#allocation5], 0
      %s30 = sshll.u32 %s2, 4
      %s31 = int_to_ptr.hbm [resolvable:$true] %s30
      %s32 = sshll.u32 [#allocation4], 4
      %s33 = int_to_ptr.vmem [resolvable:$true] %s32
      %35 = dma.hbm_to_vmem [thread:$0]  %s31, 64, %s33, [#allocation5]
    $region13: #{simple_cnn_forward.2} parent=1 // pred_fallthru
      _
    // Predicated region
    $region14: #{simple_cnn_forward.2} parent=1 // pred_check
      _
    $region15: #{simple_cnn_forward.2} parent=1 // pred_check_branch
      %37 = sbr.rel (0) target = $region17
    $region16: #{simple_cnn_forward.2} parent=1 // pred_region
      %39 = dma.done [#allocation3], 27648
    $region17: #{simple_cnn_forward.2} parent=1 // pred_fallthru
      _
    // Predicated region
    $region18: #{simple_cnn_forward.2} parent=1 // pred_check
      _
    $region19: #{simple_cnn_forward.2} parent=1 // pred_check_branch
      %41 = sbr.rel (0) target = $region21
    $region20: #{simple_cnn_forward.2} parent=1 // pred_region
      %43 = dma.done [#allocation5], 64
    $region21: #{simple_cnn_forward.2} parent=1 // pred_fallthru
      _
    %v44 = vld [vmem:[%s0] sm:$0xff]
    %v45 = vld [vmem:[%s0 + $0x8] sm:$0xff]
    %v46 = vld [vmem:[#allocation2] sm:$0xff]
    %v47 = vld [vmem:[#allocation2 + $0x8] sm:$0xff]
    %v48 = vld [vmem:[#allocation2 + $0x10] sm:$0xff]
    %v49 = vld [vmem:[#allocation2 + $0x18] sm:$0xff]
    %v50 = vld [vmem:[#allocation2 + $0x20] sm:$0xff]
    %v51 = vld [vmem:[#allocation2 + $0x28] sm:$0xff]
    %v52 = vld [vmem:[#allocation2 + $0x30] sm:$0xff]
    %v53 = vld [vmem:[#allocation2 + $0x38] sm:$0xff]
    %v54 = vld [vmem:[#allocation2 + $0x40] sm:$0xff]
    %v55 = vld [vmem:[#allocation2 + $0x48] sm:$0xff]
    %v56 = vld [vmem:[#allocation2 + $0x50] sm:$0xff]
    %v57 = vld [vmem:[#allocation2 + $0x58] sm:$0xff]
    %v58 = vld [vmem:[#allocation2 + $0x60] sm:$0xff]
    %v59 = vld [vmem:[#allocation2 + $0x68] sm:$0xff]
    %v60 = vld [vmem:[#allocation2 + $0x70] sm:$0xff]
    %v61 = vld [vmem:[#allocation2 + $0x78] sm:$0xff]
    %v62 = vld [vmem:[#allocation2 + $0x80] sm:$0xff]
    %v63 = vld [vmem:[#allocation2 + $0x88] sm:$0xff]
    %v64 = vld [vmem:[#allocation2 + $0x90] sm:$0xff]
    %v65 = vld [vmem:[#allocation2 + $0x98] sm:$0xff]
    %v66 = vld [vmem:[#allocation2 + $0xa0] sm:$0xff]
    %v67 = vld [vmem:[#allocation2 + $0xa8] sm:$0xff]
    %v68 = vld [vmem:[#allocation2 + $0xb0] sm:$0xff]
    %v69 = vld [vmem:[#allocation2 + $0xb8] sm:$0xff]
    %s70 = scalar_lea.vmem [#allocation2], 192
    %v71 = vld [vmem:[%s70] sm:$0xff]
    %v72 = vld [vmem:[%s70 + $0x8] sm:$0xff]
    %v73 = vld [vmem:[%s70 + $0x10] sm:$0xff]
    %v74 = vld [vmem:[%s70 + $0x18] sm:$0xff]
    %v75 = vld [vmem:[%s70 + $0x20] sm:$0xff]
    %v76 = vld [vmem:[%s70 + $0x28] sm:$0xff]
    %v77 = vld [vmem:[%s70 + $0x30] sm:$0xff]
    %v78 = vld [vmem:[%s70 + $0x38] sm:$0xff]
    %v79 = vld [vmem:[%s70 + $0x40] sm:$0xff]
    %v80 = vld [vmem:[%s70 + $0x48] sm:$0xff]
    %v81 = vld [vmem:[%s70 + $0x50] sm:$0xff]
    %v82 = vld [vmem:[%s70 + $0x58] sm:$0xff]
    %v83 = vld [vmem:[%s70 + $0x60] sm:$0xff]
    %v84 = vld [vmem:[%s70 + $0x68] sm:$0xff]
    %v85 = vld [vmem:[%s70 + $0x70] sm:$0xff]
    %v86 = vld [vmem:[%s70 + $0x78] sm:$0xff]
    %v87 = vld [vmem:[%s70 + $0x80] sm:$0xff]
    %v88 = vld [vmem:[%s70 + $0x88] sm:$0xff]
    %v89 = vld [vmem:[%s70 + $0x90] sm:$0xff]
    %v90 = vld [vmem:[%s70 + $0x98] sm:$0xff]
    %v91 = vld [vmem:[%s70 + $0xa0] sm:$0xff]
    %v92 = vld [vmem:[%s70 + $0xa8] sm:$0xff]
    %v93 = vld [vmem:[%s70 + $0xb0] sm:$0xff]
    %v94 = vld [vmem:[%s70 + $0xb8] sm:$0xff]
    %97 = vrot.lane.b32.xlu0 %v44, 125
    %v98 = vpop.permute.xlu0 %97
    %99 = vrot.lane.b32.xlu0 %v45, 125
    %v100 = vpop.permute.xlu0 %99
    %vm101 = vcmask 392192
    %v102 = vsel %vm101, %v98, 0
    %v104 = vsel %vm101, %v100, 0
    %106 = vmatpush.msra.mxu0 0.0
    %107 = vmatpush.msra.mxu0 0.0
    %108 = vmatpush.msra.mxu0 0.0
    %109 = vmatpush.msra.mxu0 0.0
    %110 = vmatpush.msra.mxu0 0.0
    %111 = vmatpush.msra.mxu0 0.0
    %112 = vmatpush.msra.mxu0 0.0
    %113 = vmatpush.msra.mxu0 0.0
    %114 = vmatpush.msra.mxu0 0.0
    %115 = vmatpush.msra.mxu0 0.0
    %116 = vmatpush.msra.mxu0 %v91
    %117 = vmatpush.msra.mxu0 %v87
    %118 = vmatpush.msra.mxu0 %v83
    %119 = vmatpush.msra.mxu0 %v79
    %120 = vmatpush.msra.mxu0 %v75
    %121 = vmatpush.msra.mxu0 %v71
    %122 = vmatmul.f32.gmra.mxu0 %v102
    %v123 = vpop.f32.mrf.mxu0
    %v124 = vadd.f32 0.0, %v123
    %125 = vmatmul.f32.gmra.mxu0 %v104
    %v126 = vpop.f32.mrf.mxu0
    %v127 = vadd.f32 0.0, %v126
    %128 = vdwg.mxu0
    %129 = vmatpush.msra.mxu0 0.0
    %130 = vmatpush.msra.mxu0 0.0
    %131 = vmatpush.msra.mxu0 0.0
    %132 = vmatpush.msra.mxu0 0.0
    %133 = vmatpush.msra.mxu0 0.0
    %134 = vmatpush.msra.mxu0 0.0
    %135 = vmatpush.msra.mxu0 0.0
    %136 = vmatpush.msra.mxu0 0.0
    %137 = vmatpush.msra.mxu0 0.0
    %138 = vmatpush.msra.mxu0 0.0
    %139 = vmatpush.msra.mxu0 %v92
    %140 = vmatpush.msra.mxu0 %v88
    %141 = vmatpush.msra.mxu0 %v84
    %142 = vmatpush.msra.mxu0 %v80
    %143 = vmatpush.msra.mxu0 %v76
    %144 = vmatpush.msra.mxu0 %v72
    %145 = vmatmul.f32.gmra.mxu0 %v102
    %v146 = vpop.f32.mrf.mxu0
    %v147 = vadd.f32 0.0, %v146
    %148 = vmatmul.f32.gmra.mxu0 %v104
    %v149 = vpop.f32.mrf.mxu0
    %v150 = vadd.f32 0.0, %v149
    %151 = vdwg.mxu0
    %152 = vmatpush.msra.mxu0 0.0
    %153 = vmatpush.msra.mxu0 0.0
    %154 = vmatpush.msra.mxu0 0.0
    %155 = vmatpush.msra.mxu0 0.0
    %156 = vmatpush.msra.mxu0 0.0
    %157 = vmatpush.msra.mxu0 0.0
    %158 = vmatpush.msra.mxu0 0.0
    %159 = vmatpush.msra.mxu0 0.0
    %160 = vmatpush.msra.mxu0 0.0
    %161 = vmatpush.msra.mxu0 0.0
    %162 = vmatpush.msra.mxu0 %v93
    %163 = vmatpush.msra.mxu0 %v89
    %164 = vmatpush.msra.mxu0 %v85
    %165 = vmatpush.msra.mxu0 %v81
    %166 = vmatpush.msra.mxu0 %v77
    %167 = vmatpush.msra.mxu0 %v73
    %168 = vmatmul.f32.gmra.mxu0 %v102
    %v169 = vpop.f32.mrf.mxu0
    %v170 = vadd.f32 0.0, %v169
    %171 = vmatmul.f32.gmra.mxu0 %v104
    %v172 = vpop.f32.mrf.mxu0
    %v173 = vadd.f32 0.0, %v172
    %174 = vdwg.mxu0
    %175 = vmatpush.msra.mxu0 0.0
    %176 = vmatpush.msra.mxu0 0.0
    %177 = vmatpush.msra.mxu0 0.0
    %178 = vmatpush.msra.mxu0 0.0
    %179 = vmatpush.msra.mxu0 0.0
    %180 = vmatpush.msra.mxu0 0.0
    %181 = vmatpush.msra.mxu0 0.0
    %182 = vmatpush.msra.mxu0 0.0
    %183 = vmatpush.msra.mxu0 0.0
    %184 = vmatpush.msra.mxu0 0.0
    %185 = vmatpush.msra.mxu0 %v94
    %186 = vmatpush.msra.mxu0 %v90
    %187 = vmatpush.msra.mxu0 %v86
    %188 = vmatpush.msra.mxu0 %v82
    %189 = vmatpush.msra.mxu0 %v78
    %190 = vmatpush.msra.mxu0 %v74
    %191 = vmatmul.f32.gmra.mxu0 %v102
    %v192 = vpop.f32.mrf.mxu0
    %v193 = vadd.f32 0.0, %v192
    %194 = vmatmul.f32.gmra.mxu0 %v104
    %v195 = vpop.f32.mrf.mxu0
    %v196 = vadd.f32 0.0, %v195
    %197 = vdwg.mxu0
    %v198 = vsel %vm101, %v44, 0
    %v200 = vsel %vm101, %v45, 0
    %202 = vmatpush.msra.mxu0 0.0
    %203 = vmatpush.msra.mxu0 0.0
    %204 = vmatpush.msra.mxu0 0.0
    %205 = vmatpush.msra.mxu0 0.0
    %206 = vmatpush.msra.mxu0 0.0
    %207 = vmatpush.msra.mxu0 0.0
    %208 = vmatpush.msra.mxu0 0.0
    %209 = vmatpush.msra.mxu0 0.0
    %210 = vmatpush.msra.mxu0 0.0
    %211 = vmatpush.msra.mxu0 0.0
    %212 = vmatpush.msra.mxu0 %v66
    %213 = vmatpush.msra.mxu0 %v62
    %214 = vmatpush.msra.mxu0 %v58
    %215 = vmatpush.msra.mxu0 %v54
    %216 = vmatpush.msra.mxu0 %v50
    %217 = vmatpush.msra.mxu0 %v46
    %218 = vmatmul.f32.gmra.mxu0 %v198
    %v219 = vpop.f32.mrf.mxu0
    %v220 = vadd.f32 %v124, %v219
    %221 = vmatmul.f32.gmra.mxu0 %v200
    %v222 = vpop.f32.mrf.mxu0
    %v223 = vadd.f32 %v127, %v222
    %224 = vdwg.mxu0
    %225 = vmatpush.msra.mxu0 0.0
    %226 = vmatpush.msra.mxu0 0.0
    %227 = vmatpush.msra.mxu0 0.0
    %228 = vmatpush.msra.mxu0 0.0
    %229 = vmatpush.msra.mxu0 0.0
    %230 = vmatpush.msra.mxu0 0.0
    %231 = vmatpush.msra.mxu0 0.0
    %232 = vmatpush.msra.mxu0 0.0
    %233 = vmatpush.msra.mxu0 0.0
    %234 = vmatpush.msra.mxu0 0.0
    %235 = vmatpush.msra.mxu0 %v67
    %236 = vmatpush.msra.mxu0 %v63
    %237 = vmatpush.msra.mxu0 %v59
    %238 = vmatpush.msra.mxu0 %v55
    %239 = vmatpush.msra.mxu0 %v51
    %240 = vmatpush.msra.mxu0 %v47
    %241 = vmatmul.f32.gmra.mxu0 %v198
    %v242 = vpop.f32.mrf.mxu0
    %v243 = vadd.f32 %v147, %v242
    %244 = vmatmul.f32.gmra.mxu0 %v200
    %v245 = vpop.f32.mrf.mxu0
    %v246 = vadd.f32 %v150, %v245
    %247 = vdwg.mxu0
    %248 = vmatpush.msra.mxu0 0.0
    %249 = vmatpush.msra.mxu0 0.0
    %250 = vmatpush.msra.mxu0 0.0
    %251 = vmatpush.msra.mxu0 0.0
    %252 = vmatpush.msra.mxu0 0.0
    %253 = vmatpush.msra.mxu0 0.0
    %254 = vmatpush.msra.mxu0 0.0
    %255 = vmatpush.msra.mxu0 0.0
    %256 = vmatpush.msra.mxu0 0.0
    %257 = vmatpush.msra.mxu0 0.0
    %258 = vmatpush.msra.mxu0 %v68
    %259 = vmatpush.msra.mxu0 %v64
    %260 = vmatpush.msra.mxu0 %v60
    %261 = vmatpush.msra.mxu0 %v56
    %262 = vmatpush.msra.mxu0 %v52
    %263 = vmatpush.msra.mxu0 %v48
    %264 = vmatmul.f32.gmra.mxu0 %v198
    %v265 = vpop.f32.mrf.mxu0
    %v266 = vadd.f32 %v170, %v265
    %267 = vmatmul.f32.gmra.mxu0 %v200
    %v268 = vpop.f32.mrf.mxu0
    %v269 = vadd.f32 %v173, %v268
    %270 = vdwg.mxu0
    %271 = vmatpush.msra.mxu0 0.0
    %272 = vmatpush.msra.mxu0 0.0
    %273 = vmatpush.msra.mxu0 0.0
    %274 = vmatpush.msra.mxu0 0.0
    %275 = vmatpush.msra.mxu0 0.0
    %276 = vmatpush.msra.mxu0 0.0
    %277 = vmatpush.msra.mxu0 0.0
    %278 = vmatpush.msra.mxu0 0.0
    %279 = vmatpush.msra.mxu0 0.0
    %280 = vmatpush.msra.mxu0 0.0
    %281 = vmatpush.msra.mxu0 %v69
    %282 = vmatpush.msra.mxu0 %v65
    %283 = vmatpush.msra.mxu0 %v61
    %284 = vmatpush.msra.mxu0 %v57
    %285 = vmatpush.msra.mxu0 %v53
    %286 = vmatpush.msra.mxu0 %v49
    %287 = vmatmul.f32.gmra.mxu0 %v198
    %v288 = vpop.f32.mrf.mxu0
    %v289 = vadd.f32 %v193, %v288
    %290 = vmatmul.f32.gmra.mxu0 %v200
    %v291 = vpop.f32.mrf.mxu0
    %v292 = vadd.f32 %v196, %v291
    %293 = vdwg.mxu0
    %s294 = scalar_lea.vmem [#allocation2], 384
    %v295 = vld [vmem:[%s294] sm:$0xff]
    %v296 = vld [vmem:[%s294 + $0x8] sm:$0xff]
    %v297 = vld [vmem:[%s294 + $0x10] sm:$0xff]
    %v298 = vld [vmem:[%s294 + $0x18] sm:$0xff]
    %v299 = vld [vmem:[%s294 + $0x20] sm:$0xff]
    %v300 = vld [vmem:[%s294 + $0x28] sm:$0xff]
    %v301 = vld [vmem:[%s294 + $0x30] sm:$0xff]
    %v302 = vld [vmem:[%s294 + $0x38] sm:$0xff]
    %v303 = vld [vmem:[%s294 + $0x40] sm:$0xff]
    %v304 = vld [vmem:[%s294 + $0x48] sm:$0xff]
    %v305 = vld [vmem:[%s294 + $0x50] sm:$0xff]
    %v306 = vld [vmem:[%s294 + $0x58] sm:$0xff]
    %v307 = vld [vmem:[%s294 + $0x60] sm:$0xff]
    %v308 = vld [vmem:[%s294 + $0x68] sm:$0xff]
    %v309 = vld [vmem:[%s294 + $0x70] sm:$0xff]
    %v310 = vld [vmem:[%s294 + $0x78] sm:$0xff]
    %v311 = vld [vmem:[%s294 + $0x80] sm:$0xff]
    %v312 = vld [vmem:[%s294 + $0x88] sm:$0xff]
    %v313 = vld [vmem:[%s294 + $0x90] sm:$0xff]
    %v314 = vld [vmem:[%s294 + $0x98] sm:$0xff]
    %v315 = vld [vmem:[%s294 + $0xa0] sm:$0xff]
    %v316 = vld [vmem:[%s294 + $0xa8] sm:$0xff]
    %v317 = vld [vmem:[%s294 + $0xb0] sm:$0xff]
    %v318 = vld [vmem:[%s294 + $0xb8] sm:$0xff]
    %319 = vrot.lane.b32.xlu0 %v44, 122
    %v320 = vpop.permute.xlu0 %319
    %321 = vrot.lane.b32.xlu0 %v45, 122
    %v322 = vpop.permute.xlu0 %321
    %v323 = vsel %vm101, %v320, 0
    %v325 = vsel %vm101, %v322, 0
    %327 = vmatpush.msra.mxu0 0.0
    %328 = vmatpush.msra.mxu0 0.0
    %329 = vmatpush.msra.mxu0 0.0
    %330 = vmatpush.msra.mxu0 0.0
    %331 = vmatpush.msra.mxu0 0.0
    %332 = vmatpush.msra.mxu0 0.0
    %333 = vmatpush.msra.mxu0 0.0
    %334 = vmatpush.msra.mxu0 0.0
    %335 = vmatpush.msra.mxu0 0.0
    %336 = vmatpush.msra.mxu0 0.0
    %337 = vmatpush.msra.mxu0 %v315
    %338 = vmatpush.msra.mxu0 %v311
    %339 = vmatpush.msra.mxu0 %v307
    %340 = vmatpush.msra.mxu0 %v303
    %341 = vmatpush.msra.mxu0 %v299
    %342 = vmatpush.msra.mxu0 %v295
    %343 = vmatmul.f32.gmra.mxu0 %v323
    %v344 = vpop.f32.mrf.mxu0
    %v345 = vadd.f32 0.0, %v344
    %346 = vmatmul.f32.gmra.mxu0 %v325
    %v347 = vpop.f32.mrf.mxu0
    %v348 = vadd.f32 0.0, %v347
    %349 = vdwg.mxu0
    %350 = vmatpush.msra.mxu0 0.0
    %351 = vmatpush.msra.mxu0 0.0
    %352 = vmatpush.msra.mxu0 0.0
    %353 = vmatpush.msra.mxu0 0.0
    %354 = vmatpush.msra.mxu0 0.0
    %355 = vmatpush.msra.mxu0 0.0
    %356 = vmatpush.msra.mxu0 0.0
    %357 = vmatpush.msra.mxu0 0.0
    %358 = vmatpush.msra.mxu0 0.0
    %359 = vmatpush.msra.mxu0 0.0
    %360 = vmatpush.msra.mxu0 %v316
    %361 = vmatpush.msra.mxu0 %v312
    %362 = vmatpush.msra.mxu0 %v308
    %363 = vmatpush.msra.mxu0 %v304
    %364 = vmatpush.msra.mxu0 %v300
    %365 = vmatpush.msra.mxu0 %v296
    %366 = vmatmul.f32.gmra.mxu0 %v323
    %v367 = vpop.f32.mrf.mxu0
    %v368 = vadd.f32 0.0, %v367
    %369 = vmatmul.f32.gmra.mxu0 %v325
    %v370 = vpop.f32.mrf.mxu0
    %v371 = vadd.f32 0.0, %v370
    %372 = vdwg.mxu0
    %373 = vmatpush.msra.mxu0 0.0
    %374 = vmatpush.msra.mxu0 0.0
    %375 = vmatpush.msra.mxu0 0.0
    %376 = vmatpush.msra.mxu0 0.0
    %377 = vmatpush.msra.mxu0 0.0
    %378 = vmatpush.msra.mxu0 0.0
    %379 = vmatpush.msra.mxu0 0.0
    %380 = vmatpush.msra.mxu0 0.0
    %381 = vmatpush.msra.mxu0 0.0
    %382 = vmatpush.msra.mxu0 0.0
    %383 = vmatpush.msra.mxu0 %v317
    %384 = vmatpush.msra.mxu0 %v313
    %385 = vmatpush.msra.mxu0 %v309
    %386 = vmatpush.msra.mxu0 %v305
    %387 = vmatpush.msra.mxu0 %v301
    %388 = vmatpush.msra.mxu0 %v297
    %389 = vmatmul.f32.gmra.mxu0 %v323
    %v390 = vpop.f32.mrf.mxu0
    %v391 = vadd.f32 0.0, %v390
    %392 = vmatmul.f32.gmra.mxu0 %v325
    %v393 = vpop.f32.mrf.mxu0
    %v394 = vadd.f32 0.0, %v393
    %395 = vdwg.mxu0
    %396 = vmatpush.msra.mxu0 0.0
    %397 = vmatpush.msra.mxu0 0.0
    %398 = vmatpush.msra.mxu0 0.0
    %399 = vmatpush.msra.mxu0 0.0
    %400 = vmatpush.msra.mxu0 0.0
    %401 = vmatpush.msra.mxu0 0.0
    %402 = vmatpush.msra.mxu0 0.0
    %403 = vmatpush.msra.mxu0 0.0
    %404 = vmatpush.msra.mxu0 0.0
    %405 = vmatpush.msra.mxu0 0.0
    %406 = vmatpush.msra.mxu0 %v318
    %407 = vmatpush.msra.mxu0 %v314
    %408 = vmatpush.msra.mxu0 %v310
    %409 = vmatpush.msra.mxu0 %v306
    %410 = vmatpush.msra.mxu0 %v302
    %411 = vmatpush.msra.mxu0 %v298
    %412 = vmatmul.f32.gmra.mxu0 %v323
    %v413 = vpop.f32.mrf.mxu0
    %v414 = vadd.f32 0.0, %v413
    %415 = vmatmul.f32.gmra.mxu0 %v325
    %v416 = vpop.f32.mrf.mxu0
    %v417 = vadd.f32 0.0, %v416
    %418 = vdwg.mxu0
    %v419 = vadd.f32 %v220, %v345
    %v420 = vadd.f32 %v243, %v368
    %v421 = vadd.f32 %v266, %v391
    %v422 = vadd.f32 %v289, %v414
    %v423 = vadd.f32 %v223, %v348
    %v424 = vadd.f32 %v246, %v371
    %v425 = vadd.f32 %v269, %v394
    %v426 = vadd.f32 %v292, %v417
    %v427 = vld [vmem:[%s0 + $0x1] sm:$0xff]
    %v428 = vld [vmem:[%s0 + $0x9] sm:$0xff]
    %s429 = scalar_lea.vmem [#allocation2], 576
    %v430 = vld [vmem:[%s429] sm:$0xff]
    %v431 = vld [vmem:[%s429 + $0x8] sm:$0xff]
    %v432 = vld [vmem:[%s429 + $0x10] sm:$0xff]
    %v433 = vld [vmem:[%s429 + $0x18] sm:$0xff]
    %v434 = vld [vmem:[%s429 + $0x20] sm:$0xff]
    %v435 = vld [vmem:[%s429 + $0x28] sm:$0xff]
    %v436 = vld [vmem:[%s429 + $0x30] sm:$0xff]
    %v437 = vld [vmem:[%s429 + $0x38] sm:$0xff]
    %v438 = vld [vmem:[%s429 + $0x40] sm:$0xff]
    %v439 = vld [vmem:[%s429 + $0x48] sm:$0xff]
    %v440 = vld [vmem:[%s429 + $0x50] sm:$0xff]
    %v441 = vld [vmem:[%s429 + $0x58] sm:$0xff]
    %v442 = vld [vmem:[%s429 + $0x60] sm:$0xff]
    %v443 = vld [vmem:[%s429 + $0x68] sm:$0xff]
    %v444 = vld [vmem:[%s429 + $0x70] sm:$0xff]
    %v445 = vld [vmem:[%s429 + $0x78] sm:$0xff]
    %v446 = vld [vmem:[%s429 + $0x80] sm:$0xff]
    %v447 = vld [vmem:[%s429 + $0x88] sm:$0xff]
    %v448 = vld [vmem:[%s429 + $0x90] sm:$0xff]
    %v449 = vld [vmem:[%s429 + $0x98] sm:$0xff]
    %v450 = vld [vmem:[%s429 + $0xa0] sm:$0xff]
    %v451 = vld [vmem:[%s429 + $0xa8] sm:$0xff]
    %v452 = vld [vmem:[%s429 + $0xb0] sm:$0xff]
    %v453 = vld [vmem:[%s429 + $0xb8] sm:$0xff]
    %v455 = vsel %vm101, %v427, 0
    %v458 = vsel %vm101, %v428, 0
    %460 = vmatpush.msra.mxu0 0.0
    %461 = vmatpush.msra.mxu0 0.0
    %462 = vmatpush.msra.mxu0 0.0
    %463 = vmatpush.msra.mxu0 0.0
    %464 = vmatpush.msra.mxu0 0.0
    %465 = vmatpush.msra.mxu0 0.0
    %466 = vmatpush.msra.mxu0 0.0
    %467 = vmatpush.msra.mxu0 0.0
    %468 = vmatpush.msra.mxu0 0.0
    %469 = vmatpush.msra.mxu0 0.0
    %470 = vmatpush.msra.mxu0 %v450
    %471 = vmatpush.msra.mxu0 %v446
    %472 = vmatpush.msra.mxu0 %v442
    %473 = vmatpush.msra.mxu0 %v438
    %474 = vmatpush.msra.mxu0 %v434
    %475 = vmatpush.msra.mxu0 %v430
    %476 = vmatmul.f32.gmra.mxu0 %v455
    %v477 = vpop.f32.mrf.mxu0
    %v478 = vadd.f32 0.0, %v477
    %479 = vmatmul.f32.gmra.mxu0 %v458
    %v480 = vpop.f32.mrf.mxu0
    %v481 = vadd.f32 0.0, %v480
    %482 = vdwg.mxu0
    %483 = vmatpush.msra.mxu0 0.0
    %484 = vmatpush.msra.mxu0 0.0
    %485 = vmatpush.msra.mxu0 0.0
    %486 = vmatpush.msra.mxu0 0.0
    %487 = vmatpush.msra.mxu0 0.0
    %488 = vmatpush.msra.mxu0 0.0
    %489 = vmatpush.msra.mxu0 0.0
    %490 = vmatpush.msra.mxu0 0.0
    %491 = vmatpush.msra.mxu0 0.0
    %492 = vmatpush.msra.mxu0 0.0
    %493 = vmatpush.msra.mxu0 %v451
    %494 = vmatpush.msra.mxu0 %v447
    %495 = vmatpush.msra.mxu0 %v443
    %496 = vmatpush.msra.mxu0 %v439
    %497 = vmatpush.msra.mxu0 %v435
    %498 = vmatpush.msra.mxu0 %v431
    %499 = vmatmul.f32.gmra.mxu0 %v455
    %v500 = vpop.f32.mrf.mxu0
    %v501 = vadd.f32 0.0, %v500
    %502 = vmatmul.f32.gmra.mxu0 %v458
    %v503 = vpop.f32.mrf.mxu0
    %v504 = vadd.f32 0.0, %v503
    %505 = vdwg.mxu0
    %506 = vmatpush.msra.mxu0 0.0
    %507 = vmatpush.msra.mxu0 0.0
    %508 = vmatpush.msra.mxu0 0.0
    %509 = vmatpush.msra.mxu0 0.0
    %510 = vmatpush.msra.mxu0 0.0
    %511 = vmatpush.msra.mxu0 0.0
    %512 = vmatpush.msra.mxu0 0.0
    %513 = vmatpush.msra.mxu0 0.0
    %514 = vmatpush.msra.mxu0 0.0
    %515 = vmatpush.msra.mxu0 0.0
    %516 = vmatpush.msra.mxu0 %v452
    %517 = vmatpush.msra.mxu0 %v448
    %518 = vmatpush.msra.mxu0 %v444
    %519 = vmatpush.msra.mxu0 %v440
    %520 = vmatpush.msra.mxu0 %v436
    %521 = vmatpush.msra.mxu0 %v432
    %522 = vmatmul.f32.gmra.mxu0 %v455
    %v523 = vpop.f32.mrf.mxu0
    %v524 = vadd.f32 0.0, %v523
    %525 = vmatmul.f32.gmra.mxu0 %v458
    %v526 = vpop.f32.mrf.mxu0
    %v527 = vadd.f32 0.0, %v526
    %528 = vdwg.mxu0
    %529 = vmatpush.msra.mxu0 0.0
    %530 = vmatpush.msra.mxu0 0.0
    %531 = vmatpush.msra.mxu0 0.0
    %532 = vmatpush.msra.mxu0 0.0
    %533 = vmatpush.msra.mxu0 0.0
    %534 = vmatpush.msra.mxu0 0.0
    %535 = vmatpush.msra.mxu0 0.0
    %536 = vmatpush.msra.mxu0 0.0
    %537 = vmatpush.msra.mxu0 0.0
    %538 = vmatpush.msra.mxu0 0.0
    %539 = vmatpush.msra.mxu0 %v453
    %540 = vmatpush.msra.mxu0 %v449
    %541 = vmatpush.msra.mxu0 %v445
    %542 = vmatpush.msra.mxu0 %v441
    %543 = vmatpush.msra.mxu0 %v437
    %544 = vmatpush.msra.mxu0 %v433
    %545 = vmatmul.f32.gmra.mxu0 %v455
    %v546 = vpop.f32.mrf.mxu0
    %v547 = vadd.f32 0.0, %v546
    %548 = vmatmul.f32.gmra.mxu0 %v458
    %v549 = vpop.f32.mrf.mxu0
    %v550 = vadd.f32 0.0, %v549
    %551 = vdwg.mxu0
    %v552 = vadd.f32 %v419, %v478
    %v553 = vadd.f32 %v420, %v501
    %v554 = vadd.f32 %v421, %v524
    %v555 = vadd.f32 %v422, %v547
    %v556 = vadd.f32 %v423, %v481
    %v557 = vadd.f32 %v424, %v504
    %v558 = vadd.f32 %v425, %v527
    %v559 = vadd.f32 %v426, %v550
    %s560 = scalar_lea.vmem [#allocation2], 768
    %v561 = vld [vmem:[%s560] sm:$0xff]
    %v562 = vld [vmem:[%s560 + $0x8] sm:$0xff]
    %v563 = vld [vmem:[%s560 + $0x10] sm:$0xff]
    %v564 = vld [vmem:[%s560 + $0x18] sm:$0xff]
    %v565 = vld [vmem:[%s560 + $0x20] sm:$0xff]
    %v566 = vld [vmem:[%s560 + $0x28] sm:$0xff]
    %v567 = vld [vmem:[%s560 + $0x30] sm:$0xff]
    %v568 = vld [vmem:[%s560 + $0x38] sm:$0xff]
    %v569 = vld [vmem:[%s560 + $0x40] sm:$0xff]
    %v570 = vld [vmem:[%s560 + $0x48] sm:$0xff]
    %v571 = vld [vmem:[%s560 + $0x50] sm:$0xff]
    %v572 = vld [vmem:[%s560 + $0x58] sm:$0xff]
    %v573 = vld [vmem:[%s560 + $0x60] sm:$0xff]
    %v574 = vld [vmem:[%s560 + $0x68] sm:$0xff]
    %v575 = vld [vmem:[%s560 + $0x70] sm:$0xff]
    %v576 = vld [vmem:[%s560 + $0x78] sm:$0xff]
    %v577 = vld [vmem:[%s560 + $0x80] sm:$0xff]
    %v578 = vld [vmem:[%s560 + $0x88] sm:$0xff]
    %v579 = vld [vmem:[%s560 + $0x90] sm:$0xff]
    %v580 = vld [vmem:[%s560 + $0x98] sm:$0xff]
    %v581 = vld [vmem:[%s560 + $0xa0] sm:$0xff]
    %v582 = vld [vmem:[%s560 + $0xa8] sm:$0xff]
    %v583 = vld [vmem:[%s560 + $0xb0] sm:$0xff]
    %v584 = vld [vmem:[%s560 + $0xb8] sm:$0xff]
    %585 = vrot.lane.b32.xlu0 %v427, 125
    %v586 = vpop.permute.xlu0 %585
    %587 = vrot.lane.b32.xlu0 %v428, 125
    %v588 = vpop.permute.xlu0 %587
    %v589 = vsel %vm101, %v586, 0
    %v591 = vsel %vm101, %v588, 0
    %593 = vmatpush.msra.mxu0 0.0
    %594 = vmatpush.msra.mxu0 0.0
    %595 = vmatpush.msra.mxu0 0.0
    %596 = vmatpush.msra.mxu0 0.0
    %597 = vmatpush.msra.mxu0 0.0
    %598 = vmatpush.msra.mxu0 0.0
    %599 = vmatpush.msra.mxu0 0.0
    %600 = vmatpush.msra.mxu0 0.0
    %601 = vmatpush.msra.mxu0 0.0
    %602 = vmatpush.msra.mxu0 0.0
    %603 = vmatpush.msra.mxu0 %v581
    %604 = vmatpush.msra.mxu0 %v577
    %605 = vmatpush.msra.mxu0 %v573
    %606 = vmatpush.msra.mxu0 %v569
    %607 = vmatpush.msra.mxu0 %v565
    %608 = vmatpush.msra.mxu0 %v561
    %609 = vmatmul.f32.gmra.mxu0 %v589
    %v610 = vpop.f32.mrf.mxu0
    %v611 = vadd.f32 0.0, %v610
    %612 = vmatmul.f32.gmra.mxu0 %v591
    %v613 = vpop.f32.mrf.mxu0
    %v614 = vadd.f32 0.0, %v613
    %615 = vdwg.mxu0
    %616 = vmatpush.msra.mxu0 0.0
    %617 = vmatpush.msra.mxu0 0.0
    %618 = vmatpush.msra.mxu0 0.0
    %619 = vmatpush.msra.mxu0 0.0
    %620 = vmatpush.msra.mxu0 0.0
    %621 = vmatpush.msra.mxu0 0.0
    %622 = vmatpush.msra.mxu0 0.0
    %623 = vmatpush.msra.mxu0 0.0
    %624 = vmatpush.msra.mxu0 0.0
    %625 = vmatpush.msra.mxu0 0.0
    %626 = vmatpush.msra.mxu0 %v582
    %627 = vmatpush.msra.mxu0 %v578
    %628 = vmatpush.msra.mxu0 %v574
    %629 = vmatpush.msra.mxu0 %v570
    %630 = vmatpush.msra.mxu0 %v566
    %631 = vmatpush.msra.mxu0 %v562
    %632 = vmatmul.f32.gmra.mxu0 %v589
    %v633 = vpop.f32.mrf.mxu0
    %v634 = vadd.f32 0.0, %v633
    %635 = vmatmul.f32.gmra.mxu0 %v591
    %v636 = vpop.f32.mrf.mxu0
    %v637 = vadd.f32 0.0, %v636
    %638 = vdwg.mxu0
    %639 = vmatpush.msra.mxu0 0.0
    %640 = vmatpush.msra.mxu0 0.0
    %641 = vmatpush.msra.mxu0 0.0
    %642 = vmatpush.msra.mxu0 0.0
    %643 = vmatpush.msra.mxu0 0.0
    %644 = vmatpush.msra.mxu0 0.0
    %645 = vmatpush.msra.mxu0 0.0
    %646 = vmatpush.msra.mxu0 0.0
    %647 = vmatpush.msra.mxu0 0.0
    %648 = vmatpush.msra.mxu0 0.0
    %649 = vmatpush.msra.mxu0 %v583
    %650 = vmatpush.msra.mxu0 %v579
    %651 = vmatpush.msra.mxu0 %v575
    %652 = vmatpush.msra.mxu0 %v571
    %653 = vmatpush.msra.mxu0 %v567
    %654 = vmatpush.msra.mxu0 %v563
    %655 = vmatmul.f32.gmra.mxu0 %v589
    %v656 = vpop.f32.mrf.mxu0
    %v657 = vadd.f32 0.0, %v656
    %658 = vmatmul.f32.gmra.mxu0 %v591
    %v659 = vpop.f32.mrf.mxu0
    %v660 = vadd.f32 0.0, %v659
    %661 = vdwg.mxu0
    %662 = vmatpush.msra.mxu0 0.0
    %663 = vmatpush.msra.mxu0 0.0
    %664 = vmatpush.msra.mxu0 0.0
    %665 = vmatpush.msra.mxu0 0.0
    %666 = vmatpush.msra.mxu0 0.0
    %667 = vmatpush.msra.mxu0 0.0
    %668 = vmatpush.msra.mxu0 0.0
    %669 = vmatpush.msra.mxu0 0.0
    %670 = vmatpush.msra.mxu0 0.0
    %671 = vmatpush.msra.mxu0 0.0
    %672 = vmatpush.msra.mxu0 %v584
    %673 = vmatpush.msra.mxu0 %v580
    %674 = vmatpush.msra.mxu0 %v576
    %675 = vmatpush.msra.mxu0 %v572
    %676 = vmatpush.msra.mxu0 %v568
    %677 = vmatpush.msra.mxu0 %v564
    %678 = vmatmul.f32.gmra.mxu0 %v589
    %v679 = vpop.f32.mrf.mxu0
    %v680 = vadd.f32 0.0, %v679
    %681 = vmatmul.f32.gmra.mxu0 %v591
    %v682 = vpop.f32.mrf.mxu0
    %v683 = vadd.f32 0.0, %v682
    %684 = vdwg.mxu0
    %v685 = vadd.f32 %v552, %v611
    %v686 = vadd.f32 %v553, %v634
    %v687 = vadd.f32 %v554, %v657
    %v688 = vadd.f32 %v555, %v680
    %v689 = vadd.f32 %v556, %v614
    %v690 = vadd.f32 %v557, %v637
    %v691 = vadd.f32 %v558, %v660
    %v692 = vadd.f32 %v559, %v683
    %s693 = scalar_lea.vmem [#allocation2], 960
    %v694 = vld [vmem:[%s693] sm:$0xff]
    %v695 = vld [vmem:[%s693 + $0x8] sm:$0xff]
    %v696 = vld [vmem:[%s693 + $0x10] sm:$0xff]
    %v697 = vld [vmem:[%s693 + $0x18] sm:$0xff]
    %v698 = vld [vmem:[%s693 + $0x20] sm:$0xff]
    %v699 = vld [vmem:[%s693 + $0x28] sm:$0xff]
    %v700 = vld [vmem:[%s693 + $0x30] sm:$0xff]
    %v701 = vld [vmem:[%s693 + $0x38] sm:$0xff]
    %v702 = vld [vmem:[%s693 + $0x40] sm:$0xff]
    %v703 = vld [vmem:[%s693 + $0x48] sm:$0xff]
    %v704 = vld [vmem:[%s693 + $0x50] sm:$0xff]
    %v705 = vld [vmem:[%s693 + $0x58] sm:$0xff]
    %v706 = vld [vmem:[%s693 + $0x60] sm:$0xff]
    %v707 = vld [vmem:[%s693 + $0x68] sm:$0xff]
    %v708 = vld [vmem:[%s693 + $0x70] sm:$0xff]
    %v709 = vld [vmem:[%s693 + $0x78] sm:$0xff]
    %v710 = vld [vmem:[%s693 + $0x80] sm:$0xff]
    %v711 = vld [vmem:[%s693 + $0x88] sm:$0xff]
    %v712 = vld [vmem:[%s693 + $0x90] sm:$0xff]
    %v713 = vld [vmem:[%s693 + $0x98] sm:$0xff]
    %v714 = vld [vmem:[%s693 + $0xa0] sm:$0xff]
    %v715 = vld [vmem:[%s693 + $0xa8] sm:$0xff]
    %v716 = vld [vmem:[%s693 + $0xb0] sm:$0xff]
    %v717 = vld [vmem:[%s693 + $0xb8] sm:$0xff]
    %718 = vrot.lane.b32.xlu0 %v427, 122
    %v719 = vpop.permute.xlu0 %718
    %720 = vrot.lane.b32.xlu0 %v428, 122
    %v721 = vpop.permute.xlu0 %720
    %v722 = vsel %vm101, %v719, 0
    %v724 = vsel %vm101, %v721, 0
    %726 = vmatpush.msra.mxu0 0.0
    %727 = vmatpush.msra.mxu0 0.0
    %728 = vmatpush.msra.mxu0 0.0
    %729 = vmatpush.msra.mxu0 0.0
    %730 = vmatpush.msra.mxu0 0.0
    %731 = vmatpush.msra.mxu0 0.0
    %732 = vmatpush.msra.mxu0 0.0
    %733 = vmatpush.msra.mxu0 0.0
    %734 = vmatpush.msra.mxu0 0.0
    %735 = vmatpush.msra.mxu0 0.0
    %736 = vmatpush.msra.mxu0 %v714
    %737 = vmatpush.msra.mxu0 %v710
    %738 = vmatpush.msra.mxu0 %v706
    %739 = vmatpush.msra.mxu0 %v702
    %740 = vmatpush.msra.mxu0 %v698
    %741 = vmatpush.msra.mxu0 %v694
    %742 = vmatmul.f32.gmra.mxu0 %v722
    %v743 = vpop.f32.mrf.mxu0
    %v744 = vadd.f32 0.0, %v743
    %745 = vmatmul.f32.gmra.mxu0 %v724
    %v746 = vpop.f32.mrf.mxu0
    %v747 = vadd.f32 0.0, %v746
    %748 = vdwg.mxu0
    %749 = vmatpush.msra.mxu0 0.0
    %750 = vmatpush.msra.mxu0 0.0
    %751 = vmatpush.msra.mxu0 0.0
    %752 = vmatpush.msra.mxu0 0.0
    %753 = vmatpush.msra.mxu0 0.0
    %754 = vmatpush.msra.mxu0 0.0
    %755 = vmatpush.msra.mxu0 0.0
    %756 = vmatpush.msra.mxu0 0.0
    %757 = vmatpush.msra.mxu0 0.0
    %758 = vmatpush.msra.mxu0 0.0
    %759 = vmatpush.msra.mxu0 %v715
    %760 = vmatpush.msra.mxu0 %v711
    %761 = vmatpush.msra.mxu0 %v707
    %762 = vmatpush.msra.mxu0 %v703
    %763 = vmatpush.msra.mxu0 %v699
    %764 = vmatpush.msra.mxu0 %v695
    %765 = vmatmul.f32.gmra.mxu0 %v722
    %v766 = vpop.f32.mrf.mxu0
    %v767 = vadd.f32 0.0, %v766
    %768 = vmatmul.f32.gmra.mxu0 %v724
    %v769 = vpop.f32.mrf.mxu0
    %v770 = vadd.f32 0.0, %v769
    %771 = vdwg.mxu0
    %772 = vmatpush.msra.mxu0 0.0
    %773 = vmatpush.msra.mxu0 0.0
    %774 = vmatpush.msra.mxu0 0.0
    %775 = vmatpush.msra.mxu0 0.0
    %776 = vmatpush.msra.mxu0 0.0
    %777 = vmatpush.msra.mxu0 0.0
    %778 = vmatpush.msra.mxu0 0.0
    %779 = vmatpush.msra.mxu0 0.0
    %780 = vmatpush.msra.mxu0 0.0
    %781 = vmatpush.msra.mxu0 0.0
    %782 = vmatpush.msra.mxu0 %v716
    %783 = vmatpush.msra.mxu0 %v712
    %784 = vmatpush.msra.mxu0 %v708
    %785 = vmatpush.msra.mxu0 %v704
    %786 = vmatpush.msra.mxu0 %v700
    %787 = vmatpush.msra.mxu0 %v696
    %788 = vmatmul.f32.gmra.mxu0 %v722
    %v789 = vpop.f32.mrf.mxu0
    %v790 = vadd.f32 0.0, %v789
    %791 = vmatmul.f32.gmra.mxu0 %v724
    %v792 = vpop.f32.mrf.mxu0
    %v793 = vadd.f32 0.0, %v792
    %794 = vdwg.mxu0
    %795 = vmatpush.msra.mxu0 0.0
    %796 = vmatpush.msra.mxu0 0.0
    %797 = vmatpush.msra.mxu0 0.0
    %798 = vmatpush.msra.mxu0 0.0
    %799 = vmatpush.msra.mxu0 0.0
    %800 = vmatpush.msra.mxu0 0.0
    %801 = vmatpush.msra.mxu0 0.0
    %802 = vmatpush.msra.mxu0 0.0
    %803 = vmatpush.msra.mxu0 0.0
    %804 = vmatpush.msra.mxu0 0.0
    %805 = vmatpush.msra.mxu0 %v717
    %806 = vmatpush.msra.mxu0 %v713
    %807 = vmatpush.msra.mxu0 %v709
    %808 = vmatpush.msra.mxu0 %v705
    %809 = vmatpush.msra.mxu0 %v701
    %810 = vmatpush.msra.mxu0 %v697
    %811 = vmatmul.f32.gmra.mxu0 %v722
    %v812 = vpop.f32.mrf.mxu0
    %v813 = vadd.f32 0.0, %v812
    %814 = vmatmul.f32.gmra.mxu0 %v724
    %v815 = vpop.f32.mrf.mxu0
    %v816 = vadd.f32 0.0, %v815
    %817 = vdwg.mxu0
    %v818 = vadd.f32 %v685, %v744
    %v819 = vadd.f32 %v686, %v767
    %v820 = vadd.f32 %v687, %v790
    %v821 = vadd.f32 %v688, %v813
    %v822 = vadd.f32 %v689, %v747
    %v823 = vadd.f32 %v690, %v770
    %v824 = vadd.f32 %v691, %v793
    %v825 = vadd.f32 %v692, %v816
    %v826 = vld [vmem:[%s0 + $0x2] sm:$0xff]
    %v827 = vld [vmem:[%s0 + $0xa] sm:$0xff]
    %s828 = scalar_lea.vmem [#allocation2], 1152
    %v829 = vld [vmem:[%s828] sm:$0xff]
    %v830 = vld [vmem:[%s828 + $0x8] sm:$0xff]
    %v831 = vld [vmem:[%s828 + $0x10] sm:$0xff]
    %v832 = vld [vmem:[%s828 + $0x18] sm:$0xff]
    %v833 = vld [vmem:[%s828 + $0x20] sm:$0xff]
    %v834 = vld [vmem:[%s828 + $0x28] sm:$0xff]
    %v835 = vld [vmem:[%s828 + $0x30] sm:$0xff]
    %v836 = vld [vmem:[%s828 + $0x38] sm:$0xff]
    %v837 = vld [vmem:[%s828 + $0x40] sm:$0xff]
    %v838 = vld [vmem:[%s828 + $0x48] sm:$0xff]
    %v839 = vld [vmem:[%s828 + $0x50] sm:$0xff]
    %v840 = vld [vmem:[%s828 + $0x58] sm:$0xff]
    %v841 = vld [vmem:[%s828 + $0x60] sm:$0xff]
    %v842 = vld [vmem:[%s828 + $0x68] sm:$0xff]
    %v843 = vld [vmem:[%s828 + $0x70] sm:$0xff]
    %v844 = vld [vmem:[%s828 + $0x78] sm:$0xff]
    %v845 = vld [vmem:[%s828 + $0x80] sm:$0xff]
    %v846 = vld [vmem:[%s828 + $0x88] sm:$0xff]
    %v847 = vld [vmem:[%s828 + $0x90] sm:$0xff]
    %v848 = vld [vmem:[%s828 + $0x98] sm:$0xff]
    %v849 = vld [vmem:[%s828 + $0xa0] sm:$0xff]
    %v850 = vld [vmem:[%s828 + $0xa8] sm:$0xff]
    %v851 = vld [vmem:[%s828 + $0xb0] sm:$0xff]
    %v852 = vld [vmem:[%s828 + $0xb8] sm:$0xff]
    %v854 = vsel %vm101, %v826, 0
    %v857 = vsel %vm101, %v827, 0
    %859 = vmatpush.msra.mxu0 0.0
    %860 = vmatpush.msra.mxu0 0.0
    %861 = vmatpush.msra.mxu0 0.0
    %862 = vmatpush.msra.mxu0 0.0
    %863 = vmatpush.msra.mxu0 0.0
    %864 = vmatpush.msra.mxu0 0.0
    %865 = vmatpush.msra.mxu0 0.0
    %866 = vmatpush.msra.mxu0 0.0
    %867 = vmatpush.msra.mxu0 0.0
    %868 = vmatpush.msra.mxu0 0.0
    %869 = vmatpush.msra.mxu0 %v849
    %870 = vmatpush.msra.mxu0 %v845
    %871 = vmatpush.msra.mxu0 %v841
    %872 = vmatpush.msra.mxu0 %v837
    %873 = vmatpush.msra.mxu0 %v833
    %874 = vmatpush.msra.mxu0 %v829
    %875 = vmatmul.f32.gmra.mxu0 %v854
    %v876 = vpop.f32.mrf.mxu0
    %v877 = vadd.f32 0.0, %v876
    %878 = vmatmul.f32.gmra.mxu0 %v857
    %v879 = vpop.f32.mrf.mxu0
    %v880 = vadd.f32 0.0, %v879
    %881 = vdwg.mxu0
    %882 = vmatpush.msra.mxu0 0.0
    %883 = vmatpush.msra.mxu0 0.0
    %884 = vmatpush.msra.mxu0 0.0
    %885 = vmatpush.msra.mxu0 0.0
    %886 = vmatpush.msra.mxu0 0.0
    %887 = vmatpush.msra.mxu0 0.0
    %888 = vmatpush.msra.mxu0 0.0
    %889 = vmatpush.msra.mxu0 0.0
    %890 = vmatpush.msra.mxu0 0.0
    %891 = vmatpush.msra.mxu0 0.0
    %892 = vmatpush.msra.mxu0 %v850
    %893 = vmatpush.msra.mxu0 %v846
    %894 = vmatpush.msra.mxu0 %v842
    %895 = vmatpush.msra.mxu0 %v838
    %896 = vmatpush.msra.mxu0 %v834
    %897 = vmatpush.msra.mxu0 %v830
    %898 = vmatmul.f32.gmra.mxu0 %v854
    %v899 = vpop.f32.mrf.mxu0
    %v900 = vadd.f32 0.0, %v899
    %901 = vmatmul.f32.gmra.mxu0 %v857
    %v902 = vpop.f32.mrf.mxu0
    %v903 = vadd.f32 0.0, %v902
    %904 = vdwg.mxu0
    %905 = vmatpush.msra.mxu0 0.0
    %906 = vmatpush.msra.mxu0 0.0
    %907 = vmatpush.msra.mxu0 0.0
    %908 = vmatpush.msra.mxu0 0.0
    %909 = vmatpush.msra.mxu0 0.0
    %910 = vmatpush.msra.mxu0 0.0
    %911 = vmatpush.msra.mxu0 0.0
    %912 = vmatpush.msra.mxu0 0.0
    %913 = vmatpush.msra.mxu0 0.0
    %914 = vmatpush.msra.mxu0 0.0
    %915 = vmatpush.msra.mxu0 %v851
    %916 = vmatpush.msra.mxu0 %v847
    %917 = vmatpush.msra.mxu0 %v843
    %918 = vmatpush.msra.mxu0 %v839
    %919 = vmatpush.msra.mxu0 %v835
    %920 = vmatpush.msra.mxu0 %v831
    %921 = vmatmul.f32.gmra.mxu0 %v854
    %v922 = vpop.f32.mrf.mxu0
    %v923 = vadd.f32 0.0, %v922
    %924 = vmatmul.f32.gmra.mxu0 %v857
    %v925 = vpop.f32.mrf.mxu0
    %v926 = vadd.f32 0.0, %v925
    %927 = vdwg.mxu0
    %928 = vmatpush.msra.mxu0 0.0
    %929 = vmatpush.msra.mxu0 0.0
    %930 = vmatpush.msra.mxu0 0.0
    %931 = vmatpush.msra.mxu0 0.0
    %932 = vmatpush.msra.mxu0 0.0
    %933 = vmatpush.msra.mxu0 0.0
    %934 = vmatpush.msra.mxu0 0.0
    %935 = vmatpush.msra.mxu0 0.0
    %936 = vmatpush.msra.mxu0 0.0
    %937 = vmatpush.msra.mxu0 0.0
    %938 = vmatpush.msra.mxu0 %v852
    %939 = vmatpush.msra.mxu0 %v848
    %940 = vmatpush.msra.mxu0 %v844
    %941 = vmatpush.msra.mxu0 %v840
    %942 = vmatpush.msra.mxu0 %v836
    %943 = vmatpush.msra.mxu0 %v832
    %944 = vmatmul.f32.gmra.mxu0 %v854
    %v945 = vpop.f32.mrf.mxu0
    %v946 = vadd.f32 0.0, %v945
    %947 = vmatmul.f32.gmra.mxu0 %v857
    %v948 = vpop.f32.mrf.mxu0
    %v949 = vadd.f32 0.0, %v948
    %950 = vdwg.mxu0
    %v951 = vadd.f32 %v818, %v877
    %v952 = vadd.f32 %v819, %v900
    %v953 = vadd.f32 %v820, %v923
    %v954 = vadd.f32 %v821, %v946
    %v955 = vadd.f32 %v822, %v880
    %v956 = vadd.f32 %v823, %v903
    %v957 = vadd.f32 %v824, %v926
    %v958 = vadd.f32 %v825, %v949
    %s959 = scalar_lea.vmem [#allocation2], 1344
    %v960 = vld [vmem:[%s959] sm:$0xff]
    %v961 = vld [vmem:[%s959 + $0x8] sm:$0xff]
    %v962 = vld [vmem:[%s959 + $0x10] sm:$0xff]
    %v963 = vld [vmem:[%s959 + $0x18] sm:$0xff]
    %v964 = vld [vmem:[%s959 + $0x20] sm:$0xff]
    %v965 = vld [vmem:[%s959 + $0x28] sm:$0xff]
    %v966 = vld [vmem:[%s959 + $0x30] sm:$0xff]
    %v967 = vld [vmem:[%s959 + $0x38] sm:$0xff]
    %v968 = vld [vmem:[%s959 + $0x40] sm:$0xff]
    %v969 = vld [vmem:[%s959 + $0x48] sm:$0xff]
    %v970 = vld [vmem:[%s959 + $0x50] sm:$0xff]
    %v971 = vld [vmem:[%s959 + $0x58] sm:$0xff]
    %v972 = vld [vmem:[%s959 + $0x60] sm:$0xff]
    %v973 = vld [vmem:[%s959 + $0x68] sm:$0xff]
    %v974 = vld [vmem:[%s959 + $0x70] sm:$0xff]
    %v975 = vld [vmem:[%s959 + $0x78] sm:$0xff]
    %v976 = vld [vmem:[%s959 + $0x80] sm:$0xff]
    %v977 = vld [vmem:[%s959 + $0x88] sm:$0xff]
    %v978 = vld [vmem:[%s959 + $0x90] sm:$0xff]
    %v979 = vld [vmem:[%s959 + $0x98] sm:$0xff]
    %v980 = vld [vmem:[%s959 + $0xa0] sm:$0xff]
    %v981 = vld [vmem:[%s959 + $0xa8] sm:$0xff]
    %v982 = vld [vmem:[%s959 + $0xb0] sm:$0xff]
    %v983 = vld [vmem:[%s959 + $0xb8] sm:$0xff]
    %984 = vrot.lane.b32.xlu0 %v826, 125
    %v985 = vpop.permute.xlu0 %984
    %986 = vrot.lane.b32.xlu0 %v827, 125
    %v987 = vpop.permute.xlu0 %986
    %v988 = vsel %vm101, %v985, 0
    %v990 = vsel %vm101, %v987, 0
    %992 = vmatpush.msra.mxu0 0.0
    %993 = vmatpush.msra.mxu0 0.0
    %994 = vmatpush.msra.mxu0 0.0
    %995 = vmatpush.msra.mxu0 0.0
    %996 = vmatpush.msra.mxu0 0.0
    %997 = vmatpush.msra.mxu0 0.0
    %998 = vmatpush.msra.mxu0 0.0
    %999 = vmatpush.msra.mxu0 0.0
    %1000 = vmatpush.msra.mxu0 0.0
    %1001 = vmatpush.msra.mxu0 0.0
    %1002 = vmatpush.msra.mxu0 %v980
    %1003 = vmatpush.msra.mxu0 %v976
    %1004 = vmatpush.msra.mxu0 %v972
    %1005 = vmatpush.msra.mxu0 %v968
    %1006 = vmatpush.msra.mxu0 %v964
    %1007 = vmatpush.msra.mxu0 %v960
    %1008 = vmatmul.f32.gmra.mxu0 %v988
    %v1009 = vpop.f32.mrf.mxu0
    %v1010 = vadd.f32 0.0, %v1009
    %1011 = vmatmul.f32.gmra.mxu0 %v990
    %v1012 = vpop.f32.mrf.mxu0
    %v1013 = vadd.f32 0.0, %v1012
    %1014 = vdwg.mxu0
    %1015 = vmatpush.msra.mxu0 0.0
    %1016 = vmatpush.msra.mxu0 0.0
    %1017 = vmatpush.msra.mxu0 0.0
    %1018 = vmatpush.msra.mxu0 0.0
    %1019 = vmatpush.msra.mxu0 0.0
    %1020 = vmatpush.msra.mxu0 0.0
    %1021 = vmatpush.msra.mxu0 0.0
    %1022 = vmatpush.msra.mxu0 0.0
    %1023 = vmatpush.msra.mxu0 0.0
    %1024 = vmatpush.msra.mxu0 0.0
    %1025 = vmatpush.msra.mxu0 %v981
    %1026 = vmatpush.msra.mxu0 %v977
    %1027 = vmatpush.msra.mxu0 %v973
    %1028 = vmatpush.msra.mxu0 %v969
    %1029 = vmatpush.msra.mxu0 %v965
    %1030 = vmatpush.msra.mxu0 %v961
    %1031 = vmatmul.f32.gmra.mxu0 %v988
    %v1032 = vpop.f32.mrf.mxu0
    %v1033 = vadd.f32 0.0, %v1032
    %1034 = vmatmul.f32.gmra.mxu0 %v990
    %v1035 = vpop.f32.mrf.mxu0
    %v1036 = vadd.f32 0.0, %v1035
    %1037 = vdwg.mxu0
    %1038 = vmatpush.msra.mxu0 0.0
    %1039 = vmatpush.msra.mxu0 0.0
    %1040 = vmatpush.msra.mxu0 0.0
    %1041 = vmatpush.msra.mxu0 0.0
    %1042 = vmatpush.msra.mxu0 0.0
    %1043 = vmatpush.msra.mxu0 0.0
    %1044 = vmatpush.msra.mxu0 0.0
    %1045 = vmatpush.msra.mxu0 0.0
    %1046 = vmatpush.msra.mxu0 0.0
    %1047 = vmatpush.msra.mxu0 0.0
    %1048 = vmatpush.msra.mxu0 %v982
    %1049 = vmatpush.msra.mxu0 %v978
    %1050 = vmatpush.msra.mxu0 %v974
    %1051 = vmatpush.msra.mxu0 %v970
    %1052 = vmatpush.msra.mxu0 %v966
    %1053 = vmatpush.msra.mxu0 %v962
    %1054 = vmatmul.f32.gmra.mxu0 %v988
    %v1055 = vpop.f32.mrf.mxu0
    %v1056 = vadd.f32 0.0, %v1055
    %1057 = vmatmul.f32.gmra.mxu0 %v990
    %v1058 = vpop.f32.mrf.mxu0
    %v1059 = vadd.f32 0.0, %v1058
    %1060 = vdwg.mxu0
    %1061 = vmatpush.msra.mxu0 0.0
    %1062 = vmatpush.msra.mxu0 0.0
    %1063 = vmatpush.msra.mxu0 0.0
    %1064 = vmatpush.msra.mxu0 0.0
    %1065 = vmatpush.msra.mxu0 0.0
    %1066 = vmatpush.msra.mxu0 0.0
    %1067 = vmatpush.msra.mxu0 0.0
    %1068 = vmatpush.msra.mxu0 0.0
    %1069 = vmatpush.msra.mxu0 0.0
    %1070 = vmatpush.msra.mxu0 0.0
    %1071 = vmatpush.msra.mxu0 %v983
    %1072 = vmatpush.msra.mxu0 %v979
    %1073 = vmatpush.msra.mxu0 %v975
    %1074 = vmatpush.msra.mxu0 %v971
    %1075 = vmatpush.msra.mxu0 %v967
    %1076 = vmatpush.msra.mxu0 %v963
    %1077 = vmatmul.f32.gmra.mxu0 %v988
    %v1078 = vpop.f32.mrf.mxu0
    %v1079 = vadd.f32 0.0, %v1078
    %1080 = vmatmul.f32.gmra.mxu0 %v990
    %v1081 = vpop.f32.mrf.mxu0
    %v1082 = vadd.f32 0.0, %v1081
    %1083 = vdwg.mxu0
    %v1084 = vadd.f32 %v951, %v1010
    %v1085 = vadd.f32 %v952, %v1033
    %v1086 = vadd.f32 %v953, %v1056
    %v1087 = vadd.f32 %v954, %v1079
    %v1088 = vadd.f32 %v955, %v1013
    %v1089 = vadd.f32 %v956, %v1036
    %v1090 = vadd.f32 %v957, %v1059
    %v1091 = vadd.f32 %v958, %v1082
    %s1092 = scalar_lea.vmem [#allocation2], 1536
    %v1093 = vld [vmem:[%s1092] sm:$0xff]
    %v1094 = vld [vmem:[%s1092 + $0x8] sm:$0xff]
    %v1095 = vld [vmem:[%s1092 + $0x10] sm:$0xff]
    %v1096 = vld [vmem:[%s1092 + $0x18] sm:$0xff]
    %v1097 = vld [vmem:[%s1092 + $0x20] sm:$0xff]
    %v1098 = vld [vmem:[%s1092 + $0x28] sm:$0xff]
    %v1099 = vld [vmem:[%s1092 + $0x30] sm:$0xff]
    %v1100 = vld [vmem:[%s1092 + $0x38] sm:$0xff]
    %v1101 = vld [vmem:[%s1092 + $0x40] sm:$0xff]
    %v1102 = vld [vmem:[%s1092 + $0x48] sm:$0xff]
    %v1103 = vld [vmem:[%s1092 + $0x50] sm:$0xff]
    %v1104 = vld [vmem:[%s1092 + $0x58] sm:$0xff]
    %v1105 = vld [vmem:[%s1092 + $0x60] sm:$0xff]
    %v1106 = vld [vmem:[%s1092 + $0x68] sm:$0xff]
    %v1107 = vld [vmem:[%s1092 + $0x70] sm:$0xff]
    %v1108 = vld [vmem:[%s1092 + $0x78] sm:$0xff]
    %v1109 = vld [vmem:[%s1092 + $0x80] sm:$0xff]
    %v1110 = vld [vmem:[%s1092 + $0x88] sm:$0xff]
    %v1111 = vld [vmem:[%s1092 + $0x90] sm:$0xff]
    %v1112 = vld [vmem:[%s1092 + $0x98] sm:$0xff]
    %v1113 = vld [vmem:[%s1092 + $0xa0] sm:$0xff]
    %v1114 = vld [vmem:[%s1092 + $0xa8] sm:$0xff]
    %v1115 = vld [vmem:[%s1092 + $0xb0] sm:$0xff]
    %v1116 = vld [vmem:[%s1092 + $0xb8] sm:$0xff]
    %1117 = vrot.lane.b32.xlu0 %v826, 122
    %v1118 = vpop.permute.xlu0 %1117
    %1119 = vrot.lane.b32.xlu0 %v827, 122
    %v1120 = vpop.permute.xlu0 %1119
    %v1121 = vsel %vm101, %v1118, 0
    %v1123 = vsel %vm101, %v1120, 0
    %1125 = vmatpush.msra.mxu0 0.0
    %1126 = vmatpush.msra.mxu0 0.0
    %1127 = vmatpush.msra.mxu0 0.0
    %1128 = vmatpush.msra.mxu0 0.0
    %1129 = vmatpush.msra.mxu0 0.0
    %1130 = vmatpush.msra.mxu0 0.0
    %1131 = vmatpush.msra.mxu0 0.0
    %1132 = vmatpush.msra.mxu0 0.0
    %1133 = vmatpush.msra.mxu0 0.0
    %1134 = vmatpush.msra.mxu0 0.0
    %1135 = vmatpush.msra.mxu0 %v1113
    %1136 = vmatpush.msra.mxu0 %v1109
    %1137 = vmatpush.msra.mxu0 %v1105
    %1138 = vmatpush.msra.mxu0 %v1101
    %1139 = vmatpush.msra.mxu0 %v1097
    %1140 = vmatpush.msra.mxu0 %v1093
    %1141 = vmatmul.f32.gmra.mxu0 %v1121
    %v1142 = vpop.f32.mrf.mxu0
    %v1143 = vadd.f32 0.0, %v1142
    %1144 = vmatmul.f32.gmra.mxu0 %v1123
    %v1145 = vpop.f32.mrf.mxu0
    %v1146 = vadd.f32 0.0, %v1145
    %1147 = vdwg.mxu0
    %1148 = vmatpush.msra.mxu0 0.0
    %1149 = vmatpush.msra.mxu0 0.0
    %1150 = vmatpush.msra.mxu0 0.0
    %1151 = vmatpush.msra.mxu0 0.0
    %1152 = vmatpush.msra.mxu0 0.0
    %1153 = vmatpush.msra.mxu0 0.0
    %1154 = vmatpush.msra.mxu0 0.0
    %1155 = vmatpush.msra.mxu0 0.0
    %1156 = vmatpush.msra.mxu0 0.0
    %1157 = vmatpush.msra.mxu0 0.0
    %1158 = vmatpush.msra.mxu0 %v1114
    %1159 = vmatpush.msra.mxu0 %v1110
    %1160 = vmatpush.msra.mxu0 %v1106
    %1161 = vmatpush.msra.mxu0 %v1102
    %1162 = vmatpush.msra.mxu0 %v1098
    %1163 = vmatpush.msra.mxu0 %v1094
    %1164 = vmatmul.f32.gmra.mxu0 %v1121
    %v1165 = vpop.f32.mrf.mxu0
    %v1166 = vadd.f32 0.0, %v1165
    %1167 = vmatmul.f32.gmra.mxu0 %v1123
    %v1168 = vpop.f32.mrf.mxu0
    %v1169 = vadd.f32 0.0, %v1168
    %1170 = vdwg.mxu0
    %1171 = vmatpush.msra.mxu0 0.0
    %1172 = vmatpush.msra.mxu0 0.0
    %1173 = vmatpush.msra.mxu0 0.0
    %1174 = vmatpush.msra.mxu0 0.0
    %1175 = vmatpush.msra.mxu0 0.0
    %1176 = vmatpush.msra.mxu0 0.0
    %1177 = vmatpush.msra.mxu0 0.0
    %1178 = vmatpush.msra.mxu0 0.0
    %1179 = vmatpush.msra.mxu0 0.0
    %1180 = vmatpush.msra.mxu0 0.0
    %1181 = vmatpush.msra.mxu0 %v1115
    %1182 = vmatpush.msra.mxu0 %v1111
    %1183 = vmatpush.msra.mxu0 %v1107
    %1184 = vmatpush.msra.mxu0 %v1103
    %1185 = vmatpush.msra.mxu0 %v1099
    %1186 = vmatpush.msra.mxu0 %v1095
    %1187 = vmatmul.f32.gmra.mxu0 %v1121
    %v1188 = vpop.f32.mrf.mxu0
    %v1189 = vadd.f32 0.0, %v1188
    %1190 = vmatmul.f32.gmra.mxu0 %v1123
    %v1191 = vpop.f32.mrf.mxu0
    %v1192 = vadd.f32 0.0, %v1191
    %1193 = vdwg.mxu0
    %1194 = vmatpush.msra.mxu0 0.0
    %1195 = vmatpush.msra.mxu0 0.0
    %1196 = vmatpush.msra.mxu0 0.0
    %1197 = vmatpush.msra.mxu0 0.0
    %1198 = vmatpush.msra.mxu0 0.0
    %1199 = vmatpush.msra.mxu0 0.0
    %1200 = vmatpush.msra.mxu0 0.0
    %1201 = vmatpush.msra.mxu0 0.0
    %1202 = vmatpush.msra.mxu0 0.0
    %1203 = vmatpush.msra.mxu0 0.0
    %1204 = vmatpush.msra.mxu0 %v1116
    %1205 = vmatpush.msra.mxu0 %v1112
    %1206 = vmatpush.msra.mxu0 %v1108
    %1207 = vmatpush.msra.mxu0 %v1104
    %1208 = vmatpush.msra.mxu0 %v1100
    %1209 = vmatpush.msra.mxu0 %v1096
    %1210 = vmatmul.f32.gmra.mxu0 %v1121
    %v1211 = vpop.f32.mrf.mxu0
    %v1212 = vadd.f32 0.0, %v1211
    %1213 = vmatmul.f32.gmra.mxu0 %v1123
    %v1214 = vpop.f32.mrf.mxu0
    %v1215 = vadd.f32 0.0, %v1214
    %1216 = vdwg.mxu0
    %v1217 = vadd.f32 %v1084, %v1143
    %v1218 = vadd.f32 %v1085, %v1166
    %v1219 = vadd.f32 %v1086, %v1189
    %v1220 = vadd.f32 %v1087, %v1212
    %v1221 = vadd.f32 %v1088, %v1146
    %v1222 = vadd.f32 %v1089, %v1169
    %v1223 = vadd.f32 %v1090, %v1192
    %v1224 = vadd.f32 %v1091, %v1215
    %v1225 = vld [vmem:[#allocation4] sm:$0xf]
    %v1227 = vperm.slane %v1225, 0
    %v1228 = vperm.slane %v1225, 1
    %v1229 = vperm.slane %v1225, 2
    %v1230 = vperm.slane %v1225, 3
    %v1235 = vadd.f32 %v1217, %v1227
    %v1236 = vadd.f32 %v1218, %v1228
    %v1237 = vadd.f32 %v1219, %v1229
    %v1238 = vadd.f32 %v1220, %v1230
    %v1239 = vadd.f32 %v1221, %v1227
    %v1240 = vadd.f32 %v1222, %v1228
    %v1241 = vadd.f32 %v1223, %v1229
    %v1242 = vadd.f32 %v1224, %v1230
    %1243 = vst [vmem:[%s3] sm:$0xff] %v1235
    %1244 = vst [vmem:[%s3 + $0x8] sm:$0xff] %v1236
    %1245 = vst [vmem:[%s3 + $0x10] sm:$0xff] %v1237
    %1246 = vst [vmem:[%s3 + $0x18] sm:$0xff] %v1238
    %1247 = vst [vmem:[%s3 + $0x20] sm:$0xff] %v1239
    %1248 = vst [vmem:[%s3 + $0x28] sm:$0xff] %v1240
    %1249 = vst [vmem:[%s3 + $0x30] sm:$0xff] %v1241
    %1250 = vst [vmem:[%s3 + $0x38] sm:$0xff] %v1242
    %v1251 = vld [vmem:[%s0 + $0x12] sm:$0xff]
    %v1252 = vld [vmem:[%s0 + $0x1a] sm:$0xff]
    %v1253 = vld [vmem:[#allocation2] sm:$0xff]
    %v1254 = vld [vmem:[#allocation2 + $0x8] sm:$0xff]
    %v1255 = vld [vmem:[#allocation2 + $0x10] sm:$0xff]
    %v1256 = vld [vmem:[#allocation2 + $0x18] sm:$0xff]
    %v1257 = vld [vmem:[#allocation2 + $0x20] sm:$0xff]
    %v1258 = vld [vmem:[#allocation2 + $0x28] sm:$0xff]
    %v1259 = vld [vmem:[#allocation2 + $0x30] sm:$0xff]
    %v1260 = vld [vmem:[#allocation2 + $0x38] sm:$0xff]
    %v1261 = vld [vmem:[#allocation2 + $0x40] sm:$0xff]
    %v1262 = vld [vmem:[#allocation2 + $0x48] sm:$0xff]
    %v1263 = vld [vmem:[#allocation2 + $0x50] sm:$0xff]
    %v1264 = vld [vmem:[#allocation2 + $0x58] sm:$0xff]
    %v1265 = vld [vmem:[#allocation2 + $0x60] sm:$0xff]
    %v1266 = vld [vmem:[#allocation2 + $0x68] sm:$0xff]
    %v1267 = vld [vmem:[#allocation2 + $0x70] sm:$0xff]
    %v1268 = vld [vmem:[#allocation2 + $0x78] sm:$0xff]
    %v1269 = vld [vmem:[#allocation2 + $0x80] sm:$0xff]
    %v1270 = vld [vmem:[#allocation2 + $0x88] sm:$0xff]
    %v1271 = vld [vmem:[#allocation2 + $0x90] sm:$0xff]
    %v1272 = vld [vmem:[#allocation2 + $0x98] sm:$0xff]
    %v1273 = vld [vmem:[#allocation2 + $0xa0] sm:$0xff]
    %v1274 = vld [vmem:[#allocation2 + $0xa8] sm:$0xff]
    %v1275 = vld [vmem:[#allocation2 + $0xb0] sm:$0xff]
    %v1276 = vld [vmem:[#allocation2 + $0xb8] sm:$0xff]
    %v1277 = vld [vmem:[%s70] sm:$0xff]
    %v1278 = vld [vmem:[%s70 + $0x8] sm:$0xff]
    %v1279 = vld [vmem:[%s70 + $0x10] sm:$0xff]
    %v1280 = vld [vmem:[%s70 + $0x18] sm:$0xff]
    %v1281 = vld [vmem:[%s70 + $0x20] sm:$0xff]
    %v1282 = vld [vmem:[%s70 + $0x28] sm:$0xff]
    %v1283 = vld [vmem:[%s70 + $0x30] sm:$0xff]
    %v1284 = vld [vmem:[%s70 + $0x38] sm:$0xff]
    %v1285 = vld [vmem:[%s70 + $0x40] sm:$0xff]
    %v1286 = vld [vmem:[%s70 + $0x48] sm:$0xff]
    %v1287 = vld [vmem:[%s70 + $0x50] sm:$0xff]
    %v1288 = vld [vmem:[%s70 + $0x58] sm:$0xff]
    %v1289 = vld [vmem:[%s70 + $0x60] sm:$0xff]
    %v1290 = vld [vmem:[%s70 + $0x68] sm:$0xff]
    %v1291 = vld [vmem:[%s70 + $0x70] sm:$0xff]
    %v1292 = vld [vmem:[%s70 + $0x78] sm:$0xff]
    %v1293 = vld [vmem:[%s70 + $0x80] sm:$0xff]
    %v1294 = vld [vmem:[%s70 + $0x88] sm:$0xff]
    %v1295 = vld [vmem:[%s70 + $0x90] sm:$0xff]
    %v1296 = vld [vmem:[%s70 + $0x98] sm:$0xff]
    %v1297 = vld [vmem:[%s70 + $0xa0] sm:$0xff]
    %v1298 = vld [vmem:[%s70 + $0xa8] sm:$0xff]
    %v1299 = vld [vmem:[%s70 + $0xb0] sm:$0xff]
    %v1300 = vld [vmem:[%s70 + $0xb8] sm:$0xff]
    %1303 = vrot.lane.b32.xlu0 %v1251, 125
    %v1304 = vpop.permute.xlu0 %1303
    %1305 = vrot.lane.b32.xlu0 %v1252, 125
    %v1306 = vpop.permute.xlu0 %1305
    %v1307 = vsel %vm101, %v1304, 0
    %v1309 = vsel %vm101, %v1306, 0
    %1311 = vmatpush.msra.mxu0 0.0
    %1312 = vmatpush.msra.mxu0 0.0
    %1313 = vmatpush.msra.mxu0 0.0
    %1314 = vmatpush.msra.mxu0 0.0
    %1315 = vmatpush.msra.mxu0 0.0
    %1316 = vmatpush.msra.mxu0 0.0
    %1317 = vmatpush.msra.mxu0 0.0
    %1318 = vmatpush.msra.mxu0 0.0
    %1319 = vmatpush.msra.mxu0 0.0
    %1320 = vmatpush.msra.mxu0 0.0
    %1321 = vmatpush.msra.mxu0 %v1297
    %1322 = vmatpush.msra.mxu0 %v1293
    %1323 = vmatpush.msra.mxu0 %v1289
    %1324 = vmatpush.msra.mxu0 %v1285
    %1325 = vmatpush.msra.mxu0 %v1281
    %1326 = vmatpush.msra.mxu0 %v1277
    %1327 = vmatmul.f32.gmra.mxu0 %v1307
    %v1328 = vpop.f32.mrf.mxu0
    %v1329 = vadd.f32 0.0, %v1328
    %1330 = vmatmul.f32.gmra.mxu0 %v1309
    %v1331 = vpop.f32.mrf.mxu0
    %v1332 = vadd.f32 0.0, %v1331
    %1333 = vdwg.mxu0
    %1334 = vmatpush.msra.mxu0 0.0
    %1335 = vmatpush.msra.mxu0 0.0
    %1336 = vmatpush.msra.mxu0 0.0
    %1337 = vmatpush.msra.mxu0 0.0
    %1338 = vmatpush.msra.mxu0 0.0
    %1339 = vmatpush.msra.mxu0 0.0
    %1340 = vmatpush.msra.mxu0 0.0
    %1341 = vmatpush.msra.mxu0 0.0
    %1342 = vmatpush.msra.mxu0 0.0
    %1343 = vmatpush.msra.mxu0 0.0
    %1344 = vmatpush.msra.mxu0 %v1298
    %1345 = vmatpush.msra.mxu0 %v1294
    %1346 = vmatpush.msra.mxu0 %v1290
    %1347 = vmatpush.msra.mxu0 %v1286
    %1348 = vmatpush.msra.mxu0 %v1282
    %1349 = vmatpush.msra.mxu0 %v1278
    %1350 = vmatmul.f32.gmra.mxu0 %v1307
    %v1351 = vpop.f32.mrf.mxu0
    %v1352 = vadd.f32 0.0, %v1351
    %1353 = vmatmul.f32.gmra.mxu0 %v1309
    %v1354 = vpop.f32.mrf.mxu0
    %v1355 = vadd.f32 0.0, %v1354
    %1356 = vdwg.mxu0
    %1357 = vmatpush.msra.mxu0 0.0
    %1358 = vmatpush.msra.mxu0 0.0
    %1359 = vmatpush.msra.mxu0 0.0
    %1360 = vmatpush.msra.mxu0 0.0
    %1361 = vmatpush.msra.mxu0 0.0
    %1362 = vmatpush.msra.mxu0 0.0
    %1363 = vmatpush.msra.mxu0 0.0
    %1364 = vmatpush.msra.mxu0 0.0
    %1365 = vmatpush.msra.mxu0 0.0
    %1366 = vmatpush.msra.mxu0 0.0
    %1367 = vmatpush.msra.mxu0 %v1299
    %1368 = vmatpush.msra.mxu0 %v1295
    %1369 = vmatpush.msra.mxu0 %v1291
    %1370 = vmatpush.msra.mxu0 %v1287
    %1371 = vmatpush.msra.mxu0 %v1283
    %1372 = vmatpush.msra.mxu0 %v1279
    %1373 = vmatmul.f32.gmra.mxu0 %v1307
    %v1374 = vpop.f32.mrf.mxu0
    %v1375 = vadd.f32 0.0, %v1374
    %1376 = vmatmul.f32.gmra.mxu0 %v1309
    %v1377 = vpop.f32.mrf.mxu0
    %v1378 = vadd.f32 0.0, %v1377
    %1379 = vdwg.mxu0
    %1380 = vmatpush.msra.mxu0 0.0
    %1381 = vmatpush.msra.mxu0 0.0
    %1382 = vmatpush.msra.mxu0 0.0
    %1383 = vmatpush.msra.mxu0 0.0
    %1384 = vmatpush.msra.mxu0 0.0
    %1385 = vmatpush.msra.mxu0 0.0
    %1386 = vmatpush.msra.mxu0 0.0
    %1387 = vmatpush.msra.mxu0 0.0
    %1388 = vmatpush.msra.mxu0 0.0
    %1389 = vmatpush.msra.mxu0 0.0
    %1390 = vmatpush.msra.mxu0 %v1300
    %1391 = vmatpush.msra.mxu0 %v1296
    %1392 = vmatpush.msra.mxu0 %v1292
    %1393 = vmatpush.msra.mxu0 %v1288
    %1394 = vmatpush.msra.mxu0 %v1284
    %1395 = vmatpush.msra.mxu0 %v1280
    %1396 = vmatmul.f32.gmra.mxu0 %v1307
    %v1397 = vpop.f32.mrf.mxu0
    %v1398 = vadd.f32 0.0, %v1397
    %1399 = vmatmul.f32.gmra.mxu0 %v1309
    %v1400 = vpop.f32.mrf.mxu0
    %v1401 = vadd.f32 0.0, %v1400
    %1402 = vdwg.mxu0
    %v1403 = vsel %vm101, %v1251, 0
    %v1405 = vsel %vm101, %v1252, 0
    %1407 = vmatpush.msra.mxu0 0.0
    %1408 = vmatpush.msra.mxu0 0.0
    %1409 = vmatpush.msra.mxu0 0.0
    %1410 = vmatpush.msra.mxu0 0.0
    %1411 = vmatpush.msra.mxu0 0.0
    %1412 = vmatpush.msra.mxu0 0.0
    %1413 = vmatpush.msra.mxu0 0.0
    %1414 = vmatpush.msra.mxu0 0.0
    %1415 = vmatpush.msra.mxu0 0.0
    %1416 = vmatpush.msra.mxu0 0.0
    %1417 = vmatpush.msra.mxu0 %v1273
    %1418 = vmatpush.msra.mxu0 %v1269
    %1419 = vmatpush.msra.mxu0 %v1265
    %1420 = vmatpush.msra.mxu0 %v1261
    %1421 = vmatpush.msra.mxu0 %v1257
    %1422 = vmatpush.msra.mxu0 %v1253
    %1423 = vmatmul.f32.gmra.mxu0 %v1403
    %v1424 = vpop.f32.mrf.mxu0
    %v1425 = vadd.f32 %v1329, %v1424
    %1426 = vmatmul.f32.gmra.mxu0 %v1405
    %v1427 = vpop.f32.mrf.mxu0
    %v1428 = vadd.f32 %v1332, %v1427
    %1429 = vdwg.mxu0
    %1430 = vmatpush.msra.mxu0 0.0
    %1431 = vmatpush.msra.mxu0 0.0
    %1432 = vmatpush.msra.mxu0 0.0
    %1433 = vmatpush.msra.mxu0 0.0
    %1434 = vmatpush.msra.mxu0 0.0
    %1435 = vmatpush.msra.mxu0 0.0
    %1436 = vmatpush.msra.mxu0 0.0
    %1437 = vmatpush.msra.mxu0 0.0
    %1438 = vmatpush.msra.mxu0 0.0
    %1439 = vmatpush.msra.mxu0 0.0
    %1440 = vmatpush.msra.mxu0 %v1274
    %1441 = vmatpush.msra.mxu0 %v1270
    %1442 = vmatpush.msra.mxu0 %v1266
    %1443 = vmatpush.msra.mxu0 %v1262
    %1444 = vmatpush.msra.mxu0 %v1258
    %1445 = vmatpush.msra.mxu0 %v1254
    %1446 = vmatmul.f32.gmra.mxu0 %v1403
    %v1447 = vpop.f32.mrf.mxu0
    %v1448 = vadd.f32 %v1352, %v1447
    %1449 = vmatmul.f32.gmra.mxu0 %v1405
    %v1450 = vpop.f32.mrf.mxu0
    %v1451 = vadd.f32 %v1355, %v1450
    %1452 = vdwg.mxu0
    %1453 = vmatpush.msra.mxu0 0.0
    %1454 = vmatpush.msra.mxu0 0.0
    %1455 = vmatpush.msra.mxu0 0.0
    %1456 = vmatpush.msra.mxu0 0.0
    %1457 = vmatpush.msra.mxu0 0.0
    %1458 = vmatpush.msra.mxu0 0.0
    %1459 = vmatpush.msra.mxu0 0.0
    %1460 = vmatpush.msra.mxu0 0.0
    %1461 = vmatpush.msra.mxu0 0.0
    %1462 = vmatpush.msra.mxu0 0.0
    %1463 = vmatpush.msra.mxu0 %v1275
    %1464 = vmatpush.msra.mxu0 %v1271
    %1465 = vmatpush.msra.mxu0 %v1267
    %1466 = vmatpush.msra.mxu0 %v1263
    %1467 = vmatpush.msra.mxu0 %v1259
    %1468 = vmatpush.msra.mxu0 %v1255
    %1469 = vmatmul.f32.gmra.mxu0 %v1403
    %v1470 = vpop.f32.mrf.mxu0
    %v1471 = vadd.f32 %v1375, %v1470
    %1472 = vmatmul.f32.gmra.mxu0 %v1405
    %v1473 = vpop.f32.mrf.mxu0
    %v1474 = vadd.f32 %v1378, %v1473
    %1475 = vdwg.mxu0
    %1476 = vmatpush.msra.mxu0 0.0
    %1477 = vmatpush.msra.mxu0 0.0
    %1478 = vmatpush.msra.mxu0 0.0
    %1479 = vmatpush.msra.mxu0 0.0
    %1480 = vmatpush.msra.mxu0 0.0
    %1481 = vmatpush.msra.mxu0 0.0
    %1482 = vmatpush.msra.mxu0 0.0
    %1483 = vmatpush.msra.mxu0 0.0
    %1484 = vmatpush.msra.mxu0 0.0
    %1485 = vmatpush.msra.mxu0 0.0
    %1486 = vmatpush.msra.mxu0 %v1276
    %1487 = vmatpush.msra.mxu0 %v1272
    %1488 = vmatpush.msra.mxu0 %v1268
    %1489 = vmatpush.msra.mxu0 %v1264
    %1490 = vmatpush.msra.mxu0 %v1260
    %1491 = vmatpush.msra.mxu0 %v1256
    %1492 = vmatmul.f32.gmra.mxu0 %v1403
    %v1493 = vpop.f32.mrf.mxu0
    %v1494 = vadd.f32 %v1398, %v1493
    %1495 = vmatmul.f32.gmra.mxu0 %v1405
    %v1496 = vpop.f32.mrf.mxu0
    %v1497 = vadd.f32 %v1401, %v1496
    %1498 = vdwg.mxu0
    %v1499 = vld [vmem:[%s294] sm:$0xff]
    %v1500 = vld [vmem:[%s294 + $0x8] sm:$0xff]
    %v1501 = vld [vmem:[%s294 + $0x10] sm:$0xff]
    %v1502 = vld [vmem:[%s294 + $0x18] sm:$0xff]
    %v1503 = vld [vmem:[%s294 + $0x20] sm:$0xff]
    %v1504 = vld [vmem:[%s294 + $0x28] sm:$0xff]
    %v1505 = vld [vmem:[%s294 + $0x30] sm:$0xff]
    %v1506 = vld [vmem:[%s294 + $0x38] sm:$0xff]
    %v1507 = vld [vmem:[%s294 + $0x40] sm:$0xff]
    %v1508 = vld [vmem:[%s294 + $0x48] sm:$0xff]
    %v1509 = vld [vmem:[%s294 + $0x50] sm:$0xff]
    %v1510 = vld [vmem:[%s294 + $0x58] sm:$0xff]
    %v1511 = vld [vmem:[%s294 + $0x60] sm:$0xff]
    %v1512 = vld [vmem:[%s294 + $0x68] sm:$0xff]
    %v1513 = vld [vmem:[%s294 + $0x70] sm:$0xff]
    %v1514 = vld [vmem:[%s294 + $0x78] sm:$0xff]
    %v1515 = vld [vmem:[%s294 + $0x80] sm:$0xff]
    %v1516 = vld [vmem:[%s294 + $0x88] sm:$0xff]
    %v1517 = vld [vmem:[%s294 + $0x90] sm:$0xff]
    %v1518 = vld [vmem:[%s294 + $0x98] sm:$0xff]
    %v1519 = vld [vmem:[%s294 + $0xa0] sm:$0xff]
    %v1520 = vld [vmem:[%s294 + $0xa8] sm:$0xff]
    %v1521 = vld [vmem:[%s294 + $0xb0] sm:$0xff]
    %v1522 = vld [vmem:[%s294 + $0xb8] sm:$0xff]
    %1523 = vrot.lane.b32.xlu0 %v1251, 122
    %v1524 = vpop.permute.xlu0 %1523
    %1525 = vrot.lane.b32.xlu0 %v1252, 122
    %v1526 = vpop.permute.xlu0 %1525
    %v1527 = vsel %vm101, %v1524, 0
    %v1529 = vsel %vm101, %v1526, 0
    %1531 = vmatpush.msra.mxu0 0.0
    %1532 = vmatpush.msra.mxu0 0.0
    %1533 = vmatpush.msra.mxu0 0.0
    %1534 = vmatpush.msra.mxu0 0.0
    %1535 = vmatpush.msra.mxu0 0.0
    %1536 = vmatpush.msra.mxu0 0.0
    %1537 = vmatpush.msra.mxu0 0.0
    %1538 = vmatpush.msra.mxu0 0.0
    %1539 = vmatpush.msra.mxu0 0.0
    %1540 = vmatpush.msra.mxu0 0.0
    %1541 = vmatpush.msra.mxu0 %v1519
    %1542 = vmatpush.msra.mxu0 %v1515
    %1543 = vmatpush.msra.mxu0 %v1511
    %1544 = vmatpush.msra.mxu0 %v1507
    %1545 = vmatpush.msra.mxu0 %v1503
    %1546 = vmatpush.msra.mxu0 %v1499
    %1547 = vmatmul.f32.gmra.mxu0 %v1527
    %v1548 = vpop.f32.mrf.mxu0
    %v1549 = vadd.f32 0.0, %v1548
    %1550 = vmatmul.f32.gmra.mxu0 %v1529
    %v1551 = vpop.f32.mrf.mxu0
    %v1552 = vadd.f32 0.0, %v1551
    %1553 = vdwg.mxu0
    %1554 = vmatpush.msra.mxu0 0.0
    %1555 = vmatpush.msra.mxu0 0.0
    %1556 = vmatpush.msra.mxu0 0.0
    %1557 = vmatpush.msra.mxu0 0.0
    %1558 = vmatpush.msra.mxu0 0.0
    %1559 = vmatpush.msra.mxu0 0.0
    %1560 = vmatpush.msra.mxu0 0.0
    %1561 = vmatpush.msra.mxu0 0.0
    %1562 = vmatpush.msra.mxu0 0.0
    %1563 = vmatpush.msra.mxu0 0.0
    %1564 = vmatpush.msra.mxu0 %v1520
    %1565 = vmatpush.msra.mxu0 %v1516
    %1566 = vmatpush.msra.mxu0 %v1512
    %1567 = vmatpush.msra.mxu0 %v1508
    %1568 = vmatpush.msra.mxu0 %v1504
    %1569 = vmatpush.msra.mxu0 %v1500
    %1570 = vmatmul.f32.gmra.mxu0 %v1527
    %v1571 = vpop.f32.mrf.mxu0
    %v1572 = vadd.f32 0.0, %v1571
    %1573 = vmatmul.f32.gmra.mxu0 %v1529
    %v1574 = vpop.f32.mrf.mxu0
    %v1575 = vadd.f32 0.0, %v1574
    %1576 = vdwg.mxu0
    %1577 = vmatpush.msra.mxu0 0.0
    %1578 = vmatpush.msra.mxu0 0.0
    %1579 = vmatpush.msra.mxu0 0.0
    %1580 = vmatpush.msra.mxu0 0.0
    %1581 = vmatpush.msra.mxu0 0.0
    %1582 = vmatpush.msra.mxu0 0.0
    %1583 = vmatpush.msra.mxu0 0.0
    %1584 = vmatpush.msra.mxu0 0.0
    %1585 = vmatpush.msra.mxu0 0.0
    %1586 = vmatpush.msra.mxu0 0.0
    %1587 = vmatpush.msra.mxu0 %v1521
    %1588 = vmatpush.msra.mxu0 %v1517
    %1589 = vmatpush.msra.mxu0 %v1513
    %1590 = vmatpush.msra.mxu0 %v1509
    %1591 = vmatpush.msra.mxu0 %v1505
    %1592 = vmatpush.msra.mxu0 %v1501
    %1593 = vmatmul.f32.gmra.mxu0 %v1527
    %v1594 = vpop.f32.mrf.mxu0
    %v1595 = vadd.f32 0.0, %v1594
    %1596 = vmatmul.f32.gmra.mxu0 %v1529
    %v1597 = vpop.f32.mrf.mxu0
    %v1598 = vadd.f32 0.0, %v1597
    %1599 = vdwg.mxu0
    %1600 = vmatpush.msra.mxu0 0.0
    %1601 = vmatpush.msra.mxu0 0.0
    %1602 = vmatpush.msra.mxu0 0.0
    %1603 = vmatpush.msra.mxu0 0.0
    %1604 = vmatpush.msra.mxu0 0.0
    %1605 = vmatpush.msra.mxu0 0.0
    %1606 = vmatpush.msra.mxu0 0.0
    %1607 = vmatpush.msra.mxu0 0.0
    %1608 = vmatpush.msra.mxu0 0.0
    %1609 = vmatpush.msra.mxu0 0.0
    %1610 = vmatpush.msra.mxu0 %v1522
    %1611 = vmatpush.msra.mxu0 %v1518
    %1612 = vmatpush.msra.mxu0 %v1514
    %1613 = vmatpush.msra.mxu0 %v1510
    %1614 = vmatpush.msra.mxu0 %v1506
    %1615 = vmatpush.msra.mxu0 %v1502
    %1616 = vmatmul.f32.gmra.mxu0 %v1527
    %v1617 = vpop.f32.mrf.mxu0
    %v1618 = vadd.f32 0.0, %v1617
    %1619 = vmatmul.f32.gmra.mxu0 %v1529
    %v1620 = vpop.f32.mrf.mxu0
    %v1621 = vadd.f32 0.0, %v1620
    %1622 = vdwg.mxu0
    %v1623 = vadd.f32 %v1425, %v1549
    %v1624 = vadd.f32 %v1448, %v1572
    %v1625 = vadd.f32 %v1471, %v1595
    %v1626 = vadd.f32 %v1494, %v1618
    %v1627 = vadd.f32 %v1428, %v1552
    %v1628 = vadd.f32 %v1451, %v1575
    %v1629 = vadd.f32 %v1474, %v1598
    %v1630 = vadd.f32 %v1497, %v1621
    %v1631 = vld [vmem:[%s0 + $0x13] sm:$0xff]
    %v1632 = vld [vmem:[%s0 + $0x1b] sm:$0xff]
    %v1633 = vld [vmem:[%s429] sm:$0xff]
    %v1634 = vld [vmem:[%s429 + $0x8] sm:$0xff]
    %v1635 = vld [vmem:[%s429 + $0x10] sm:$0xff]
    %v1636 = vld [vmem:[%s429 + $0x18] sm:$0xff]
    %v1637 = vld [vmem:[%s429 + $0x20] sm:$0xff]
    %v1638 = vld [vmem:[%s429 + $0x28] sm:$0xff]
    %v1639 = vld [vmem:[%s429 + $0x30] sm:$0xff]
    %v1640 = vld [vmem:[%s429 + $0x38] sm:$0xff]
    %v1641 = vld [vmem:[%s429 + $0x40] sm:$0xff]
    %v1642 = vld [vmem:[%s429 + $0x48] sm:$0xff]
    %v1643 = vld [vmem:[%s429 + $0x50] sm:$0xff]
    %v1644 = vld [vmem:[%s429 + $0x58] sm:$0xff]
    %v1645 = vld [vmem:[%s429 + $0x60] sm:$0xff]
    %v1646 = vld [vmem:[%s429 + $0x68] sm:$0xff]
    %v1647 = vld [vmem:[%s429 + $0x70] sm:$0xff]
    %v1648 = vld [vmem:[%s429 + $0x78] sm:$0xff]
    %v1649 = vld [vmem:[%s429 + $0x80] sm:$0xff]
    %v1650 = vld [vmem:[%s429 + $0x88] sm:$0xff]
    %v1651 = vld [vmem:[%s429 + $0x90] sm:$0xff]
    %v1652 = vld [vmem:[%s429 + $0x98] sm:$0xff]
    %v1653 = vld [vmem:[%s429 + $0xa0] sm:$0xff]
    %v1654 = vld [vmem:[%s429 + $0xa8] sm:$0xff]
    %v1655 = vld [vmem:[%s429 + $0xb0] sm:$0xff]
    %v1656 = vld [vmem:[%s429 + $0xb8] sm:$0xff]
    %v1658 = vsel %vm101, %v1631, 0
    %v1661 = vsel %vm101, %v1632, 0
    %1663 = vmatpush.msra.mxu0 0.0
    %1664 = vmatpush.msra.mxu0 0.0
    %1665 = vmatpush.msra.mxu0 0.0
    %1666 = vmatpush.msra.mxu0 0.0
    %1667 = vmatpush.msra.mxu0 0.0
    %1668 = vmatpush.msra.mxu0 0.0
    %1669 = vmatpush.msra.mxu0 0.0
    %1670 = vmatpush.msra.mxu0 0.0
    %1671 = vmatpush.msra.mxu0 0.0
    %1672 = vmatpush.msra.mxu0 0.0
    %1673 = vmatpush.msra.mxu0 %v1653
    %1674 = vmatpush.msra.mxu0 %v1649
    %1675 = vmatpush.msra.mxu0 %v1645
    %1676 = vmatpush.msra.mxu0 %v1641
    %1677 = vmatpush.msra.mxu0 %v1637
    %1678 = vmatpush.msra.mxu0 %v1633
    %1679 = vmatmul.f32.gmra.mxu0 %v1658
    %v1680 = vpop.f32.mrf.mxu0
    %v1681 = vadd.f32 0.0, %v1680
    %1682 = vmatmul.f32.gmra.mxu0 %v1661
    %v1683 = vpop.f32.mrf.mxu0
    %v1684 = vadd.f32 0.0, %v1683
    %1685 = vdwg.mxu0
    %1686 = vmatpush.msra.mxu0 0.0
    %1687 = vmatpush.msra.mxu0 0.0
    %1688 = vmatpush.msra.mxu0 0.0
    %1689 = vmatpush.msra.mxu0 0.0
    %1690 = vmatpush.msra.mxu0 0.0
    %1691 = vmatpush.msra.mxu0 0.0
    %1692 = vmatpush.msra.mxu0 0.0
    %1693 = vmatpush.msra.mxu0 0.0
    %1694 = vmatpush.msra.mxu0 0.0
    %1695 = vmatpush.msra.mxu0 0.0
    %1696 = vmatpush.msra.mxu0 %v1654
    %1697 = vmatpush.msra.mxu0 %v1650
    %1698 = vmatpush.msra.mxu0 %v1646
    %1699 = vmatpush.msra.mxu0 %v1642
    %1700 = vmatpush.msra.mxu0 %v1638
    %1701 = vmatpush.msra.mxu0 %v1634
    %1702 = vmatmul.f32.gmra.mxu0 %v1658
    %v1703 = vpop.f32.mrf.mxu0
    %v1704 = vadd.f32 0.0, %v1703
    %1705 = vmatmul.f32.gmra.mxu0 %v1661
    %v1706 = vpop.f32.mrf.mxu0
    %v1707 = vadd.f32 0.0, %v1706
    %1708 = vdwg.mxu0
    %1709 = vmatpush.msra.mxu0 0.0
    %1710 = vmatpush.msra.mxu0 0.0
    %1711 = vmatpush.msra.mxu0 0.0
    %1712 = vmatpush.msra.mxu0 0.0
    %1713 = vmatpush.msra.mxu0 0.0
    %1714 = vmatpush.msra.mxu0 0.0
    %1715 = vmatpush.msra.mxu0 0.0
    %1716 = vmatpush.msra.mxu0 0.0
    %1717 = vmatpush.msra.mxu0 0.0
    %1718 = vmatpush.msra.mxu0 0.0
    %1719 = vmatpush.msra.mxu0 %v1655
    %1720 = vmatpush.msra.mxu0 %v1651
    %1721 = vmatpush.msra.mxu0 %v1647
    %1722 = vmatpush.msra.mxu0 %v1643
    %1723 = vmatpush.msra.mxu0 %v1639
    %1724 = vmatpush.msra.mxu0 %v1635
    %1725 = vmatmul.f32.gmra.mxu0 %v1658
    %v1726 = vpop.f32.mrf.mxu0
    %v1727 = vadd.f32 0.0, %v1726
    %1728 = vmatmul.f32.gmra.mxu0 %v1661
    %v1729 = vpop.f32.mrf.mxu0
    %v1730 = vadd.f32 0.0, %v1729
    %1731 = vdwg.mxu0
    %1732 = vmatpush.msra.mxu0 0.0
    %1733 = vmatpush.msra.mxu0 0.0
    %1734 = vmatpush.msra.mxu0 0.0
    %1735 = vmatpush.msra.mxu0 0.0
    %1736 = vmatpush.msra.mxu0 0.0
    %1737 = vmatpush.msra.mxu0 0.0
    %1738 = vmatpush.msra.mxu0 0.0
    %1739 = vmatpush.msra.mxu0 0.0
    %1740 = vmatpush.msra.mxu0 0.0
    %1741 = vmatpush.msra.mxu0 0.0
    %1742 = vmatpush.msra.mxu0 %v1656
    %1743 = vmatpush.msra.mxu0 %v1652
    %1744 = vmatpush.msra.mxu0 %v1648
    %1745 = vmatpush.msra.mxu0 %v1644
    %1746 = vmatpush.msra.mxu0 %v1640
    %1747 = vmatpush.msra.mxu0 %v1636
    %1748 = vmatmul.f32.gmra.mxu0 %v1658
    %v1749 = vpop.f32.mrf.mxu0
    %v1750 = vadd.f32 0.0, %v1749
    %1751 = vmatmul.f32.gmra.mxu0 %v1661
    %v1752 = vpop.f32.mrf.mxu0
    %v1753 = vadd.f32 0.0, %v1752
    %1754 = vdwg.mxu0
    %v1755 = vadd.f32 %v1623, %v1681
    %v1756 = vadd.f32 %v1624, %v1704
    %v1757 = vadd.f32 %v1625, %v1727
    %v1758 = vadd.f32 %v1626, %v1750
    %v1759 = vadd.f32 %v1627, %v1684
    %v1760 = vadd.f32 %v1628, %v1707
    %v1761 = vadd.f32 %v1629, %v1730
    %v1762 = vadd.f32 %v1630, %v1753
    %v1763 = vld [vmem:[%s560] sm:$0xff]
    %v1764 = vld [vmem:[%s560 + $0x8] sm:$0xff]
    %v1765 = vld [vmem:[%s560 + $0x10] sm:$0xff]
    %v1766 = vld [vmem:[%s560 + $0x18] sm:$0xff]
    %v1767 = vld [vmem:[%s560 + $0x20] sm:$0xff]
    %v1768 = vld [vmem:[%s560 + $0x28] sm:$0xff]
    %v1769 = vld [vmem:[%s560 + $0x30] sm:$0xff]
    %v1770 = vld [vmem:[%s560 + $0x38] sm:$0xff]
    %v1771 = vld [vmem:[%s560 + $0x40] sm:$0xff]
    %v1772 = vld [vmem:[%s560 + $0x48] sm:$0xff]
    %v1773 = vld [vmem:[%s560 + $0x50] sm:$0xff]
    %v1774 = vld [vmem:[%s560 + $0x58] sm:$0xff]
    %v1775 = vld [vmem:[%s560 + $0x60] sm:$0xff]
    %v1776 = vld [vmem:[%s560 + $0x68] sm:$0xff]
    %v1777 = vld [vmem:[%s560 + $0x70] sm:$0xff]
    %v1778 = vld [vmem:[%s560 + $0x78] sm:$0xff]
    %v1779 = vld [vmem:[%s560 + $0x80] sm:$0xff]
    %v1780 = vld [vmem:[%s560 + $0x88] sm:$0xff]
    %v1781 = vld [vmem:[%s560 + $0x90] sm:$0xff]
    %v1782 = vld [vmem:[%s560 + $0x98] sm:$0xff]
    %v1783 = vld [vmem:[%s560 + $0xa0] sm:$0xff]
    %v1784 = vld [vmem:[%s560 + $0xa8] sm:$0xff]
    %v1785 = vld [vmem:[%s560 + $0xb0] sm:$0xff]
    %v1786 = vld [vmem:[%s560 + $0xb8] sm:$0xff]
    %1787 = vrot.lane.b32.xlu0 %v1631, 125
    %v1788 = vpop.permute.xlu0 %1787
    %1789 = vrot.lane.b32.xlu0 %v1632, 125
    %v1790 = vpop.permute.xlu0 %1789
    %v1791 = vsel %vm101, %v1788, 0
    %v1793 = vsel %vm101, %v1790, 0
    %1795 = vmatpush.msra.mxu0 0.0
    %1796 = vmatpush.msra.mxu0 0.0
    %1797 = vmatpush.msra.mxu0 0.0
    %1798 = vmatpush.msra.mxu0 0.0
    %1799 = vmatpush.msra.mxu0 0.0
    %1800 = vmatpush.msra.mxu0 0.0
    %1801 = vmatpush.msra.mxu0 0.0
    %1802 = vmatpush.msra.mxu0 0.0
    %1803 = vmatpush.msra.mxu0 0.0
    %1804 = vmatpush.msra.mxu0 0.0
    %1805 = vmatpush.msra.mxu0 %v1783
    %1806 = vmatpush.msra.mxu0 %v1779
    %1807 = vmatpush.msra.mxu0 %v1775
    %1808 = vmatpush.msra.mxu0 %v1771
    %1809 = vmatpush.msra.mxu0 %v1767
    %1810 = vmatpush.msra.mxu0 %v1763
    %1811 = vmatmul.f32.gmra.mxu0 %v1791
    %v1812 = vpop.f32.mrf.mxu0
    %v1813 = vadd.f32 0.0, %v1812
    %1814 = vmatmul.f32.gmra.mxu0 %v1793
    %v1815 = vpop.f32.mrf.mxu0
    %v1816 = vadd.f32 0.0, %v1815
    %1817 = vdwg.mxu0
    %1818 = vmatpush.msra.mxu0 0.0
    %1819 = vmatpush.msra.mxu0 0.0
    %1820 = vmatpush.msra.mxu0 0.0
    %1821 = vmatpush.msra.mxu0 0.0
    %1822 = vmatpush.msra.mxu0 0.0
    %1823 = vmatpush.msra.mxu0 0.0
    %1824 = vmatpush.msra.mxu0 0.0
    %1825 = vmatpush.msra.mxu0 0.0
    %1826 = vmatpush.msra.mxu0 0.0
    %1827 = vmatpush.msra.mxu0 0.0
    %1828 = vmatpush.msra.mxu0 %v1784
    %1829 = vmatpush.msra.mxu0 %v1780
    %1830 = vmatpush.msra.mxu0 %v1776
    %1831 = vmatpush.msra.mxu0 %v1772
    %1832 = vmatpush.msra.mxu0 %v1768
    %1833 = vmatpush.msra.mxu0 %v1764
    %1834 = vmatmul.f32.gmra.mxu0 %v1791
    %v1835 = vpop.f32.mrf.mxu0
    %v1836 = vadd.f32 0.0, %v1835
    %1837 = vmatmul.f32.gmra.mxu0 %v1793
    %v1838 = vpop.f32.mrf.mxu0
    %v1839 = vadd.f32 0.0, %v1838
    %1840 = vdwg.mxu0
    %1841 = vmatpush.msra.mxu0 0.0
    %1842 = vmatpush.msra.mxu0 0.0
    %1843 = vmatpush.msra.mxu0 0.0
    %1844 = vmatpush.msra.mxu0 0.0
    %1845 = vmatpush.msra.mxu0 0.0
    %1846 = vmatpush.msra.mxu0 0.0
    %1847 = vmatpush.msra.mxu0 0.0
    %1848 = vmatpush.msra.mxu0 0.0
    %1849 = vmatpush.msra.mxu0 0.0
    %1850 = vmatpush.msra.mxu0 0.0
    %1851 = vmatpush.msra.mxu0 %v1785
    %1852 = vmatpush.msra.mxu0 %v1781
    %1853 = vmatpush.msra.mxu0 %v1777
    %1854 = vmatpush.msra.mxu0 %v1773
    %1855 = vmatpush.msra.mxu0 %v1769
    %1856 = vmatpush.msra.mxu0 %v1765
    %1857 = vmatmul.f32.gmra.mxu0 %v1791
    %v1858 = vpop.f32.mrf.mxu0
    %v1859 = vadd.f32 0.0, %v1858
    %1860 = vmatmul.f32.gmra.mxu0 %v1793
    %v1861 = vpop.f32.mrf.mxu0
    %v1862 = vadd.f32 0.0, %v1861
    %1863 = vdwg.mxu0
    %1864 = vmatpush.msra.mxu0 0.0
    %1865 = vmatpush.msra.mxu0 0.0
    %1866 = vmatpush.msra.mxu0 0.0
    %1867 = vmatpush.msra.mxu0 0.0
    %1868 = vmatpush.msra.mxu0 0.0
    %1869 = vmatpush.msra.mxu0 0.0
    %1870 = vmatpush.msra.mxu0 0.0
    %1871 = vmatpush.msra.mxu0 0.0
    %1872 = vmatpush.msra.mxu0 0.0
    %1873 = vmatpush.msra.mxu0 0.0
    %1874 = vmatpush.msra.mxu0 %v1786
    %1875 = vmatpush.msra.mxu0 %v1782
    %1876 = vmatpush.msra.mxu0 %v1778
    %1877 = vmatpush.msra.mxu0 %v1774
    %1878 = vmatpush.msra.mxu0 %v1770
    %1879 = vmatpush.msra.mxu0 %v1766
    %1880 = vmatmul.f32.gmra.mxu0 %v1791
    %v1881 = vpop.f32.mrf.mxu0
    %v1882 = vadd.f32 0.0, %v1881
    %1883 = vmatmul.f32.gmra.mxu0 %v1793
    %v1884 = vpop.f32.mrf.mxu0
    %v1885 = vadd.f32 0.0, %v1884
    %1886 = vdwg.mxu0
    %v1887 = vadd.f32 %v1755, %v1813
    %v1888 = vadd.f32 %v1756, %v1836
    %v1889 = vadd.f32 %v1757, %v1859
    %v1890 = vadd.f32 %v1758, %v1882
    %v1891 = vadd.f32 %v1759, %v1816
    %v1892 = vadd.f32 %v1760, %v1839
    %v1893 = vadd.f32 %v1761, %v1862
    %v1894 = vadd.f32 %v1762, %v1885
    %v1895 = vld [vmem:[%s693] sm:$0xff]
    %v1896 = vld [vmem:[%s693 + $0x8] sm:$0xff]
    %v1897 = vld [vmem:[%s693 + $0x10] sm:$0xff]
    %v1898 = vld [vmem:[%s693 + $0x18] sm:$0xff]
    %v1899 = vld [vmem:[%s693 + $0x20] sm:$0xff]
    %v1900 = vld [vmem:[%s693 + $0x28] sm:$0xff]
    %v1901 = vld [vmem:[%s693 + $0x30] sm:$0xff]
    %v1902 = vld [vmem:[%s693 + $0x38] sm:$0xff]
    %v1903 = vld [vmem:[%s693 + $0x40] sm:$0xff]
    %v1904 = vld [vmem:[%s693 + $0x48] sm:$0xff]
    %v1905 = vld [vmem:[%s693 + $0x50] sm:$0xff]
    %v1906 = vld [vmem:[%s693 + $0x58] sm:$0xff]
    %v1907 = vld [vmem:[%s693 + $0x60] sm:$0xff]
    %v1908 = vld [vmem:[%s693 + $0x68] sm:$0xff]
    %v1909 = vld [vmem:[%s693 + $0x70] sm:$0xff]
    %v1910 = vld [vmem:[%s693 + $0x78] sm:$0xff]
    %v1911 = vld [vmem:[%s693 + $0x80] sm:$0xff]
    %v1912 = vld [vmem:[%s693 + $0x88] sm:$0xff]
    %v1913 = vld [vmem:[%s693 + $0x90] sm:$0xff]
    %v1914 = vld [vmem:[%s693 + $0x98] sm:$0xff]
    %v1915 = vld [vmem:[%s693 + $0xa0] sm:$0xff]
    %v1916 = vld [vmem:[%s693 + $0xa8] sm:$0xff]
    %v1917 = vld [vmem:[%s693 + $0xb0] sm:$0xff]
    %v1918 = vld [vmem:[%s693 + $0xb8] sm:$0xff]
    %1919 = vrot.lane.b32.xlu0 %v1631, 122
    %v1920 = vpop.permute.xlu0 %1919
    %1921 = vrot.lane.b32.xlu0 %v1632, 122
    %v1922 = vpop.permute.xlu0 %1921
    %v1923 = vsel %vm101, %v1920, 0
    %v1925 = vsel %vm101, %v1922, 0
    %1927 = vmatpush.msra.mxu0 0.0
    %1928 = vmatpush.msra.mxu0 0.0
    %1929 = vmatpush.msra.mxu0 0.0
    %1930 = vmatpush.msra.mxu0 0.0
    %1931 = vmatpush.msra.mxu0 0.0
    %1932 = vmatpush.msra.mxu0 0.0
    %1933 = vmatpush.msra.mxu0 0.0
    %1934 = vmatpush.msra.mxu0 0.0
    %1935 = vmatpush.msra.mxu0 0.0
    %1936 = vmatpush.msra.mxu0 0.0
    %1937 = vmatpush.msra.mxu0 %v1915
    %1938 = vmatpush.msra.mxu0 %v1911
    %1939 = vmatpush.msra.mxu0 %v1907
    %1940 = vmatpush.msra.mxu0 %v1903
    %1941 = vmatpush.msra.mxu0 %v1899
    %1942 = vmatpush.msra.mxu0 %v1895
    %1943 = vmatmul.f32.gmra.mxu0 %v1923
    %v1944 = vpop.f32.mrf.mxu0
    %v1945 = vadd.f32 0.0, %v1944
    %1946 = vmatmul.f32.gmra.mxu0 %v1925
    %v1947 = vpop.f32.mrf.mxu0
    %v1948 = vadd.f32 0.0, %v1947
    %1949 = vdwg.mxu0
    %1950 = vmatpush.msra.mxu0 0.0
    %1951 = vmatpush.msra.mxu0 0.0
    %1952 = vmatpush.msra.mxu0 0.0
    %1953 = vmatpush.msra.mxu0 0.0
    %1954 = vmatpush.msra.mxu0 0.0
    %1955 = vmatpush.msra.mxu0 0.0
    %1956 = vmatpush.msra.mxu0 0.0
    %1957 = vmatpush.msra.mxu0 0.0
    %1958 = vmatpush.msra.mxu0 0.0
    %1959 = vmatpush.msra.mxu0 0.0
    %1960 = vmatpush.msra.mxu0 %v1916
    %1961 = vmatpush.msra.mxu0 %v1912
    %1962 = vmatpush.msra.mxu0 %v1908
    %1963 = vmatpush.msra.mxu0 %v1904
    %1964 = vmatpush.msra.mxu0 %v1900
    %1965 = vmatpush.msra.mxu0 %v1896
    %1966 = vmatmul.f32.gmra.mxu0 %v1923
    %v1967 = vpop.f32.mrf.mxu0
    %v1968 = vadd.f32 0.0, %v1967
    %1969 = vmatmul.f32.gmra.mxu0 %v1925
    %v1970 = vpop.f32.mrf.mxu0
    %v1971 = vadd.f32 0.0, %v1970
    %1972 = vdwg.mxu0
    %1973 = vmatpush.msra.mxu0 0.0
    %1974 = vmatpush.msra.mxu0 0.0
    %1975 = vmatpush.msra.mxu0 0.0
    %1976 = vmatpush.msra.mxu0 0.0
    %1977 = vmatpush.msra.mxu0 0.0
    %1978 = vmatpush.msra.mxu0 0.0
    %1979 = vmatpush.msra.mxu0 0.0
    %1980 = vmatpush.msra.mxu0 0.0
    %1981 = vmatpush.msra.mxu0 0.0
    %1982 = vmatpush.msra.mxu0 0.0
    %1983 = vmatpush.msra.mxu0 %v1917
    %1984 = vmatpush.msra.mxu0 %v1913
    %1985 = vmatpush.msra.mxu0 %v1909
    %1986 = vmatpush.msra.mxu0 %v1905
    %1987 = vmatpush.msra.mxu0 %v1901
    %1988 = vmatpush.msra.mxu0 %v1897
    %1989 = vmatmul.f32.gmra.mxu0 %v1923
    %v1990 = vpop.f32.mrf.mxu0
    %v1991 = vadd.f32 0.0, %v1990
    %1992 = vmatmul.f32.gmra.mxu0 %v1925
    %v1993 = vpop.f32.mrf.mxu0
    %v1994 = vadd.f32 0.0, %v1993
    %1995 = vdwg.mxu0
    %1996 = vmatpush.msra.mxu0 0.0
    %1997 = vmatpush.msra.mxu0 0.0
    %1998 = vmatpush.msra.mxu0 0.0
    %1999 = vmatpush.msra.mxu0 0.0
    %2000 = vmatpush.msra.mxu0 0.0
    %2001 = vmatpush.msra.mxu0 0.0
    %2002 = vmatpush.msra.mxu0 0.0
    %2003 = vmatpush.msra.mxu0 0.0
    %2004 = vmatpush.msra.mxu0 0.0
    %2005 = vmatpush.msra.mxu0 0.0
    %2006 = vmatpush.msra.mxu0 %v1918
    %2007 = vmatpush.msra.mxu0 %v1914
    %2008 = vmatpush.msra.mxu0 %v1910
    %2009 = vmatpush.msra.mxu0 %v1906
    %2010 = vmatpush.msra.mxu0 %v1902
    %2011 = vmatpush.msra.mxu0 %v1898
    %2012 = vmatmul.f32.gmra.mxu0 %v1923
    %v2013 = vpop.f32.mrf.mxu0
    %v2014 = vadd.f32 0.0, %v2013
    %2015 = vmatmul.f32.gmra.mxu0 %v1925
    %v2016 = vpop.f32.mrf.mxu0
    %v2017 = vadd.f32 0.0, %v2016
    %2018 = vdwg.mxu0
    %v2019 = vadd.f32 %v1887, %v1945
    %v2020 = vadd.f32 %v1888, %v1968
    %v2021 = vadd.f32 %v1889, %v1991
    %v2022 = vadd.f32 %v1890, %v2014
    %v2023 = vadd.f32 %v1891, %v1948
    %v2024 = vadd.f32 %v1892, %v1971
    %v2025 = vadd.f32 %v1893, %v1994
    %v2026 = vadd.f32 %v1894, %v2017
    %v2027 = vld [vmem:[%s0 + $0x14] sm:$0xff]
    %v2028 = vld [vmem:[%s0 + $0x1c] sm:$0xff]
    %v2029 = vld [vmem:[%s828] sm:$0xff]
    %v2030 = vld [vmem:[%s828 + $0x8] sm:$0xff]
    %v2031 = vld [vmem:[%s828 + $0x10] sm:$0xff]
    %v2032 = vld [vmem:[%s828 + $0x18] sm:$0xff]
    %v2033 = vld [vmem:[%s828 + $0x20] sm:$0xff]
    %v2034 = vld [vmem:[%s828 + $0x28] sm:$0xff]
    %v2035 = vld [vmem:[%s828 + $0x30] sm:$0xff]
    %v2036 = vld [vmem:[%s828 + $0x38] sm:$0xff]
    %v2037 = vld [vmem:[%s828 + $0x40] sm:$0xff]
    %v2038 = vld [vmem:[%s828 + $0x48] sm:$0xff]
    %v2039 = vld [vmem:[%s828 + $0x50] sm:$0xff]
    %v2040 = vld [vmem:[%s828 + $0x58] sm:$0xff]
    %v2041 = vld [vmem:[%s828 + $0x60] sm:$0xff]
    %v2042 = vld [vmem:[%s828 + $0x68] sm:$0xff]
    %v2043 = vld [vmem:[%s828 + $0x70] sm:$0xff]
    %v2044 = vld [vmem:[%s828 + $0x78] sm:$0xff]
    %v2045 = vld [vmem:[%s828 + $0x80] sm:$0xff]
    %v2046 = vld [vmem:[%s828 + $0x88] sm:$0xff]
    %v2047 = vld [vmem:[%s828 + $0x90] sm:$0xff]
    %v2048 = vld [vmem:[%s828 + $0x98] sm:$0xff]
    %v2049 = vld [vmem:[%s828 + $0xa0] sm:$0xff]
    %v2050 = vld [vmem:[%s828 + $0xa8] sm:$0xff]
    %v2051 = vld [vmem:[%s828 + $0xb0] sm:$0xff]
    %v2052 = vld [vmem:[%s828 + $0xb8] sm:$0xff]
    %v2054 = vsel %vm101, %v2027, 0
    %v2057 = vsel %vm101, %v2028, 0
    %2059 = vmatpush.msra.mxu0 0.0
    %2060 = vmatpush.msra.mxu0 0.0
    %2061 = vmatpush.msra.mxu0 0.0
    %2062 = vmatpush.msra.mxu0 0.0
    %2063 = vmatpush.msra.mxu0 0.0
    %2064 = vmatpush.msra.mxu0 0.0
    %2065 = vmatpush.msra.mxu0 0.0
    %2066 = vmatpush.msra.mxu0 0.0
    %2067 = vmatpush.msra.mxu0 0.0
    %2068 = vmatpush.msra.mxu0 0.0
    %2069 = vmatpush.msra.mxu0 %v2049
    %2070 = vmatpush.msra.mxu0 %v2045
    %2071 = vmatpush.msra.mxu0 %v2041
    %2072 = vmatpush.msra.mxu0 %v2037
    %2073 = vmatpush.msra.mxu0 %v2033
    %2074 = vmatpush.msra.mxu0 %v2029
    %2075 = vmatmul.f32.gmra.mxu0 %v2054
    %v2076 = vpop.f32.mrf.mxu0
    %v2077 = vadd.f32 0.0, %v2076
    %2078 = vmatmul.f32.gmra.mxu0 %v2057
    %v2079 = vpop.f32.mrf.mxu0
    %v2080 = vadd.f32 0.0, %v2079
    %2081 = vdwg.mxu0
    %2082 = vmatpush.msra.mxu0 0.0
    %2083 = vmatpush.msra.mxu0 0.0
    %2084 = vmatpush.msra.mxu0 0.0
    %2085 = vmatpush.msra.mxu0 0.0
    %2086 = vmatpush.msra.mxu0 0.0
    %2087 = vmatpush.msra.mxu0 0.0
    %2088 = vmatpush.msra.mxu0 0.0
    %2089 = vmatpush.msra.mxu0 0.0
    %2090 = vmatpush.msra.mxu0 0.0
    %2091 = vmatpush.msra.mxu0 0.0
    %2092 = vmatpush.msra.mxu0 %v2050
    %2093 = vmatpush.msra.mxu0 %v2046
    %2094 = vmatpush.msra.mxu0 %v2042
    %2095 = vmatpush.msra.mxu0 %v2038
    %2096 = vmatpush.msra.mxu0 %v2034
    %2097 = vmatpush.msra.mxu0 %v2030
    %2098 = vmatmul.f32.gmra.mxu0 %v2054
    %v2099 = vpop.f32.mrf.mxu0
    %v2100 = vadd.f32 0.0, %v2099
    %2101 = vmatmul.f32.gmra.mxu0 %v2057
    %v2102 = vpop.f32.mrf.mxu0
    %v2103 = vadd.f32 0.0, %v2102
    %2104 = vdwg.mxu0
    %2105 = vmatpush.msra.mxu0 0.0
    %2106 = vmatpush.msra.mxu0 0.0
    %2107 = vmatpush.msra.mxu0 0.0
    %2108 = vmatpush.msra.mxu0 0.0
    %2109 = vmatpush.msra.mxu0 0.0
    %2110 = vmatpush.msra.mxu0 0.0
    %2111 = vmatpush.msra.mxu0 0.0
    %2112 = vmatpush.msra.mxu0 0.0
    %2113 = vmatpush.msra.mxu0 0.0
    %2114 = vmatpush.msra.mxu0 0.0
    %2115 = vmatpush.msra.mxu0 %v2051
    %2116 = vmatpush.msra.mxu0 %v2047
    %2117 = vmatpush.msra.mxu0 %v2043
    %2118 = vmatpush.msra.mxu0 %v2039
    %2119 = vmatpush.msra.mxu0 %v2035
    %2120 = vmatpush.msra.mxu0 %v2031
    %2121 = vmatmul.f32.gmra.mxu0 %v2054
    %v2122 = vpop.f32.mrf.mxu0
    %v2123 = vadd.f32 0.0, %v2122
    %2124 = vmatmul.f32.gmra.mxu0 %v2057
    %v2125 = vpop.f32.mrf.mxu0
    %v2126 = vadd.f32 0.0, %v2125
    %2127 = vdwg.mxu0
    %2128 = vmatpush.msra.mxu0 0.0
    %2129 = vmatpush.msra.mxu0 0.0
    %2130 = vmatpush.msra.mxu0 0.0
    %2131 = vmatpush.msra.mxu0 0.0
    %2132 = vmatpush.msra.mxu0 0.0
    %2133 = vmatpush.msra.mxu0 0.0
    %2134 = vmatpush.msra.mxu0 0.0
    %2135 = vmatpush.msra.mxu0 0.0
    %2136 = vmatpush.msra.mxu0 0.0
    %2137 = vmatpush.msra.mxu0 0.0
    %2138 = vmatpush.msra.mxu0 %v2052
    %2139 = vmatpush.msra.mxu0 %v2048
    %2140 = vmatpush.msra.mxu0 %v2044
    %2141 = vmatpush.msra.mxu0 %v2040
    %2142 = vmatpush.msra.mxu0 %v2036
    %2143 = vmatpush.msra.mxu0 %v2032
    %2144 = vmatmul.f32.gmra.mxu0 %v2054
    %v2145 = vpop.f32.mrf.mxu0
    %v2146 = vadd.f32 0.0, %v2145
    %2147 = vmatmul.f32.gmra.mxu0 %v2057
    %v2148 = vpop.f32.mrf.mxu0
    %v2149 = vadd.f32 0.0, %v2148
    %2150 = vdwg.mxu0
    %v2151 = vadd.f32 %v2019, %v2077
    %v2152 = vadd.f32 %v2020, %v2100
    %v2153 = vadd.f32 %v2021, %v2123
    %v2154 = vadd.f32 %v2022, %v2146
    %v2155 = vadd.f32 %v2023, %v2080
    %v2156 = vadd.f32 %v2024, %v2103
    %v2157 = vadd.f32 %v2025, %v2126
    %v2158 = vadd.f32 %v2026, %v2149
    %v2159 = vld [vmem:[%s959] sm:$0xff]
    %v2160 = vld [vmem:[%s959 + $0x8] sm:$0xff]
    %v2161 = vld [vmem:[%s959 + $0x10] sm:$0xff]
    %v2162 = vld [vmem:[%s959 + $0x18] sm:$0xff]
    %v2163 = vld [vmem:[%s959 + $0x20] sm:$0xff]
    %v2164 = vld [vmem:[%s959 + $0x28] sm:$0xff]
    %v2165 = vld [vmem:[%s959 + $0x30] sm:$0xff]
    %v2166 = vld [vmem:[%s959 + $0x38] sm:$0xff]
    %v2167 = vld [vmem:[%s959 + $0x40] sm:$0xff]
    %v2168 = vld [vmem:[%s959 + $0x48] sm:$0xff]
    %v2169 = vld [vmem:[%s959 + $0x50] sm:$0xff]
    %v2170 = vld [vmem:[%s959 + $0x58] sm:$0xff]
    %v2171 = vld [vmem:[%s959 + $0x60] sm:$0xff]
    %v2172 = vld [vmem:[%s959 + $0x68] sm:$0xff]
    %v2173 = vld [vmem:[%s959 + $0x70] sm:$0xff]
    %v2174 = vld [vmem:[%s959 + $0x78] sm:$0xff]
    %v2175 = vld [vmem:[%s959 + $0x80] sm:$0xff]
    %v2176 = vld [vmem:[%s959 + $0x88] sm:$0xff]
    %v2177 = vld [vmem:[%s959 + $0x90] sm:$0xff]
    %v2178 = vld [vmem:[%s959 + $0x98] sm:$0xff]
    %v2179 = vld [vmem:[%s959 + $0xa0] sm:$0xff]
    %v2180 = vld [vmem:[%s959 + $0xa8] sm:$0xff]
    %v2181 = vld [vmem:[%s959 + $0xb0] sm:$0xff]
    %v2182 = vld [vmem:[%s959 + $0xb8] sm:$0xff]
    %2183 = vrot.lane.b32.xlu0 %v2027, 125
    %v2184 = vpop.permute.xlu0 %2183
    %2185 = vrot.lane.b32.xlu0 %v2028, 125
    %v2186 = vpop.permute.xlu0 %2185
    %v2187 = vsel %vm101, %v2184, 0
    %v2189 = vsel %vm101, %v2186, 0
    %2191 = vmatpush.msra.mxu0 0.0
    %2192 = vmatpush.msra.mxu0 0.0
    %2193 = vmatpush.msra.mxu0 0.0
    %2194 = vmatpush.msra.mxu0 0.0
    %2195 = vmatpush.msra.mxu0 0.0
    %2196 = vmatpush.msra.mxu0 0.0
    %2197 = vmatpush.msra.mxu0 0.0
    %2198 = vmatpush.msra.mxu0 0.0
    %2199 = vmatpush.msra.mxu0 0.0
    %2200 = vmatpush.msra.mxu0 0.0
    %2201 = vmatpush.msra.mxu0 %v2179
    %2202 = vmatpush.msra.mxu0 %v2175
    %2203 = vmatpush.msra.mxu0 %v2171
    %2204 = vmatpush.msra.mxu0 %v2167
    %2205 = vmatpush.msra.mxu0 %v2163
    %2206 = vmatpush.msra.mxu0 %v2159
    %2207 = vmatmul.f32.gmra.mxu0 %v2187
    %v2208 = vpop.f32.mrf.mxu0
    %v2209 = vadd.f32 0.0, %v2208
    %2210 = vmatmul.f32.gmra.mxu0 %v2189
    %v2211 = vpop.f32.mrf.mxu0
    %v2212 = vadd.f32 0.0, %v2211
    %2213 = vdwg.mxu0
    %2214 = vmatpush.msra.mxu0 0.0
    %2215 = vmatpush.msra.mxu0 0.0
    %2216 = vmatpush.msra.mxu0 0.0
    %2217 = vmatpush.msra.mxu0 0.0
    %2218 = vmatpush.msra.mxu0 0.0
    %2219 = vmatpush.msra.mxu0 0.0
    %2220 = vmatpush.msra.mxu0 0.0
    %2221 = vmatpush.msra.mxu0 0.0
    %2222 = vmatpush.msra.mxu0 0.0
    %2223 = vmatpush.msra.mxu0 0.0
    %2224 = vmatpush.msra.mxu0 %v2180
    %2225 = vmatpush.msra.mxu0 %v2176
    %2226 = vmatpush.msra.mxu0 %v2172
    %2227 = vmatpush.msra.mxu0 %v2168
    %2228 = vmatpush.msra.mxu0 %v2164
    %2229 = vmatpush.msra.mxu0 %v2160
    %2230 = vmatmul.f32.gmra.mxu0 %v2187
    %v2231 = vpop.f32.mrf.mxu0
    %v2232 = vadd.f32 0.0, %v2231
    %2233 = vmatmul.f32.gmra.mxu0 %v2189
    %v2234 = vpop.f32.mrf.mxu0
    %v2235 = vadd.f32 0.0, %v2234
    %2236 = vdwg.mxu0
    %2237 = vmatpush.msra.mxu0 0.0
    %2238 = vmatpush.msra.mxu0 0.0
    %2239 = vmatpush.msra.mxu0 0.0
    %2240 = vmatpush.msra.mxu0 0.0
    %2241 = vmatpush.msra.mxu0 0.0
    %2242 = vmatpush.msra.mxu0 0.0
    %2243 = vmatpush.msra.mxu0 0.0
    %2244 = vmatpush.msra.mxu0 0.0
    %2245 = vmatpush.msra.mxu0 0.0
    %2246 = vmatpush.msra.mxu0 0.0
    %2247 = vmatpush.msra.mxu0 %v2181
    %2248 = vmatpush.msra.mxu0 %v2177
    %2249 = vmatpush.msra.mxu0 %v2173
    %2250 = vmatpush.msra.mxu0 %v2169
    %2251 = vmatpush.msra.mxu0 %v2165
    %2252 = vmatpush.msra.mxu0 %v2161
    %2253 = vmatmul.f32.gmra.mxu0 %v2187
    %v2254 = vpop.f32.mrf.mxu0
    %v2255 = vadd.f32 0.0, %v2254
    %2256 = vmatmul.f32.gmra.mxu0 %v2189
    %v2257 = vpop.f32.mrf.mxu0
    %v2258 = vadd.f32 0.0, %v2257
    %2259 = vdwg.mxu0
    %2260 = vmatpush.msra.mxu0 0.0
    %2261 = vmatpush.msra.mxu0 0.0
    %2262 = vmatpush.msra.mxu0 0.0
    %2263 = vmatpush.msra.mxu0 0.0
    %2264 = vmatpush.msra.mxu0 0.0
    %2265 = vmatpush.msra.mxu0 0.0
    %2266 = vmatpush.msra.mxu0 0.0
    %2267 = vmatpush.msra.mxu0 0.0
    %2268 = vmatpush.msra.mxu0 0.0
    %2269 = vmatpush.msra.mxu0 0.0
    %2270 = vmatpush.msra.mxu0 %v2182
    %2271 = vmatpush.msra.mxu0 %v2178
    %2272 = vmatpush.msra.mxu0 %v2174
    %2273 = vmatpush.msra.mxu0 %v2170
    %2274 = vmatpush.msra.mxu0 %v2166
    %2275 = vmatpush.msra.mxu0 %v2162
    %2276 = vmatmul.f32.gmra.mxu0 %v2187
    %v2277 = vpop.f32.mrf.mxu0
    %v2278 = vadd.f32 0.0, %v2277
    %2279 = vmatmul.f32.gmra.mxu0 %v2189
    %v2280 = vpop.f32.mrf.mxu0
    %v2281 = vadd.f32 0.0, %v2280
    %2282 = vdwg.mxu0
    %v2283 = vadd.f32 %v2151, %v2209
    %v2284 = vadd.f32 %v2152, %v2232
    %v2285 = vadd.f32 %v2153, %v2255
    %v2286 = vadd.f32 %v2154, %v2278
    %v2287 = vadd.f32 %v2155, %v2212
    %v2288 = vadd.f32 %v2156, %v2235
    %v2289 = vadd.f32 %v2157, %v2258
    %v2290 = vadd.f32 %v2158, %v2281
    %v2291 = vld [vmem:[%s1092] sm:$0xff]
    %v2292 = vld [vmem:[%s1092 + $0x8] sm:$0xff]
    %v2293 = vld [vmem:[%s1092 + $0x10] sm:$0xff]
    %v2294 = vld [vmem:[%s1092 + $0x18] sm:$0xff]
    %v2295 = vld [vmem:[%s1092 + $0x20] sm:$0xff]
    %v2296 = vld [vmem:[%s1092 + $0x28] sm:$0xff]
    %v2297 = vld [vmem:[%s1092 + $0x30] sm:$0xff]
    %v2298 = vld [vmem:[%s1092 + $0x38] sm:$0xff]
    %v2299 = vld [vmem:[%s1092 + $0x40] sm:$0xff]
    %v2300 = vld [vmem:[%s1092 + $0x48] sm:$0xff]
    %v2301 = vld [vmem:[%s1092 + $0x50] sm:$0xff]
    %v2302 = vld [vmem:[%s1092 + $0x58] sm:$0xff]
    %v2303 = vld [vmem:[%s1092 + $0x60] sm:$0xff]
    %v2304 = vld [vmem:[%s1092 + $0x68] sm:$0xff]
    %v2305 = vld [vmem:[%s1092 + $0x70] sm:$0xff]
    %v2306 = vld [vmem:[%s1092 + $0x78] sm:$0xff]
    %v2307 = vld [vmem:[%s1092 + $0x80] sm:$0xff]
    %v2308 = vld [vmem:[%s1092 + $0x88] sm:$0xff]
    %v2309 = vld [vmem:[%s1092 + $0x90] sm:$0xff]
    %v2310 = vld [vmem:[%s1092 + $0x98] sm:$0xff]
    %v2311 = vld [vmem:[%s1092 + $0xa0] sm:$0xff]
    %v2312 = vld [vmem:[%s1092 + $0xa8] sm:$0xff]
    %v2313 = vld [vmem:[%s1092 + $0xb0] sm:$0xff]
    %v2314 = vld [vmem:[%s1092 + $0xb8] sm:$0xff]
    %2315 = vrot.lane.b32.xlu0 %v2027, 122
    %v2316 = vpop.permute.xlu0 %2315
    %2317 = vrot.lane.b32.xlu0 %v2028, 122
    %v2318 = vpop.permute.xlu0 %2317
    %v2319 = vsel %vm101, %v2316, 0
    %v2321 = vsel %vm101, %v2318, 0
    %2323 = vmatpush.msra.mxu0 0.0
    %2324 = vmatpush.msra.mxu0 0.0
    %2325 = vmatpush.msra.mxu0 0.0
    %2326 = vmatpush.msra.mxu0 0.0
    %2327 = vmatpush.msra.mxu0 0.0
    %2328 = vmatpush.msra.mxu0 0.0
    %2329 = vmatpush.msra.mxu0 0.0
    %2330 = vmatpush.msra.mxu0 0.0
    %2331 = vmatpush.msra.mxu0 0.0
    %2332 = vmatpush.msra.mxu0 0.0
    %2333 = vmatpush.msra.mxu0 %v2311
    %2334 = vmatpush.msra.mxu0 %v2307
    %2335 = vmatpush.msra.mxu0 %v2303
    %2336 = vmatpush.msra.mxu0 %v2299
    %2337 = vmatpush.msra.mxu0 %v2295
    %2338 = vmatpush.msra.mxu0 %v2291
    %2339 = vmatmul.f32.gmra.mxu0 %v2319
    %v2340 = vpop.f32.mrf.mxu0
    %v2341 = vadd.f32 0.0, %v2340
    %2342 = vmatmul.f32.gmra.mxu0 %v2321
    %v2343 = vpop.f32.mrf.mxu0
    %v2344 = vadd.f32 0.0, %v2343
    %2345 = vdwg.mxu0
    %2346 = vmatpush.msra.mxu0 0.0
    %2347 = vmatpush.msra.mxu0 0.0
    %2348 = vmatpush.msra.mxu0 0.0
    %2349 = vmatpush.msra.mxu0 0.0
    %2350 = vmatpush.msra.mxu0 0.0
    %2351 = vmatpush.msra.mxu0 0.0
    %2352 = vmatpush.msra.mxu0 0.0
    %2353 = vmatpush.msra.mxu0 0.0
    %2354 = vmatpush.msra.mxu0 0.0
    %2355 = vmatpush.msra.mxu0 0.0
    %2356 = vmatpush.msra.mxu0 %v2312
    %2357 = vmatpush.msra.mxu0 %v2308
    %2358 = vmatpush.msra.mxu0 %v2304
    %2359 = vmatpush.msra.mxu0 %v2300
    %2360 = vmatpush.msra.mxu0 %v2296
    %2361 = vmatpush.msra.mxu0 %v2292
    %2362 = vmatmul.f32.gmra.mxu0 %v2319
    %v2363 = vpop.f32.mrf.mxu0
    %v2364 = vadd.f32 0.0, %v2363
    %2365 = vmatmul.f32.gmra.mxu0 %v2321
    %v2366 = vpop.f32.mrf.mxu0
    %v2367 = vadd.f32 0.0, %v2366
    %2368 = vdwg.mxu0
    %2369 = vmatpush.msra.mxu0 0.0
    %2370 = vmatpush.msra.mxu0 0.0
    %2371 = vmatpush.msra.mxu0 0.0
    %2372 = vmatpush.msra.mxu0 0.0
    %2373 = vmatpush.msra.mxu0 0.0
    %2374 = vmatpush.msra.mxu0 0.0
    %2375 = vmatpush.msra.mxu0 0.0
    %2376 = vmatpush.msra.mxu0 0.0
    %2377 = vmatpush.msra.mxu0 0.0
    %2378 = vmatpush.msra.mxu0 0.0
    %2379 = vmatpush.msra.mxu0 %v2313
    %2380 = vmatpush.msra.mxu0 %v2309
    %2381 = vmatpush.msra.mxu0 %v2305
    %2382 = vmatpush.msra.mxu0 %v2301
    %2383 = vmatpush.msra.mxu0 %v2297
    %2384 = vmatpush.msra.mxu0 %v2293
    %2385 = vmatmul.f32.gmra.mxu0 %v2319
    %v2386 = vpop.f32.mrf.mxu0
    %v2387 = vadd.f32 0.0, %v2386
    %2388 = vmatmul.f32.gmra.mxu0 %v2321
    %v2389 = vpop.f32.mrf.mxu0
    %v2390 = vadd.f32 0.0, %v2389
    %2391 = vdwg.mxu0
    %2392 = vmatpush.msra.mxu0 0.0
    %2393 = vmatpush.msra.mxu0 0.0
    %2394 = vmatpush.msra.mxu0 0.0
    %2395 = vmatpush.msra.mxu0 0.0
    %2396 = vmatpush.msra.mxu0 0.0
    %2397 = vmatpush.msra.mxu0 0.0
    %2398 = vmatpush.msra.mxu0 0.0
    %2399 = vmatpush.msra.mxu0 0.0
    %2400 = vmatpush.msra.mxu0 0.0
    %2401 = vmatpush.msra.mxu0 0.0
    %2402 = vmatpush.msra.mxu0 %v2314
    %2403 = vmatpush.msra.mxu0 %v2310
    %2404 = vmatpush.msra.mxu0 %v2306
    %2405 = vmatpush.msra.mxu0 %v2302
    %2406 = vmatpush.msra.mxu0 %v2298
    %2407 = vmatpush.msra.mxu0 %v2294
    %2408 = vmatmul.f32.gmra.mxu0 %v2319
    %v2409 = vpop.f32.mrf.mxu0
    %v2410 = vadd.f32 0.0, %v2409
    %2411 = vmatmul.f32.gmra.mxu0 %v2321
    %v2412 = vpop.f32.mrf.mxu0
    %v2413 = vadd.f32 0.0, %v2412
    %2414 = vdwg.mxu0
    %v2415 = vadd.f32 %v2283, %v2341
    %v2416 = vadd.f32 %v2284, %v2364
    %v2417 = vadd.f32 %v2285, %v2387
    %v2418 = vadd.f32 %v2286, %v2410
    %v2419 = vadd.f32 %v2287, %v2344
    %v2420 = vadd.f32 %v2288, %v2367
    %v2421 = vadd.f32 %v2289, %v2390
    %v2422 = vadd.f32 %v2290, %v2413
    %v2423 = vld [vmem:[#allocation4] sm:$0xf]
    %v2425 = vperm.slane %v2423, 0
    %v2426 = vperm.slane %v2423, 1
    %v2427 = vperm.slane %v2423, 2
    %v2428 = vperm.slane %v2423, 3
    %v2433 = vadd.f32 %v2415, %v2425
    %v2434 = vadd.f32 %v2416, %v2426
    %v2435 = vadd.f32 %v2417, %v2427
    %v2436 = vadd.f32 %v2418, %v2428
    %v2437 = vadd.f32 %v2419, %v2425
    %v2438 = vadd.f32 %v2420, %v2426
    %v2439 = vadd.f32 %v2421, %v2427
    %v2440 = vadd.f32 %v2422, %v2428
    %2441 = vst [vmem:[%s3 + $0x40] sm:$0xff] %v2433
    %2442 = vst [vmem:[%s3 + $0x48] sm:$0xff] %v2434
    %2443 = vst [vmem:[%s3 + $0x50] sm:$0xff] %v2435
    %2444 = vst [vmem:[%s3 + $0x58] sm:$0xff] %v2436
    %2445 = vst [vmem:[%s3 + $0x60] sm:$0xff] %v2437
    %2446 = vst [vmem:[%s3 + $0x68] sm:$0xff] %v2438
    %2447 = vst [vmem:[%s3 + $0x70] sm:$0xff] %v2439
    %2448 = vst [vmem:[%s3 + $0x78] sm:$0xff] %v2440
    // Predicated region
    $region22: #{simple_cnn_forward.2} parent=1 // pred_check
      _
    $region23: #{simple_cnn_forward.2} parent=1 // pred_check_branch
      %2450 = sbr.rel (0) target = $region25
    $region24: #{simple_cnn_forward.2} parent=1 // pred_region
      _
    $region25: #{simple_cnn_forward.2} parent=1 // pred_fallthru
      _
    // Predicated region
    $region26: #{simple_cnn_forward.2} parent=1 // pred_check
      _
    $region27: #{simple_cnn_forward.2} parent=1 // pred_check_branch
      %2452 = sbr.rel (0) target = $region29
    $region28: #{simple_cnn_forward.2} parent=1 // pred_region
      _
    $region29: #{simple_cnn_forward.2} parent=1 // pred_fallthru
      _
    %2453 = vsyncpa [#allocation3], 1
    %2454 = vsyncpa [#allocation5], 1

// kernel: simple_cnn_forward.3
$region0: #{simple_cnn_forward.3}
  #allocation0 [shape = 'u32[]', space=smem, size = 0x4, offset = 0x4, fixed_abs, tag = 'smem constant byte address 0x4 - core index']
  #allocation1 [shape = 'u32[72,128]{1,0:T(1,128)}', space=vmem, size = 0x9000, scoped, tag = 'internal scratch']
  %s0 = inlined_call_operand.vmem [shape: f32[2,8192], index: 0, kind: input, shape index: {}]
  %s1 = inlined_call_operand.vmem [shape: bf16[8192,64], index: 1, kind: input, shape index: {}]
  %s2 = inlined_call_operand.vmem [shape: f32[1,64], index: 2, kind: input, shape index: {}]
  %s3 = inlined_call_operand.vmem [shape: f32[2,64], index: 3, kind: input, shape index: {}]
  %s4 = inlined_call_operand.vmem [shape: f32[2,64], index: 4, kind: input, shape index: {}]
  %s5 = inlined_call_operand.hbm [shape: f32[1,1], index: 5, kind: output, shape index: {}]
  %s6 = sld [smem:[#allocation0]]
  $region30: #{simple_cnn_forward.3} parent=0
    _
  %s8 = ssub.s32 1, %s6
  %s9 = scalar_select 0, %s8, %s6
  $region1: #{simple_cnn_forward.3} parent=0
    #allocation2 [shape = 'u8[512]{0}', space=vmem, size = 0x400, scoped, tag = 'output window, operand 0, single buffered']
    #allocation3 [shape = 's32[1]{0}', space=sflag, size = 0x4, scoped, tag = 'scoped memory for simple_cnn_forward.3']
    %10 = vsyncpa [#allocation3], 0
    // Predicated region
    $region2: #{simple_cnn_forward.3} parent=1 // pred_check
      _
    $region3: #{simple_cnn_forward.3} parent=1 // pred_check_branch
      %12 = sbr.rel (0) target = $region5
    $region4: #{simple_cnn_forward.3} parent=1 // pred_region
      _
    $region5: #{simple_cnn_forward.3} parent=1 // pred_fallthru
      _
    // Predicated region
    $region6: #{simple_cnn_forward.3} parent=1 // pred_check
      _
    $region7: #{simple_cnn_forward.3} parent=1 // pred_check_branch
      %14 = sbr.rel (0) target = $region9
    $region8: #{simple_cnn_forward.3} parent=1 // pred_region
      _
    $region9: #{simple_cnn_forward.3} parent=1 // pred_fallthru
      _
    // Predicated region
    $region10: #{simple_cnn_forward.3} parent=1 // pred_check
      _
    $region11: #{simple_cnn_forward.3} parent=1 // pred_check_branch
      %16 = sbr.rel (0) target = $region13
    $region12: #{simple_cnn_forward.3} parent=1 // pred_region
      _
    $region13: #{simple_cnn_forward.3} parent=1 // pred_fallthru
      _
    // Predicated region
    $region14: #{simple_cnn_forward.3} parent=1 // pred_check
      _
    $region15: #{simple_cnn_forward.3} parent=1 // pred_check_branch
      %18 = sbr.rel (0) target = $region17
    $region16: #{simple_cnn_forward.3} parent=1 // pred_region
      _
    $region17: #{simple_cnn_forward.3} parent=1 // pred_fallthru
      _
    // Predicated region
    $region18: #{simple_cnn_forward.3} parent=1 // pred_check
      _
    $region19: #{simple_cnn_forward.3} parent=1 // pred_check_branch
      %20 = sbr.rel (0) target = $region21
    $region20: #{simple_cnn_forward.3} parent=1 // pred_region
      _
    $region21: #{simple_cnn_forward.3} parent=1 // pred_fallthru
      _
    %v21 = vld [vmem:[%s1] sm:$0xf]
    %v22 = vld [vmem:[%s1 + $0x4] sm:$0xf]
    %v23 = vld [vmem:[%s1 + $0x8] sm:$0xf]
    %v24 = vld [vmem:[%s1 + $0xc] sm:$0xf]
    %v25 = vld [vmem:[%s1 + $0x10] sm:$0xf]
    %v26 = vld [vmem:[%s1 + $0x14] sm:$0xf]
    %v27 = vld [vmem:[%s1 + $0x18] sm:$0xf]
    %v28 = vld [vmem:[%s1 + $0x1c] sm:$0xf]
    %v29 = vld [vmem:[%s1 + $0x20] sm:$0xf]
    %v30 = vld [vmem:[%s1 + $0x24] sm:$0xf]
    %v31 = vld [vmem:[%s1 + $0x28] sm:$0xf]
    %v32 = vld [vmem:[%s1 + $0x2c] sm:$0xf]
    %v33 = vld [vmem:[%s1 + $0x30] sm:$0xf]
    %v34 = vld [vmem:[%s1 + $0x34] sm:$0xf]
    %v35 = vld [vmem:[%s1 + $0x38] sm:$0xf]
    %v36 = vld [vmem:[%s1 + $0x3c] sm:$0xf]
    %v37 = vld [vmem:[%s1 + $0x40] sm:$0xf]
    %v38 = vld [vmem:[%s1 + $0x44] sm:$0xf]
    %v39 = vld [vmem:[%s1 + $0x48] sm:$0xf]
    %v40 = vld [vmem:[%s1 + $0x4c] sm:$0xf]
    %v41 = vld [vmem:[%s1 + $0x50] sm:$0xf]
    %v42 = vld [vmem:[%s1 + $0x54] sm:$0xf]
    %v43 = vld [vmem:[%s1 + $0x58] sm:$0xf]
    %v44 = vld [vmem:[%s1 + $0x5c] sm:$0xf]
    %v45 = vld [vmem:[%s1 + $0x60] sm:$0xf]
    %v46 = vld [vmem:[%s1 + $0x64] sm:$0xf]
    %v47 = vld [vmem:[%s1 + $0x68] sm:$0xf]
    %v48 = vld [vmem:[%s1 + $0x6c] sm:$0xf]
    %v49 = vld [vmem:[%s1 + $0x70] sm:$0xf]
    %v50 = vld [vmem:[%s1 + $0x74] sm:$0xf]
    %v51 = vld [vmem:[%s1 + $0x78] sm:$0xf]
    %v52 = vld [vmem:[%s1 + $0x7c] sm:$0xf]
    %v53 = vld [vmem:[%s1 + $0x80] sm:$0xf]
    %v54 = vld [vmem:[%s1 + $0x84] sm:$0xf]
    %v55 = vld [vmem:[%s1 + $0x88] sm:$0xf]
    %v56 = vld [vmem:[%s1 + $0x8c] sm:$0xf]
    %v57 = vld [vmem:[%s1 + $0x90] sm:$0xf]
    %v58 = vld [vmem:[%s1 + $0x94] sm:$0xf]
    %v59 = vld [vmem:[%s1 + $0x98] sm:$0xf]
    %v60 = vld [vmem:[%s1 + $0x9c] sm:$0xf]
    %v61 = vld [vmem:[%s1 + $0xa0] sm:$0xf]
    %v62 = vld [vmem:[%s1 + $0xa4] sm:$0xf]
    %v63 = vld [vmem:[%s1 + $0xa8] sm:$0xf]
    %v64 = vld [vmem:[%s1 + $0xac] sm:$0xf]
    %v65 = vld [vmem:[%s1 + $0xb0] sm:$0xf]
    %v66 = vld [vmem:[%s1 + $0xb4] sm:$0xf]
    %v67 = vld [vmem:[%s1 + $0xb8] sm:$0xf]
    %v68 = vld [vmem:[%s1 + $0xbc] sm:$0xf]
    %v69 = vld [vmem:[%s1 + $0xc0] sm:$0xf]
    %v70 = vld [vmem:[%s1 + $0xc4] sm:$0xf]
    %v71 = vld [vmem:[%s1 + $0xc8] sm:$0xf]
    %v72 = vld [vmem:[%s1 + $0xcc] sm:$0xf]
    %v73 = vld [vmem:[%s1 + $0xd0] sm:$0xf]
    %v74 = vld [vmem:[%s1 + $0xd4] sm:$0xf]
    %v75 = vld [vmem:[%s1 + $0xd8] sm:$0xf]
    %v76 = vld [vmem:[%s1 + $0xdc] sm:$0xf]
    %v77 = vld [vmem:[%s1 + $0xe0] sm:$0xf]
    %v78 = vld [vmem:[%s1 + $0xe4] sm:$0xf]
    %v79 = vld [vmem:[%s1 + $0xe8] sm:$0xf]
    %v80 = vld [vmem:[%s1 + $0xec] sm:$0xf]
    %v81 = vld [vmem:[%s1 + $0xf0] sm:$0xf]
    %v82 = vld [vmem:[%s1 + $0xf4] sm:$0xf]
    %v83 = vld [vmem:[%s1 + $0xf8] sm:$0xf]
    %v84 = vld [vmem:[%s1 + $0xfc] sm:$0xf]
    %v85 = vld [vmem:[%s1 + $0x100] sm:$0xf]
    %v86 = vld [vmem:[%s1 + $0x104] sm:$0xf]
    %v87 = vld [vmem:[%s1 + $0x108] sm:$0xf]
    %v88 = vld [vmem:[%s1 + $0x10c] sm:$0xf]
    %v89 = vld [vmem:[%s1 + $0x110] sm:$0xf]
    %v90 = vld [vmem:[%s1 + $0x114] sm:$0xf]
    %v91 = vld [vmem:[%s1 + $0x118] sm:$0xf]
    %v92 = vld [vmem:[%s1 + $0x11c] sm:$0xf]
    %v93 = vld [vmem:[%s1 + $0x120] sm:$0xf]
    %v94 = vld [vmem:[%s1 + $0x124] sm:$0xf]
    %v95 = vld [vmem:[%s1 + $0x128] sm:$0xf]
    %v96 = vld [vmem:[%s1 + $0x12c] sm:$0xf]
    %v97 = vld [vmem:[%s1 + $0x130] sm:$0xf]
    %v98 = vld [vmem:[%s1 + $0x134] sm:$0xf]
    %v99 = vld [vmem:[%s1 + $0x138] sm:$0xf]
    %v100 = vld [vmem:[%s1 + $0x13c] sm:$0xf]
    %v101 = vld [vmem:[%s1 + $0x140] sm:$0xf]
    %v102 = vld [vmem:[%s1 + $0x144] sm:$0xf]
    %v103 = vld [vmem:[%s1 + $0x148] sm:$0xf]
    %v104 = vld [vmem:[%s1 + $0x14c] sm:$0xf]
    %v105 = vld [vmem:[%s1 + $0x150] sm:$0xf]
    %v106 = vld [vmem:[%s1 + $0x154] sm:$0xf]
    %v107 = vld [vmem:[%s1 + $0x158] sm:$0xf]
    %v108 = vld [vmem:[%s1 + $0x15c] sm:$0xf]
    %v109 = vld [vmem:[%s1 + $0x160] sm:$0xf]
    %v110 = vld [vmem:[%s1 + $0x164] sm:$0xf]
    %v111 = vld [vmem:[%s1 + $0x168] sm:$0xf]
    %v112 = vld [vmem:[%s1 + $0x16c] sm:$0xf]
    %v113 = vld [vmem:[%s1 + $0x170] sm:$0xf]
    %v114 = vld [vmem:[%s1 + $0x174] sm:$0xf]
    %v115 = vld [vmem:[%s1 + $0x178] sm:$0xf]
    %v116 = vld [vmem:[%s1 + $0x17c] sm:$0xf]
    %v117 = vld [vmem:[%s1 + $0x180] sm:$0xf]
    %v118 = vld [vmem:[%s1 + $0x184] sm:$0xf]
    %v119 = vld [vmem:[%s1 + $0x188] sm:$0xf]
    %v120 = vld [vmem:[%s1 + $0x18c] sm:$0xf]
    %v121 = vld [vmem:[%s1 + $0x190] sm:$0xf]
    %v122 = vld [vmem:[%s1 + $0x194] sm:$0xf]
    %v123 = vld [vmem:[%s1 + $0x198] sm:$0xf]
    %v124 = vld [vmem:[%s1 + $0x19c] sm:$0xf]
    %v125 = vld [vmem:[%s1 + $0x1a0] sm:$0xf]
    %v126 = vld [vmem:[%s1 + $0x1a4] sm:$0xf]
    %v127 = vld [vmem:[%s1 + $0x1a8] sm:$0xf]
    %v128 = vld [vmem:[%s1 + $0x1ac] sm:$0xf]
    %v129 = vld [vmem:[%s1 + $0x1b0] sm:$0xf]
    %v130 = vld [vmem:[%s1 + $0x1b4] sm:$0xf]
    %v131 = vld [vmem:[%s1 + $0x1b8] sm:$0xf]
    %v132 = vld [vmem:[%s1 + $0x1bc] sm:$0xf]
    %v133 = vld [vmem:[%s1 + $0x1c0] sm:$0xf]
    %v134 = vld [vmem:[%s1 + $0x1c4] sm:$0xf]
    %v135 = vld [vmem:[%s1 + $0x1c8] sm:$0xf]
    %v136 = vld [vmem:[%s1 + $0x1cc] sm:$0xf]
    %v137 = vld [vmem:[%s1 + $0x1d0] sm:$0xf]
    %v138 = vld [vmem:[%s1 + $0x1d4] sm:$0xf]
    %v139 = vld [vmem:[%s1 + $0x1d8] sm:$0xf]
    %v140 = vld [vmem:[%s1 + $0x1dc] sm:$0xf]
    %v141 = vld [vmem:[%s1 + $0x1e0] sm:$0xf]
    %v142 = vld [vmem:[%s1 + $0x1e4] sm:$0xf]
    %v143 = vld [vmem:[%s1 + $0x1e8] sm:$0xf]
    %v144 = vld [vmem:[%s1 + $0x1ec] sm:$0xf]
    %v145 = vld [vmem:[%s1 + $0x1f0] sm:$0xf]
    %v146 = vld [vmem:[%s1 + $0x1f4] sm:$0xf]
    %v147 = vld [vmem:[%s1 + $0x1f8] sm:$0xf]
    %v148 = vld [vmem:[%s1 + $0x1fc] sm:$0xf]
    %v149 = vld [vmem:[%s1 + $0x200] sm:$0xf]
    %v150 = vld [vmem:[%s1 + $0x204] sm:$0xf]
    %v151 = vld [vmem:[%s1 + $0x208] sm:$0xf]
    %v152 = vld [vmem:[%s1 + $0x20c] sm:$0xf]
    %v153 = vld [vmem:[%s1 + $0x210] sm:$0xf]
    %v154 = vld [vmem:[%s1 + $0x214] sm:$0xf]
    %v155 = vld [vmem:[%s1 + $0x218] sm:$0xf]
    %v156 = vld [vmem:[%s1 + $0x21c] sm:$0xf]
    %v157 = vld [vmem:[%s1 + $0x220] sm:$0xf]
    %v158 = vld [vmem:[%s1 + $0x224] sm:$0xf]
    %v159 = vld [vmem:[%s1 + $0x228] sm:$0xf]
    %v160 = vld [vmem:[%s1 + $0x22c] sm:$0xf]
    %v161 = vld [vmem:[%s1 + $0x230] sm:$0xf]
    %v162 = vld [vmem:[%s1 + $0x234] sm:$0xf]
    %v163 = vld [vmem:[%s1 + $0x238] sm:$0xf]
    %v164 = vld [vmem:[%s1 + $0x23c] sm:$0xf]
    %v165 = vld [vmem:[%s1 + $0x240] sm:$0xf]
    %v166 = vld [vmem:[%s1 + $0x244] sm:$0xf]
    %v167 = vld [vmem:[%s1 + $0x248] sm:$0xf]
    %v168 = vld [vmem:[%s1 + $0x24c] sm:$0xf]
    %v169 = vld [vmem:[%s1 + $0x250] sm:$0xf]
    %v170 = vld [vmem:[%s1 + $0x254] sm:$0xf]
    %v171 = vld [vmem:[%s1 + $0x258] sm:$0xf]
    %v172 = vld [vmem:[%s1 + $0x25c] sm:$0xf]
    %v173 = vld [vmem:[%s1 + $0x260] sm:$0xf]
    %v174 = vld [vmem:[%s1 + $0x264] sm:$0xf]
    %v175 = vld [vmem:[%s1 + $0x268] sm:$0xf]
    %v176 = vld [vmem:[%s1 + $0x26c] sm:$0xf]
    %v177 = vld [vmem:[%s1 + $0x270] sm:$0xf]
    %v178 = vld [vmem:[%s1 + $0x274] sm:$0xf]
    %v179 = vld [vmem:[%s1 + $0x278] sm:$0xf]
    %v180 = vld [vmem:[%s1 + $0x27c] sm:$0xf]
    %v181 = vld [vmem:[%s1 + $0x280] sm:$0xf]
    %v182 = vld [vmem:[%s1 + $0x284] sm:$0xf]
    %v183 = vld [vmem:[%s1 + $0x288] sm:$0xf]
    %v184 = vld [vmem:[%s1 + $0x28c] sm:$0xf]
    %v185 = vld [vmem:[%s1 + $0x290] sm:$0xf]
    %v186 = vld [vmem:[%s1 + $0x294] sm:$0xf]
    %v187 = vld [vmem:[%s1 + $0x298] sm:$0xf]
    %v188 = vld [vmem:[%s1 + $0x29c] sm:$0xf]
    %v189 = vld [vmem:[%s1 + $0x2a0] sm:$0xf]
    %v190 = vld [vmem:[%s1 + $0x2a4] sm:$0xf]
    %v191 = vld [vmem:[%s1 + $0x2a8] sm:$0xf]
    %v192 = vld [vmem:[%s1 + $0x2ac] sm:$0xf]
    %v193 = vld [vmem:[%s1 + $0x2b0] sm:$0xf]
    %v194 = vld [vmem:[%s1 + $0x2b4] sm:$0xf]
    %v195 = vld [vmem:[%s1 + $0x2b8] sm:$0xf]
    %v196 = vld [vmem:[%s1 + $0x2bc] sm:$0xf]
    %v197 = vld [vmem:[%s1 + $0x2c0] sm:$0xf]
    %v198 = vld [vmem:[%s1 + $0x2c4] sm:$0xf]
    %v199 = vld [vmem:[%s1 + $0x2c8] sm:$0xf]
    %v200 = vld [vmem:[%s1 + $0x2cc] sm:$0xf]
    %v201 = vld [vmem:[%s1 + $0x2d0] sm:$0xf]
    %v202 = vld [vmem:[%s1 + $0x2d4] sm:$0xf]
    %v203 = vld [vmem:[%s1 + $0x2d8] sm:$0xf]
    %v204 = vld [vmem:[%s1 + $0x2dc] sm:$0xf]
    %v205 = vld [vmem:[%s1 + $0x2e0] sm:$0xf]
    %v206 = vld [vmem:[%s1 + $0x2e4] sm:$0xf]
    %v207 = vld [vmem:[%s1 + $0x2e8] sm:$0xf]
    %v208 = vld [vmem:[%s1 + $0x2ec] sm:$0xf]
    %v209 = vld [vmem:[%s1 + $0x2f0] sm:$0xf]
    %v210 = vld [vmem:[%s1 + $0x2f4] sm:$0xf]
    %v211 = vld [vmem:[%s1 + $0x2f8] sm:$0xf]
    %v212 = vld [vmem:[%s1 + $0x2fc] sm:$0xf]
    %v213 = vld [vmem:[%s1 + $0x300] sm:$0xf]
    %v214 = vld [vmem:[%s1 + $0x304] sm:$0xf]
    %v215 = vld [vmem:[%s1 + $0x308] sm:$0xf]
    %v216 = vld [vmem:[%s1 + $0x30c] sm:$0xf]
    %v217 = vld [vmem:[%s1 + $0x310] sm:$0xf]
    %v218 = vld [vmem:[%s1 + $0x314] sm:$0xf]
    %v219 = vld [vmem:[%s1 + $0x318] sm:$0xf]
    %v220 = vld [vmem:[%s1 + $0x31c] sm:$0xf]
    %v221 = vld [vmem:[%s1 + $0x320] sm:$0xf]
    %v222 = vld [vmem:[%s1 + $0x324] sm:$0xf]
    %v223 = vld [vmem:[%s1 + $0x328] sm:$0xf]
    %v224 = vld [vmem:[%s1 + $0x32c] sm:$0xf]
    %v225 = vld [vmem:[%s1 + $0x330] sm:$0xf]
    %v226 = vld [vmem:[%s1 + $0x334] sm:$0xf]
    %v227 = vld [vmem:[%s1 + $0x338] sm:$0xf]
    %v228 = vld [vmem:[%s1 + $0x33c] sm:$0xf]
    %v229 = vld [vmem:[%s1 + $0x340] sm:$0xf]
    %v230 = vld [vmem:[%s1 + $0x344] sm:$0xf]
    %v231 = vld [vmem:[%s1 + $0x348] sm:$0xf]
    %v232 = vld [vmem:[%s1 + $0x34c] sm:$0xf]
    %v233 = vld [vmem:[%s1 + $0x350] sm:$0xf]
    %v234 = vld [vmem:[%s1 + $0x354] sm:$0xf]
    %v235 = vld [vmem:[%s1 + $0x358] sm:$0xf]
    %v236 = vld [vmem:[%s1 + $0x35c] sm:$0xf]
    %v237 = vld [vmem:[%s1 + $0x360] sm:$0xf]
    %v238 = vld [vmem:[%s1 + $0x364] sm:$0xf]
    %v239 = vld [vmem:[%s1 + $0x368] sm:$0xf]
    %v240 = vld [vmem:[%s1 + $0x36c] sm:$0xf]
    %v241 = vld [vmem:[%s1 + $0x370] sm:$0xf]
    %v242 = vld [vmem:[%s1 + $0x374] sm:$0xf]
    %v243 = vld [vmem:[%s1 + $0x378] sm:$0xf]
    %v244 = vld [vmem:[%s1 + $0x37c] sm:$0xf]
    %v245 = vld [vmem:[%s1 + $0x380] sm:$0xf]
    %v246 = vld [vmem:[%s1 + $0x384] sm:$0xf]
    %v247 = vld [vmem:[%s1 + $0x388] sm:$0xf]
    %v248 = vld [vmem:[%s1 + $0x38c] sm:$0xf]
    %v249 = vld [vmem:[%s1 + $0x390] sm:$0xf]
    %v250 = vld [vmem:[%s1 + $0x394] sm:$0xf]
    %v251 = vld [vmem:[%s1 + $0x398] sm:$0xf]
    %v252 = vld [vmem:[%s1 + $0x39c] sm:$0xf]
    %v253 = vld [vmem:[%s1 + $0x3a0] sm:$0xf]
    %v254 = vld [vmem:[%s1 + $0x3a4] sm:$0xf]
    %v255 = vld [vmem:[%s1 + $0x3a8] sm:$0xf]
    %v256 = vld [vmem:[%s1 + $0x3ac] sm:$0xf]
    %v257 = vld [vmem:[%s1 + $0x3b0] sm:$0xf]
    %v258 = vld [vmem:[%s1 + $0x3b4] sm:$0xf]
    %v259 = vld [vmem:[%s1 + $0x3b8] sm:$0xf]
    %v260 = vld [vmem:[%s1 + $0x3bc] sm:$0xf]
    %v261 = vld [vmem:[%s1 + $0x3c0] sm:$0xf]
    %v262 = vld [vmem:[%s1 + $0x3c4] sm:$0xf]
    %v263 = vld [vmem:[%s1 + $0x3c8] sm:$0xf]
    %v264 = vld [vmem:[%s1 + $0x3cc] sm:$0xf]
    %v265 = vld [vmem:[%s1 + $0x3d0] sm:$0xf]
    %v266 = vld [vmem:[%s1 + $0x3d4] sm:$0xf]
    %v267 = vld [vmem:[%s1 + $0x3d8] sm:$0xf]
    %v268 = vld [vmem:[%s1 + $0x3dc] sm:$0xf]
    %v269 = vld [vmem:[%s1 + $0x3e0] sm:$0xf]
    %v270 = vld [vmem:[%s1 + $0x3e4] sm:$0xf]
    %v271 = vld [vmem:[%s1 + $0x3e8] sm:$0xf]
    %v272 = vld [vmem:[%s1 + $0x3ec] sm:$0xf]
    %v273 = vld [vmem:[%s1 + $0x3f0] sm:$0xf]
    %v274 = vld [vmem:[%s1 + $0x3f4] sm:$0xf]
    %v275 = vld [vmem:[%s1 + $0x3f8] sm:$0xf]
    %v276 = vld [vmem:[%s1 + $0x3fc] sm:$0xf]
    %v277 = vld [vmem:[%s1 + $0x400] sm:$0xf]
    %v278 = vld [vmem:[%s1 + $0x404] sm:$0xf]
    %v279 = vld [vmem:[%s1 + $0x408] sm:$0xf]
    %v280 = vld [vmem:[%s1 + $0x40c] sm:$0xf]
    %v281 = vld [vmem:[%s1 + $0x410] sm:$0xf]
    %v282 = vld [vmem:[%s1 + $0x414] sm:$0xf]
    %v283 = vld [vmem:[%s1 + $0x418] sm:$0xf]
    %v284 = vld [vmem:[%s1 + $0x41c] sm:$0xf]
    %v285 = vld [vmem:[%s1 + $0x420] sm:$0xf]
    %v286 = vld [vmem:[%s1 + $0x424] sm:$0xf]
    %v287 = vld [vmem:[%s1 + $0x428] sm:$0xf]
    %v288 = vld [vmem:[%s1 + $0x42c] sm:$0xf]
    %v289 = vld [vmem:[%s1 + $0x430] sm:$0xf]
    %v290 = vld [vmem:[%s1 + $0x434] sm:$0xf]
    %v291 = vld [vmem:[%s1 + $0x438] sm:$0xf]
    %v292 = vld [vmem:[%s1 + $0x43c] sm:$0xf]
    %v293 = vld [vmem:[%s1 + $0x440] sm:$0xf]
    %v294 = vld [vmem:[%s1 + $0x444] sm:$0xf]
    %v295 = vld [vmem:[%s1 + $0x448] sm:$0xf]
    %v296 = vld [vmem:[%s1 + $0x44c] sm:$0xf]
    %v297 = vld [vmem:[%s1 + $0x450] sm:$0xf]
    %v298 = vld [vmem:[%s1 + $0x454] sm:$0xf]
    %v299 = vld [vmem:[%s1 + $0x458] sm:$0xf]
    %v300 = vld [vmem:[%s1 + $0x45c] sm:$0xf]
    %v301 = vld [vmem:[%s1 + $0x460] sm:$0xf]
    %v302 = vld [vmem:[%s1 + $0x464] sm:$0xf]
    %v303 = vld [vmem:[%s1 + $0x468] sm:$0xf]
    %v304 = vld [vmem:[%s1 + $0x46c] sm:$0xf]
    %v305 = vld [vmem:[%s1 + $0x470] sm:$0xf]
    %v306 = vld [vmem:[%s1 + $0x474] sm:$0xf]
    %v307 = vld [vmem:[%s1 + $0x478] sm:$0xf]
    %v308 = vld [vmem:[%s1 + $0x47c] sm:$0xf]
    %v309 = vld [vmem:[%s1 + $0x480] sm:$0xf]
    %v310 = vld [vmem:[%s1 + $0x484] sm:$0xf]
    %v311 = vld [vmem:[%s1 + $0x488] sm:$0xf]
    %v312 = vld [vmem:[%s1 + $0x48c] sm:$0xf]
    %v313 = vld [vmem:[%s1 + $0x490] sm:$0xf]
    %v314 = vld [vmem:[%s1 + $0x494] sm:$0xf]
    %v315 = vld [vmem:[%s1 + $0x498] sm:$0xf]
    %v316 = vld [vmem:[%s1 + $0x49c] sm:$0xf]
    %v317 = vld [vmem:[%s1 + $0x4a0] sm:$0xf]
    %v318 = vld [vmem:[%s1 + $0x4a4] sm:$0xf]
    %v319 = vld [vmem:[%s1 + $0x4a8] sm:$0xf]
    %v320 = vld [vmem:[%s1 + $0x4ac] sm:$0xf]
    %v321 = vld [vmem:[%s1 + $0x4b0] sm:$0xf]
    %v322 = vld [vmem:[%s1 + $0x4b4] sm:$0xf]
    %v323 = vld [vmem:[%s1 + $0x4b8] sm:$0xf]
    %v324 = vld [vmem:[%s1 + $0x4bc] sm:$0xf]
    %v325 = vld [vmem:[%s1 + $0x4c0] sm:$0xf]
    %v326 = vld [vmem:[%s1 + $0x4c4] sm:$0xf]
    %v327 = vld [vmem:[%s1 + $0x4c8] sm:$0xf]
    %v328 = vld [vmem:[%s1 + $0x4cc] sm:$0xf]
    %v329 = vld [vmem:[%s1 + $0x4d0] sm:$0xf]
    %v330 = vld [vmem:[%s1 + $0x4d4] sm:$0xf]
    %v331 = vld [vmem:[%s1 + $0x4d8] sm:$0xf]
    %v332 = vld [vmem:[%s1 + $0x4dc] sm:$0xf]
    %v333 = vld [vmem:[%s1 + $0x4e0] sm:$0xf]
    %v334 = vld [vmem:[%s1 + $0x4e4] sm:$0xf]
    %v335 = vld [vmem:[%s1 + $0x4e8] sm:$0xf]
    %v336 = vld [vmem:[%s1 + $0x4ec] sm:$0xf]
    %v337 = vld [vmem:[%s1 + $0x4f0] sm:$0xf]
    %v338 = vld [vmem:[%s1 + $0x4f4] sm:$0xf]
    %v339 = vld [vmem:[%s1 + $0x4f8] sm:$0xf]
    %v340 = vld [vmem:[%s1 + $0x4fc] sm:$0xf]
    %v341 = vld [vmem:[%s1 + $0x500] sm:$0xf]
    %v342 = vld [vmem:[%s1 + $0x504] sm:$0xf]
    %v343 = vld [vmem:[%s1 + $0x508] sm:$0xf]
    %v344 = vld [vmem:[%s1 + $0x50c] sm:$0xf]
    %v345 = vld [vmem:[%s1 + $0x510] sm:$0xf]
    %v346 = vld [vmem:[%s1 + $0x514] sm:$0xf]
    %v347 = vld [vmem:[%s1 + $0x518] sm:$0xf]
    %v348 = vld [vmem:[%s1 + $0x51c] sm:$0xf]
    %v349 = vld [vmem:[%s1 + $0x520] sm:$0xf]
    %v350 = vld [vmem:[%s1 + $0x524] sm:$0xf]
    %v351 = vld [vmem:[%s1 + $0x528] sm:$0xf]
    %v352 = vld [vmem:[%s1 + $0x52c] sm:$0xf]
    %v353 = vld [vmem:[%s1 + $0x530] sm:$0xf]
    %v354 = vld [vmem:[%s1 + $0x534] sm:$0xf]
    %v355 = vld [vmem:[%s1 + $0x538] sm:$0xf]
    %v356 = vld [vmem:[%s1 + $0x53c] sm:$0xf]
    %v357 = vld [vmem:[%s1 + $0x540] sm:$0xf]
    %v358 = vld [vmem:[%s1 + $0x544] sm:$0xf]
    %v359 = vld [vmem:[%s1 + $0x548] sm:$0xf]
    %v360 = vld [vmem:[%s1 + $0x54c] sm:$0xf]
    %v361 = vld [vmem:[%s1 + $0x550] sm:$0xf]
    %v362 = vld [vmem:[%s1 + $0x554] sm:$0xf]
    %v363 = vld [vmem:[%s1 + $0x558] sm:$0xf]
    %v364 = vld [vmem:[%s1 + $0x55c] sm:$0xf]
    %v365 = vld [vmem:[%s1 + $0x560] sm:$0xf]
    %v366 = vld [vmem:[%s1 + $0x564] sm:$0xf]
    %v367 = vld [vmem:[%s1 + $0x568] sm:$0xf]
    %v368 = vld [vmem:[%s1 + $0x56c] sm:$0xf]
    %v369 = vld [vmem:[%s1 + $0x570] sm:$0xf]
    %v370 = vld [vmem:[%s1 + $0x574] sm:$0xf]
    %v371 = vld [vmem:[%s1 + $0x578] sm:$0xf]
    %v372 = vld [vmem:[%s1 + $0x57c] sm:$0xf]
    %v373 = vld [vmem:[%s1 + $0x580] sm:$0xf]
    %v374 = vld [vmem:[%s1 + $0x584] sm:$0xf]
    %v375 = vld [vmem:[%s1 + $0x588] sm:$0xf]
    %v376 = vld [vmem:[%s1 + $0x58c] sm:$0xf]
    %v377 = vld [vmem:[%s1 + $0x590] sm:$0xf]
    %v378 = vld [vmem:[%s1 + $0x594] sm:$0xf]
    %v379 = vld [vmem:[%s1 + $0x598] sm:$0xf]
    %v380 = vld [vmem:[%s1 + $0x59c] sm:$0xf]
    %v381 = vld [vmem:[%s1 + $0x5a0] sm:$0xf]
    %v382 = vld [vmem:[%s1 + $0x5a4] sm:$0xf]
    %v383 = vld [vmem:[%s1 + $0x5a8] sm:$0xf]
    %v384 = vld [vmem:[%s1 + $0x5ac] sm:$0xf]
    %v385 = vld [vmem:[%s1 + $0x5b0] sm:$0xf]
    %v386 = vld [vmem:[%s1 + $0x5b4] sm:$0xf]
    %v387 = vld [vmem:[%s1 + $0x5b8] sm:$0xf]
    %v388 = vld [vmem:[%s1 + $0x5bc] sm:$0xf]
    %v389 = vld [vmem:[%s1 + $0x5c0] sm:$0xf]
    %v390 = vld [vmem:[%s1 + $0x5c4] sm:$0xf]
    %v391 = vld [vmem:[%s1 + $0x5c8] sm:$0xf]
    %v392 = vld [vmem:[%s1 + $0x5cc] sm:$0xf]
    %v393 = vld [vmem:[%s1 + $0x5d0] sm:$0xf]
    %v394 = vld [vmem:[%s1 + $0x5d4] sm:$0xf]
    %v395 = vld [vmem:[%s1 + $0x5d8] sm:$0xf]
    %v396 = vld [vmem:[%s1 + $0x5dc] sm:$0xf]
    %v397 = vld [vmem:[%s1 + $0x5e0] sm:$0xf]
    %v398 = vld [vmem:[%s1 + $0x5e4] sm:$0xf]
    %v399 = vld [vmem:[%s1 + $0x5e8] sm:$0xf]
    %v400 = vld [vmem:[%s1 + $0x5ec] sm:$0xf]
    %v401 = vld [vmem:[%s1 + $0x5f0] sm:$0xf]
    %v402 = vld [vmem:[%s1 + $0x5f4] sm:$0xf]
    %v403 = vld [vmem:[%s1 + $0x5f8] sm:$0xf]
    %v404 = vld [vmem:[%s1 + $0x5fc] sm:$0xf]
    %v405 = vld [vmem:[%s1 + $0x600] sm:$0xf]
    %v406 = vld [vmem:[%s1 + $0x604] sm:$0xf]
    %v407 = vld [vmem:[%s1 + $0x608] sm:$0xf]
    %v408 = vld [vmem:[%s1 + $0x60c] sm:$0xf]
    %v409 = vld [vmem:[%s1 + $0x610] sm:$0xf]
    %v410 = vld [vmem:[%s1 + $0x614] sm:$0xf]
    %v411 = vld [vmem:[%s1 + $0x618] sm:$0xf]
    %v412 = vld [vmem:[%s1 + $0x61c] sm:$0xf]
    %v413 = vld [vmem:[%s1 + $0x620] sm:$0xf]
    %v414 = vld [vmem:[%s1 + $0x624] sm:$0xf]
    %v415 = vld [vmem:[%s1 + $0x628] sm:$0xf]
    %v416 = vld [vmem:[%s1 + $0x62c] sm:$0xf]
    %v417 = vld [vmem:[%s1 + $0x630] sm:$0xf]
    %v418 = vld [vmem:[%s1 + $0x634] sm:$0xf]
    %v419 = vld [vmem:[%s1 + $0x638] sm:$0xf]
    %v420 = vld [vmem:[%s1 + $0x63c] sm:$0xf]
    %v421 = vld [vmem:[%s1 + $0x640] sm:$0xf]
    %v422 = vld [vmem:[%s1 + $0x644] sm:$0xf]
    %v423 = vld [vmem:[%s1 + $0x648] sm:$0xf]
    %v424 = vld [vmem:[%s1 + $0x64c] sm:$0xf]
    %v425 = vld [vmem:[%s1 + $0x650] sm:$0xf]
    %v426 = vld [vmem:[%s1 + $0x654] sm:$0xf]
    %v427 = vld [vmem:[%s1 + $0x658] sm:$0xf]
    %v428 = vld [vmem:[%s1 + $0x65c] sm:$0xf]
    %v429 = vld [vmem:[%s1 + $0x660] sm:$0xf]
    %v430 = vld [vmem:[%s1 + $0x664] sm:$0xf]
    %v431 = vld [vmem:[%s1 + $0x668] sm:$0xf]
    %v432 = vld [vmem:[%s1 + $0x66c] sm:$0xf]
    %v433 = vld [vmem:[%s1 + $0x670] sm:$0xf]
    %v434 = vld [vmem:[%s1 + $0x674] sm:$0xf]
    %v435 = vld [vmem:[%s1 + $0x678] sm:$0xf]
    %v436 = vld [vmem:[%s1 + $0x67c] sm:$0xf]
    %v437 = vld [vmem:[%s1 + $0x680] sm:$0xf]
    %v438 = vld [vmem:[%s1 + $0x684] sm:$0xf]
    %v439 = vld [vmem:[%s1 + $0x688] sm:$0xf]
    %v440 = vld [vmem:[%s1 + $0x68c] sm:$0xf]
    %v441 = vld [vmem:[%s1 + $0x690] sm:$0xf]
    %v442 = vld [vmem:[%s1 + $0x694] sm:$0xf]
    %v443 = vld [vmem:[%s1 + $0x698] sm:$0xf]
    %v444 = vld [vmem:[%s1 + $0x69c] sm:$0xf]
    %v445 = vld [vmem:[%s1 + $0x6a0] sm:$0xf]
    %v446 = vld [vmem:[%s1 + $0x6a4] sm:$0xf]
    %v447 = vld [vmem:[%s1 + $0x6a8] sm:$0xf]
    %v448 = vld [vmem:[%s1 + $0x6ac] sm:$0xf]
    %v449 = vld [vmem:[%s1 + $0x6b0] sm:$0xf]
    %v450 = vld [vmem:[%s1 + $0x6b4] sm:$0xf]
    %v451 = vld [vmem:[%s1 + $0x6b8] sm:$0xf]
    %v452 = vld [vmem:[%s1 + $0x6bc] sm:$0xf]
    %v453 = vld [vmem:[%s1 + $0x6c0] sm:$0xf]
    %v454 = vld [vmem:[%s1 + $0x6c4] sm:$0xf]
    %v455 = vld [vmem:[%s1 + $0x6c8] sm:$0xf]
    %v456 = vld [vmem:[%s1 + $0x6cc] sm:$0xf]
    %v457 = vld [vmem:[%s1 + $0x6d0] sm:$0xf]
    %v458 = vld [vmem:[%s1 + $0x6d4] sm:$0xf]
    %v459 = vld [vmem:[%s1 + $0x6d8] sm:$0xf]
    %v460 = vld [vmem:[%s1 + $0x6dc] sm:$0xf]
    %v461 = vld [vmem:[%s1 + $0x6e0] sm:$0xf]
    %v462 = vld [vmem:[%s1 + $0x6e4] sm:$0xf]
    %v463 = vld [vmem:[%s1 + $0x6e8] sm:$0xf]
    %v464 = vld [vmem:[%s1 + $0x6ec] sm:$0xf]
    %v465 = vld [vmem:[%s1 + $0x6f0] sm:$0xf]
    %v466 = vld [vmem:[%s1 + $0x6f4] sm:$0xf]
    %v467 = vld [vmem:[%s1 + $0x6f8] sm:$0xf]
    %v468 = vld [vmem:[%s1 + $0x6fc] sm:$0xf]
    %v469 = vld [vmem:[%s1 + $0x700] sm:$0xf]
    %v470 = vld [vmem:[%s1 + $0x704] sm:$0xf]
    %v471 = vld [vmem:[%s1 + $0x708] sm:$0xf]
    %v472 = vld [vmem:[%s1 + $0x70c] sm:$0xf]
    %v473 = vld [vmem:[%s1 + $0x710] sm:$0xf]
    %v474 = vld [vmem:[%s1 + $0x714] sm:$0xf]
    %v475 = vld [vmem:[%s1 + $0x718] sm:$0xf]
    %v476 = vld [vmem:[%s1 + $0x71c] sm:$0xf]
    %v477 = vld [vmem:[%s1 + $0x720] sm:$0xf]
    %v478 = vld [vmem:[%s1 + $0x724] sm:$0xf]
    %v479 = vld [vmem:[%s1 + $0x728] sm:$0xf]
    %v480 = vld [vmem:[%s1 + $0x72c] sm:$0xf]
    %v481 = vld [vmem:[%s1 + $0x730] sm:$0xf]
    %v482 = vld [vmem:[%s1 + $0x734] sm:$0xf]
    %v483 = vld [vmem:[%s1 + $0x738] sm:$0xf]
    %v484 = vld [vmem:[%s1 + $0x73c] sm:$0xf]
    %v485 = vld [vmem:[%s1 + $0x740] sm:$0xf]
    %v486 = vld [vmem:[%s1 + $0x744] sm:$0xf]
    %v487 = vld [vmem:[%s1 + $0x748] sm:$0xf]
    %v488 = vld [vmem:[%s1 + $0x74c] sm:$0xf]
    %v489 = vld [vmem:[%s1 + $0x750] sm:$0xf]
    %v490 = vld [vmem:[%s1 + $0x754] sm:$0xf]
    %v491 = vld [vmem:[%s1 + $0x758] sm:$0xf]
    %v492 = vld [vmem:[%s1 + $0x75c] sm:$0xf]
    %v493 = vld [vmem:[%s1 + $0x760] sm:$0xf]
    %v494 = vld [vmem:[%s1 + $0x764] sm:$0xf]
    %v495 = vld [vmem:[%s1 + $0x768] sm:$0xf]
    %v496 = vld [vmem:[%s1 + $0x76c] sm:$0xf]
    %v497 = vld [vmem:[%s1 + $0x770] sm:$0xf]
    %v498 = vld [vmem:[%s1 + $0x774] sm:$0xf]
    %v499 = vld [vmem:[%s1 + $0x778] sm:$0xf]
    %v500 = vld [vmem:[%s1 + $0x77c] sm:$0xf]
    %v501 = vld [vmem:[%s1 + $0x780] sm:$0xf]
    %v502 = vld [vmem:[%s1 + $0x784] sm:$0xf]
    %v503 = vld [vmem:[%s1 + $0x788] sm:$0xf]
    %v504 = vld [vmem:[%s1 + $0x78c] sm:$0xf]
    %v505 = vld [vmem:[%s1 + $0x790] sm:$0xf]
    %v506 = vld [vmem:[%s1 + $0x794] sm:$0xf]
    %v507 = vld [vmem:[%s1 + $0x798] sm:$0xf]
    %v508 = vld [vmem:[%s1 + $0x79c] sm:$0xf]
    %v509 = vld [vmem:[%s1 + $0x7a0] sm:$0xf]
    %v510 = vld [vmem:[%s1 + $0x7a4] sm:$0xf]
    %v511 = vld [vmem:[%s1 + $0x7a8] sm:$0xf]
    %v512 = vld [vmem:[%s1 + $0x7ac] sm:$0xf]
    %v513 = vld [vmem:[%s1 + $0x7b0] sm:$0xf]
    %v514 = vld [vmem:[%s1 + $0x7b4] sm:$0xf]
    %v515 = vld [vmem:[%s1 + $0x7b8] sm:$0xf]
    %v516 = vld [vmem:[%s1 + $0x7bc] sm:$0xf]
    %v517 = vld [vmem:[%s1 + $0x7c0] sm:$0xf]
    %v518 = vld [vmem:[%s1 + $0x7c4] sm:$0xf]
    %v519 = vld [vmem:[%s1 + $0x7c8] sm:$0xf]
    %v520 = vld [vmem:[%s1 + $0x7cc] sm:$0xf]
    %v521 = vld [vmem:[%s1 + $0x7d0] sm:$0xf]
    %v522 = vld [vmem:[%s1 + $0x7d4] sm:$0xf]
    %v523 = vld [vmem:[%s1 + $0x7d8] sm:$0xf]
    %v524 = vld [vmem:[%s1 + $0x7dc] sm:$0xf]
    %v525 = vld [vmem:[%s1 + $0x7e0] sm:$0xf]
    %v526 = vld [vmem:[%s1 + $0x7e4] sm:$0xf]
    %v527 = vld [vmem:[%s1 + $0x7e8] sm:$0xf]
    %v528 = vld [vmem:[%s1 + $0x7ec] sm:$0xf]
    %v529 = vld [vmem:[%s1 + $0x7f0] sm:$0xf]
    %v530 = vld [vmem:[%s1 + $0x7f4] sm:$0xf]
    %v531 = vld [vmem:[%s1 + $0x7f8] sm:$0xf]
    %v532 = vld [vmem:[%s1 + $0x7fc] sm:$0xf]
    %v533 = vld [vmem:[%s1 + $0x800] sm:$0xf]
    %v534 = vld [vmem:[%s1 + $0x804] sm:$0xf]
    %v535 = vld [vmem:[%s1 + $0x808] sm:$0xf]
    %v536 = vld [vmem:[%s1 + $0x80c] sm:$0xf]
    %v537 = vld [vmem:[%s1 + $0x810] sm:$0xf]
    %v538 = vld [vmem:[%s1 + $0x814] sm:$0xf]
    %v539 = vld [vmem:[%s1 + $0x818] sm:$0xf]
    %v540 = vld [vmem:[%s1 + $0x81c] sm:$0xf]
    %v541 = vld [vmem:[%s1 + $0x820] sm:$0xf]
    %v542 = vld [vmem:[%s1 + $0x824] sm:$0xf]
    %v543 = vld [vmem:[%s1 + $0x828] sm:$0xf]
    %v544 = vld [vmem:[%s1 + $0x82c] sm:$0xf]
    %v545 = vld [vmem:[%s1 + $0x830] sm:$0xf]
    %v546 = vld [vmem:[%s1 + $0x834] sm:$0xf]
    %v547 = vld [vmem:[%s1 + $0x838] sm:$0xf]
    %v548 = vld [vmem:[%s1 + $0x83c] sm:$0xf]
    %v549 = vld [vmem:[%s1 + $0x840] sm:$0xf]
    %v550 = vld [vmem:[%s1 + $0x844] sm:$0xf]
    %v551 = vld [vmem:[%s1 + $0x848] sm:$0xf]
    %v552 = vld [vmem:[%s1 + $0x84c] sm:$0xf]
    %v553 = vld [vmem:[%s1 + $0x850] sm:$0xf]
    %v554 = vld [vmem:[%s1 + $0x854] sm:$0xf]
    %v555 = vld [vmem:[%s1 + $0x858] sm:$0xf]
    %v556 = vld [vmem:[%s1 + $0x85c] sm:$0xf]
    %v557 = vld [vmem:[%s1 + $0x860] sm:$0xf]
    %v558 = vld [vmem:[%s1 + $0x864] sm:$0xf]
    %v559 = vld [vmem:[%s1 + $0x868] sm:$0xf]
    %v560 = vld [vmem:[%s1 + $0x86c] sm:$0xf]
    %v561 = vld [vmem:[%s1 + $0x870] sm:$0xf]
    %v562 = vld [vmem:[%s1 + $0x874] sm:$0xf]
    %v563 = vld [vmem:[%s1 + $0x878] sm:$0xf]
    %v564 = vld [vmem:[%s1 + $0x87c] sm:$0xf]
    %v565 = vld [vmem:[%s1 + $0x880] sm:$0xf]
    %v566 = vld [vmem:[%s1 + $0x884] sm:$0xf]
    %v567 = vld [vmem:[%s1 + $0x888] sm:$0xf]
    %v568 = vld [vmem:[%s1 + $0x88c] sm:$0xf]
    %v569 = vld [vmem:[%s1 + $0x890] sm:$0xf]
    %v570 = vld [vmem:[%s1 + $0x894] sm:$0xf]
    %v571 = vld [vmem:[%s1 + $0x898] sm:$0xf]
    %v572 = vld [vmem:[%s1 + $0x89c] sm:$0xf]
    %v573 = vld [vmem:[%s1 + $0x8a0] sm:$0xf]
    %v574 = vld [vmem:[%s1 + $0x8a4] sm:$0xf]
    %v575 = vld [vmem:[%s1 + $0x8a8] sm:$0xf]
    %v576 = vld [vmem:[%s1 + $0x8ac] sm:$0xf]
    %v577 = vld [vmem:[%s1 + $0x8b0] sm:$0xf]
    %v578 = vld [vmem:[%s1 + $0x8b4] sm:$0xf]
    %v579 = vld [vmem:[%s1 + $0x8b8] sm:$0xf]
    %v580 = vld [vmem:[%s1 + $0x8bc] sm:$0xf]
    %v581 = vld [vmem:[%s1 + $0x8c0] sm:$0xf]
    %v582 = vld [vmem:[%s1 + $0x8c4] sm:$0xf]
    %v583 = vld [vmem:[%s1 + $0x8c8] sm:$0xf]
    %v584 = vld [vmem:[%s1 + $0x8cc] sm:$0xf]
    %v585 = vld [vmem:[%s1 + $0x8d0] sm:$0xf]
    %v586 = vld [vmem:[%s1 + $0x8d4] sm:$0xf]
    %v587 = vld [vmem:[%s1 + $0x8d8] sm:$0xf]
    %v588 = vld [vmem:[%s1 + $0x8dc] sm:$0xf]
    %v589 = vld [vmem:[%s1 + $0x8e0] sm:$0xf]
    %v590 = vld [vmem:[%s1 + $0x8e4] sm:$0xf]
    %v591 = vld [vmem:[%s1 + $0x8e8] sm:$0xf]
    %v592 = vld [vmem:[%s1 + $0x8ec] sm:$0xf]
    %v593 = vld [vmem:[%s1 + $0x8f0] sm:$0xf]
    %v594 = vld [vmem:[%s1 + $0x8f4] sm:$0xf]
    %v595 = vld [vmem:[%s1 + $0x8f8] sm:$0xf]
    %v596 = vld [vmem:[%s1 + $0x8fc] sm:$0xf]
    %v597 = vld [vmem:[%s1 + $0x900] sm:$0xf]
    %v598 = vld [vmem:[%s1 + $0x904] sm:$0xf]
    %v599 = vld [vmem:[%s1 + $0x908] sm:$0xf]
    %v600 = vld [vmem:[%s1 + $0x90c] sm:$0xf]
    %v601 = vld [vmem:[%s1 + $0x910] sm:$0xf]
    %v602 = vld [vmem:[%s1 + $0x914] sm:$0xf]
    %v603 = vld [vmem:[%s1 + $0x918] sm:$0xf]
    %v604 = vld [vmem:[%s1 + $0x91c] sm:$0xf]
    %v605 = vld [vmem:[%s1 + $0x920] sm:$0xf]
    %v606 = vld [vmem:[%s1 + $0x924] sm:$0xf]
    %v607 = vld [vmem:[%s1 + $0x928] sm:$0xf]
    %v608 = vld [vmem:[%s1 + $0x92c] sm:$0xf]
    %v609 = vld [vmem:[%s1 + $0x930] sm:$0xf]
    %v610 = vld [vmem:[%s1 + $0x934] sm:$0xf]
    %v611 = vld [vmem:[%s1 + $0x938] sm:$0xf]
    %v612 = vld [vmem:[%s1 + $0x93c] sm:$0xf]
    %v613 = vld [vmem:[%s1 + $0x940] sm:$0xf]
    %v614 = vld [vmem:[%s1 + $0x944] sm:$0xf]
    %v615 = vld [vmem:[%s1 + $0x948] sm:$0xf]
    %v616 = vld [vmem:[%s1 + $0x94c] sm:$0xf]
    %v617 = vld [vmem:[%s1 + $0x950] sm:$0xf]
    %v618 = vld [vmem:[%s1 + $0x954] sm:$0xf]
    %v619 = vld [vmem:[%s1 + $0x958] sm:$0xf]
    %v620 = vld [vmem:[%s1 + $0x95c] sm:$0xf]
    %v621 = vld [vmem:[%s1 + $0x960] sm:$0xf]
    %v622 = vld [vmem:[%s1 + $0x964] sm:$0xf]
    %v623 = vld [vmem:[%s1 + $0x968] sm:$0xf]
    %v624 = vld [vmem:[%s1 + $0x96c] sm:$0xf]
    %v625 = vld [vmem:[%s1 + $0x970] sm:$0xf]
    %v626 = vld [vmem:[%s1 + $0x974] sm:$0xf]
    %v627 = vld [vmem:[%s1 + $0x978] sm:$0xf]
    %v628 = vld [vmem:[%s1 + $0x97c] sm:$0xf]
    %v629 = vld [vmem:[%s1 + $0x980] sm:$0xf]
    %v630 = vld [vmem:[%s1 + $0x984] sm:$0xf]
    %v631 = vld [vmem:[%s1 + $0x988] sm:$0xf]
    %v632 = vld [vmem:[%s1 + $0x98c] sm:$0xf]
    %v633 = vld [vmem:[%s1 + $0x990] sm:$0xf]
    %v634 = vld [vmem:[%s1 + $0x994] sm:$0xf]
    %v635 = vld [vmem:[%s1 + $0x998] sm:$0xf]
    %v636 = vld [vmem:[%s1 + $0x99c] sm:$0xf]
    %v637 = vld [vmem:[%s1 + $0x9a0] sm:$0xf]
    %v638 = vld [vmem:[%s1 + $0x9a4] sm:$0xf]
    %v639 = vld [vmem:[%s1 + $0x9a8] sm:$0xf]
    %v640 = vld [vmem:[%s1 + $0x9ac] sm:$0xf]
    %v641 = vld [vmem:[%s1 + $0x9b0] sm:$0xf]
    %v642 = vld [vmem:[%s1 + $0x9b4] sm:$0xf]
    %v643 = vld [vmem:[%s1 + $0x9b8] sm:$0xf]
    %v644 = vld [vmem:[%s1 + $0x9bc] sm:$0xf]
    %v645 = vld [vmem:[%s1 + $0x9c0] sm:$0xf]
    %v646 = vld [vmem:[%s1 + $0x9c4] sm:$0xf]
    %v647 = vld [vmem:[%s1 + $0x9c8] sm:$0xf]
    %v648 = vld [vmem:[%s1 + $0x9cc] sm:$0xf]
    %v649 = vld [vmem:[%s1 + $0x9d0] sm:$0xf]
    %v650 = vld [vmem:[%s1 + $0x9d4] sm:$0xf]
    %v651 = vld [vmem:[%s1 + $0x9d8] sm:$0xf]
    %v652 = vld [vmem:[%s1 + $0x9dc] sm:$0xf]
    %v653 = vld [vmem:[%s1 + $0x9e0] sm:$0xf]
    %v654 = vld [vmem:[%s1 + $0x9e4] sm:$0xf]
    %v655 = vld [vmem:[%s1 + $0x9e8] sm:$0xf]
    %v656 = vld [vmem:[%s1 + $0x9ec] sm:$0xf]
    %v657 = vld [vmem:[%s1 + $0x9f0] sm:$0xf]
    %v658 = vld [vmem:[%s1 + $0x9f4] sm:$0xf]
    %v659 = vld [vmem:[%s1 + $0x9f8] sm:$0xf]
    %v660 = vld [vmem:[%s1 + $0x9fc] sm:$0xf]
    %v661 = vld [vmem:[%s1 + $0xa00] sm:$0xf]
    %v662 = vld [vmem:[%s1 + $0xa04] sm:$0xf]
    %v663 = vld [vmem:[%s1 + $0xa08] sm:$0xf]
    %v664 = vld [vmem:[%s1 + $0xa0c] sm:$0xf]
    %v665 = vld [vmem:[%s1 + $0xa10] sm:$0xf]
    %v666 = vld [vmem:[%s1 + $0xa14] sm:$0xf]
    %v667 = vld [vmem:[%s1 + $0xa18] sm:$0xf]
    %v668 = vld [vmem:[%s1 + $0xa1c] sm:$0xf]
    %v669 = vld [vmem:[%s1 + $0xa20] sm:$0xf]
    %v670 = vld [vmem:[%s1 + $0xa24] sm:$0xf]
    %v671 = vld [vmem:[%s1 + $0xa28] sm:$0xf]
    %v672 = vld [vmem:[%s1 + $0xa2c] sm:$0xf]
    %v673 = vld [vmem:[%s1 + $0xa30] sm:$0xf]
    %v674 = vld [vmem:[%s1 + $0xa34] sm:$0xf]
    %v675 = vld [vmem:[%s1 + $0xa38] sm:$0xf]
    %v676 = vld [vmem:[%s1 + $0xa3c] sm:$0xf]
    %v677 = vld [vmem:[%s1 + $0xa40] sm:$0xf]
    %v678 = vld [vmem:[%s1 + $0xa44] sm:$0xf]
    %v679 = vld [vmem:[%s1 + $0xa48] sm:$0xf]
    %v680 = vld [vmem:[%s1 + $0xa4c] sm:$0xf]
    %v681 = vld [vmem:[%s1 + $0xa50] sm:$0xf]
    %v682 = vld [vmem:[%s1 + $0xa54] sm:$0xf]
    %v683 = vld [vmem:[%s1 + $0xa58] sm:$0xf]
    %v684 = vld [vmem:[%s1 + $0xa5c] sm:$0xf]
    %v685 = vld [vmem:[%s1 + $0xa60] sm:$0xf]
    %v686 = vld [vmem:[%s1 + $0xa64] sm:$0xf]
    %v687 = vld [vmem:[%s1 + $0xa68] sm:$0xf]
    %v688 = vld [vmem:[%s1 + $0xa6c] sm:$0xf]
    %v689 = vld [vmem:[%s1 + $0xa70] sm:$0xf]
    %v690 = vld [vmem:[%s1 + $0xa74] sm:$0xf]
    %v691 = vld [vmem:[%s1 + $0xa78] sm:$0xf]
    %v692 = vld [vmem:[%s1 + $0xa7c] sm:$0xf]
    %v693 = vld [vmem:[%s1 + $0xa80] sm:$0xf]
    %v694 = vld [vmem:[%s1 + $0xa84] sm:$0xf]
    %v695 = vld [vmem:[%s1 + $0xa88] sm:$0xf]
    %v696 = vld [vmem:[%s1 + $0xa8c] sm:$0xf]
    %v697 = vld [vmem:[%s1 + $0xa90] sm:$0xf]
    %v698 = vld [vmem:[%s1 + $0xa94] sm:$0xf]
    %v699 = vld [vmem:[%s1 + $0xa98] sm:$0xf]
    %v700 = vld [vmem:[%s1 + $0xa9c] sm:$0xf]
    %v701 = vld [vmem:[%s1 + $0xaa0] sm:$0xf]
    %v702 = vld [vmem:[%s1 + $0xaa4] sm:$0xf]
    %v703 = vld [vmem:[%s1 + $0xaa8] sm:$0xf]
    %v704 = vld [vmem:[%s1 + $0xaac] sm:$0xf]
    %v705 = vld [vmem:[%s1 + $0xab0] sm:$0xf]
    %v706 = vld [vmem:[%s1 + $0xab4] sm:$0xf]
    %v707 = vld [vmem:[%s1 + $0xab8] sm:$0xf]
    %v708 = vld [vmem:[%s1 + $0xabc] sm:$0xf]
    %v709 = vld [vmem:[%s1 + $0xac0] sm:$0xf]
    %v710 = vld [vmem:[%s1 + $0xac4] sm:$0xf]
    %v711 = vld [vmem:[%s1 + $0xac8] sm:$0xf]
    %v712 = vld [vmem:[%s1 + $0xacc] sm:$0xf]
    %v713 = vld [vmem:[%s1 + $0xad0] sm:$0xf]
    %v714 = vld [vmem:[%s1 + $0xad4] sm:$0xf]
    %v715 = vld [vmem:[%s1 + $0xad8] sm:$0xf]
    %v716 = vld [vmem:[%s1 + $0xadc] sm:$0xf]
    %v717 = vld [vmem:[%s1 + $0xae0] sm:$0xf]
    %v718 = vld [vmem:[%s1 + $0xae4] sm:$0xf]
    %v719 = vld [vmem:[%s1 + $0xae8] sm:$0xf]
    %v720 = vld [vmem:[%s1 + $0xaec] sm:$0xf]
    %v721 = vld [vmem:[%s1 + $0xaf0] sm:$0xf]
    %v722 = vld [vmem:[%s1 + $0xaf4] sm:$0xf]
    %v723 = vld [vmem:[%s1 + $0xaf8] sm:$0xf]
    %v724 = vld [vmem:[%s1 + $0xafc] sm:$0xf]
    %v725 = vld [vmem:[%s1 + $0xb00] sm:$0xf]
    %v726 = vld [vmem:[%s1 + $0xb04] sm:$0xf]
    %v727 = vld [vmem:[%s1 + $0xb08] sm:$0xf]
    %v728 = vld [vmem:[%s1 + $0xb0c] sm:$0xf]
    %v729 = vld [vmem:[%s1 + $0xb10] sm:$0xf]
    %v730 = vld [vmem:[%s1 + $0xb14] sm:$0xf]
    %v731 = vld [vmem:[%s1 + $0xb18] sm:$0xf]
    %v732 = vld [vmem:[%s1 + $0xb1c] sm:$0xf]
    %v733 = vld [vmem:[%s1 + $0xb20] sm:$0xf]
    %v734 = vld [vmem:[%s1 + $0xb24] sm:$0xf]
    %v735 = vld [vmem:[%s1 + $0xb28] sm:$0xf]
    %v736 = vld [vmem:[%s1 + $0xb2c] sm:$0xf]
    %v737 = vld [vmem:[%s1 + $0xb30] sm:$0xf]
    %v738 = vld [vmem:[%s1 + $0xb34] sm:$0xf]
    %v739 = vld [vmem:[%s1 + $0xb38] sm:$0xf]
    %v740 = vld [vmem:[%s1 + $0xb3c] sm:$0xf]
    %v741 = vld [vmem:[%s1 + $0xb40] sm:$0xf]
    %v742 = vld [vmem:[%s1 + $0xb44] sm:$0xf]
    %v743 = vld [vmem:[%s1 + $0xb48] sm:$0xf]
    %v744 = vld [vmem:[%s1 + $0xb4c] sm:$0xf]
    %v745 = vld [vmem:[%s1 + $0xb50] sm:$0xf]
    %v746 = vld [vmem:[%s1 + $0xb54] sm:$0xf]
    %v747 = vld [vmem:[%s1 + $0xb58] sm:$0xf]
    %v748 = vld [vmem:[%s1 + $0xb5c] sm:$0xf]
    %v749 = vld [vmem:[%s1 + $0xb60] sm:$0xf]
    %v750 = vld [vmem:[%s1 + $0xb64] sm:$0xf]
    %v751 = vld [vmem:[%s1 + $0xb68] sm:$0xf]
    %v752 = vld [vmem:[%s1 + $0xb6c] sm:$0xf]
    %v753 = vld [vmem:[%s1 + $0xb70] sm:$0xf]
    %v754 = vld [vmem:[%s1 + $0xb74] sm:$0xf]
    %v755 = vld [vmem:[%s1 + $0xb78] sm:$0xf]
    %v756 = vld [vmem:[%s1 + $0xb7c] sm:$0xf]
    %v757 = vld [vmem:[%s1 + $0xb80] sm:$0xf]
    %v758 = vld [vmem:[%s1 + $0xb84] sm:$0xf]
    %v759 = vld [vmem:[%s1 + $0xb88] sm:$0xf]
    %v760 = vld [vmem:[%s1 + $0xb8c] sm:$0xf]
    %v761 = vld [vmem:[%s1 + $0xb90] sm:$0xf]
    %v762 = vld [vmem:[%s1 + $0xb94] sm:$0xf]
    %v763 = vld [vmem:[%s1 + $0xb98] sm:$0xf]
    %v764 = vld [vmem:[%s1 + $0xb9c] sm:$0xf]
    %v765 = vld [vmem:[%s1 + $0xba0] sm:$0xf]
    %v766 = vld [vmem:[%s1 + $0xba4] sm:$0xf]
    %v767 = vld [vmem:[%s1 + $0xba8] sm:$0xf]
    %v768 = vld [vmem:[%s1 + $0xbac] sm:$0xf]
    %v769 = vld [vmem:[%s1 + $0xbb0] sm:$0xf]
    %v770 = vld [vmem:[%s1 + $0xbb4] sm:$0xf]
    %v771 = vld [vmem:[%s1 + $0xbb8] sm:$0xf]
    %v772 = vld [vmem:[%s1 + $0xbbc] sm:$0xf]
    %v773 = vld [vmem:[%s1 + $0xbc0] sm:$0xf]
    %v774 = vld [vmem:[%s1 + $0xbc4] sm:$0xf]
    %v775 = vld [vmem:[%s1 + $0xbc8] sm:$0xf]
    %v776 = vld [vmem:[%s1 + $0xbcc] sm:$0xf]
    %v777 = vld [vmem:[%s1 + $0xbd0] sm:$0xf]
    %v778 = vld [vmem:[%s1 + $0xbd4] sm:$0xf]
    %v779 = vld [vmem:[%s1 + $0xbd8] sm:$0xf]
    %v780 = vld [vmem:[%s1 + $0xbdc] sm:$0xf]
    %v781 = vld [vmem:[%s1 + $0xbe0] sm:$0xf]
    %v782 = vld [vmem:[%s1 + $0xbe4] sm:$0xf]
    %v783 = vld [vmem:[%s1 + $0xbe8] sm:$0xf]
    %v784 = vld [vmem:[%s1 + $0xbec] sm:$0xf]
    %v785 = vld [vmem:[%s1 + $0xbf0] sm:$0xf]
    %v786 = vld [vmem:[%s1 + $0xbf4] sm:$0xf]
    %v787 = vld [vmem:[%s1 + $0xbf8] sm:$0xf]
    %v788 = vld [vmem:[%s1 + $0xbfc] sm:$0xf]
    %v789 = vld [vmem:[%s1 + $0xc00] sm:$0xf]
    %v790 = vld [vmem:[%s1 + $0xc04] sm:$0xf]
    %v791 = vld [vmem:[%s1 + $0xc08] sm:$0xf]
    %v792 = vld [vmem:[%s1 + $0xc0c] sm:$0xf]
    %v793 = vld [vmem:[%s1 + $0xc10] sm:$0xf]
    %v794 = vld [vmem:[%s1 + $0xc14] sm:$0xf]
    %v795 = vld [vmem:[%s1 + $0xc18] sm:$0xf]
    %v796 = vld [vmem:[%s1 + $0xc1c] sm:$0xf]
    %v797 = vld [vmem:[%s1 + $0xc20] sm:$0xf]
    %v798 = vld [vmem:[%s1 + $0xc24] sm:$0xf]
    %v799 = vld [vmem:[%s1 + $0xc28] sm:$0xf]
    %v800 = vld [vmem:[%s1 + $0xc2c] sm:$0xf]
    %v801 = vld [vmem:[%s1 + $0xc30] sm:$0xf]
    %v802 = vld [vmem:[%s1 + $0xc34] sm:$0xf]
    %v803 = vld [vmem:[%s1 + $0xc38] sm:$0xf]
    %v804 = vld [vmem:[%s1 + $0xc3c] sm:$0xf]
    %v805 = vld [vmem:[%s1 + $0xc40] sm:$0xf]
    %v806 = vld [vmem:[%s1 + $0xc44] sm:$0xf]
    %v807 = vld [vmem:[%s1 + $0xc48] sm:$0xf]
    %v808 = vld [vmem:[%s1 + $0xc4c] sm:$0xf]
    %v809 = vld [vmem:[%s1 + $0xc50] sm:$0xf]
    %v810 = vld [vmem:[%s1 + $0xc54] sm:$0xf]
    %v811 = vld [vmem:[%s1 + $0xc58] sm:$0xf]
    %v812 = vld [vmem:[%s1 + $0xc5c] sm:$0xf]
    %v813 = vld [vmem:[%s1 + $0xc60] sm:$0xf]
    %v814 = vld [vmem:[%s1 + $0xc64] sm:$0xf]
    %v815 = vld [vmem:[%s1 + $0xc68] sm:$0xf]
    %v816 = vld [vmem:[%s1 + $0xc6c] sm:$0xf]
    %v817 = vld [vmem:[%s1 + $0xc70] sm:$0xf]
    %v818 = vld [vmem:[%s1 + $0xc74] sm:$0xf]
    %v819 = vld [vmem:[%s1 + $0xc78] sm:$0xf]
    %v820 = vld [vmem:[%s1 + $0xc7c] sm:$0xf]
    %v821 = vld [vmem:[%s1 + $0xc80] sm:$0xf]
    %v822 = vld [vmem:[%s1 + $0xc84] sm:$0xf]
    %v823 = vld [vmem:[%s1 + $0xc88] sm:$0xf]
    %v824 = vld [vmem:[%s1 + $0xc8c] sm:$0xf]
    %v825 = vld [vmem:[%s1 + $0xc90] sm:$0xf]
    %v826 = vld [vmem:[%s1 + $0xc94] sm:$0xf]
    %v827 = vld [vmem:[%s1 + $0xc98] sm:$0xf]
    %v828 = vld [vmem:[%s1 + $0xc9c] sm:$0xf]
    %v829 = vld [vmem:[%s1 + $0xca0] sm:$0xf]
    %v830 = vld [vmem:[%s1 + $0xca4] sm:$0xf]
    %v831 = vld [vmem:[%s1 + $0xca8] sm:$0xf]
    %v832 = vld [vmem:[%s1 + $0xcac] sm:$0xf]
    %v833 = vld [vmem:[%s1 + $0xcb0] sm:$0xf]
    %v834 = vld [vmem:[%s1 + $0xcb4] sm:$0xf]
    %v835 = vld [vmem:[%s1 + $0xcb8] sm:$0xf]
    %v836 = vld [vmem:[%s1 + $0xcbc] sm:$0xf]
    %v837 = vld [vmem:[%s1 + $0xcc0] sm:$0xf]
    %v838 = vld [vmem:[%s1 + $0xcc4] sm:$0xf]
    %v839 = vld [vmem:[%s1 + $0xcc8] sm:$0xf]
    %v840 = vld [vmem:[%s1 + $0xccc] sm:$0xf]
    %v841 = vld [vmem:[%s1 + $0xcd0] sm:$0xf]
    %v842 = vld [vmem:[%s1 + $0xcd4] sm:$0xf]
    %v843 = vld [vmem:[%s1 + $0xcd8] sm:$0xf]
    %v844 = vld [vmem:[%s1 + $0xcdc] sm:$0xf]
    %v845 = vld [vmem:[%s1 + $0xce0] sm:$0xf]
    %v846 = vld [vmem:[%s1 + $0xce4] sm:$0xf]
    %v847 = vld [vmem:[%s1 + $0xce8] sm:$0xf]
    %v848 = vld [vmem:[%s1 + $0xcec] sm:$0xf]
    %v849 = vld [vmem:[%s1 + $0xcf0] sm:$0xf]
    %v850 = vld [vmem:[%s1 + $0xcf4] sm:$0xf]
    %v851 = vld [vmem:[%s1 + $0xcf8] sm:$0xf]
    %v852 = vld [vmem:[%s1 + $0xcfc] sm:$0xf]
    %v853 = vld [vmem:[%s1 + $0xd00] sm:$0xf]
    %v854 = vld [vmem:[%s1 + $0xd04] sm:$0xf]
    %v855 = vld [vmem:[%s1 + $0xd08] sm:$0xf]
    %v856 = vld [vmem:[%s1 + $0xd0c] sm:$0xf]
    %v857 = vld [vmem:[%s1 + $0xd10] sm:$0xf]
    %v858 = vld [vmem:[%s1 + $0xd14] sm:$0xf]
    %v859 = vld [vmem:[%s1 + $0xd18] sm:$0xf]
    %v860 = vld [vmem:[%s1 + $0xd1c] sm:$0xf]
    %v861 = vld [vmem:[%s1 + $0xd20] sm:$0xf]
    %v862 = vld [vmem:[%s1 + $0xd24] sm:$0xf]
    %v863 = vld [vmem:[%s1 + $0xd28] sm:$0xf]
    %v864 = vld [vmem:[%s1 + $0xd2c] sm:$0xf]
    %v865 = vld [vmem:[%s1 + $0xd30] sm:$0xf]
    %v866 = vld [vmem:[%s1 + $0xd34] sm:$0xf]
    %v867 = vld [vmem:[%s1 + $0xd38] sm:$0xf]
    %v868 = vld [vmem:[%s1 + $0xd3c] sm:$0xf]
    %v869 = vld [vmem:[%s1 + $0xd40] sm:$0xf]
    %v870 = vld [vmem:[%s1 + $0xd44] sm:$0xf]
    %v871 = vld [vmem:[%s1 + $0xd48] sm:$0xf]
    %v872 = vld [vmem:[%s1 + $0xd4c] sm:$0xf]
    %v873 = vld [vmem:[%s1 + $0xd50] sm:$0xf]
    %v874 = vld [vmem:[%s1 + $0xd54] sm:$0xf]
    %v875 = vld [vmem:[%s1 + $0xd58] sm:$0xf]
    %v876 = vld [vmem:[%s1 + $0xd5c] sm:$0xf]
    %v877 = vld [vmem:[%s1 + $0xd60] sm:$0xf]
    %v878 = vld [vmem:[%s1 + $0xd64] sm:$0xf]
    %v879 = vld [vmem:[%s1 + $0xd68] sm:$0xf]
    %v880 = vld [vmem:[%s1 + $0xd6c] sm:$0xf]
    %v881 = vld [vmem:[%s1 + $0xd70] sm:$0xf]
    %v882 = vld [vmem:[%s1 + $0xd74] sm:$0xf]
    %v883 = vld [vmem:[%s1 + $0xd78] sm:$0xf]
    %v884 = vld [vmem:[%s1 + $0xd7c] sm:$0xf]
    %v885 = vld [vmem:[%s1 + $0xd80] sm:$0xf]
    %v886 = vld [vmem:[%s1 + $0xd84] sm:$0xf]
    %v887 = vld [vmem:[%s1 + $0xd88] sm:$0xf]
    %v888 = vld [vmem:[%s1 + $0xd8c] sm:$0xf]
    %v889 = vld [vmem:[%s1 + $0xd90] sm:$0xf]
    %v890 = vld [vmem:[%s1 + $0xd94] sm:$0xf]
    %v891 = vld [vmem:[%s1 + $0xd98] sm:$0xf]
    %v892 = vld [vmem:[%s1 + $0xd9c] sm:$0xf]
    %v893 = vld [vmem:[%s1 + $0xda0] sm:$0xf]
    %v894 = vld [vmem:[%s1 + $0xda4] sm:$0xf]
    %v895 = vld [vmem:[%s1 + $0xda8] sm:$0xf]
    %v896 = vld [vmem:[%s1 + $0xdac] sm:$0xf]
    %v897 = vld [vmem:[%s1 + $0xdb0] sm:$0xf]
    %v898 = vld [vmem:[%s1 + $0xdb4] sm:$0xf]
    %v899 = vld [vmem:[%s1 + $0xdb8] sm:$0xf]
    %v900 = vld [vmem:[%s1 + $0xdbc] sm:$0xf]
    %v901 = vld [vmem:[%s1 + $0xdc0] sm:$0xf]
    %v902 = vld [vmem:[%s1 + $0xdc4] sm:$0xf]
    %v903 = vld [vmem:[%s1 + $0xdc8] sm:$0xf]
    %v904 = vld [vmem:[%s1 + $0xdcc] sm:$0xf]
    %v905 = vld [vmem:[%s1 + $0xdd0] sm:$0xf]
    %v906 = vld [vmem:[%s1 + $0xdd4] sm:$0xf]
    %v907 = vld [vmem:[%s1 + $0xdd8] sm:$0xf]
    %v908 = vld [vmem:[%s1 + $0xddc] sm:$0xf]
    %v909 = vld [vmem:[%s1 + $0xde0] sm:$0xf]
    %v910 = vld [vmem:[%s1 + $0xde4] sm:$0xf]
    %v911 = vld [vmem:[%s1 + $0xde8] sm:$0xf]
    %v912 = vld [vmem:[%s1 + $0xdec] sm:$0xf]
    %v913 = vld [vmem:[%s1 + $0xdf0] sm:$0xf]
    %v914 = vld [vmem:[%s1 + $0xdf4] sm:$0xf]
    %v915 = vld [vmem:[%s1 + $0xdf8] sm:$0xf]
    %v916 = vld [vmem:[%s1 + $0xdfc] sm:$0xf]
    %v917 = vld [vmem:[%s1 + $0xe00] sm:$0xf]
    %v918 = vld [vmem:[%s1 + $0xe04] sm:$0xf]
    %v919 = vld [vmem:[%s1 + $0xe08] sm:$0xf]
    %v920 = vld [vmem:[%s1 + $0xe0c] sm:$0xf]
    %v921 = vld [vmem:[%s1 + $0xe10] sm:$0xf]
    %v922 = vld [vmem:[%s1 + $0xe14] sm:$0xf]
    %v923 = vld [vmem:[%s1 + $0xe18] sm:$0xf]
    %v924 = vld [vmem:[%s1 + $0xe1c] sm:$0xf]
    %v925 = vld [vmem:[%s1 + $0xe20] sm:$0xf]
    %v926 = vld [vmem:[%s1 + $0xe24] sm:$0xf]
    %v927 = vld [vmem:[%s1 + $0xe28] sm:$0xf]
    %v928 = vld [vmem:[%s1 + $0xe2c] sm:$0xf]
    %v929 = vld [vmem:[%s1 + $0xe30] sm:$0xf]
    %v930 = vld [vmem:[%s1 + $0xe34] sm:$0xf]
    %v931 = vld [vmem:[%s1 + $0xe38] sm:$0xf]
    %v932 = vld [vmem:[%s1 + $0xe3c] sm:$0xf]
    %v933 = vld [vmem:[%s1 + $0xe40] sm:$0xf]
    %v934 = vld [vmem:[%s1 + $0xe44] sm:$0xf]
    %v935 = vld [vmem:[%s1 + $0xe48] sm:$0xf]
    %v936 = vld [vmem:[%s1 + $0xe4c] sm:$0xf]
    %v937 = vld [vmem:[%s1 + $0xe50] sm:$0xf]
    %v938 = vld [vmem:[%s1 + $0xe54] sm:$0xf]
    %v939 = vld [vmem:[%s1 + $0xe58] sm:$0xf]
    %v940 = vld [vmem:[%s1 + $0xe5c] sm:$0xf]
    %v941 = vld [vmem:[%s1 + $0xe60] sm:$0xf]
    %v942 = vld [vmem:[%s1 + $0xe64] sm:$0xf]
    %v943 = vld [vmem:[%s1 + $0xe68] sm:$0xf]
    %v944 = vld [vmem:[%s1 + $0xe6c] sm:$0xf]
    %v945 = vld [vmem:[%s1 + $0xe70] sm:$0xf]
    %v946 = vld [vmem:[%s1 + $0xe74] sm:$0xf]
    %v947 = vld [vmem:[%s1 + $0xe78] sm:$0xf]
    %v948 = vld [vmem:[%s1 + $0xe7c] sm:$0xf]
    %v949 = vld [vmem:[%s1 + $0xe80] sm:$0xf]
    %v950 = vld [vmem:[%s1 + $0xe84] sm:$0xf]
    %v951 = vld [vmem:[%s1 + $0xe88] sm:$0xf]
    %v952 = vld [vmem:[%s1 + $0xe8c] sm:$0xf]
    %v953 = vld [vmem:[%s1 + $0xe90] sm:$0xf]
    %v954 = vld [vmem:[%s1 + $0xe94] sm:$0xf]
    %v955 = vld [vmem:[%s1 + $0xe98] sm:$0xf]
    %v956 = vld [vmem:[%s1 + $0xe9c] sm:$0xf]
    %v957 = vld [vmem:[%s1 + $0xea0] sm:$0xf]
    %v958 = vld [vmem:[%s1 + $0xea4] sm:$0xf]
    %v959 = vld [vmem:[%s1 + $0xea8] sm:$0xf]
    %v960 = vld [vmem:[%s1 + $0xeac] sm:$0xf]
    %v961 = vld [vmem:[%s1 + $0xeb0] sm:$0xf]
    %v962 = vld [vmem:[%s1 + $0xeb4] sm:$0xf]
    %v963 = vld [vmem:[%s1 + $0xeb8] sm:$0xf]
    %v964 = vld [vmem:[%s1 + $0xebc] sm:$0xf]
    %v965 = vld [vmem:[%s1 + $0xec0] sm:$0xf]
    %v966 = vld [vmem:[%s1 + $0xec4] sm:$0xf]
    %v967 = vld [vmem:[%s1 + $0xec8] sm:$0xf]
    %v968 = vld [vmem:[%s1 + $0xecc] sm:$0xf]
    %v969 = vld [vmem:[%s1 + $0xed0] sm:$0xf]
    %v970 = vld [vmem:[%s1 + $0xed4] sm:$0xf]
    %v971 = vld [vmem:[%s1 + $0xed8] sm:$0xf]
    %v972 = vld [vmem:[%s1 + $0xedc] sm:$0xf]
    %v973 = vld [vmem:[%s1 + $0xee0] sm:$0xf]
    %v974 = vld [vmem:[%s1 + $0xee4] sm:$0xf]
    %v975 = vld [vmem:[%s1 + $0xee8] sm:$0xf]
    %v976 = vld [vmem:[%s1 + $0xeec] sm:$0xf]
    %v977 = vld [vmem:[%s1 + $0xef0] sm:$0xf]
    %v978 = vld [vmem:[%s1 + $0xef4] sm:$0xf]
    %v979 = vld [vmem:[%s1 + $0xef8] sm:$0xf]
    %v980 = vld [vmem:[%s1 + $0xefc] sm:$0xf]
    %v981 = vld [vmem:[%s1 + $0xf00] sm:$0xf]
    %v982 = vld [vmem:[%s1 + $0xf04] sm:$0xf]
    %v983 = vld [vmem:[%s1 + $0xf08] sm:$0xf]
    %v984 = vld [vmem:[%s1 + $0xf0c] sm:$0xf]
    %v985 = vld [vmem:[%s1 + $0xf10] sm:$0xf]
    %v986 = vld [vmem:[%s1 + $0xf14] sm:$0xf]
    %v987 = vld [vmem:[%s1 + $0xf18] sm:$0xf]
    %v988 = vld [vmem:[%s1 + $0xf1c] sm:$0xf]
    %v989 = vld [vmem:[%s1 + $0xf20] sm:$0xf]
    %v990 = vld [vmem:[%s1 + $0xf24] sm:$0xf]
    %v991 = vld [vmem:[%s1 + $0xf28] sm:$0xf]
    %v992 = vld [vmem:[%s1 + $0xf2c] sm:$0xf]
    %v993 = vld [vmem:[%s1 + $0xf30] sm:$0xf]
    %v994 = vld [vmem:[%s1 + $0xf34] sm:$0xf]
    %v995 = vld [vmem:[%s1 + $0xf38] sm:$0xf]
    %v996 = vld [vmem:[%s1 + $0xf3c] sm:$0xf]
    %v997 = vld [vmem:[%s1 + $0xf40] sm:$0xf]
    %v998 = vld [vmem:[%s1 + $0xf44] sm:$0xf]
    %v999 = vld [vmem:[%s1 + $0xf48] sm:$0xf]
    %v1000 = vld [vmem:[%s1 + $0xf4c] sm:$0xf]
    %v1001 = vld [vmem:[%s1 + $0xf50] sm:$0xf]
    %v1002 = vld [vmem:[%s1 + $0xf54] sm:$0xf]
    %v1003 = vld [vmem:[%s1 + $0xf58] sm:$0xf]
    %v1004 = vld [vmem:[%s1 + $0xf5c] sm:$0xf]
    %v1005 = vld [vmem:[%s1 + $0xf60] sm:$0xf]
    %v1006 = vld [vmem:[%s1 + $0xf64] sm:$0xf]
    %v1007 = vld [vmem:[%s1 + $0xf68] sm:$0xf]
    %v1008 = vld [vmem:[%s1 + $0xf6c] sm:$0xf]
    %v1009 = vld [vmem:[%s1 + $0xf70] sm:$0xf]
    %v1010 = vld [vmem:[%s1 + $0xf74] sm:$0xf]
    %v1011 = vld [vmem:[%s1 + $0xf78] sm:$0xf]
    %v1012 = vld [vmem:[%s1 + $0xf7c] sm:$0xf]
    %v1013 = vld [vmem:[%s1 + $0xf80] sm:$0xf]
    %v1014 = vld [vmem:[%s1 + $0xf84] sm:$0xf]
    %v1015 = vld [vmem:[%s1 + $0xf88] sm:$0xf]
    %v1016 = vld [vmem:[%s1 + $0xf8c] sm:$0xf]
    %v1017 = vld [vmem:[%s1 + $0xf90] sm:$0xf]
    %v1018 = vld [vmem:[%s1 + $0xf94] sm:$0xf]
    %v1019 = vld [vmem:[%s1 + $0xf98] sm:$0xf]
    %v1020 = vld [vmem:[%s1 + $0xf9c] sm:$0xf]
    %v1021 = vld [vmem:[%s1 + $0xfa0] sm:$0xf]
    %v1022 = vld [vmem:[%s1 + $0xfa4] sm:$0xf]
    %v1023 = vld [vmem:[%s1 + $0xfa8] sm:$0xf]
    %v1024 = vld [vmem:[%s1 + $0xfac] sm:$0xf]
    %v1025 = vld [vmem:[%s1 + $0xfb0] sm:$0xf]
    %v1026 = vld [vmem:[%s1 + $0xfb4] sm:$0xf]
    %v1027 = vld [vmem:[%s1 + $0xfb8] sm:$0xf]
    %v1028 = vld [vmem:[%s1 + $0xfbc] sm:$0xf]
    %v1029 = vld [vmem:[%s1 + $0xfc0] sm:$0xf]
    %v1030 = vld [vmem:[%s1 + $0xfc4] sm:$0xf]
    %v1031 = vld [vmem:[%s1 + $0xfc8] sm:$0xf]
    %v1032 = vld [vmem:[%s1 + $0xfcc] sm:$0xf]
    %v1033 = vld [vmem:[%s1 + $0xfd0] sm:$0xf]
    %v1034 = vld [vmem:[%s1 + $0xfd4] sm:$0xf]
    %v1035 = vld [vmem:[%s1 + $0xfd8] sm:$0xf]
    %v1036 = vld [vmem:[%s1 + $0xfdc] sm:$0xf]
    %v1037 = vld [vmem:[%s1 + $0xfe0] sm:$0xf]
    %v1038 = vld [vmem:[%s1 + $0xfe4] sm:$0xf]
    %v1039 = vld [vmem:[%s1 + $0xfe8] sm:$0xf]
    %v1040 = vld [vmem:[%s1 + $0xfec] sm:$0xf]
    %v1041 = vld [vmem:[%s1 + $0xff0] sm:$0xf]
    %v1042 = vld [vmem:[%s1 + $0xff4] sm:$0xf]
    %v1043 = vld [vmem:[%s1 + $0xff8] sm:$0xf]
    %v1044 = vld [vmem:[%s1 + $0xffc] sm:$0xf]
    %v1045 = vunpack.c.l.bf16 %v21
    %v1046 = vunpack.c.l.bf16 %v22
    %v1047 = vunpack.c.l.bf16 %v23
    %v1048 = vunpack.c.l.bf16 %v24
    %v1049 = vunpack.c.l.bf16 %v25
    %v1050 = vunpack.c.l.bf16 %v26
    %v1051 = vunpack.c.l.bf16 %v27
    %v1052 = vunpack.c.l.bf16 %v28
    %v1053 = vunpack.c.l.bf16 %v29
    %v1054 = vunpack.c.l.bf16 %v30
    %v1055 = vunpack.c.l.bf16 %v31
    %v1056 = vunpack.c.l.bf16 %v32
    %v1057 = vunpack.c.l.bf16 %v33
    %v1058 = vunpack.c.l.bf16 %v34
    %v1059 = vunpack.c.l.bf16 %v35
    %v1060 = vunpack.c.l.bf16 %v36
    %v1061 = vunpack.c.l.bf16 %v37
    %v1062 = vunpack.c.l.bf16 %v38
    %v1063 = vunpack.c.l.bf16 %v39
    %v1064 = vunpack.c.l.bf16 %v40
    %v1065 = vunpack.c.l.bf16 %v41
    %v1066 = vunpack.c.l.bf16 %v42
    %v1067 = vunpack.c.l.bf16 %v43
    %v1068 = vunpack.c.l.bf16 %v44
    %v1069 = vunpack.c.l.bf16 %v45
    %v1070 = vunpack.c.l.bf16 %v46
    %v1071 = vunpack.c.l.bf16 %v47
    %v1072 = vunpack.c.l.bf16 %v48
    %v1073 = vunpack.c.l.bf16 %v49
    %v1074 = vunpack.c.l.bf16 %v50
    %v1075 = vunpack.c.l.bf16 %v51
    %v1076 = vunpack.c.l.bf16 %v52
    %v1077 = vunpack.c.l.bf16 %v53
    %v1078 = vunpack.c.l.bf16 %v54
    %v1079 = vunpack.c.l.bf16 %v55
    %v1080 = vunpack.c.l.bf16 %v56
    %v1081 = vunpack.c.l.bf16 %v57
    %v1082 = vunpack.c.l.bf16 %v58
    %v1083 = vunpack.c.l.bf16 %v59
    %v1084 = vunpack.c.l.bf16 %v60
    %v1085 = vunpack.c.l.bf16 %v61
    %v1086 = vunpack.c.l.bf16 %v62
    %v1087 = vunpack.c.l.bf16 %v63
    %v1088 = vunpack.c.l.bf16 %v64
    %v1089 = vunpack.c.l.bf16 %v65
    %v1090 = vunpack.c.l.bf16 %v66
    %v1091 = vunpack.c.l.bf16 %v67
    %v1092 = vunpack.c.l.bf16 %v68
    %v1093 = vunpack.c.l.bf16 %v69
    %v1094 = vunpack.c.l.bf16 %v70
    %v1095 = vunpack.c.l.bf16 %v71
    %v1096 = vunpack.c.l.bf16 %v72
    %v1097 = vunpack.c.l.bf16 %v73
    %v1098 = vunpack.c.l.bf16 %v74
    %v1099 = vunpack.c.l.bf16 %v75
    %v1100 = vunpack.c.l.bf16 %v76
    %v1101 = vunpack.c.l.bf16 %v77
    %v1102 = vunpack.c.l.bf16 %v78
    %v1103 = vunpack.c.l.bf16 %v79
    %v1104 = vunpack.c.l.bf16 %v80
    %v1105 = vunpack.c.l.bf16 %v81
    %v1106 = vunpack.c.l.bf16 %v82
    %v1107 = vunpack.c.l.bf16 %v83
    %v1108 = vunpack.c.l.bf16 %v84
    %v1109 = vunpack.c.l.bf16 %v85
    %v1110 = vunpack.c.l.bf16 %v86
    %v1111 = vunpack.c.l.bf16 %v87
    %v1112 = vunpack.c.l.bf16 %v88
    %v1113 = vunpack.c.l.bf16 %v89
    %v1114 = vunpack.c.l.bf16 %v90
    %v1115 = vunpack.c.l.bf16 %v91
    %v1116 = vunpack.c.l.bf16 %v92
    %v1117 = vunpack.c.l.bf16 %v93
    %v1118 = vunpack.c.l.bf16 %v94
    %v1119 = vunpack.c.l.bf16 %v95
    %v1120 = vunpack.c.l.bf16 %v96
    %v1121 = vunpack.c.l.bf16 %v97
    %v1122 = vunpack.c.l.bf16 %v98
    %v1123 = vunpack.c.l.bf16 %v99
    %v1124 = vunpack.c.l.bf16 %v100
    %v1125 = vunpack.c.l.bf16 %v101
    %v1126 = vunpack.c.l.bf16 %v102
    %v1127 = vunpack.c.l.bf16 %v103
    %v1128 = vunpack.c.l.bf16 %v104
    %v1129 = vunpack.c.l.bf16 %v105
    %v1130 = vunpack.c.l.bf16 %v106
    %v1131 = vunpack.c.l.bf16 %v107
    %v1132 = vunpack.c.l.bf16 %v108
    %v1133 = vunpack.c.l.bf16 %v109
    %v1134 = vunpack.c.l.bf16 %v110
    %v1135 = vunpack.c.l.bf16 %v111
    %v1136 = vunpack.c.l.bf16 %v112
    %v1137 = vunpack.c.l.bf16 %v113
    %v1138 = vunpack.c.l.bf16 %v114
    %v1139 = vunpack.c.l.bf16 %v115
    %v1140 = vunpack.c.l.bf16 %v116
    %v1141 = vunpack.c.l.bf16 %v117
    %v1142 = vunpack.c.l.bf16 %v118
    %v1143 = vunpack.c.l.bf16 %v119
    %v1144 = vunpack.c.l.bf16 %v120
    %v1145 = vunpack.c.l.bf16 %v121
    %v1146 = vunpack.c.l.bf16 %v122
    %v1147 = vunpack.c.l.bf16 %v123
    %v1148 = vunpack.c.l.bf16 %v124
    %v1149 = vunpack.c.l.bf16 %v125
    %v1150 = vunpack.c.l.bf16 %v126
    %v1151 = vunpack.c.l.bf16 %v127
    %v1152 = vunpack.c.l.bf16 %v128
    %v1153 = vunpack.c.l.bf16 %v129
    %v1154 = vunpack.c.l.bf16 %v130
    %v1155 = vunpack.c.l.bf16 %v131
    %v1156 = vunpack.c.l.bf16 %v132
    %v1157 = vunpack.c.l.bf16 %v133
    %v1158 = vunpack.c.l.bf16 %v134
    %v1159 = vunpack.c.l.bf16 %v135
    %v1160 = vunpack.c.l.bf16 %v136
    %v1161 = vunpack.c.l.bf16 %v137
    %v1162 = vunpack.c.l.bf16 %v138
    %v1163 = vunpack.c.l.bf16 %v139
    %v1164 = vunpack.c.l.bf16 %v140
    %v1165 = vunpack.c.l.bf16 %v141
    %v1166 = vunpack.c.l.bf16 %v142
    %v1167 = vunpack.c.l.bf16 %v143
    %v1168 = vunpack.c.l.bf16 %v144
    %v1169 = vunpack.c.l.bf16 %v145
    %v1170 = vunpack.c.l.bf16 %v146
    %v1171 = vunpack.c.l.bf16 %v147
    %v1172 = vunpack.c.l.bf16 %v148
    %v1173 = vunpack.c.l.bf16 %v149
    %v1174 = vunpack.c.l.bf16 %v150
    %v1175 = vunpack.c.l.bf16 %v151
    %v1176 = vunpack.c.l.bf16 %v152
    %v1177 = vunpack.c.l.bf16 %v153
    %v1178 = vunpack.c.l.bf16 %v154
    %v1179 = vunpack.c.l.bf16 %v155
    %v1180 = vunpack.c.l.bf16 %v156
    %v1181 = vunpack.c.l.bf16 %v157
    %v1182 = vunpack.c.l.bf16 %v158
    %v1183 = vunpack.c.l.bf16 %v159
    %v1184 = vunpack.c.l.bf16 %v160
    %v1185 = vunpack.c.l.bf16 %v161
    %v1186 = vunpack.c.l.bf16 %v162
    %v1187 = vunpack.c.l.bf16 %v163
    %v1188 = vunpack.c.l.bf16 %v164
    %v1189 = vunpack.c.l.bf16 %v165
    %v1190 = vunpack.c.l.bf16 %v166
    %v1191 = vunpack.c.l.bf16 %v167
    %v1192 = vunpack.c.l.bf16 %v168
    %v1193 = vunpack.c.l.bf16 %v169
    %v1194 = vunpack.c.l.bf16 %v170
    %v1195 = vunpack.c.l.bf16 %v171
    %v1196 = vunpack.c.l.bf16 %v172
    %v1197 = vunpack.c.l.bf16 %v173
    %v1198 = vunpack.c.l.bf16 %v174
    %v1199 = vunpack.c.l.bf16 %v175
    %v1200 = vunpack.c.l.bf16 %v176
    %v1201 = vunpack.c.l.bf16 %v177
    %v1202 = vunpack.c.l.bf16 %v178
    %v1203 = vunpack.c.l.bf16 %v179
    %v1204 = vunpack.c.l.bf16 %v180
    %v1205 = vunpack.c.l.bf16 %v181
    %v1206 = vunpack.c.l.bf16 %v182
    %v1207 = vunpack.c.l.bf16 %v183
    %v1208 = vunpack.c.l.bf16 %v184
    %v1209 = vunpack.c.l.bf16 %v185
    %v1210 = vunpack.c.l.bf16 %v186
    %v1211 = vunpack.c.l.bf16 %v187
    %v1212 = vunpack.c.l.bf16 %v188
    %v1213 = vunpack.c.l.bf16 %v189
    %v1214 = vunpack.c.l.bf16 %v190
    %v1215 = vunpack.c.l.bf16 %v191
    %v1216 = vunpack.c.l.bf16 %v192
    %v1217 = vunpack.c.l.bf16 %v193
    %v1218 = vunpack.c.l.bf16 %v194
    %v1219 = vunpack.c.l.bf16 %v195
    %v1220 = vunpack.c.l.bf16 %v196
    %v1221 = vunpack.c.l.bf16 %v197
    %v1222 = vunpack.c.l.bf16 %v198
    %v1223 = vunpack.c.l.bf16 %v199
    %v1224 = vunpack.c.l.bf16 %v200
    %v1225 = vunpack.c.l.bf16 %v201
    %v1226 = vunpack.c.l.bf16 %v202
    %v1227 = vunpack.c.l.bf16 %v203
    %v1228 = vunpack.c.l.bf16 %v204
    %v1229 = vunpack.c.l.bf16 %v205
    %v1230 = vunpack.c.l.bf16 %v206
    %v1231 = vunpack.c.l.bf16 %v207
    %v1232 = vunpack.c.l.bf16 %v208
    %v1233 = vunpack.c.l.bf16 %v209
    %v1234 = vunpack.c.l.bf16 %v210
    %v1235 = vunpack.c.l.bf16 %v211
    %v1236 = vunpack.c.l.bf16 %v212
    %v1237 = vunpack.c.l.bf16 %v213
    %v1238 = vunpack.c.l.bf16 %v214
    %v1239 = vunpack.c.l.bf16 %v215
    %v1240 = vunpack.c.l.bf16 %v216
    %v1241 = vunpack.c.l.bf16 %v217
    %v1242 = vunpack.c.l.bf16 %v218
    %v1243 = vunpack.c.l.bf16 %v219
    %v1244 = vunpack.c.l.bf16 %v220
    %v1245 = vunpack.c.l.bf16 %v221
    %v1246 = vunpack.c.l.bf16 %v222
    %v1247 = vunpack.c.l.bf16 %v223
    %v1248 = vunpack.c.l.bf16 %v224
    %v1249 = vunpack.c.l.bf16 %v225
    %v1250 = vunpack.c.l.bf16 %v226
    %v1251 = vunpack.c.l.bf16 %v227
    %v1252 = vunpack.c.l.bf16 %v228
    %v1253 = vunpack.c.l.bf16 %v229
    %v1254 = vunpack.c.l.bf16 %v230
    %v1255 = vunpack.c.l.bf16 %v231
    %v1256 = vunpack.c.l.bf16 %v232
    %v1257 = vunpack.c.l.bf16 %v233
    %v1258 = vunpack.c.l.bf16 %v234
    %v1259 = vunpack.c.l.bf16 %v235
    %v1260 = vunpack.c.l.bf16 %v236
    %v1261 = vunpack.c.l.bf16 %v237
    %v1262 = vunpack.c.l.bf16 %v238
    %v1263 = vunpack.c.l.bf16 %v239
    %v1264 = vunpack.c.l.bf16 %v240
    %v1265 = vunpack.c.l.bf16 %v241
    %v1266 = vunpack.c.l.bf16 %v242
    %v1267 = vunpack.c.l.bf16 %v243
    %v1268 = vunpack.c.l.bf16 %v244
    %v1269 = vunpack.c.l.bf16 %v245
    %v1270 = vunpack.c.l.bf16 %v246
    %v1271 = vunpack.c.l.bf16 %v247
    %v1272 = vunpack.c.l.bf16 %v248
    %v1273 = vunpack.c.l.bf16 %v249
    %v1274 = vunpack.c.l.bf16 %v250
    %v1275 = vunpack.c.l.bf16 %v251
    %v1276 = vunpack.c.l.bf16 %v252
    %v1277 = vunpack.c.l.bf16 %v253
    %v1278 = vunpack.c.l.bf16 %v254
    %v1279 = vunpack.c.l.bf16 %v255
    %v1280 = vunpack.c.l.bf16 %v256
    %v1281 = vunpack.c.l.bf16 %v257
    %v1282 = vunpack.c.l.bf16 %v258
    %v1283 = vunpack.c.l.bf16 %v259
    %v1284 = vunpack.c.l.bf16 %v260
    %v1285 = vunpack.c.l.bf16 %v261
    %v1286 = vunpack.c.l.bf16 %v262
    %v1287 = vunpack.c.l.bf16 %v263
    %v1288 = vunpack.c.l.bf16 %v264
    %v1289 = vunpack.c.l.bf16 %v265
    %v1290 = vunpack.c.l.bf16 %v266
    %v1291 = vunpack.c.l.bf16 %v267
    %v1292 = vunpack.c.l.bf16 %v268
    %v1293 = vunpack.c.l.bf16 %v269
    %v1294 = vunpack.c.l.bf16 %v270
    %v1295 = vunpack.c.l.bf16 %v271
    %v1296 = vunpack.c.l.bf16 %v272
    %v1297 = vunpack.c.l.bf16 %v273
    %v1298 = vunpack.c.l.bf16 %v274
    %v1299 = vunpack.c.l.bf16 %v275
    %v1300 = vunpack.c.l.bf16 %v276
    %v1301 = vunpack.c.l.bf16 %v277
    %v1302 = vunpack.c.l.bf16 %v278
    %v1303 = vunpack.c.l.bf16 %v279
    %v1304 = vunpack.c.l.bf16 %v280
    %v1305 = vunpack.c.l.bf16 %v281
    %v1306 = vunpack.c.l.bf16 %v282
    %v1307 = vunpack.c.l.bf16 %v283
    %v1308 = vunpack.c.l.bf16 %v284
    %v1309 = vunpack.c.l.bf16 %v285
    %v1310 = vunpack.c.l.bf16 %v286
    %v1311 = vunpack.c.l.bf16 %v287
    %v1312 = vunpack.c.l.bf16 %v288
    %v1313 = vunpack.c.l.bf16 %v289
    %v1314 = vunpack.c.l.bf16 %v290
    %v1315 = vunpack.c.l.bf16 %v291
    %v1316 = vunpack.c.l.bf16 %v292
    %v1317 = vunpack.c.l.bf16 %v293
    %v1318 = vunpack.c.l.bf16 %v294
    %v1319 = vunpack.c.l.bf16 %v295
    %v1320 = vunpack.c.l.bf16 %v296
    %v1321 = vunpack.c.l.bf16 %v297
    %v1322 = vunpack.c.l.bf16 %v298
    %v1323 = vunpack.c.l.bf16 %v299
    %v1324 = vunpack.c.l.bf16 %v300
    %v1325 = vunpack.c.l.bf16 %v301
    %v1326 = vunpack.c.l.bf16 %v302
    %v1327 = vunpack.c.l.bf16 %v303
    %v1328 = vunpack.c.l.bf16 %v304
    %v1329 = vunpack.c.l.bf16 %v305
    %v1330 = vunpack.c.l.bf16 %v306
    %v1331 = vunpack.c.l.bf16 %v307
    %v1332 = vunpack.c.l.bf16 %v308
    %v1333 = vunpack.c.l.bf16 %v309
    %v1334 = vunpack.c.l.bf16 %v310
    %v1335 = vunpack.c.l.bf16 %v311
    %v1336 = vunpack.c.l.bf16 %v312
    %v1337 = vunpack.c.l.bf16 %v313
    %v1338 = vunpack.c.l.bf16 %v314
    %v1339 = vunpack.c.l.bf16 %v315
    %v1340 = vunpack.c.l.bf16 %v316
    %v1341 = vunpack.c.l.bf16 %v317
    %v1342 = vunpack.c.l.bf16 %v318
    %v1343 = vunpack.c.l.bf16 %v319
    %v1344 = vunpack.c.l.bf16 %v320
    %v1345 = vunpack.c.l.bf16 %v321
    %v1346 = vunpack.c.l.bf16 %v322
    %v1347 = vunpack.c.l.bf16 %v323
    %v1348 = vunpack.c.l.bf16 %v324
    %v1349 = vunpack.c.l.bf16 %v325
    %v1350 = vunpack.c.l.bf16 %v326
    %v1351 = vunpack.c.l.bf16 %v327
    %v1352 = vunpack.c.l.bf16 %v328
    %v1353 = vunpack.c.l.bf16 %v329
    %v1354 = vunpack.c.l.bf16 %v330
    %v1355 = vunpack.c.l.bf16 %v331
    %v1356 = vunpack.c.l.bf16 %v332
    %v1357 = vunpack.c.l.bf16 %v333
    %v1358 = vunpack.c.l.bf16 %v334
    %v1359 = vunpack.c.l.bf16 %v335
    %v1360 = vunpack.c.l.bf16 %v336
    %v1361 = vunpack.c.l.bf16 %v337
    %v1362 = vunpack.c.l.bf16 %v338
    %v1363 = vunpack.c.l.bf16 %v339
    %v1364 = vunpack.c.l.bf16 %v340
    %v1365 = vunpack.c.l.bf16 %v341
    %v1366 = vunpack.c.l.bf16 %v342
    %v1367 = vunpack.c.l.bf16 %v343
    %v1368 = vunpack.c.l.bf16 %v344
    %v1369 = vunpack.c.l.bf16 %v345
    %v1370 = vunpack.c.l.bf16 %v346
    %v1371 = vunpack.c.l.bf16 %v347
    %v1372 = vunpack.c.l.bf16 %v348
    %v1373 = vunpack.c.l.bf16 %v349
    %v1374 = vunpack.c.l.bf16 %v350
    %v1375 = vunpack.c.l.bf16 %v351
    %v1376 = vunpack.c.l.bf16 %v352
    %v1377 = vunpack.c.l.bf16 %v353
    %v1378 = vunpack.c.l.bf16 %v354
    %v1379 = vunpack.c.l.bf16 %v355
    %v1380 = vunpack.c.l.bf16 %v356
    %v1381 = vunpack.c.l.bf16 %v357
    %v1382 = vunpack.c.l.bf16 %v358
    %v1383 = vunpack.c.l.bf16 %v359
    %v1384 = vunpack.c.l.bf16 %v360
    %v1385 = vunpack.c.l.bf16 %v361
    %v1386 = vunpack.c.l.bf16 %v362
    %v1387 = vunpack.c.l.bf16 %v363
    %v1388 = vunpack.c.l.bf16 %v364
    %v1389 = vunpack.c.l.bf16 %v365
    %v1390 = vunpack.c.l.bf16 %v366
    %v1391 = vunpack.c.l.bf16 %v367
    %v1392 = vunpack.c.l.bf16 %v368
    %v1393 = vunpack.c.l.bf16 %v369
    %v1394 = vunpack.c.l.bf16 %v370
    %v1395 = vunpack.c.l.bf16 %v371
    %v1396 = vunpack.c.l.bf16 %v372
    %v1397 = vunpack.c.l.bf16 %v373
    %v1398 = vunpack.c.l.bf16 %v374
    %v1399 = vunpack.c.l.bf16 %v375
    %v1400 = vunpack.c.l.bf16 %v376
    %v1401 = vunpack.c.l.bf16 %v377
    %v1402 = vunpack.c.l.bf16 %v378
    %v1403 = vunpack.c.l.bf16 %v379
    %v1404 = vunpack.c.l.bf16 %v380
    %v1405 = vunpack.c.l.bf16 %v381
    %v1406 = vunpack.c.l.bf16 %v382
    %v1407 = vunpack.c.l.bf16 %v383
    %v1408 = vunpack.c.l.bf16 %v384
    %v1409 = vunpack.c.l.bf16 %v385
    %v1410 = vunpack.c.l.bf16 %v386
    %v1411 = vunpack.c.l.bf16 %v387
    %v1412 = vunpack.c.l.bf16 %v388
    %v1413 = vunpack.c.l.bf16 %v389
    %v1414 = vunpack.c.l.bf16 %v390
    %v1415 = vunpack.c.l.bf16 %v391
    %v1416 = vunpack.c.l.bf16 %v392
    %v1417 = vunpack.c.l.bf16 %v393
    %v1418 = vunpack.c.l.bf16 %v394
    %v1419 = vunpack.c.l.bf16 %v395
    %v1420 = vunpack.c.l.bf16 %v396
    %v1421 = vunpack.c.l.bf16 %v397
    %v1422 = vunpack.c.l.bf16 %v398
    %v1423 = vunpack.c.l.bf16 %v399
    %v1424 = vunpack.c.l.bf16 %v400
    %v1425 = vunpack.c.l.bf16 %v401
    %v1426 = vunpack.c.l.bf16 %v402
    %v1427 = vunpack.c.l.bf16 %v403
    %v1428 = vunpack.c.l.bf16 %v404
    %v1429 = vunpack.c.l.bf16 %v405
    %v1430 = vunpack.c.l.bf16 %v406
    %v1431 = vunpack.c.l.bf16 %v407
    %v1432 = vunpack.c.l.bf16 %v408
    %v1433 = vunpack.c.l.bf16 %v409
    %v1434 = vunpack.c.l.bf16 %v410
    %v1435 = vunpack.c.l.bf16 %v411
    %v1436 = vunpack.c.l.bf16 %v412
    %v1437 = vunpack.c.l.bf16 %v413
    %v1438 = vunpack.c.l.bf16 %v414
    %v1439 = vunpack.c.l.bf16 %v415
    %v1440 = vunpack.c.l.bf16 %v416
    %v1441 = vunpack.c.l.bf16 %v417
    %v1442 = vunpack.c.l.bf16 %v418
    %v1443 = vunpack.c.l.bf16 %v419
    %v1444 = vunpack.c.l.bf16 %v420
    %v1445 = vunpack.c.l.bf16 %v421
    %v1446 = vunpack.c.l.bf16 %v422
    %v1447 = vunpack.c.l.bf16 %v423
    %v1448 = vunpack.c.l.bf16 %v424
    %v1449 = vunpack.c.l.bf16 %v425
    %v1450 = vunpack.c.l.bf16 %v426
    %v1451 = vunpack.c.l.bf16 %v427
    %v1452 = vunpack.c.l.bf16 %v428
    %v1453 = vunpack.c.l.bf16 %v429
    %v1454 = vunpack.c.l.bf16 %v430
    %v1455 = vunpack.c.l.bf16 %v431
    %v1456 = vunpack.c.l.bf16 %v432
    %v1457 = vunpack.c.l.bf16 %v433
    %v1458 = vunpack.c.l.bf16 %v434
    %v1459 = vunpack.c.l.bf16 %v435
    %v1460 = vunpack.c.l.bf16 %v436
    %v1461 = vunpack.c.l.bf16 %v437
    %v1462 = vunpack.c.l.bf16 %v438
    %v1463 = vunpack.c.l.bf16 %v439
    %v1464 = vunpack.c.l.bf16 %v440
    %v1465 = vunpack.c.l.bf16 %v441
    %v1466 = vunpack.c.l.bf16 %v442
    %v1467 = vunpack.c.l.bf16 %v443
    %v1468 = vunpack.c.l.bf16 %v444
    %v1469 = vunpack.c.l.bf16 %v445
    %v1470 = vunpack.c.l.bf16 %v446
    %v1471 = vunpack.c.l.bf16 %v447
    %v1472 = vunpack.c.l.bf16 %v448
    %v1473 = vunpack.c.l.bf16 %v449
    %v1474 = vunpack.c.l.bf16 %v450
    %v1475 = vunpack.c.l.bf16 %v451
    %v1476 = vunpack.c.l.bf16 %v452
    %v1477 = vunpack.c.l.bf16 %v453
    %v1478 = vunpack.c.l.bf16 %v454
    %v1479 = vunpack.c.l.bf16 %v455
    %v1480 = vunpack.c.l.bf16 %v456
    %v1481 = vunpack.c.l.bf16 %v457
    %v1482 = vunpack.c.l.bf16 %v458
    %v1483 = vunpack.c.l.bf16 %v459
    %v1484 = vunpack.c.l.bf16 %v460
    %v1485 = vunpack.c.l.bf16 %v461
    %v1486 = vunpack.c.l.bf16 %v462
    %v1487 = vunpack.c.l.bf16 %v463
    %v1488 = vunpack.c.l.bf16 %v464
    %v1489 = vunpack.c.l.bf16 %v465
    %v1490 = vunpack.c.l.bf16 %v466
    %v1491 = vunpack.c.l.bf16 %v467
    %v1492 = vunpack.c.l.bf16 %v468
    %v1493 = vunpack.c.l.bf16 %v469
    %v1494 = vunpack.c.l.bf16 %v470
    %v1495 = vunpack.c.l.bf16 %v471
    %v1496 = vunpack.c.l.bf16 %v472
    %v1497 = vunpack.c.l.bf16 %v473
    %v1498 = vunpack.c.l.bf16 %v474
    %v1499 = vunpack.c.l.bf16 %v475
    %v1500 = vunpack.c.l.bf16 %v476
    %v1501 = vunpack.c.l.bf16 %v477
    %v1502 = vunpack.c.l.bf16 %v478
    %v1503 = vunpack.c.l.bf16 %v479
    %v1504 = vunpack.c.l.bf16 %v480
    %v1505 = vunpack.c.l.bf16 %v481
    %v1506 = vunpack.c.l.bf16 %v482
    %v1507 = vunpack.c.l.bf16 %v483
    %v1508 = vunpack.c.l.bf16 %v484
    %v1509 = vunpack.c.l.bf16 %v485
    %v1510 = vunpack.c.l.bf16 %v486
    %v1511 = vunpack.c.l.bf16 %v487
    %v1512 = vunpack.c.l.bf16 %v488
    %v1513 = vunpack.c.l.bf16 %v489
    %v1514 = vunpack.c.l.bf16 %v490
    %v1515 = vunpack.c.l.bf16 %v491
    %v1516 = vunpack.c.l.bf16 %v492
    %v1517 = vunpack.c.l.bf16 %v493
    %v1518 = vunpack.c.l.bf16 %v494
    %v1519 = vunpack.c.l.bf16 %v495
    %v1520 = vunpack.c.l.bf16 %v496
    %v1521 = vunpack.c.l.bf16 %v497
    %v1522 = vunpack.c.l.bf16 %v498
    %v1523 = vunpack.c.l.bf16 %v499
    %v1524 = vunpack.c.l.bf16 %v500
    %v1525 = vunpack.c.l.bf16 %v501
    %v1526 = vunpack.c.l.bf16 %v502
    %v1527 = vunpack.c.l.bf16 %v503
    %v1528 = vunpack.c.l.bf16 %v504
    %v1529 = vunpack.c.l.bf16 %v505
    %v1530 = vunpack.c.l.bf16 %v506
    %v1531 = vunpack.c.l.bf16 %v507
    %v1532 = vunpack.c.l.bf16 %v508
    %v1533 = vunpack.c.l.bf16 %v509
    %v1534 = vunpack.c.l.bf16 %v510
    %v1535 = vunpack.c.l.bf16 %v511
    %v1536 = vunpack.c.l.bf16 %v512
    %v1537 = vunpack.c.l.bf16 %v513
    %v1538 = vunpack.c.l.bf16 %v514
    %v1539 = vunpack.c.l.bf16 %v515
    %v1540 = vunpack.c.l.bf16 %v516
    %v1541 = vunpack.c.l.bf16 %v517
    %v1542 = vunpack.c.l.bf16 %v518
    %v1543 = vunpack.c.l.bf16 %v519
    %v1544 = vunpack.c.l.bf16 %v520
    %v1545 = vunpack.c.l.bf16 %v521
    %v1546 = vunpack.c.l.bf16 %v522
    %v1547 = vunpack.c.l.bf16 %v523
    %v1548 = vunpack.c.l.bf16 %v524
    %v1549 = vunpack.c.l.bf16 %v525
    %v1550 = vunpack.c.l.bf16 %v526
    %v1551 = vunpack.c.l.bf16 %v527
    %v1552 = vunpack.c.l.bf16 %v528
    %v1553 = vunpack.c.l.bf16 %v529
    %v1554 = vunpack.c.l.bf16 %v530
    %v1555 = vunpack.c.l.bf16 %v531
    %v1556 = vunpack.c.l.bf16 %v532
    %v1557 = vunpack.c.l.bf16 %v533
    %v1558 = vunpack.c.l.bf16 %v534
    %v1559 = vunpack.c.l.bf16 %v535
    %v1560 = vunpack.c.l.bf16 %v536
    %v1561 = vunpack.c.l.bf16 %v537
    %v1562 = vunpack.c.l.bf16 %v538
    %v1563 = vunpack.c.l.bf16 %v539
    %v1564 = vunpack.c.l.bf16 %v540
    %v1565 = vunpack.c.l.bf16 %v541
    %v1566 = vunpack.c.l.bf16 %v542
    %v1567 = vunpack.c.l.bf16 %v543
    %v1568 = vunpack.c.l.bf16 %v544
    %v1569 = vunpack.c.l.bf16 %v545
    %v1570 = vunpack.c.l.bf16 %v546
    %v1571 = vunpack.c.l.bf16 %v547
    %v1572 = vunpack.c.l.bf16 %v548
    %v1573 = vunpack.c.l.bf16 %v549
    %v1574 = vunpack.c.l.bf16 %v550
    %v1575 = vunpack.c.l.bf16 %v551
    %v1576 = vunpack.c.l.bf16 %v552
    %v1577 = vunpack.c.l.bf16 %v553
    %v1578 = vunpack.c.l.bf16 %v554
    %v1579 = vunpack.c.l.bf16 %v555
    %v1580 = vunpack.c.l.bf16 %v556
    %v1581 = vunpack.c.l.bf16 %v557
    %v1582 = vunpack.c.l.bf16 %v558
    %v1583 = vunpack.c.l.bf16 %v559
    %v1584 = vunpack.c.l.bf16 %v560
    %v1585 = vunpack.c.l.bf16 %v561
    %v1586 = vunpack.c.l.bf16 %v562
    %v1587 = vunpack.c.l.bf16 %v563
    %v1588 = vunpack.c.l.bf16 %v564
    %v1589 = vunpack.c.l.bf16 %v565
    %v1590 = vunpack.c.l.bf16 %v566
    %v1591 = vunpack.c.l.bf16 %v567
    %v1592 = vunpack.c.l.bf16 %v568
    %v1593 = vunpack.c.l.bf16 %v569
    %v1594 = vunpack.c.l.bf16 %v570
    %v1595 = vunpack.c.l.bf16 %v571
    %v1596 = vunpack.c.l.bf16 %v572
    %v1597 = vunpack.c.l.bf16 %v573
    %v1598 = vunpack.c.l.bf16 %v574
    %v1599 = vunpack.c.l.bf16 %v575
    %v1600 = vunpack.c.l.bf16 %v576
    %v1601 = vunpack.c.l.bf16 %v577
    %v1602 = vunpack.c.l.bf16 %v578
    %v1603 = vunpack.c.l.bf16 %v579
    %v1604 = vunpack.c.l.bf16 %v580
    %v1605 = vunpack.c.l.bf16 %v581
    %v1606 = vunpack.c.l.bf16 %v582
    %v1607 = vunpack.c.l.bf16 %v583
    %v1608 = vunpack.c.l.bf16 %v584
    %v1609 = vunpack.c.l.bf16 %v585
    %v1610 = vunpack.c.l.bf16 %v586
    %v1611 = vunpack.c.l.bf16 %v587
    %v1612 = vunpack.c.l.bf16 %v588
    %v1613 = vunpack.c.l.bf16 %v589
    %v1614 = vunpack.c.l.bf16 %v590
    %v1615 = vunpack.c.l.bf16 %v591
    %v1616 = vunpack.c.l.bf16 %v592
    %v1617 = vunpack.c.l.bf16 %v593
    %v1618 = vunpack.c.l.bf16 %v594
    %v1619 = vunpack.c.l.bf16 %v595
    %v1620 = vunpack.c.l.bf16 %v596
    %v1621 = vunpack.c.l.bf16 %v597
    %v1622 = vunpack.c.l.bf16 %v598
    %v1623 = vunpack.c.l.bf16 %v599
    %v1624 = vunpack.c.l.bf16 %v600
    %v1625 = vunpack.c.l.bf16 %v601
    %v1626 = vunpack.c.l.bf16 %v602
    %v1627 = vunpack.c.l.bf16 %v603
    %v1628 = vunpack.c.l.bf16 %v604
    %v1629 = vunpack.c.l.bf16 %v605
    %v1630 = vunpack.c.l.bf16 %v606
    %v1631 = vunpack.c.l.bf16 %v607
    %v1632 = vunpack.c.l.bf16 %v608
    %v1633 = vunpack.c.l.bf16 %v609
    %v1634 = vunpack.c.l.bf16 %v610
    %v1635 = vunpack.c.l.bf16 %v611
    %v1636 = vunpack.c.l.bf16 %v612
    %v1637 = vunpack.c.l.bf16 %v613
    %v1638 = vunpack.c.l.bf16 %v614
    %v1639 = vunpack.c.l.bf16 %v615
    %v1640 = vunpack.c.l.bf16 %v616
    %v1641 = vunpack.c.l.bf16 %v617
    %v1642 = vunpack.c.l.bf16 %v618
    %v1643 = vunpack.c.l.bf16 %v619
    %v1644 = vunpack.c.l.bf16 %v620
    %v1645 = vunpack.c.l.bf16 %v621
    %v1646 = vunpack.c.l.bf16 %v622
    %v1647 = vunpack.c.l.bf16 %v623
    %v1648 = vunpack.c.l.bf16 %v624
    %v1649 = vunpack.c.l.bf16 %v625
    %v1650 = vunpack.c.l.bf16 %v626
    %v1651 = vunpack.c.l.bf16 %v627
    %v1652 = vunpack.c.l.bf16 %v628
    %v1653 = vunpack.c.l.bf16 %v629
    %v1654 = vunpack.c.l.bf16 %v630
    %v1655 = vunpack.c.l.bf16 %v631
    %v1656 = vunpack.c.l.bf16 %v632
    %v1657 = vunpack.c.l.bf16 %v633
    %v1658 = vunpack.c.l.bf16 %v634
    %v1659 = vunpack.c.l.bf16 %v635
    %v1660 = vunpack.c.l.bf16 %v636
    %v1661 = vunpack.c.l.bf16 %v637
    %v1662 = vunpack.c.l.bf16 %v638
    %v1663 = vunpack.c.l.bf16 %v639
    %v1664 = vunpack.c.l.bf16 %v640
    %v1665 = vunpack.c.l.bf16 %v641
    %v1666 = vunpack.c.l.bf16 %v642
    %v1667 = vunpack.c.l.bf16 %v643
    %v1668 = vunpack.c.l.bf16 %v644
    %v1669 = vunpack.c.l.bf16 %v645
    %v1670 = vunpack.c.l.bf16 %v646
    %v1671 = vunpack.c.l.bf16 %v647
    %v1672 = vunpack.c.l.bf16 %v648
    %v1673 = vunpack.c.l.bf16 %v649
    %v1674 = vunpack.c.l.bf16 %v650
    %v1675 = vunpack.c.l.bf16 %v651
    %v1676 = vunpack.c.l.bf16 %v652
    %v1677 = vunpack.c.l.bf16 %v653
    %v1678 = vunpack.c.l.bf16 %v654
    %v1679 = vunpack.c.l.bf16 %v655
    %v1680 = vunpack.c.l.bf16 %v656
    %v1681 = vunpack.c.l.bf16 %v657
    %v1682 = vunpack.c.l.bf16 %v658
    %v1683 = vunpack.c.l.bf16 %v659
    %v1684 = vunpack.c.l.bf16 %v660
    %v1685 = vunpack.c.l.bf16 %v661
    %v1686 = vunpack.c.l.bf16 %v662
    %v1687 = vunpack.c.l.bf16 %v663
    %v1688 = vunpack.c.l.bf16 %v664
    %v1689 = vunpack.c.l.bf16 %v665
    %v1690 = vunpack.c.l.bf16 %v666
    %v1691 = vunpack.c.l.bf16 %v667
    %v1692 = vunpack.c.l.bf16 %v668
    %v1693 = vunpack.c.l.bf16 %v669
    %v1694 = vunpack.c.l.bf16 %v670
    %v1695 = vunpack.c.l.bf16 %v671
    %v1696 = vunpack.c.l.bf16 %v672
    %v1697 = vunpack.c.l.bf16 %v673
    %v1698 = vunpack.c.l.bf16 %v674
    %v1699 = vunpack.c.l.bf16 %v675
    %v1700 = vunpack.c.l.bf16 %v676
    %v1701 = vunpack.c.l.bf16 %v677
    %v1702 = vunpack.c.l.bf16 %v678
    %v1703 = vunpack.c.l.bf16 %v679
    %v1704 = vunpack.c.l.bf16 %v680
    %v1705 = vunpack.c.l.bf16 %v681
    %v1706 = vunpack.c.l.bf16 %v682
    %v1707 = vunpack.c.l.bf16 %v683
    %v1708 = vunpack.c.l.bf16 %v684
    %v1709 = vunpack.c.l.bf16 %v685
    %v1710 = vunpack.c.l.bf16 %v686
    %v1711 = vunpack.c.l.bf16 %v687
    %v1712 = vunpack.c.l.bf16 %v688
    %v1713 = vunpack.c.l.bf16 %v689
    %v1714 = vunpack.c.l.bf16 %v690
    %v1715 = vunpack.c.l.bf16 %v691
    %v1716 = vunpack.c.l.bf16 %v692
    %v1717 = vunpack.c.l.bf16 %v693
    %v1718 = vunpack.c.l.bf16 %v694
    %v1719 = vunpack.c.l.bf16 %v695
    %v1720 = vunpack.c.l.bf16 %v696
    %v1721 = vunpack.c.l.bf16 %v697
    %v1722 = vunpack.c.l.bf16 %v698
    %v1723 = vunpack.c.l.bf16 %v699
    %v1724 = vunpack.c.l.bf16 %v700
    %v1725 = vunpack.c.l.bf16 %v701
    %v1726 = vunpack.c.l.bf16 %v702
    %v1727 = vunpack.c.l.bf16 %v703
    %v1728 = vunpack.c.l.bf16 %v704
    %v1729 = vunpack.c.l.bf16 %v705
    %v1730 = vunpack.c.l.bf16 %v706
    %v1731 = vunpack.c.l.bf16 %v707
    %v1732 = vunpack.c.l.bf16 %v708
    %v1733 = vunpack.c.l.bf16 %v709
    %v1734 = vunpack.c.l.bf16 %v710
    %v1735 = vunpack.c.l.bf16 %v711
    %v1736 = vunpack.c.l.bf16 %v712
    %v1737 = vunpack.c.l.bf16 %v713
    %v1738 = vunpack.c.l.bf16 %v714
    %v1739 = vunpack.c.l.bf16 %v715
    %v1740 = vunpack.c.l.bf16 %v716
    %v1741 = vunpack.c.l.bf16 %v717
    %v1742 = vunpack.c.l.bf16 %v718
    %v1743 = vunpack.c.l.bf16 %v719
    %v1744 = vunpack.c.l.bf16 %v720
    %v1745 = vunpack.c.l.bf16 %v721
    %v1746 = vunpack.c.l.bf16 %v722
    %v1747 = vunpack.c.l.bf16 %v723
    %v1748 = vunpack.c.l.bf16 %v724
    %v1749 = vunpack.c.l.bf16 %v725
    %v1750 = vunpack.c.l.bf16 %v726
    %v1751 = vunpack.c.l.bf16 %v727
    %v1752 = vunpack.c.l.bf16 %v728
    %v1753 = vunpack.c.l.bf16 %v729
    %v1754 = vunpack.c.l.bf16 %v730
    %v1755 = vunpack.c.l.bf16 %v731
    %v1756 = vunpack.c.l.bf16 %v732
    %v1757 = vunpack.c.l.bf16 %v733
    %v1758 = vunpack.c.l.bf16 %v734
    %v1759 = vunpack.c.l.bf16 %v735
    %v1760 = vunpack.c.l.bf16 %v736
    %v1761 = vunpack.c.l.bf16 %v737
    %v1762 = vunpack.c.l.bf16 %v738
    %v1763 = vunpack.c.l.bf16 %v739
    %v1764 = vunpack.c.l.bf16 %v740
    %v1765 = vunpack.c.l.bf16 %v741
    %v1766 = vunpack.c.l.bf16 %v742
    %v1767 = vunpack.c.l.bf16 %v743
    %v1768 = vunpack.c.l.bf16 %v744
    %v1769 = vunpack.c.l.bf16 %v745
    %v1770 = vunpack.c.l.bf16 %v746
    %v1771 = vunpack.c.l.bf16 %v747
    %v1772 = vunpack.c.l.bf16 %v748
    %v1773 = vunpack.c.l.bf16 %v749
    %v1774 = vunpack.c.l.bf16 %v750
    %v1775 = vunpack.c.l.bf16 %v751
    %v1776 = vunpack.c.l.bf16 %v752
    %v1777 = vunpack.c.l.bf16 %v753
    %v1778 = vunpack.c.l.bf16 %v754
    %v1779 = vunpack.c.l.bf16 %v755
    %v1780 = vunpack.c.l.bf16 %v756
    %v1781 = vunpack.c.l.bf16 %v757
    %v1782 = vunpack.c.l.bf16 %v758
    %v1783 = vunpack.c.l.bf16 %v759
    %v1784 = vunpack.c.l.bf16 %v760
    %v1785 = vunpack.c.l.bf16 %v761
    %v1786 = vunpack.c.l.bf16 %v762
    %v1787 = vunpack.c.l.bf16 %v763
    %v1788 = vunpack.c.l.bf16 %v764
    %v1789 = vunpack.c.l.bf16 %v765
    %v1790 = vunpack.c.l.bf16 %v766
    %v1791 = vunpack.c.l.bf16 %v767
    %v1792 = vunpack.c.l.bf16 %v768
    %v1793 = vunpack.c.l.bf16 %v769
    %v1794 = vunpack.c.l.bf16 %v770
    %v1795 = vunpack.c.l.bf16 %v771
    %v1796 = vunpack.c.l.bf16 %v772
    %v1797 = vunpack.c.l.bf16 %v773
    %v1798 = vunpack.c.l.bf16 %v774
    %v1799 = vunpack.c.l.bf16 %v775
    %v1800 = vunpack.c.l.bf16 %v776
    %v1801 = vunpack.c.l.bf16 %v777
    %v1802 = vunpack.c.l.bf16 %v778
    %v1803 = vunpack.c.l.bf16 %v779
    %v1804 = vunpack.c.l.bf16 %v780
    %v1805 = vunpack.c.l.bf16 %v781
    %v1806 = vunpack.c.l.bf16 %v782
    %v1807 = vunpack.c.l.bf16 %v783
    %v1808 = vunpack.c.l.bf16 %v784
    %v1809 = vunpack.c.l.bf16 %v785
    %v1810 = vunpack.c.l.bf16 %v786
    %v1811 = vunpack.c.l.bf16 %v787
    %v1812 = vunpack.c.l.bf16 %v788
    %v1813 = vunpack.c.l.bf16 %v789
    %v1814 = vunpack.c.l.bf16 %v790
    %v1815 = vunpack.c.l.bf16 %v791
    %v1816 = vunpack.c.l.bf16 %v792
    %v1817 = vunpack.c.l.bf16 %v793
    %v1818 = vunpack.c.l.bf16 %v794
    %v1819 = vunpack.c.l.bf16 %v795
    %v1820 = vunpack.c.l.bf16 %v796
    %v1821 = vunpack.c.l.bf16 %v797
    %v1822 = vunpack.c.l.bf16 %v798
    %v1823 = vunpack.c.l.bf16 %v799
    %v1824 = vunpack.c.l.bf16 %v800
    %v1825 = vunpack.c.l.bf16 %v801
    %v1826 = vunpack.c.l.bf16 %v802
    %v1827 = vunpack.c.l.bf16 %v803
    %v1828 = vunpack.c.l.bf16 %v804
    %v1829 = vunpack.c.l.bf16 %v805
    %v1830 = vunpack.c.l.bf16 %v806
    %v1831 = vunpack.c.l.bf16 %v807
    %v1832 = vunpack.c.l.bf16 %v808
    %v1833 = vunpack.c.l.bf16 %v809
    %v1834 = vunpack.c.l.bf16 %v810
    %v1835 = vunpack.c.l.bf16 %v811
    %v1836 = vunpack.c.l.bf16 %v812
    %v1837 = vunpack.c.l.bf16 %v813
    %v1838 = vunpack.c.l.bf16 %v814
    %v1839 = vunpack.c.l.bf16 %v815
    %v1840 = vunpack.c.l.bf16 %v816
    %v1841 = vunpack.c.l.bf16 %v817
    %v1842 = vunpack.c.l.bf16 %v818
    %v1843 = vunpack.c.l.bf16 %v819
    %v1844 = vunpack.c.l.bf16 %v820
    %v1845 = vunpack.c.l.bf16 %v821
    %v1846 = vunpack.c.l.bf16 %v822
    %v1847 = vunpack.c.l.bf16 %v823
    %v1848 = vunpack.c.l.bf16 %v824
    %v1849 = vunpack.c.l.bf16 %v825
    %v1850 = vunpack.c.l.bf16 %v826
    %v1851 = vunpack.c.l.bf16 %v827
    %v1852 = vunpack.c.l.bf16 %v828
    %v1853 = vunpack.c.l.bf16 %v829
    %v1854 = vunpack.c.l.bf16 %v830
    %v1855 = vunpack.c.l.bf16 %v831
    %v1856 = vunpack.c.l.bf16 %v832
    %v1857 = vunpack.c.l.bf16 %v833
    %v1858 = vunpack.c.l.bf16 %v834
    %v1859 = vunpack.c.l.bf16 %v835
    %v1860 = vunpack.c.l.bf16 %v836
    %v1861 = vunpack.c.l.bf16 %v837
    %v1862 = vunpack.c.l.bf16 %v838
    %v1863 = vunpack.c.l.bf16 %v839
    %v1864 = vunpack.c.l.bf16 %v840
    %v1865 = vunpack.c.l.bf16 %v841
    %v1866 = vunpack.c.l.bf16 %v842
    %v1867 = vunpack.c.l.bf16 %v843
    %v1868 = vunpack.c.l.bf16 %v844
    %v1869 = vunpack.c.l.bf16 %v845
    %v1870 = vunpack.c.l.bf16 %v846
    %v1871 = vunpack.c.l.bf16 %v847
    %v1872 = vunpack.c.l.bf16 %v848
    %v1873 = vunpack.c.l.bf16 %v849
    %v1874 = vunpack.c.l.bf16 %v850
    %v1875 = vunpack.c.l.bf16 %v851
    %v1876 = vunpack.c.l.bf16 %v852
    %v1877 = vunpack.c.l.bf16 %v853
    %v1878 = vunpack.c.l.bf16 %v854
    %v1879 = vunpack.c.l.bf16 %v855
    %v1880 = vunpack.c.l.bf16 %v856
    %v1881 = vunpack.c.l.bf16 %v857
    %v1882 = vunpack.c.l.bf16 %v858
    %v1883 = vunpack.c.l.bf16 %v859
    %v1884 = vunpack.c.l.bf16 %v860
    %v1885 = vunpack.c.l.bf16 %v861
    %v1886 = vunpack.c.l.bf16 %v862
    %v1887 = vunpack.c.l.bf16 %v863
    %v1888 = vunpack.c.l.bf16 %v864
    %v1889 = vunpack.c.l.bf16 %v865
    %v1890 = vunpack.c.l.bf16 %v866
    %v1891 = vunpack.c.l.bf16 %v867
    %v1892 = vunpack.c.l.bf16 %v868
    %v1893 = vunpack.c.l.bf16 %v869
    %v1894 = vunpack.c.l.bf16 %v870
    %v1895 = vunpack.c.l.bf16 %v871
    %v1896 = vunpack.c.l.bf16 %v872
    %v1897 = vunpack.c.l.bf16 %v873
    %v1898 = vunpack.c.l.bf16 %v874
    %v1899 = vunpack.c.l.bf16 %v875
    %v1900 = vunpack.c.l.bf16 %v876
    %v1901 = vunpack.c.l.bf16 %v877
    %v1902 = vunpack.c.l.bf16 %v878
    %v1903 = vunpack.c.l.bf16 %v879
    %v1904 = vunpack.c.l.bf16 %v880
    %v1905 = vunpack.c.l.bf16 %v881
    %v1906 = vunpack.c.l.bf16 %v882
    %v1907 = vunpack.c.l.bf16 %v883
    %v1908 = vunpack.c.l.bf16 %v884
    %v1909 = vunpack.c.l.bf16 %v885
    %v1910 = vunpack.c.l.bf16 %v886
    %v1911 = vunpack.c.l.bf16 %v887
    %v1912 = vunpack.c.l.bf16 %v888
    %v1913 = vunpack.c.l.bf16 %v889
    %v1914 = vunpack.c.l.bf16 %v890
    %v1915 = vunpack.c.l.bf16 %v891
    %v1916 = vunpack.c.l.bf16 %v892
    %v1917 = vunpack.c.l.bf16 %v893
    %v1918 = vunpack.c.l.bf16 %v894
    %v1919 = vunpack.c.l.bf16 %v895
    %v1920 = vunpack.c.l.bf16 %v896
    %v1921 = vunpack.c.l.bf16 %v897
    %v1922 = vunpack.c.l.bf16 %v898
    %v1923 = vunpack.c.l.bf16 %v899
    %v1924 = vunpack.c.l.bf16 %v900
    %v1925 = vunpack.c.l.bf16 %v901
    %v1926 = vunpack.c.l.bf16 %v902
    %v1927 = vunpack.c.l.bf16 %v903
    %v1928 = vunpack.c.l.bf16 %v904
    %v1929 = vunpack.c.l.bf16 %v905
    %v1930 = vunpack.c.l.bf16 %v906
    %v1931 = vunpack.c.l.bf16 %v907
    %v1932 = vunpack.c.l.bf16 %v908
    %v1933 = vunpack.c.l.bf16 %v909
    %v1934 = vunpack.c.l.bf16 %v910
    %v1935 = vunpack.c.l.bf16 %v911
    %v1936 = vunpack.c.l.bf16 %v912
    %v1937 = vunpack.c.l.bf16 %v913
    %v1938 = vunpack.c.l.bf16 %v914
    %v1939 = vunpack.c.l.bf16 %v915
    %v1940 = vunpack.c.l.bf16 %v916
    %v1941 = vunpack.c.l.bf16 %v917
    %v1942 = vunpack.c.l.bf16 %v918
    %v1943 = vunpack.c.l.bf16 %v919
    %v1944 = vunpack.c.l.bf16 %v920
    %v1945 = vunpack.c.l.bf16 %v921
    %v1946 = vunpack.c.l.bf16 %v922
    %v1947 = vunpack.c.l.bf16 %v923
    %v1948 = vunpack.c.l.bf16 %v924
    %v1949 = vunpack.c.l.bf16 %v925
    %v1950 = vunpack.c.l.bf16 %v926
    %v1951 = vunpack.c.l.bf16 %v927
    %v1952 = vunpack.c.l.bf16 %v928
    %v1953 = vunpack.c.l.bf16 %v929
    %v1954 = vunpack.c.l.bf16 %v930
    %v1955 = vunpack.c.l.bf16 %v931
    %v1956 = vunpack.c.l.bf16 %v932
    %v1957 = vunpack.c.l.bf16 %v933
    %v1958 = vunpack.c.l.bf16 %v934
    %v1959 = vunpack.c.l.bf16 %v935
    %v1960 = vunpack.c.l.bf16 %v936
    %v1961 = vunpack.c.l.bf16 %v937
    %v1962 = vunpack.c.l.bf16 %v938
    %v1963 = vunpack.c.l.bf16 %v939
    %v1964 = vunpack.c.l.bf16 %v940
    %v1965 = vunpack.c.l.bf16 %v941
    %v1966 = vunpack.c.l.bf16 %v942
    %v1967 = vunpack.c.l.bf16 %v943
    %v1968 = vunpack.c.l.bf16 %v944
    %v1969 = vunpack.c.l.bf16 %v945
    %v1970 = vunpack.c.l.bf16 %v946
    %v1971 = vunpack.c.l.bf16 %v947
    %v1972 = vunpack.c.l.bf16 %v948
    %v1973 = vunpack.c.l.bf16 %v949
    %v1974 = vunpack.c.l.bf16 %v950
    %v1975 = vunpack.c.l.bf16 %v951
    %v1976 = vunpack.c.l.bf16 %v952
    %v1977 = vunpack.c.l.bf16 %v953
    %v1978 = vunpack.c.l.bf16 %v954
    %v1979 = vunpack.c.l.bf16 %v955
    %v1980 = vunpack.c.l.bf16 %v956
    %v1981 = vunpack.c.l.bf16 %v957
    %v1982 = vunpack.c.l.bf16 %v958
    %v1983 = vunpack.c.l.bf16 %v959
    %v1984 = vunpack.c.l.bf16 %v960
    %v1985 = vunpack.c.l.bf16 %v961
    %v1986 = vunpack.c.l.bf16 %v962
    %v1987 = vunpack.c.l.bf16 %v963
    %v1988 = vunpack.c.l.bf16 %v964
    %v1989 = vunpack.c.l.bf16 %v965
    %v1990 = vunpack.c.l.bf16 %v966
    %v1991 = vunpack.c.l.bf16 %v967
    %v1992 = vunpack.c.l.bf16 %v968
    %v1993 = vunpack.c.l.bf16 %v969
    %v1994 = vunpack.c.l.bf16 %v970
    %v1995 = vunpack.c.l.bf16 %v971
    %v1996 = vunpack.c.l.bf16 %v972
    %v1997 = vunpack.c.l.bf16 %v973
    %v1998 = vunpack.c.l.bf16 %v974
    %v1999 = vunpack.c.l.bf16 %v975
    %v2000 = vunpack.c.l.bf16 %v976
    %v2001 = vunpack.c.l.bf16 %v977
    %v2002 = vunpack.c.l.bf16 %v978
    %v2003 = vunpack.c.l.bf16 %v979
    %v2004 = vunpack.c.l.bf16 %v980
    %v2005 = vunpack.c.l.bf16 %v981
    %v2006 = vunpack.c.l.bf16 %v982
    %v2007 = vunpack.c.l.bf16 %v983
    %v2008 = vunpack.c.l.bf16 %v984
    %v2009 = vunpack.c.l.bf16 %v985
    %v2010 = vunpack.c.l.bf16 %v986
    %v2011 = vunpack.c.l.bf16 %v987
    %v2012 = vunpack.c.l.bf16 %v988
    %v2013 = vunpack.c.l.bf16 %v989
    %v2014 = vunpack.c.l.bf16 %v990
    %v2015 = vunpack.c.l.bf16 %v991
    %v2016 = vunpack.c.l.bf16 %v992
    %v2017 = vunpack.c.l.bf16 %v993
    %v2018 = vunpack.c.l.bf16 %v994
    %v2019 = vunpack.c.l.bf16 %v995
    %v2020 = vunpack.c.l.bf16 %v996
    %v2021 = vunpack.c.l.bf16 %v997
    %v2022 = vunpack.c.l.bf16 %v998
    %v2023 = vunpack.c.l.bf16 %v999
    %v2024 = vunpack.c.l.bf16 %v1000
    %v2025 = vunpack.c.l.bf16 %v1001
    %v2026 = vunpack.c.l.bf16 %v1002
    %v2027 = vunpack.c.l.bf16 %v1003
    %v2028 = vunpack.c.l.bf16 %v1004
    %v2029 = vunpack.c.l.bf16 %v1005
    %v2030 = vunpack.c.l.bf16 %v1006
    %v2031 = vunpack.c.l.bf16 %v1007
    %v2032 = vunpack.c.l.bf16 %v1008
    %v2033 = vunpack.c.l.bf16 %v1009
    %v2034 = vunpack.c.l.bf16 %v1010
    %v2035 = vunpack.c.l.bf16 %v1011
    %v2036 = vunpack.c.l.bf16 %v1012
    %v2037 = vunpack.c.l.bf16 %v1013
    %v2038 = vunpack.c.l.bf16 %v1014
    %v2039 = vunpack.c.l.bf16 %v1015
    %v2040 = vunpack.c.l.bf16 %v1016
    %v2041 = vunpack.c.l.bf16 %v1017
    %v2042 = vunpack.c.l.bf16 %v1018
    %v2043 = vunpack.c.l.bf16 %v1019
    %v2044 = vunpack.c.l.bf16 %v1020
    %v2045 = vunpack.c.l.bf16 %v1021
    %v2046 = vunpack.c.l.bf16 %v1022
    %v2047 = vunpack.c.l.bf16 %v1023
    %v2048 = vunpack.c.l.bf16 %v1024
    %v2049 = vunpack.c.l.bf16 %v1025
    %v2050 = vunpack.c.l.bf16 %v1026
    %v2051 = vunpack.c.l.bf16 %v1027
    %v2052 = vunpack.c.l.bf16 %v1028
    %v2053 = vunpack.c.l.bf16 %v1029
    %v2054 = vunpack.c.l.bf16 %v1030
    %v2055 = vunpack.c.l.bf16 %v1031
    %v2056 = vunpack.c.l.bf16 %v1032
    %v2057 = vunpack.c.l.bf16 %v1033
    %v2058 = vunpack.c.l.bf16 %v1034
    %v2059 = vunpack.c.l.bf16 %v1035
    %v2060 = vunpack.c.l.bf16 %v1036
    %v2061 = vunpack.c.l.bf16 %v1037
    %v2062 = vunpack.c.l.bf16 %v1038
    %v2063 = vunpack.c.l.bf16 %v1039
    %v2064 = vunpack.c.l.bf16 %v1040
    %v2065 = vunpack.c.l.bf16 %v1041
    %v2066 = vunpack.c.l.bf16 %v1042
    %v2067 = vunpack.c.l.bf16 %v1043
    %v2068 = vunpack.c.l.bf16 %v1044
    %v2069 = vld [vmem:[%s0] sm:$0xff]
    %v2070 = vld [vmem:[%s0 + $0x8] sm:$0xff]
    %v2071 = vld [vmem:[%s0 + $0x10] sm:$0xff]
    %v2072 = vld [vmem:[%s0 + $0x18] sm:$0xff]
    %v2073 = vld [vmem:[%s0 + $0x20] sm:$0xff]
    %v2074 = vld [vmem:[%s0 + $0x28] sm:$0xff]
    %v2075 = vld [vmem:[%s0 + $0x30] sm:$0xff]
    %v2076 = vld [vmem:[%s0 + $0x38] sm:$0xff]
    %v2077 = vld [vmem:[%s0 + $0x40] sm:$0xff]
    %v2078 = vld [vmem:[%s0 + $0x48] sm:$0xff]
    %v2079 = vld [vmem:[%s0 + $0x50] sm:$0xff]
    %v2080 = vld [vmem:[%s0 + $0x58] sm:$0xff]
    %v2081 = vld [vmem:[%s0 + $0x60] sm:$0xff]
    %v2082 = vld [vmem:[%s0 + $0x68] sm:$0xff]
    %v2083 = vld [vmem:[%s0 + $0x70] sm:$0xff]
    %v2084 = vld [vmem:[%s0 + $0x78] sm:$0xff]
    %v2085 = vld [vmem:[%s2] sm:$0x1]
    %v2087 = vperm.slane %v2085, 0
    %2105 = vst [vmem:[#allocation1] ss:$4 sm:$0xff] %v2069
    %s2106 = scalar_lea.vmem [#allocation1], 32
    %2107 = vst [vmem:[%s2106] ss:$4 sm:$0xff] %v2070
    %v2108 = vld.sshfl [vmem:[#allocation1] sm:$0xff pattern:$0x73625140]
    %v2109 = vld.sshfl [vmem:[#allocation1 + $0x8] sm:$0xff pattern:$0x73625140]
    %v2110 = vld.sshfl [vmem:[#allocation1 + $0x10] sm:$0xff pattern:$0x73625140]
    %v2111 = vld.sshfl [vmem:[#allocation1 + $0x18] sm:$0xff pattern:$0x73625140]
    %v2112 = vld.sshfl [vmem:[#allocation1 + $0x20] sm:$0xff pattern:$0x73625140]
    %v2113 = vld.sshfl [vmem:[#allocation1 + $0x28] sm:$0xff pattern:$0x73625140]
    %v2114 = vld.sshfl [vmem:[#allocation1 + $0x30] sm:$0xff pattern:$0x73625140]
    %v2115 = vld.sshfl [vmem:[#allocation1 + $0x38] sm:$0xff pattern:$0x73625140]
    %2116 = vst [vmem:[#allocation1] ss:$4 sm:$0xff] %v2071
    %2117 = vst [vmem:[%s2106] ss:$4 sm:$0xff] %v2072
    %v2118 = vld.sshfl [vmem:[#allocation1] sm:$0xff pattern:$0x73625140]
    %v2119 = vld.sshfl [vmem:[#allocation1 + $0x8] sm:$0xff pattern:$0x73625140]
    %v2120 = vld.sshfl [vmem:[#allocation1 + $0x10] sm:$0xff pattern:$0x73625140]
    %v2121 = vld.sshfl [vmem:[#allocation1 + $0x18] sm:$0xff pattern:$0x73625140]
    %v2122 = vld.sshfl [vmem:[#allocation1 + $0x20] sm:$0xff pattern:$0x73625140]
    %v2123 = vld.sshfl [vmem:[#allocation1 + $0x28] sm:$0xff pattern:$0x73625140]
    %v2124 = vld.sshfl [vmem:[#allocation1 + $0x30] sm:$0xff pattern:$0x73625140]
    %v2125 = vld.sshfl [vmem:[#allocation1 + $0x38] sm:$0xff pattern:$0x73625140]
    %2126 = vst [vmem:[#allocation1] ss:$4 sm:$0xff] %v2073
    %2127 = vst [vmem:[%s2106] ss:$4 sm:$0xff] %v2074
    %v2128 = vld.sshfl [vmem:[#allocation1] sm:$0xff pattern:$0x73625140]
    %v2129 = vld.sshfl [vmem:[#allocation1 + $0x8] sm:$0xff pattern:$0x73625140]
    %v2130 = vld.sshfl [vmem:[#allocation1 + $0x10] sm:$0xff pattern:$0x73625140]
    %v2131 = vld.sshfl [vmem:[#allocation1 + $0x18] sm:$0xff pattern:$0x73625140]
    %v2132 = vld.sshfl [vmem:[#allocation1 + $0x20] sm:$0xff pattern:$0x73625140]
    %v2133 = vld.sshfl [vmem:[#allocation1 + $0x28] sm:$0xff pattern:$0x73625140]
    %v2134 = vld.sshfl [vmem:[#allocation1 + $0x30] sm:$0xff pattern:$0x73625140]
    %v2135 = vld.sshfl [vmem:[#allocation1 + $0x38] sm:$0xff pattern:$0x73625140]
    %2136 = vst [vmem:[#allocation1] ss:$4 sm:$0xff] %v2075
    %2137 = vst [vmem:[%s2106] ss:$4 sm:$0xff] %v2076
    %v2138 = vld.sshfl [vmem:[#allocation1] sm:$0xff pattern:$0x73625140]
    %v2139 = vld.sshfl [vmem:[#allocation1 + $0x8] sm:$0xff pattern:$0x73625140]
    %v2140 = vld.sshfl [vmem:[#allocation1 + $0x10] sm:$0xff pattern:$0x73625140]
    %v2141 = vld.sshfl [vmem:[#allocation1 + $0x18] sm:$0xff pattern:$0x73625140]
    %v2142 = vld.sshfl [vmem:[#allocation1 + $0x20] sm:$0xff pattern:$0x73625140]
    %v2143 = vld.sshfl [vmem:[#allocation1 + $0x28] sm:$0xff pattern:$0x73625140]
    %v2144 = vld.sshfl [vmem:[#allocation1 + $0x30] sm:$0xff pattern:$0x73625140]
    %v2145 = vld.sshfl [vmem:[#allocation1 + $0x38] sm:$0xff pattern:$0x73625140]
    %2146 = vst [vmem:[#allocation1] ss:$4 sm:$0xff] %v2077
    %2147 = vst [vmem:[%s2106] ss:$4 sm:$0xff] %v2078
    %v2148 = vld.sshfl [vmem:[#allocation1] sm:$0xff pattern:$0x73625140]
    %v2149 = vld.sshfl [vmem:[#allocation1 + $0x8] sm:$0xff pattern:$0x73625140]
    %v2150 = vld.sshfl [vmem:[#allocation1 + $0x10] sm:$0xff pattern:$0x73625140]
    %v2151 = vld.sshfl [vmem:[#allocation1 + $0x18] sm:$0xff pattern:$0x73625140]
    %v2152 = vld.sshfl [vmem:[#allocation1 + $0x20] sm:$0xff pattern:$0x73625140]
    %v2153 = vld.sshfl [vmem:[#allocation1 + $0x28] sm:$0xff pattern:$0x73625140]
    %v2154 = vld.sshfl [vmem:[#allocation1 + $0x30] sm:$0xff pattern:$0x73625140]
    %v2155 = vld.sshfl [vmem:[#allocation1 + $0x38] sm:$0xff pattern:$0x73625140]
    %2156 = vst [vmem:[#allocation1] ss:$4 sm:$0xff] %v2079
    %2157 = vst [vmem:[%s2106] ss:$4 sm:$0xff] %v2080
    %v2158 = vld.sshfl [vmem:[#allocation1] sm:$0xff pattern:$0x73625140]
    %v2159 = vld.sshfl [vmem:[#allocation1 + $0x8] sm:$0xff pattern:$0x73625140]
    %v2160 = vld.sshfl [vmem:[#allocation1 + $0x10] sm:$0xff pattern:$0x73625140]
    %v2161 = vld.sshfl [vmem:[#allocation1 + $0x18] sm:$0xff pattern:$0x73625140]
    %v2162 = vld.sshfl [vmem:[#allocation1 + $0x20] sm:$0xff pattern:$0x73625140]
    %v2163 = vld.sshfl [vmem:[#allocation1 + $0x28] sm:$0xff pattern:$0x73625140]
    %v2164 = vld.sshfl [vmem:[#allocation1 + $0x30] sm:$0xff pattern:$0x73625140]
    %v2165 = vld.sshfl [vmem:[#allocation1 + $0x38] sm:$0xff pattern:$0x73625140]
    %2166 = vst [vmem:[#allocation1] ss:$4 sm:$0xff] %v2081
    %2167 = vst [vmem:[%s2106] ss:$4 sm:$0xff] %v2082
    %v2168 = vld.sshfl [vmem:[#allocation1] sm:$0xff pattern:$0x73625140]
    %v2169 = vld.sshfl [vmem:[#allocation1 + $0x8] sm:$0xff pattern:$0x73625140]
    %v2170 = vld.sshfl [vmem:[#allocation1 + $0x10] sm:$0xff pattern:$0x73625140]
    %v2171 = vld.sshfl [vmem:[#allocation1 + $0x18] sm:$0xff pattern:$0x73625140]
    %v2172 = vld.sshfl [vmem:[#allocation1 + $0x20] sm:$0xff pattern:$0x73625140]
    %v2173 = vld.sshfl [vmem:[#allocation1 + $0x28] sm:$0xff pattern:$0x73625140]
    %v2174 = vld.sshfl [vmem:[#allocation1 + $0x30] sm:$0xff pattern:$0x73625140]
    %v2175 = vld.sshfl [vmem:[#allocation1 + $0x38] sm:$0xff pattern:$0x73625140]
    %2176 = vst [vmem:[#allocation1] ss:$4 sm:$0xff] %v2083
    %2177 = vst [vmem:[%s2106] ss:$4 sm:$0xff] %v2084
    %v2178 = vld.sshfl [vmem:[#allocation1] sm:$0xff pattern:$0x73625140]
    %v2179 = vld.sshfl [vmem:[#allocation1 + $0x8] sm:$0xff pattern:$0x73625140]
    %v2180 = vld.sshfl [vmem:[#allocation1 + $0x10] sm:$0xff pattern:$0x73625140]
    %v2181 = vld.sshfl [vmem:[#allocation1 + $0x18] sm:$0xff pattern:$0x73625140]
    %v2182 = vld.sshfl [vmem:[#allocation1 + $0x20] sm:$0xff pattern:$0x73625140]
    %v2183 = vld.sshfl [vmem:[#allocation1 + $0x28] sm:$0xff pattern:$0x73625140]
    %v2184 = vld.sshfl [vmem:[#allocation1 + $0x30] sm:$0xff pattern:$0x73625140]
    %v2185 = vld.sshfl [vmem:[#allocation1 + $0x38] sm:$0xff pattern:$0x73625140]
    %2250 = vmatpush.msra.mxu0 %v1060
    %2251 = vmatpush.msra.mxu0 %v1059
    %2252 = vmatpush.msra.mxu0 %v1058
    %2253 = vmatpush.msra.mxu0 %v1057
    %2254 = vmatpush.msra.mxu0 %v1056
    %2255 = vmatpush.msra.mxu0 %v1055
    %2256 = vmatpush.msra.mxu0 %v1054
    %2257 = vmatpush.msra.mxu0 %v1053
    %2258 = vmatpush.msra.mxu0 %v1052
    %2259 = vmatpush.msra.mxu0 %v1051
    %2260 = vmatpush.msra.mxu0 %v1050
    %2261 = vmatpush.msra.mxu0 %v1049
    %2262 = vmatpush.msra.mxu0 %v1048
    %2263 = vmatpush.msra.mxu0 %v1047
    %2264 = vmatpush.msra.mxu0 %v1046
    %2265 = vmatpush.msra.mxu0 %v1045
    %2266 = vmatmul.f32.gmra.mxu0 %v2108
    %v2267 = vpop.f32.mrf.mxu0
    %v2268 = vadd.f32 %v2087, %v2267
    %2269 = vdwg.mxu0
    %2270 = vmatpush.msra.mxu0 %v1076
    %2271 = vmatpush.msra.mxu0 %v1075
    %2272 = vmatpush.msra.mxu0 %v1074
    %2273 = vmatpush.msra.mxu0 %v1073
    %2274 = vmatpush.msra.mxu0 %v1072
    %2275 = vmatpush.msra.mxu0 %v1071
    %2276 = vmatpush.msra.mxu0 %v1070
    %2277 = vmatpush.msra.mxu0 %v1069
    %2278 = vmatpush.msra.mxu0 %v1068
    %2279 = vmatpush.msra.mxu0 %v1067
    %2280 = vmatpush.msra.mxu0 %v1066
    %2281 = vmatpush.msra.mxu0 %v1065
    %2282 = vmatpush.msra.mxu0 %v1064
    %2283 = vmatpush.msra.mxu0 %v1063
    %2284 = vmatpush.msra.mxu0 %v1062
    %2285 = vmatpush.msra.mxu0 %v1061
    %2286 = vmatmul.f32.gmra.mxu0 %v2109
    %v2287 = vpop.f32.mrf.mxu0
    %v2288 = vadd.f32 %v2268, %v2287
    %2289 = vdwg.mxu0
    %2290 = vmatpush.msra.mxu0 %v1092
    %2291 = vmatpush.msra.mxu0 %v1091
    %2292 = vmatpush.msra.mxu0 %v1090
    %2293 = vmatpush.msra.mxu0 %v1089
    %2294 = vmatpush.msra.mxu0 %v1088
    %2295 = vmatpush.msra.mxu0 %v1087
    %2296 = vmatpush.msra.mxu0 %v1086
    %2297 = vmatpush.msra.mxu0 %v1085
    %2298 = vmatpush.msra.mxu0 %v1084
    %2299 = vmatpush.msra.mxu0 %v1083
    %2300 = vmatpush.msra.mxu0 %v1082
    %2301 = vmatpush.msra.mxu0 %v1081
    %2302 = vmatpush.msra.mxu0 %v1080
    %2303 = vmatpush.msra.mxu0 %v1079
    %2304 = vmatpush.msra.mxu0 %v1078
    %2305 = vmatpush.msra.mxu0 %v1077
    %2306 = vmatmul.f32.gmra.mxu0 %v2110
    %v2307 = vpop.f32.mrf.mxu0
    %v2308 = vadd.f32 %v2288, %v2307
    %2309 = vdwg.mxu0
    %2310 = vmatpush.msra.mxu0 %v1108
    %2311 = vmatpush.msra.mxu0 %v1107
    %2312 = vmatpush.msra.mxu0 %v1106
    %2313 = vmatpush.msra.mxu0 %v1105
    %2314 = vmatpush.msra.mxu0 %v1104
    %2315 = vmatpush.msra.mxu0 %v1103
    %2316 = vmatpush.msra.mxu0 %v1102
    %2317 = vmatpush.msra.mxu0 %v1101
    %2318 = vmatpush.msra.mxu0 %v1100
    %2319 = vmatpush.msra.mxu0 %v1099
    %2320 = vmatpush.msra.mxu0 %v1098
    %2321 = vmatpush.msra.mxu0 %v1097
    %2322 = vmatpush.msra.mxu0 %v1096
    %2323 = vmatpush.msra.mxu0 %v1095
    %2324 = vmatpush.msra.mxu0 %v1094
    %2325 = vmatpush.msra.mxu0 %v1093
    %2326 = vmatmul.f32.gmra.mxu0 %v2111
    %v2327 = vpop.f32.mrf.mxu0
    %v2328 = vadd.f32 %v2308, %v2327
    %2329 = vdwg.mxu0
    %2330 = vmatpush.msra.mxu0 %v1124
    %2331 = vmatpush.msra.mxu0 %v1123
    %2332 = vmatpush.msra.mxu0 %v1122
    %2333 = vmatpush.msra.mxu0 %v1121
    %2334 = vmatpush.msra.mxu0 %v1120
    %2335 = vmatpush.msra.mxu0 %v1119
    %2336 = vmatpush.msra.mxu0 %v1118
    %2337 = vmatpush.msra.mxu0 %v1117
    %2338 = vmatpush.msra.mxu0 %v1116
    %2339 = vmatpush.msra.mxu0 %v1115
    %2340 = vmatpush.msra.mxu0 %v1114
    %2341 = vmatpush.msra.mxu0 %v1113
    %2342 = vmatpush.msra.mxu0 %v1112
    %2343 = vmatpush.msra.mxu0 %v1111
    %2344 = vmatpush.msra.mxu0 %v1110
    %2345 = vmatpush.msra.mxu0 %v1109
    %2346 = vmatmul.f32.gmra.mxu0 %v2112
    %v2347 = vpop.f32.mrf.mxu0
    %v2348 = vadd.f32 %v2328, %v2347
    %2349 = vdwg.mxu0
    %2350 = vmatpush.msra.mxu0 %v1140
    %2351 = vmatpush.msra.mxu0 %v1139
    %2352 = vmatpush.msra.mxu0 %v1138
    %2353 = vmatpush.msra.mxu0 %v1137
    %2354 = vmatpush.msra.mxu0 %v1136
    %2355 = vmatpush.msra.mxu0 %v1135
    %2356 = vmatpush.msra.mxu0 %v1134
    %2357 = vmatpush.msra.mxu0 %v1133
    %2358 = vmatpush.msra.mxu0 %v1132
    %2359 = vmatpush.msra.mxu0 %v1131
    %2360 = vmatpush.msra.mxu0 %v1130
    %2361 = vmatpush.msra.mxu0 %v1129
    %2362 = vmatpush.msra.mxu0 %v1128
    %2363 = vmatpush.msra.mxu0 %v1127
    %2364 = vmatpush.msra.mxu0 %v1126
    %2365 = vmatpush.msra.mxu0 %v1125
    %2366 = vmatmul.f32.gmra.mxu0 %v2113
    %v2367 = vpop.f32.mrf.mxu0
    %v2368 = vadd.f32 %v2348, %v2367
    %2369 = vdwg.mxu0
    %2370 = vmatpush.msra.mxu0 %v1156
    %2371 = vmatpush.msra.mxu0 %v1155
    %2372 = vmatpush.msra.mxu0 %v1154
    %2373 = vmatpush.msra.mxu0 %v1153
    %2374 = vmatpush.msra.mxu0 %v1152
    %2375 = vmatpush.msra.mxu0 %v1151
    %2376 = vmatpush.msra.mxu0 %v1150
    %2377 = vmatpush.msra.mxu0 %v1149
    %2378 = vmatpush.msra.mxu0 %v1148
    %2379 = vmatpush.msra.mxu0 %v1147
    %2380 = vmatpush.msra.mxu0 %v1146
    %2381 = vmatpush.msra.mxu0 %v1145
    %2382 = vmatpush.msra.mxu0 %v1144
    %2383 = vmatpush.msra.mxu0 %v1143
    %2384 = vmatpush.msra.mxu0 %v1142
    %2385 = vmatpush.msra.mxu0 %v1141
    %2386 = vmatmul.f32.gmra.mxu0 %v2114
    %v2387 = vpop.f32.mrf.mxu0
    %v2388 = vadd.f32 %v2368, %v2387
    %2389 = vdwg.mxu0
    %2390 = vmatpush.msra.mxu0 %v1172
    %2391 = vmatpush.msra.mxu0 %v1171
    %2392 = vmatpush.msra.mxu0 %v1170
    %2393 = vmatpush.msra.mxu0 %v1169
    %2394 = vmatpush.msra.mxu0 %v1168
    %2395 = vmatpush.msra.mxu0 %v1167
    %2396 = vmatpush.msra.mxu0 %v1166
    %2397 = vmatpush.msra.mxu0 %v1165
    %2398 = vmatpush.msra.mxu0 %v1164
    %2399 = vmatpush.msra.mxu0 %v1163
    %2400 = vmatpush.msra.mxu0 %v1162
    %2401 = vmatpush.msra.mxu0 %v1161
    %2402 = vmatpush.msra.mxu0 %v1160
    %2403 = vmatpush.msra.mxu0 %v1159
    %2404 = vmatpush.msra.mxu0 %v1158
    %2405 = vmatpush.msra.mxu0 %v1157
    %2406 = vmatmul.f32.gmra.mxu0 %v2115
    %v2407 = vpop.f32.mrf.mxu0
    %v2408 = vadd.f32 %v2388, %v2407
    %2409 = vdwg.mxu0
    %2410 = vmatpush.msra.mxu0 %v1188
    %2411 = vmatpush.msra.mxu0 %v1187
    %2412 = vmatpush.msra.mxu0 %v1186
    %2413 = vmatpush.msra.mxu0 %v1185
    %2414 = vmatpush.msra.mxu0 %v1184
    %2415 = vmatpush.msra.mxu0 %v1183
    %2416 = vmatpush.msra.mxu0 %v1182
    %2417 = vmatpush.msra.mxu0 %v1181
    %2418 = vmatpush.msra.mxu0 %v1180
    %2419 = vmatpush.msra.mxu0 %v1179
    %2420 = vmatpush.msra.mxu0 %v1178
    %2421 = vmatpush.msra.mxu0 %v1177
    %2422 = vmatpush.msra.mxu0 %v1176
    %2423 = vmatpush.msra.mxu0 %v1175
    %2424 = vmatpush.msra.mxu0 %v1174
    %2425 = vmatpush.msra.mxu0 %v1173
    %2426 = vmatmul.f32.gmra.mxu0 %v2118
    %v2427 = vpop.f32.mrf.mxu0
    %v2428 = vadd.f32 %v2408, %v2427
    %2429 = vdwg.mxu0
    %2430 = vmatpush.msra.mxu0 %v1204
    %2431 = vmatpush.msra.mxu0 %v1203
    %2432 = vmatpush.msra.mxu0 %v1202
    %2433 = vmatpush.msra.mxu0 %v1201
    %2434 = vmatpush.msra.mxu0 %v1200
    %2435 = vmatpush.msra.mxu0 %v1199
    %2436 = vmatpush.msra.mxu0 %v1198
    %2437 = vmatpush.msra.mxu0 %v1197
    %2438 = vmatpush.msra.mxu0 %v1196
    %2439 = vmatpush.msra.mxu0 %v1195
    %2440 = vmatpush.msra.mxu0 %v1194
    %2441 = vmatpush.msra.mxu0 %v1193
    %2442 = vmatpush.msra.mxu0 %v1192
    %2443 = vmatpush.msra.mxu0 %v1191
    %2444 = vmatpush.msra.mxu0 %v1190
    %2445 = vmatpush.msra.mxu0 %v1189
    %2446 = vmatmul.f32.gmra.mxu0 %v2119
    %v2447 = vpop.f32.mrf.mxu0
    %v2448 = vadd.f32 %v2428, %v2447
    %2449 = vdwg.mxu0
    %2450 = vmatpush.msra.mxu0 %v1220
    %2451 = vmatpush.msra.mxu0 %v1219
    %2452 = vmatpush.msra.mxu0 %v1218
    %2453 = vmatpush.msra.mxu0 %v1217
    %2454 = vmatpush.msra.mxu0 %v1216
    %2455 = vmatpush.msra.mxu0 %v1215
    %2456 = vmatpush.msra.mxu0 %v1214
    %2457 = vmatpush.msra.mxu0 %v1213
    %2458 = vmatpush.msra.mxu0 %v1212
    %2459 = vmatpush.msra.mxu0 %v1211
    %2460 = vmatpush.msra.mxu0 %v1210
    %2461 = vmatpush.msra.mxu0 %v1209
    %2462 = vmatpush.msra.mxu0 %v1208
    %2463 = vmatpush.msra.mxu0 %v1207
    %2464 = vmatpush.msra.mxu0 %v1206
    %2465 = vmatpush.msra.mxu0 %v1205
    %2466 = vmatmul.f32.gmra.mxu0 %v2120
    %v2467 = vpop.f32.mrf.mxu0
    %v2468 = vadd.f32 %v2448, %v2467
    %2469 = vdwg.mxu0
    %2470 = vmatpush.msra.mxu0 %v1236
    %2471 = vmatpush.msra.mxu0 %v1235
    %2472 = vmatpush.msra.mxu0 %v1234
    %2473 = vmatpush.msra.mxu0 %v1233
    %2474 = vmatpush.msra.mxu0 %v1232
    %2475 = vmatpush.msra.mxu0 %v1231
    %2476 = vmatpush.msra.mxu0 %v1230
    %2477 = vmatpush.msra.mxu0 %v1229
    %2478 = vmatpush.msra.mxu0 %v1228
    %2479 = vmatpush.msra.mxu0 %v1227
    %2480 = vmatpush.msra.mxu0 %v1226
    %2481 = vmatpush.msra.mxu0 %v1225
    %2482 = vmatpush.msra.mxu0 %v1224
    %2483 = vmatpush.msra.mxu0 %v1223
    %2484 = vmatpush.msra.mxu0 %v1222
    %2485 = vmatpush.msra.mxu0 %v1221
    %2486 = vmatmul.f32.gmra.mxu0 %v2121
    %v2487 = vpop.f32.mrf.mxu0
    %v2488 = vadd.f32 %v2468, %v2487
    %2489 = vdwg.mxu0
    %2490 = vmatpush.msra.mxu0 %v1252
    %2491 = vmatpush.msra.mxu0 %v1251
    %2492 = vmatpush.msra.mxu0 %v1250
    %2493 = vmatpush.msra.mxu0 %v1249
    %2494 = vmatpush.msra.mxu0 %v1248
    %2495 = vmatpush.msra.mxu0 %v1247
    %2496 = vmatpush.msra.mxu0 %v1246
    %2497 = vmatpush.msra.mxu0 %v1245
    %2498 = vmatpush.msra.mxu0 %v1244
    %2499 = vmatpush.msra.mxu0 %v1243
    %2500 = vmatpush.msra.mxu0 %v1242
    %2501 = vmatpush.msra.mxu0 %v1241
    %2502 = vmatpush.msra.mxu0 %v1240
    %2503 = vmatpush.msra.mxu0 %v1239
    %2504 = vmatpush.msra.mxu0 %v1238
    %2505 = vmatpush.msra.mxu0 %v1237
    %2506 = vmatmul.f32.gmra.mxu0 %v2122
    %v2507 = vpop.f32.mrf.mxu0
    %v2508 = vadd.f32 %v2488, %v2507
    %2509 = vdwg.mxu0
    %2510 = vmatpush.msra.mxu0 %v1268
    %2511 = vmatpush.msra.mxu0 %v1267
    %2512 = vmatpush.msra.mxu0 %v1266
    %2513 = vmatpush.msra.mxu0 %v1265
    %2514 = vmatpush.msra.mxu0 %v1264
    %2515 = vmatpush.msra.mxu0 %v1263
    %2516 = vmatpush.msra.mxu0 %v1262
    %2517 = vmatpush.msra.mxu0 %v1261
    %2518 = vmatpush.msra.mxu0 %v1260
    %2519 = vmatpush.msra.mxu0 %v1259
    %2520 = vmatpush.msra.mxu0 %v1258
    %2521 = vmatpush.msra.mxu0 %v1257
    %2522 = vmatpush.msra.mxu0 %v1256
    %2523 = vmatpush.msra.mxu0 %v1255
    %2524 = vmatpush.msra.mxu0 %v1254
    %2525 = vmatpush.msra.mxu0 %v1253
    %2526 = vmatmul.f32.gmra.mxu0 %v2123
    %v2527 = vpop.f32.mrf.mxu0
    %v2528 = vadd.f32 %v2508, %v2527
    %2529 = vdwg.mxu0
    %2530 = vmatpush.msra.mxu0 %v1284
    %2531 = vmatpush.msra.mxu0 %v1283
    %2532 = vmatpush.msra.mxu0 %v1282
    %2533 = vmatpush.msra.mxu0 %v1281
    %2534 = vmatpush.msra.mxu0 %v1280
    %2535 = vmatpush.msra.mxu0 %v1279
    %2536 = vmatpush.msra.mxu0 %v1278
    %2537 = vmatpush.msra.mxu0 %v1277
    %2538 = vmatpush.msra.mxu0 %v1276
    %2539 = vmatpush.msra.mxu0 %v1275
    %2540 = vmatpush.msra.mxu0 %v1274
    %2541 = vmatpush.msra.mxu0 %v1273
    %2542 = vmatpush.msra.mxu0 %v1272
    %2543 = vmatpush.msra.mxu0 %v1271
    %2544 = vmatpush.msra.mxu0 %v1270
    %2545 = vmatpush.msra.mxu0 %v1269
    %2546 = vmatmul.f32.gmra.mxu0 %v2124
    %v2547 = vpop.f32.mrf.mxu0
    %v2548 = vadd.f32 %v2528, %v2547
    %2549 = vdwg.mxu0
    %2550 = vmatpush.msra.mxu0 %v1300
    %2551 = vmatpush.msra.mxu0 %v1299
    %2552 = vmatpush.msra.mxu0 %v1298
    %2553 = vmatpush.msra.mxu0 %v1297
    %2554 = vmatpush.msra.mxu0 %v1296
    %2555 = vmatpush.msra.mxu0 %v1295
    %2556 = vmatpush.msra.mxu0 %v1294
    %2557 = vmatpush.msra.mxu0 %v1293
    %2558 = vmatpush.msra.mxu0 %v1292
    %2559 = vmatpush.msra.mxu0 %v1291
    %2560 = vmatpush.msra.mxu0 %v1290
    %2561 = vmatpush.msra.mxu0 %v1289
    %2562 = vmatpush.msra.mxu0 %v1288
    %2563 = vmatpush.msra.mxu0 %v1287
    %2564 = vmatpush.msra.mxu0 %v1286
    %2565 = vmatpush.msra.mxu0 %v1285
    %2566 = vmatmul.f32.gmra.mxu0 %v2125
    %v2567 = vpop.f32.mrf.mxu0
    %v2568 = vadd.f32 %v2548, %v2567
    %2569 = vdwg.mxu0
    %2570 = vmatpush.msra.mxu0 %v1316
    %2571 = vmatpush.msra.mxu0 %v1315
    %2572 = vmatpush.msra.mxu0 %v1314
    %2573 = vmatpush.msra.mxu0 %v1313
    %2574 = vmatpush.msra.mxu0 %v1312
    %2575 = vmatpush.msra.mxu0 %v1311
    %2576 = vmatpush.msra.mxu0 %v1310
    %2577 = vmatpush.msra.mxu0 %v1309
    %2578 = vmatpush.msra.mxu0 %v1308
    %2579 = vmatpush.msra.mxu0 %v1307
    %2580 = vmatpush.msra.mxu0 %v1306
    %2581 = vmatpush.msra.mxu0 %v1305
    %2582 = vmatpush.msra.mxu0 %v1304
    %2583 = vmatpush.msra.mxu0 %v1303
    %2584 = vmatpush.msra.mxu0 %v1302
    %2585 = vmatpush.msra.mxu0 %v1301
    %2586 = vmatmul.f32.gmra.mxu0 %v2128
    %v2587 = vpop.f32.mrf.mxu0
    %v2588 = vadd.f32 %v2568, %v2587
    %2589 = vdwg.mxu0
    %2590 = vmatpush.msra.mxu0 %v1332
    %2591 = vmatpush.msra.mxu0 %v1331
    %2592 = vmatpush.msra.mxu0 %v1330
    %2593 = vmatpush.msra.mxu0 %v1329
    %2594 = vmatpush.msra.mxu0 %v1328
    %2595 = vmatpush.msra.mxu0 %v1327
    %2596 = vmatpush.msra.mxu0 %v1326
    %2597 = vmatpush.msra.mxu0 %v1325
    %2598 = vmatpush.msra.mxu0 %v1324
    %2599 = vmatpush.msra.mxu0 %v1323
    %2600 = vmatpush.msra.mxu0 %v1322
    %2601 = vmatpush.msra.mxu0 %v1321
    %2602 = vmatpush.msra.mxu0 %v1320
    %2603 = vmatpush.msra.mxu0 %v1319
    %2604 = vmatpush.msra.mxu0 %v1318
    %2605 = vmatpush.msra.mxu0 %v1317
    %2606 = vmatmul.f32.gmra.mxu0 %v2129
    %v2607 = vpop.f32.mrf.mxu0
    %v2608 = vadd.f32 %v2588, %v2607
    %2609 = vdwg.mxu0
    %2610 = vmatpush.msra.mxu0 %v1348
    %2611 = vmatpush.msra.mxu0 %v1347
    %2612 = vmatpush.msra.mxu0 %v1346
    %2613 = vmatpush.msra.mxu0 %v1345
    %2614 = vmatpush.msra.mxu0 %v1344
    %2615 = vmatpush.msra.mxu0 %v1343
    %2616 = vmatpush.msra.mxu0 %v1342
    %2617 = vmatpush.msra.mxu0 %v1341
    %2618 = vmatpush.msra.mxu0 %v1340
    %2619 = vmatpush.msra.mxu0 %v1339
    %2620 = vmatpush.msra.mxu0 %v1338
    %2621 = vmatpush.msra.mxu0 %v1337
    %2622 = vmatpush.msra.mxu0 %v1336
    %2623 = vmatpush.msra.mxu0 %v1335
    %2624 = vmatpush.msra.mxu0 %v1334
    %2625 = vmatpush.msra.mxu0 %v1333
    %2626 = vmatmul.f32.gmra.mxu0 %v2130
    %v2627 = vpop.f32.mrf.mxu0
    %v2628 = vadd.f32 %v2608, %v2627
    %2629 = vdwg.mxu0
    %2630 = vmatpush.msra.mxu0 %v1364
    %2631 = vmatpush.msra.mxu0 %v1363
    %2632 = vmatpush.msra.mxu0 %v1362
    %2633 = vmatpush.msra.mxu0 %v1361
    %2634 = vmatpush.msra.mxu0 %v1360
    %2635 = vmatpush.msra.mxu0 %v1359
    %2636 = vmatpush.msra.mxu0 %v1358
    %2637 = vmatpush.msra.mxu0 %v1357
    %2638 = vmatpush.msra.mxu0 %v1356
    %2639 = vmatpush.msra.mxu0 %v1355
    %2640 = vmatpush.msra.mxu0 %v1354
    %2641 = vmatpush.msra.mxu0 %v1353
    %2642 = vmatpush.msra.mxu0 %v1352
    %2643 = vmatpush.msra.mxu0 %v1351
    %2644 = vmatpush.msra.mxu0 %v1350
    %2645 = vmatpush.msra.mxu0 %v1349
    %2646 = vmatmul.f32.gmra.mxu0 %v2131
    %v2647 = vpop.f32.mrf.mxu0
    %v2648 = vadd.f32 %v2628, %v2647
    %2649 = vdwg.mxu0
    %2650 = vmatpush.msra.mxu0 %v1380
    %2651 = vmatpush.msra.mxu0 %v1379
    %2652 = vmatpush.msra.mxu0 %v1378
    %2653 = vmatpush.msra.mxu0 %v1377
    %2654 = vmatpush.msra.mxu0 %v1376
    %2655 = vmatpush.msra.mxu0 %v1375
    %2656 = vmatpush.msra.mxu0 %v1374
    %2657 = vmatpush.msra.mxu0 %v1373
    %2658 = vmatpush.msra.mxu0 %v1372
    %2659 = vmatpush.msra.mxu0 %v1371
    %2660 = vmatpush.msra.mxu0 %v1370
    %2661 = vmatpush.msra.mxu0 %v1369
    %2662 = vmatpush.msra.mxu0 %v1368
    %2663 = vmatpush.msra.mxu0 %v1367
    %2664 = vmatpush.msra.mxu0 %v1366
    %2665 = vmatpush.msra.mxu0 %v1365
    %2666 = vmatmul.f32.gmra.mxu0 %v2132
    %v2667 = vpop.f32.mrf.mxu0
    %v2668 = vadd.f32 %v2648, %v2667
    %2669 = vdwg.mxu0
    %2670 = vmatpush.msra.mxu0 %v1396
    %2671 = vmatpush.msra.mxu0 %v1395
    %2672 = vmatpush.msra.mxu0 %v1394
    %2673 = vmatpush.msra.mxu0 %v1393
    %2674 = vmatpush.msra.mxu0 %v1392
    %2675 = vmatpush.msra.mxu0 %v1391
    %2676 = vmatpush.msra.mxu0 %v1390
    %2677 = vmatpush.msra.mxu0 %v1389
    %2678 = vmatpush.msra.mxu0 %v1388
    %2679 = vmatpush.msra.mxu0 %v1387
    %2680 = vmatpush.msra.mxu0 %v1386
    %2681 = vmatpush.msra.mxu0 %v1385
    %2682 = vmatpush.msra.mxu0 %v1384
    %2683 = vmatpush.msra.mxu0 %v1383
    %2684 = vmatpush.msra.mxu0 %v1382
    %2685 = vmatpush.msra.mxu0 %v1381
    %2686 = vmatmul.f32.gmra.mxu0 %v2133
    %v2687 = vpop.f32.mrf.mxu0
    %v2688 = vadd.f32 %v2668, %v2687
    %2689 = vdwg.mxu0
    %2690 = vmatpush.msra.mxu0 %v1412
    %2691 = vmatpush.msra.mxu0 %v1411
    %2692 = vmatpush.msra.mxu0 %v1410
    %2693 = vmatpush.msra.mxu0 %v1409
    %2694 = vmatpush.msra.mxu0 %v1408
    %2695 = vmatpush.msra.mxu0 %v1407
    %2696 = vmatpush.msra.mxu0 %v1406
    %2697 = vmatpush.msra.mxu0 %v1405
    %2698 = vmatpush.msra.mxu0 %v1404
    %2699 = vmatpush.msra.mxu0 %v1403
    %2700 = vmatpush.msra.mxu0 %v1402
    %2701 = vmatpush.msra.mxu0 %v1401
    %2702 = vmatpush.msra.mxu0 %v1400
    %2703 = vmatpush.msra.mxu0 %v1399
    %2704 = vmatpush.msra.mxu0 %v1398
    %2705 = vmatpush.msra.mxu0 %v1397
    %2706 = vmatmul.f32.gmra.mxu0 %v2134
    %v2707 = vpop.f32.mrf.mxu0
    %v2708 = vadd.f32 %v2688, %v2707
    %2709 = vdwg.mxu0
    %2710 = vmatpush.msra.mxu0 %v1428
    %2711 = vmatpush.msra.mxu0 %v1427
    %2712 = vmatpush.msra.mxu0 %v1426
    %2713 = vmatpush.msra.mxu0 %v1425
    %2714 = vmatpush.msra.mxu0 %v1424
    %2715 = vmatpush.msra.mxu0 %v1423
    %2716 = vmatpush.msra.mxu0 %v1422
    %2717 = vmatpush.msra.mxu0 %v1421
    %2718 = vmatpush.msra.mxu0 %v1420
    %2719 = vmatpush.msra.mxu0 %v1419
    %2720 = vmatpush.msra.mxu0 %v1418
    %2721 = vmatpush.msra.mxu0 %v1417
    %2722 = vmatpush.msra.mxu0 %v1416
    %2723 = vmatpush.msra.mxu0 %v1415
    %2724 = vmatpush.msra.mxu0 %v1414
    %2725 = vmatpush.msra.mxu0 %v1413
    %2726 = vmatmul.f32.gmra.mxu0 %v2135
    %v2727 = vpop.f32.mrf.mxu0
    %v2728 = vadd.f32 %v2708, %v2727
    %2729 = vdwg.mxu0
    %2730 = vmatpush.msra.mxu0 %v1444
    %2731 = vmatpush.msra.mxu0 %v1443
    %2732 = vmatpush.msra.mxu0 %v1442
    %2733 = vmatpush.msra.mxu0 %v1441
    %2734 = vmatpush.msra.mxu0 %v1440
    %2735 = vmatpush.msra.mxu0 %v1439
    %2736 = vmatpush.msra.mxu0 %v1438
    %2737 = vmatpush.msra.mxu0 %v1437
    %2738 = vmatpush.msra.mxu0 %v1436
    %2739 = vmatpush.msra.mxu0 %v1435
    %2740 = vmatpush.msra.mxu0 %v1434
    %2741 = vmatpush.msra.mxu0 %v1433
    %2742 = vmatpush.msra.mxu0 %v1432
    %2743 = vmatpush.msra.mxu0 %v1431
    %2744 = vmatpush.msra.mxu0 %v1430
    %2745 = vmatpush.msra.mxu0 %v1429
    %2746 = vmatmul.f32.gmra.mxu0 %v2138
    %v2747 = vpop.f32.mrf.mxu0
    %v2748 = vadd.f32 %v2728, %v2747
    %2749 = vdwg.mxu0
    %2750 = vmatpush.msra.mxu0 %v1460
    %2751 = vmatpush.msra.mxu0 %v1459
    %2752 = vmatpush.msra.mxu0 %v1458
    %2753 = vmatpush.msra.mxu0 %v1457
    %2754 = vmatpush.msra.mxu0 %v1456
    %2755 = vmatpush.msra.mxu0 %v1455
    %2756 = vmatpush.msra.mxu0 %v1454
    %2757 = vmatpush.msra.mxu0 %v1453
    %2758 = vmatpush.msra.mxu0 %v1452
    %2759 = vmatpush.msra.mxu0 %v1451
    %2760 = vmatpush.msra.mxu0 %v1450
    %2761 = vmatpush.msra.mxu0 %v1449
    %2762 = vmatpush.msra.mxu0 %v1448
    %2763 = vmatpush.msra.mxu0 %v1447
    %2764 = vmatpush.msra.mxu0 %v1446
    %2765 = vmatpush.msra.mxu0 %v1445
    %2766 = vmatmul.f32.gmra.mxu0 %v2139
    %v2767 = vpop.f32.mrf.mxu0
    %v2768 = vadd.f32 %v2748, %v2767
    %2769 = vdwg.mxu0
    %2770 = vmatpush.msra.mxu0 %v1476
    %2771 = vmatpush.msra.mxu0 %v1475
    %2772 = vmatpush.msra.mxu0 %v1474
    %2773 = vmatpush.msra.mxu0 %v1473
    %2774 = vmatpush.msra.mxu0 %v1472
    %2775 = vmatpush.msra.mxu0 %v1471
    %2776 = vmatpush.msra.mxu0 %v1470
    %2777 = vmatpush.msra.mxu0 %v1469
    %2778 = vmatpush.msra.mxu0 %v1468
    %2779 = vmatpush.msra.mxu0 %v1467
    %2780 = vmatpush.msra.mxu0 %v1466
    %2781 = vmatpush.msra.mxu0 %v1465
    %2782 = vmatpush.msra.mxu0 %v1464
    %2783 = vmatpush.msra.mxu0 %v1463
    %2784 = vmatpush.msra.mxu0 %v1462
    %2785 = vmatpush.msra.mxu0 %v1461
    %2786 = vmatmul.f32.gmra.mxu0 %v2140
    %v2787 = vpop.f32.mrf.mxu0
    %v2788 = vadd.f32 %v2768, %v2787
    %2789 = vdwg.mxu0
    %2790 = vmatpush.msra.mxu0 %v1492
    %2791 = vmatpush.msra.mxu0 %v1491
    %2792 = vmatpush.msra.mxu0 %v1490
    %2793 = vmatpush.msra.mxu0 %v1489
    %2794 = vmatpush.msra.mxu0 %v1488
    %2795 = vmatpush.msra.mxu0 %v1487
    %2796 = vmatpush.msra.mxu0 %v1486
    %2797 = vmatpush.msra.mxu0 %v1485
    %2798 = vmatpush.msra.mxu0 %v1484
    %2799 = vmatpush.msra.mxu0 %v1483
    %2800 = vmatpush.msra.mxu0 %v1482
    %2801 = vmatpush.msra.mxu0 %v1481
    %2802 = vmatpush.msra.mxu0 %v1480
    %2803 = vmatpush.msra.mxu0 %v1479
    %2804 = vmatpush.msra.mxu0 %v1478
    %2805 = vmatpush.msra.mxu0 %v1477
    %2806 = vmatmul.f32.gmra.mxu0 %v2141
    %v2807 = vpop.f32.mrf.mxu0
    %v2808 = vadd.f32 %v2788, %v2807
    %2809 = vdwg.mxu0
    %2810 = vmatpush.msra.mxu0 %v1508
    %2811 = vmatpush.msra.mxu0 %v1507
    %2812 = vmatpush.msra.mxu0 %v1506
    %2813 = vmatpush.msra.mxu0 %v1505
    %2814 = vmatpush.msra.mxu0 %v1504
    %2815 = vmatpush.msra.mxu0 %v1503
    %2816 = vmatpush.msra.mxu0 %v1502
    %2817 = vmatpush.msra.mxu0 %v1501
    %2818 = vmatpush.msra.mxu0 %v1500
    %2819 = vmatpush.msra.mxu0 %v1499
    %2820 = vmatpush.msra.mxu0 %v1498
    %2821 = vmatpush.msra.mxu0 %v1497
    %2822 = vmatpush.msra.mxu0 %v1496
    %2823 = vmatpush.msra.mxu0 %v1495
    %2824 = vmatpush.msra.mxu0 %v1494
    %2825 = vmatpush.msra.mxu0 %v1493
    %2826 = vmatmul.f32.gmra.mxu0 %v2142
    %v2827 = vpop.f32.mrf.mxu0
    %v2828 = vadd.f32 %v2808, %v2827
    %2829 = vdwg.mxu0
    %2830 = vmatpush.msra.mxu0 %v1524
    %2831 = vmatpush.msra.mxu0 %v1523
    %2832 = vmatpush.msra.mxu0 %v1522
    %2833 = vmatpush.msra.mxu0 %v1521
    %2834 = vmatpush.msra.mxu0 %v1520
    %2835 = vmatpush.msra.mxu0 %v1519
    %2836 = vmatpush.msra.mxu0 %v1518
    %2837 = vmatpush.msra.mxu0 %v1517
    %2838 = vmatpush.msra.mxu0 %v1516
    %2839 = vmatpush.msra.mxu0 %v1515
    %2840 = vmatpush.msra.mxu0 %v1514
    %2841 = vmatpush.msra.mxu0 %v1513
    %2842 = vmatpush.msra.mxu0 %v1512
    %2843 = vmatpush.msra.mxu0 %v1511
    %2844 = vmatpush.msra.mxu0 %v1510
    %2845 = vmatpush.msra.mxu0 %v1509
    %2846 = vmatmul.f32.gmra.mxu0 %v2143
    %v2847 = vpop.f32.mrf.mxu0
    %v2848 = vadd.f32 %v2828, %v2847
    %2849 = vdwg.mxu0
    %2850 = vmatpush.msra.mxu0 %v1540
    %2851 = vmatpush.msra.mxu0 %v1539
    %2852 = vmatpush.msra.mxu0 %v1538
    %2853 = vmatpush.msra.mxu0 %v1537
    %2854 = vmatpush.msra.mxu0 %v1536
    %2855 = vmatpush.msra.mxu0 %v1535
    %2856 = vmatpush.msra.mxu0 %v1534
    %2857 = vmatpush.msra.mxu0 %v1533
    %2858 = vmatpush.msra.mxu0 %v1532
    %2859 = vmatpush.msra.mxu0 %v1531
    %2860 = vmatpush.msra.mxu0 %v1530
    %2861 = vmatpush.msra.mxu0 %v1529
    %2862 = vmatpush.msra.mxu0 %v1528
    %2863 = vmatpush.msra.mxu0 %v1527
    %2864 = vmatpush.msra.mxu0 %v1526
    %2865 = vmatpush.msra.mxu0 %v1525
    %2866 = vmatmul.f32.gmra.mxu0 %v2144
    %v2867 = vpop.f32.mrf.mxu0
    %v2868 = vadd.f32 %v2848, %v2867
    %2869 = vdwg.mxu0
    %2870 = vmatpush.msra.mxu0 %v1556
    %2871 = vmatpush.msra.mxu0 %v1555
    %2872 = vmatpush.msra.mxu0 %v1554
    %2873 = vmatpush.msra.mxu0 %v1553
    %2874 = vmatpush.msra.mxu0 %v1552
    %2875 = vmatpush.msra.mxu0 %v1551
    %2876 = vmatpush.msra.mxu0 %v1550
    %2877 = vmatpush.msra.mxu0 %v1549
    %2878 = vmatpush.msra.mxu0 %v1548
    %2879 = vmatpush.msra.mxu0 %v1547
    %2880 = vmatpush.msra.mxu0 %v1546
    %2881 = vmatpush.msra.mxu0 %v1545
    %2882 = vmatpush.msra.mxu0 %v1544
    %2883 = vmatpush.msra.mxu0 %v1543
    %2884 = vmatpush.msra.mxu0 %v1542
    %2885 = vmatpush.msra.mxu0 %v1541
    %2886 = vmatmul.f32.gmra.mxu0 %v2145
    %v2887 = vpop.f32.mrf.mxu0
    %v2888 = vadd.f32 %v2868, %v2887
    %2889 = vdwg.mxu0
    %2890 = vmatpush.msra.mxu0 %v1572
    %2891 = vmatpush.msra.mxu0 %v1571
    %2892 = vmatpush.msra.mxu0 %v1570
    %2893 = vmatpush.msra.mxu0 %v1569
    %2894 = vmatpush.msra.mxu0 %v1568
    %2895 = vmatpush.msra.mxu0 %v1567
    %2896 = vmatpush.msra.mxu0 %v1566
    %2897 = vmatpush.msra.mxu0 %v1565
    %2898 = vmatpush.msra.mxu0 %v1564
    %2899 = vmatpush.msra.mxu0 %v1563
    %2900 = vmatpush.msra.mxu0 %v1562
    %2901 = vmatpush.msra.mxu0 %v1561
    %2902 = vmatpush.msra.mxu0 %v1560
    %2903 = vmatpush.msra.mxu0 %v1559
    %2904 = vmatpush.msra.mxu0 %v1558
    %2905 = vmatpush.msra.mxu0 %v1557
    %2906 = vmatmul.f32.gmra.mxu0 %v2148
    %v2907 = vpop.f32.mrf.mxu0
    %v2908 = vadd.f32 %v2888, %v2907
    %2909 = vdwg.mxu0
    %2910 = vmatpush.msra.mxu0 %v1588
    %2911 = vmatpush.msra.mxu0 %v1587
    %2912 = vmatpush.msra.mxu0 %v1586
    %2913 = vmatpush.msra.mxu0 %v1585
    %2914 = vmatpush.msra.mxu0 %v1584
    %2915 = vmatpush.msra.mxu0 %v1583
    %2916 = vmatpush.msra.mxu0 %v1582
    %2917 = vmatpush.msra.mxu0 %v1581
    %2918 = vmatpush.msra.mxu0 %v1580
    %2919 = vmatpush.msra.mxu0 %v1579
    %2920 = vmatpush.msra.mxu0 %v1578
    %2921 = vmatpush.msra.mxu0 %v1577
    %2922 = vmatpush.msra.mxu0 %v1576
    %2923 = vmatpush.msra.mxu0 %v1575
    %2924 = vmatpush.msra.mxu0 %v1574
    %2925 = vmatpush.msra.mxu0 %v1573
    %2926 = vmatmul.f32.gmra.mxu0 %v2149
    %v2927 = vpop.f32.mrf.mxu0
    %v2928 = vadd.f32 %v2908, %v2927
    %2929 = vdwg.mxu0
    %2930 = vmatpush.msra.mxu0 %v1604
    %2931 = vmatpush.msra.mxu0 %v1603
    %2932 = vmatpush.msra.mxu0 %v1602
    %2933 = vmatpush.msra.mxu0 %v1601
    %2934 = vmatpush.msra.mxu0 %v1600
    %2935 = vmatpush.msra.mxu0 %v1599
    %2936 = vmatpush.msra.mxu0 %v1598
    %2937 = vmatpush.msra.mxu0 %v1597
    %2938 = vmatpush.msra.mxu0 %v1596
    %2939 = vmatpush.msra.mxu0 %v1595
    %2940 = vmatpush.msra.mxu0 %v1594
    %2941 = vmatpush.msra.mxu0 %v1593
    %2942 = vmatpush.msra.mxu0 %v1592
    %2943 = vmatpush.msra.mxu0 %v1591
    %2944 = vmatpush.msra.mxu0 %v1590
    %2945 = vmatpush.msra.mxu0 %v1589
    %2946 = vmatmul.f32.gmra.mxu0 %v2150
    %v2947 = vpop.f32.mrf.mxu0
    %v2948 = vadd.f32 %v2928, %v2947
    %2949 = vdwg.mxu0
    %2950 = vmatpush.msra.mxu0 %v1620
    %2951 = vmatpush.msra.mxu0 %v1619
    %2952 = vmatpush.msra.mxu0 %v1618
    %2953 = vmatpush.msra.mxu0 %v1617
    %2954 = vmatpush.msra.mxu0 %v1616
    %2955 = vmatpush.msra.mxu0 %v1615
    %2956 = vmatpush.msra.mxu0 %v1614
    %2957 = vmatpush.msra.mxu0 %v1613
    %2958 = vmatpush.msra.mxu0 %v1612
    %2959 = vmatpush.msra.mxu0 %v1611
    %2960 = vmatpush.msra.mxu0 %v1610
    %2961 = vmatpush.msra.mxu0 %v1609
    %2962 = vmatpush.msra.mxu0 %v1608
    %2963 = vmatpush.msra.mxu0 %v1607
    %2964 = vmatpush.msra.mxu0 %v1606
    %2965 = vmatpush.msra.mxu0 %v1605
    %2966 = vmatmul.f32.gmra.mxu0 %v2151
    %v2967 = vpop.f32.mrf.mxu0
    %v2968 = vadd.f32 %v2948, %v2967
    %2969 = vdwg.mxu0
    %2970 = vmatpush.msra.mxu0 %v1636
    %2971 = vmatpush.msra.mxu0 %v1635
    %2972 = vmatpush.msra.mxu0 %v1634
    %2973 = vmatpush.msra.mxu0 %v1633
    %2974 = vmatpush.msra.mxu0 %v1632
    %2975 = vmatpush.msra.mxu0 %v1631
    %2976 = vmatpush.msra.mxu0 %v1630
    %2977 = vmatpush.msra.mxu0 %v1629
    %2978 = vmatpush.msra.mxu0 %v1628
    %2979 = vmatpush.msra.mxu0 %v1627
    %2980 = vmatpush.msra.mxu0 %v1626
    %2981 = vmatpush.msra.mxu0 %v1625
    %2982 = vmatpush.msra.mxu0 %v1624
    %2983 = vmatpush.msra.mxu0 %v1623
    %2984 = vmatpush.msra.mxu0 %v1622
    %2985 = vmatpush.msra.mxu0 %v1621
    %2986 = vmatmul.f32.gmra.mxu0 %v2152
    %v2987 = vpop.f32.mrf.mxu0
    %v2988 = vadd.f32 %v2968, %v2987
    %2989 = vdwg.mxu0
    %2990 = vmatpush.msra.mxu0 %v1652
    %2991 = vmatpush.msra.mxu0 %v1651
    %2992 = vmatpush.msra.mxu0 %v1650
    %2993 = vmatpush.msra.mxu0 %v1649
    %2994 = vmatpush.msra.mxu0 %v1648
    %2995 = vmatpush.msra.mxu0 %v1647
    %2996 = vmatpush.msra.mxu0 %v1646
    %2997 = vmatpush.msra.mxu0 %v1645
    %2998 = vmatpush.msra.mxu0 %v1644
    %2999 = vmatpush.msra.mxu0 %v1643
    %3000 = vmatpush.msra.mxu0 %v1642
    %3001 = vmatpush.msra.mxu0 %v1641
    %3002 = vmatpush.msra.mxu0 %v1640
    %3003 = vmatpush.msra.mxu0 %v1639
    %3004 = vmatpush.msra.mxu0 %v1638
    %3005 = vmatpush.msra.mxu0 %v1637
    %3006 = vmatmul.f32.gmra.mxu0 %v2153
    %v3007 = vpop.f32.mrf.mxu0
    %v3008 = vadd.f32 %v2988, %v3007
    %3009 = vdwg.mxu0
    %3010 = vmatpush.msra.mxu0 %v1668
    %3011 = vmatpush.msra.mxu0 %v1667
    %3012 = vmatpush.msra.mxu0 %v1666
    %3013 = vmatpush.msra.mxu0 %v1665
    %3014 = vmatpush.msra.mxu0 %v1664
    %3015 = vmatpush.msra.mxu0 %v1663
    %3016 = vmatpush.msra.mxu0 %v1662
    %3017 = vmatpush.msra.mxu0 %v1661
    %3018 = vmatpush.msra.mxu0 %v1660
    %3019 = vmatpush.msra.mxu0 %v1659
    %3020 = vmatpush.msra.mxu0 %v1658
    %3021 = vmatpush.msra.mxu0 %v1657
    %3022 = vmatpush.msra.mxu0 %v1656
    %3023 = vmatpush.msra.mxu0 %v1655
    %3024 = vmatpush.msra.mxu0 %v1654
    %3025 = vmatpush.msra.mxu0 %v1653
    %3026 = vmatmul.f32.gmra.mxu0 %v2154
    %v3027 = vpop.f32.mrf.mxu0
    %v3028 = vadd.f32 %v3008, %v3027
    %3029 = vdwg.mxu0
    %3030 = vmatpush.msra.mxu0 %v1684
    %3031 = vmatpush.msra.mxu0 %v1683
    %3032 = vmatpush.msra.mxu0 %v1682
    %3033 = vmatpush.msra.mxu0 %v1681
    %3034 = vmatpush.msra.mxu0 %v1680
    %3035 = vmatpush.msra.mxu0 %v1679
    %3036 = vmatpush.msra.mxu0 %v1678
    %3037 = vmatpush.msra.mxu0 %v1677
    %3038 = vmatpush.msra.mxu0 %v1676
    %3039 = vmatpush.msra.mxu0 %v1675
    %3040 = vmatpush.msra.mxu0 %v1674
    %3041 = vmatpush.msra.mxu0 %v1673
    %3042 = vmatpush.msra.mxu0 %v1672
    %3043 = vmatpush.msra.mxu0 %v1671
    %3044 = vmatpush.msra.mxu0 %v1670
    %3045 = vmatpush.msra.mxu0 %v1669
    %3046 = vmatmul.f32.gmra.mxu0 %v2155
    %v3047 = vpop.f32.mrf.mxu0
    %v3048 = vadd.f32 %v3028, %v3047
    %3049 = vdwg.mxu0
    %3050 = vmatpush.msra.mxu0 %v1700
    %3051 = vmatpush.msra.mxu0 %v1699
    %3052 = vmatpush.msra.mxu0 %v1698
    %3053 = vmatpush.msra.mxu0 %v1697
    %3054 = vmatpush.msra.mxu0 %v1696
    %3055 = vmatpush.msra.mxu0 %v1695
    %3056 = vmatpush.msra.mxu0 %v1694
    %3057 = vmatpush.msra.mxu0 %v1693
    %3058 = vmatpush.msra.mxu0 %v1692
    %3059 = vmatpush.msra.mxu0 %v1691
    %3060 = vmatpush.msra.mxu0 %v1690
    %3061 = vmatpush.msra.mxu0 %v1689
    %3062 = vmatpush.msra.mxu0 %v1688
    %3063 = vmatpush.msra.mxu0 %v1687
    %3064 = vmatpush.msra.mxu0 %v1686
    %3065 = vmatpush.msra.mxu0 %v1685
    %3066 = vmatmul.f32.gmra.mxu0 %v2158
    %v3067 = vpop.f32.mrf.mxu0
    %v3068 = vadd.f32 %v3048, %v3067
    %3069 = vdwg.mxu0
    %3070 = vmatpush.msra.mxu0 %v1716
    %3071 = vmatpush.msra.mxu0 %v1715
    %3072 = vmatpush.msra.mxu0 %v1714
    %3073 = vmatpush.msra.mxu0 %v1713
    %3074 = vmatpush.msra.mxu0 %v1712
    %3075 = vmatpush.msra.mxu0 %v1711
    %3076 = vmatpush.msra.mxu0 %v1710
    %3077 = vmatpush.msra.mxu0 %v1709
    %3078 = vmatpush.msra.mxu0 %v1708
    %3079 = vmatpush.msra.mxu0 %v1707
    %3080 = vmatpush.msra.mxu0 %v1706
    %3081 = vmatpush.msra.mxu0 %v1705
    %3082 = vmatpush.msra.mxu0 %v1704
    %3083 = vmatpush.msra.mxu0 %v1703
    %3084 = vmatpush.msra.mxu0 %v1702
    %3085 = vmatpush.msra.mxu0 %v1701
    %3086 = vmatmul.f32.gmra.mxu0 %v2159
    %v3087 = vpop.f32.mrf.mxu0
    %v3088 = vadd.f32 %v3068, %v3087
    %3089 = vdwg.mxu0
    %3090 = vmatpush.msra.mxu0 %v1732
    %3091 = vmatpush.msra.mxu0 %v1731
    %3092 = vmatpush.msra.mxu0 %v1730
    %3093 = vmatpush.msra.mxu0 %v1729
    %3094 = vmatpush.msra.mxu0 %v1728
    %3095 = vmatpush.msra.mxu0 %v1727
    %3096 = vmatpush.msra.mxu0 %v1726
    %3097 = vmatpush.msra.mxu0 %v1725
    %3098 = vmatpush.msra.mxu0 %v1724
    %3099 = vmatpush.msra.mxu0 %v1723
    %3100 = vmatpush.msra.mxu0 %v1722
    %3101 = vmatpush.msra.mxu0 %v1721
    %3102 = vmatpush.msra.mxu0 %v1720
    %3103 = vmatpush.msra.mxu0 %v1719
    %3104 = vmatpush.msra.mxu0 %v1718
    %3105 = vmatpush.msra.mxu0 %v1717
    %3106 = vmatmul.f32.gmra.mxu0 %v2160
    %v3107 = vpop.f32.mrf.mxu0
    %v3108 = vadd.f32 %v3088, %v3107
    %3109 = vdwg.mxu0
    %3110 = vmatpush.msra.mxu0 %v1748
    %3111 = vmatpush.msra.mxu0 %v1747
    %3112 = vmatpush.msra.mxu0 %v1746
    %3113 = vmatpush.msra.mxu0 %v1745
    %3114 = vmatpush.msra.mxu0 %v1744
    %3115 = vmatpush.msra.mxu0 %v1743
    %3116 = vmatpush.msra.mxu0 %v1742
    %3117 = vmatpush.msra.mxu0 %v1741
    %3118 = vmatpush.msra.mxu0 %v1740
    %3119 = vmatpush.msra.mxu0 %v1739
    %3120 = vmatpush.msra.mxu0 %v1738
    %3121 = vmatpush.msra.mxu0 %v1737
    %3122 = vmatpush.msra.mxu0 %v1736
    %3123 = vmatpush.msra.mxu0 %v1735
    %3124 = vmatpush.msra.mxu0 %v1734
    %3125 = vmatpush.msra.mxu0 %v1733
    %3126 = vmatmul.f32.gmra.mxu0 %v2161
    %v3127 = vpop.f32.mrf.mxu0
    %v3128 = vadd.f32 %v3108, %v3127
    %3129 = vdwg.mxu0
    %3130 = vmatpush.msra.mxu0 %v1764
    %3131 = vmatpush.msra.mxu0 %v1763
    %3132 = vmatpush.msra.mxu0 %v1762
    %3133 = vmatpush.msra.mxu0 %v1761
    %3134 = vmatpush.msra.mxu0 %v1760
    %3135 = vmatpush.msra.mxu0 %v1759
    %3136 = vmatpush.msra.mxu0 %v1758
    %3137 = vmatpush.msra.mxu0 %v1757
    %3138 = vmatpush.msra.mxu0 %v1756
    %3139 = vmatpush.msra.mxu0 %v1755
    %3140 = vmatpush.msra.mxu0 %v1754
    %3141 = vmatpush.msra.mxu0 %v1753
    %3142 = vmatpush.msra.mxu0 %v1752
    %3143 = vmatpush.msra.mxu0 %v1751
    %3144 = vmatpush.msra.mxu0 %v1750
    %3145 = vmatpush.msra.mxu0 %v1749
    %3146 = vmatmul.f32.gmra.mxu0 %v2162
    %v3147 = vpop.f32.mrf.mxu0
    %v3148 = vadd.f32 %v3128, %v3147
    %3149 = vdwg.mxu0
    %3150 = vmatpush.msra.mxu0 %v1780
    %3151 = vmatpush.msra.mxu0 %v1779
    %3152 = vmatpush.msra.mxu0 %v1778
    %3153 = vmatpush.msra.mxu0 %v1777
    %3154 = vmatpush.msra.mxu0 %v1776
    %3155 = vmatpush.msra.mxu0 %v1775
    %3156 = vmatpush.msra.mxu0 %v1774
    %3157 = vmatpush.msra.mxu0 %v1773
    %3158 = vmatpush.msra.mxu0 %v1772
    %3159 = vmatpush.msra.mxu0 %v1771
    %3160 = vmatpush.msra.mxu0 %v1770
    %3161 = vmatpush.msra.mxu0 %v1769
    %3162 = vmatpush.msra.mxu0 %v1768
    %3163 = vmatpush.msra.mxu0 %v1767
    %3164 = vmatpush.msra.mxu0 %v1766
    %3165 = vmatpush.msra.mxu0 %v1765
    %3166 = vmatmul.f32.gmra.mxu0 %v2163
    %v3167 = vpop.f32.mrf.mxu0
    %v3168 = vadd.f32 %v3148, %v3167
    %3169 = vdwg.mxu0
    %3170 = vmatpush.msra.mxu0 %v1796
    %3171 = vmatpush.msra.mxu0 %v1795
    %3172 = vmatpush.msra.mxu0 %v1794
    %3173 = vmatpush.msra.mxu0 %v1793
    %3174 = vmatpush.msra.mxu0 %v1792
    %3175 = vmatpush.msra.mxu0 %v1791
    %3176 = vmatpush.msra.mxu0 %v1790
    %3177 = vmatpush.msra.mxu0 %v1789
    %3178 = vmatpush.msra.mxu0 %v1788
    %3179 = vmatpush.msra.mxu0 %v1787
    %3180 = vmatpush.msra.mxu0 %v1786
    %3181 = vmatpush.msra.mxu0 %v1785
    %3182 = vmatpush.msra.mxu0 %v1784
    %3183 = vmatpush.msra.mxu0 %v1783
    %3184 = vmatpush.msra.mxu0 %v1782
    %3185 = vmatpush.msra.mxu0 %v1781
    %3186 = vmatmul.f32.gmra.mxu0 %v2164
    %v3187 = vpop.f32.mrf.mxu0
    %v3188 = vadd.f32 %v3168, %v3187
    %3189 = vdwg.mxu0
    %3190 = vmatpush.msra.mxu0 %v1812
    %3191 = vmatpush.msra.mxu0 %v1811
    %3192 = vmatpush.msra.mxu0 %v1810
    %3193 = vmatpush.msra.mxu0 %v1809
    %3194 = vmatpush.msra.mxu0 %v1808
    %3195 = vmatpush.msra.mxu0 %v1807
    %3196 = vmatpush.msra.mxu0 %v1806
    %3197 = vmatpush.msra.mxu0 %v1805
    %3198 = vmatpush.msra.mxu0 %v1804
    %3199 = vmatpush.msra.mxu0 %v1803
    %3200 = vmatpush.msra.mxu0 %v1802
    %3201 = vmatpush.msra.mxu0 %v1801
    %3202 = vmatpush.msra.mxu0 %v1800
    %3203 = vmatpush.msra.mxu0 %v1799
    %3204 = vmatpush.msra.mxu0 %v1798
    %3205 = vmatpush.msra.mxu0 %v1797
    %3206 = vmatmul.f32.gmra.mxu0 %v2165
    %v3207 = vpop.f32.mrf.mxu0
    %v3208 = vadd.f32 %v3188, %v3207
    %3209 = vdwg.mxu0
    %3210 = vmatpush.msra.mxu0 %v1828
    %3211 = vmatpush.msra.mxu0 %v1827
    %3212 = vmatpush.msra.mxu0 %v1826
    %3213 = vmatpush.msra.mxu0 %v1825
    %3214 = vmatpush.msra.mxu0 %v1824
    %3215 = vmatpush.msra.mxu0 %v1823
    %3216 = vmatpush.msra.mxu0 %v1822
    %3217 = vmatpush.msra.mxu0 %v1821
    %3218 = vmatpush.msra.mxu0 %v1820
    %3219 = vmatpush.msra.mxu0 %v1819
    %3220 = vmatpush.msra.mxu0 %v1818
    %3221 = vmatpush.msra.mxu0 %v1817
    %3222 = vmatpush.msra.mxu0 %v1816
    %3223 = vmatpush.msra.mxu0 %v1815
    %3224 = vmatpush.msra.mxu0 %v1814
    %3225 = vmatpush.msra.mxu0 %v1813
    %3226 = vmatmul.f32.gmra.mxu0 %v2168
    %v3227 = vpop.f32.mrf.mxu0
    %v3228 = vadd.f32 %v3208, %v3227
    %3229 = vdwg.mxu0
    %3230 = vmatpush.msra.mxu0 %v1844
    %3231 = vmatpush.msra.mxu0 %v1843
    %3232 = vmatpush.msra.mxu0 %v1842
    %3233 = vmatpush.msra.mxu0 %v1841
    %3234 = vmatpush.msra.mxu0 %v1840
    %3235 = vmatpush.msra.mxu0 %v1839
    %3236 = vmatpush.msra.mxu0 %v1838
    %3237 = vmatpush.msra.mxu0 %v1837
    %3238 = vmatpush.msra.mxu0 %v1836
    %3239 = vmatpush.msra.mxu0 %v1835
    %3240 = vmatpush.msra.mxu0 %v1834
    %3241 = vmatpush.msra.mxu0 %v1833
    %3242 = vmatpush.msra.mxu0 %v1832
    %3243 = vmatpush.msra.mxu0 %v1831
    %3244 = vmatpush.msra.mxu0 %v1830
    %3245 = vmatpush.msra.mxu0 %v1829
    %3246 = vmatmul.f32.gmra.mxu0 %v2169
    %v3247 = vpop.f32.mrf.mxu0
    %v3248 = vadd.f32 %v3228, %v3247
    %3249 = vdwg.mxu0
    %3250 = vmatpush.msra.mxu0 %v1860
    %3251 = vmatpush.msra.mxu0 %v1859
    %3252 = vmatpush.msra.mxu0 %v1858
    %3253 = vmatpush.msra.mxu0 %v1857
    %3254 = vmatpush.msra.mxu0 %v1856
    %3255 = vmatpush.msra.mxu0 %v1855
    %3256 = vmatpush.msra.mxu0 %v1854
    %3257 = vmatpush.msra.mxu0 %v1853
    %3258 = vmatpush.msra.mxu0 %v1852
    %3259 = vmatpush.msra.mxu0 %v1851
    %3260 = vmatpush.msra.mxu0 %v1850
    %3261 = vmatpush.msra.mxu0 %v1849
    %3262 = vmatpush.msra.mxu0 %v1848
    %3263 = vmatpush.msra.mxu0 %v1847
    %3264 = vmatpush.msra.mxu0 %v1846
    %3265 = vmatpush.msra.mxu0 %v1845
    %3266 = vmatmul.f32.gmra.mxu0 %v2170
    %v3267 = vpop.f32.mrf.mxu0
    %v3268 = vadd.f32 %v3248, %v3267
    %3269 = vdwg.mxu0
    %3270 = vmatpush.msra.mxu0 %v1876
    %3271 = vmatpush.msra.mxu0 %v1875
    %3272 = vmatpush.msra.mxu0 %v1874
    %3273 = vmatpush.msra.mxu0 %v1873
    %3274 = vmatpush.msra.mxu0 %v1872
    %3275 = vmatpush.msra.mxu0 %v1871
    %3276 = vmatpush.msra.mxu0 %v1870
    %3277 = vmatpush.msra.mxu0 %v1869
    %3278 = vmatpush.msra.mxu0 %v1868
    %3279 = vmatpush.msra.mxu0 %v1867
    %3280 = vmatpush.msra.mxu0 %v1866
    %3281 = vmatpush.msra.mxu0 %v1865
    %3282 = vmatpush.msra.mxu0 %v1864
    %3283 = vmatpush.msra.mxu0 %v1863
    %3284 = vmatpush.msra.mxu0 %v1862
    %3285 = vmatpush.msra.mxu0 %v1861
    %3286 = vmatmul.f32.gmra.mxu0 %v2171
    %v3287 = vpop.f32.mrf.mxu0
    %v3288 = vadd.f32 %v3268, %v3287
    %3289 = vdwg.mxu0
    %3290 = vmatpush.msra.mxu0 %v1892
    %3291 = vmatpush.msra.mxu0 %v1891
    %3292 = vmatpush.msra.mxu0 %v1890
    %3293 = vmatpush.msra.mxu0 %v1889
    %3294 = vmatpush.msra.mxu0 %v1888
    %3295 = vmatpush.msra.mxu0 %v1887
    %3296 = vmatpush.msra.mxu0 %v1886
    %3297 = vmatpush.msra.mxu0 %v1885
    %3298 = vmatpush.msra.mxu0 %v1884
    %3299 = vmatpush.msra.mxu0 %v1883
    %3300 = vmatpush.msra.mxu0 %v1882
    %3301 = vmatpush.msra.mxu0 %v1881
    %3302 = vmatpush.msra.mxu0 %v1880
    %3303 = vmatpush.msra.mxu0 %v1879
    %3304 = vmatpush.msra.mxu0 %v1878
    %3305 = vmatpush.msra.mxu0 %v1877
    %3306 = vmatmul.f32.gmra.mxu0 %v2172
    %v3307 = vpop.f32.mrf.mxu0
    %v3308 = vadd.f32 %v3288, %v3307
    %3309 = vdwg.mxu0
    %3310 = vmatpush.msra.mxu0 %v1908
    %3311 = vmatpush.msra.mxu0 %v1907
    %3312 = vmatpush.msra.mxu0 %v1906
    %3313 = vmatpush.msra.mxu0 %v1905
    %3314 = vmatpush.msra.mxu0 %v1904
    %3315 = vmatpush.msra.mxu0 %v1903
    %3316 = vmatpush.msra.mxu0 %v1902
    %3317 = vmatpush.msra.mxu0 %v1901
    %3318 = vmatpush.msra.mxu0 %v1900
    %3319 = vmatpush.msra.mxu0 %v1899
    %3320 = vmatpush.msra.mxu0 %v1898
    %3321 = vmatpush.msra.mxu0 %v1897
    %3322 = vmatpush.msra.mxu0 %v1896
    %3323 = vmatpush.msra.mxu0 %v1895
    %3324 = vmatpush.msra.mxu0 %v1894
    %3325 = vmatpush.msra.mxu0 %v1893
    %3326 = vmatmul.f32.gmra.mxu0 %v2173
    %v3327 = vpop.f32.mrf.mxu0
    %v3328 = vadd.f32 %v3308, %v3327
    %3329 = vdwg.mxu0
    %3330 = vmatpush.msra.mxu0 %v1924
    %3331 = vmatpush.msra.mxu0 %v1923
    %3332 = vmatpush.msra.mxu0 %v1922
    %3333 = vmatpush.msra.mxu0 %v1921
    %3334 = vmatpush.msra.mxu0 %v1920
    %3335 = vmatpush.msra.mxu0 %v1919
    %3336 = vmatpush.msra.mxu0 %v1918
    %3337 = vmatpush.msra.mxu0 %v1917
    %3338 = vmatpush.msra.mxu0 %v1916
    %3339 = vmatpush.msra.mxu0 %v1915
    %3340 = vmatpush.msra.mxu0 %v1914
    %3341 = vmatpush.msra.mxu0 %v1913
    %3342 = vmatpush.msra.mxu0 %v1912
    %3343 = vmatpush.msra.mxu0 %v1911
    %3344 = vmatpush.msra.mxu0 %v1910
    %3345 = vmatpush.msra.mxu0 %v1909
    %3346 = vmatmul.f32.gmra.mxu0 %v2174
    %v3347 = vpop.f32.mrf.mxu0
    %v3348 = vadd.f32 %v3328, %v3347
    %3349 = vdwg.mxu0
    %3350 = vmatpush.msra.mxu0 %v1940
    %3351 = vmatpush.msra.mxu0 %v1939
    %3352 = vmatpush.msra.mxu0 %v1938
    %3353 = vmatpush.msra.mxu0 %v1937
    %3354 = vmatpush.msra.mxu0 %v1936
    %3355 = vmatpush.msra.mxu0 %v1935
    %3356 = vmatpush.msra.mxu0 %v1934
    %3357 = vmatpush.msra.mxu0 %v1933
    %3358 = vmatpush.msra.mxu0 %v1932
    %3359 = vmatpush.msra.mxu0 %v1931
    %3360 = vmatpush.msra.mxu0 %v1930
    %3361 = vmatpush.msra.mxu0 %v1929
    %3362 = vmatpush.msra.mxu0 %v1928
    %3363 = vmatpush.msra.mxu0 %v1927
    %3364 = vmatpush.msra.mxu0 %v1926
    %3365 = vmatpush.msra.mxu0 %v1925
    %3366 = vmatmul.f32.gmra.mxu0 %v2175
    %v3367 = vpop.f32.mrf.mxu0
    %v3368 = vadd.f32 %v3348, %v3367
    %3369 = vdwg.mxu0
    %3370 = vmatpush.msra.mxu0 %v1956
    %3371 = vmatpush.msra.mxu0 %v1955
    %3372 = vmatpush.msra.mxu0 %v1954
    %3373 = vmatpush.msra.mxu0 %v1953
    %3374 = vmatpush.msra.mxu0 %v1952
    %3375 = vmatpush.msra.mxu0 %v1951
    %3376 = vmatpush.msra.mxu0 %v1950
    %3377 = vmatpush.msra.mxu0 %v1949
    %3378 = vmatpush.msra.mxu0 %v1948
    %3379 = vmatpush.msra.mxu0 %v1947
    %3380 = vmatpush.msra.mxu0 %v1946
    %3381 = vmatpush.msra.mxu0 %v1945
    %3382 = vmatpush.msra.mxu0 %v1944
    %3383 = vmatpush.msra.mxu0 %v1943
    %3384 = vmatpush.msra.mxu0 %v1942
    %3385 = vmatpush.msra.mxu0 %v1941
    %3386 = vmatmul.f32.gmra.mxu0 %v2178
    %v3387 = vpop.f32.mrf.mxu0
    %v3388 = vadd.f32 %v3368, %v3387
    %3389 = vdwg.mxu0
    %3390 = vmatpush.msra.mxu0 %v1972
    %3391 = vmatpush.msra.mxu0 %v1971
    %3392 = vmatpush.msra.mxu0 %v1970
    %3393 = vmatpush.msra.mxu0 %v1969
    %3394 = vmatpush.msra.mxu0 %v1968
    %3395 = vmatpush.msra.mxu0 %v1967
    %3396 = vmatpush.msra.mxu0 %v1966
    %3397 = vmatpush.msra.mxu0 %v1965
    %3398 = vmatpush.msra.mxu0 %v1964
    %3399 = vmatpush.msra.mxu0 %v1963
    %3400 = vmatpush.msra.mxu0 %v1962
    %3401 = vmatpush.msra.mxu0 %v1961
    %3402 = vmatpush.msra.mxu0 %v1960
    %3403 = vmatpush.msra.mxu0 %v1959
    %3404 = vmatpush.msra.mxu0 %v1958
    %3405 = vmatpush.msra.mxu0 %v1957
    %3406 = vmatmul.f32.gmra.mxu0 %v2179
    %v3407 = vpop.f32.mrf.mxu0
    %v3408 = vadd.f32 %v3388, %v3407
    %3409 = vdwg.mxu0
    %3410 = vmatpush.msra.mxu0 %v1988
    %3411 = vmatpush.msra.mxu0 %v1987
    %3412 = vmatpush.msra.mxu0 %v1986
    %3413 = vmatpush.msra.mxu0 %v1985
    %3414 = vmatpush.msra.mxu0 %v1984
    %3415 = vmatpush.msra.mxu0 %v1983
    %3416 = vmatpush.msra.mxu0 %v1982
    %3417 = vmatpush.msra.mxu0 %v1981
    %3418 = vmatpush.msra.mxu0 %v1980
    %3419 = vmatpush.msra.mxu0 %v1979
    %3420 = vmatpush.msra.mxu0 %v1978
    %3421 = vmatpush.msra.mxu0 %v1977
    %3422 = vmatpush.msra.mxu0 %v1976
    %3423 = vmatpush.msra.mxu0 %v1975
    %3424 = vmatpush.msra.mxu0 %v1974
    %3425 = vmatpush.msra.mxu0 %v1973
    %3426 = vmatmul.f32.gmra.mxu0 %v2180
    %v3427 = vpop.f32.mrf.mxu0
    %v3428 = vadd.f32 %v3408, %v3427
    %3429 = vdwg.mxu0
    %3430 = vmatpush.msra.mxu0 %v2004
    %3431 = vmatpush.msra.mxu0 %v2003
    %3432 = vmatpush.msra.mxu0 %v2002
    %3433 = vmatpush.msra.mxu0 %v2001
    %3434 = vmatpush.msra.mxu0 %v2000
    %3435 = vmatpush.msra.mxu0 %v1999
    %3436 = vmatpush.msra.mxu0 %v1998
    %3437 = vmatpush.msra.mxu0 %v1997
    %3438 = vmatpush.msra.mxu0 %v1996
    %3439 = vmatpush.msra.mxu0 %v1995
    %3440 = vmatpush.msra.mxu0 %v1994
    %3441 = vmatpush.msra.mxu0 %v1993
    %3442 = vmatpush.msra.mxu0 %v1992
    %3443 = vmatpush.msra.mxu0 %v1991
    %3444 = vmatpush.msra.mxu0 %v1990
    %3445 = vmatpush.msra.mxu0 %v1989
    %3446 = vmatmul.f32.gmra.mxu0 %v2181
    %v3447 = vpop.f32.mrf.mxu0
    %v3448 = vadd.f32 %v3428, %v3447
    %3449 = vdwg.mxu0
    %3450 = vmatpush.msra.mxu0 %v2020
    %3451 = vmatpush.msra.mxu0 %v2019
    %3452 = vmatpush.msra.mxu0 %v2018
    %3453 = vmatpush.msra.mxu0 %v2017
    %3454 = vmatpush.msra.mxu0 %v2016
    %3455 = vmatpush.msra.mxu0 %v2015
    %3456 = vmatpush.msra.mxu0 %v2014
    %3457 = vmatpush.msra.mxu0 %v2013
    %3458 = vmatpush.msra.mxu0 %v2012
    %3459 = vmatpush.msra.mxu0 %v2011
    %3460 = vmatpush.msra.mxu0 %v2010
    %3461 = vmatpush.msra.mxu0 %v2009
    %3462 = vmatpush.msra.mxu0 %v2008
    %3463 = vmatpush.msra.mxu0 %v2007
    %3464 = vmatpush.msra.mxu0 %v2006
    %3465 = vmatpush.msra.mxu0 %v2005
    %3466 = vmatmul.f32.gmra.mxu0 %v2182
    %v3467 = vpop.f32.mrf.mxu0
    %v3468 = vadd.f32 %v3448, %v3467
    %3469 = vdwg.mxu0
    %3470 = vmatpush.msra.mxu0 %v2036
    %3471 = vmatpush.msra.mxu0 %v2035
    %3472 = vmatpush.msra.mxu0 %v2034
    %3473 = vmatpush.msra.mxu0 %v2033
    %3474 = vmatpush.msra.mxu0 %v2032
    %3475 = vmatpush.msra.mxu0 %v2031
    %3476 = vmatpush.msra.mxu0 %v2030
    %3477 = vmatpush.msra.mxu0 %v2029
    %3478 = vmatpush.msra.mxu0 %v2028
    %3479 = vmatpush.msra.mxu0 %v2027
    %3480 = vmatpush.msra.mxu0 %v2026
    %3481 = vmatpush.msra.mxu0 %v2025
    %3482 = vmatpush.msra.mxu0 %v2024
    %3483 = vmatpush.msra.mxu0 %v2023
    %3484 = vmatpush.msra.mxu0 %v2022
    %3485 = vmatpush.msra.mxu0 %v2021
    %3486 = vmatmul.f32.gmra.mxu0 %v2183
    %v3487 = vpop.f32.mrf.mxu0
    %v3488 = vadd.f32 %v3468, %v3487
    %3489 = vdwg.mxu0
    %3490 = vmatpush.msra.mxu0 %v2052
    %3491 = vmatpush.msra.mxu0 %v2051
    %3492 = vmatpush.msra.mxu0 %v2050
    %3493 = vmatpush.msra.mxu0 %v2049
    %3494 = vmatpush.msra.mxu0 %v2048
    %3495 = vmatpush.msra.mxu0 %v2047
    %3496 = vmatpush.msra.mxu0 %v2046
    %3497 = vmatpush.msra.mxu0 %v2045
    %3498 = vmatpush.msra.mxu0 %v2044
    %3499 = vmatpush.msra.mxu0 %v2043
    %3500 = vmatpush.msra.mxu0 %v2042
    %3501 = vmatpush.msra.mxu0 %v2041
    %3502 = vmatpush.msra.mxu0 %v2040
    %3503 = vmatpush.msra.mxu0 %v2039
    %3504 = vmatpush.msra.mxu0 %v2038
    %3505 = vmatpush.msra.mxu0 %v2037
    %3506 = vmatmul.f32.gmra.mxu0 %v2184
    %v3507 = vpop.f32.mrf.mxu0
    %v3508 = vadd.f32 %v3488, %v3507
    %3509 = vdwg.mxu0
    %3510 = vmatpush.msra.mxu0 %v2068
    %3511 = vmatpush.msra.mxu0 %v2067
    %3512 = vmatpush.msra.mxu0 %v2066
    %3513 = vmatpush.msra.mxu0 %v2065
    %3514 = vmatpush.msra.mxu0 %v2064
    %3515 = vmatpush.msra.mxu0 %v2063
    %3516 = vmatpush.msra.mxu0 %v2062
    %3517 = vmatpush.msra.mxu0 %v2061
    %3518 = vmatpush.msra.mxu0 %v2060
    %3519 = vmatpush.msra.mxu0 %v2059
    %3520 = vmatpush.msra.mxu0 %v2058
    %3521 = vmatpush.msra.mxu0 %v2057
    %3522 = vmatpush.msra.mxu0 %v2056
    %3523 = vmatpush.msra.mxu0 %v2055
    %3524 = vmatpush.msra.mxu0 %v2054
    %3525 = vmatpush.msra.mxu0 %v2053
    %3526 = vmatmul.f32.gmra.mxu0 %v2185
    %v3527 = vpop.f32.mrf.mxu0
    %v3528 = vadd.f32 %v3508, %v3527
    %3529 = vdwg.mxu0
    %v3530 = vmin.f32 %v3528, 0.0
    %v3531 = vmul.f32 %v3530, 1.442695
    %v3532 = vpow.pop %v3531
    %v3533 = vsub.f32 %v3532, 1.0
    %vm3534 = vcmp.gt.f32.partialorder %v3528, 0.0
    %v3535 = vsel %vm3534, %v3528, %v3533
    %v3536 = vld [vmem:[%s3] sm:$0x3]
    %v3537 = vld [vmem:[%s4] sm:$0x3]
    %v3538 = vmul.f32 %v3536, %v3537
    %v3539 = vadd.f32 %v3535, %v3538
    %vm3540 = vcmask 517120
    %v3541 = vsel %vm3540, %v3539, 0.0
    %3542 = vadd.xlane.f32.xlu0 %v3541
    %v3543 = vpop.xlane.xlu0 %3542
    %v3544 = vrot.slane %v3543, 4
    %v3545 = vadd.f32 %v3543, %v3544
    %v3546 = vrot.slane %v3545, 2
    %v3547 = vadd.f32 %v3545, %v3546
    %v3548 = vrot.slane %v3547, 1
    %v3549 = vadd.f32 %v3547, %v3548
    %s3550 = vtos %v3549
    %v3551 = vstv %s3550
    %vm3552 = vcmask 0
    %3553 = vst.msk [vmem:[#allocation2] sm:$0x1] %vm3552, %v3551
    // Predicated region
    $region22: #{simple_cnn_forward.3} parent=1 // pred_check
      _
    $region23: #{simple_cnn_forward.3} parent=1 // pred_check_branch
      %3555 = sbr.rel (0) target = $region25
    $region24: #{simple_cnn_forward.3} parent=1 // pred_region
      %3557 = vsyncadd [#allocation3], 0
      %s3559 = sshll.u32 [#allocation2], 4
      %s3560 = int_to_ptr.vmem [resolvable:$true] %s3559
      %s3561 = sshll.u32 %s5, 4
      %s3562 = int_to_ptr.hbm [resolvable:$true] %s3561
      %3564 = dma.vmem_to_hbm [thread:$0]  %s3560, 16, %s3562, [#allocation3]
    $region25: #{simple_cnn_forward.3} parent=1 // pred_fallthru
      _
    // Predicated region
    $region26: #{simple_cnn_forward.3} parent=1 // pred_check
      _
    $region27: #{simple_cnn_forward.3} parent=1 // pred_check_branch
      %3566 = sbr.rel (0) target = $region29
    $region28: #{simple_cnn_forward.3} parent=1 // pred_region
      %3568 = dma.done [#allocation3], 16
    $region29: #{simple_cnn_forward.3} parent=1 // pred_fallthru
      _
    %3569 = vsyncpa [#allocation3], 1

</llo_original>
